<compile_context>
chip_gen: v7x
topology: tpu7x:2x2x1
jax: 0.10.0
libtpu: 0.0.40
codegen_flags: <defaults>
</compile_context>

<pallas_src>
import functools

import jax
import jax.numpy as jnp
from jax.experimental import pallas as pl
from jax.experimental.pallas import tpu as pltpu

IN_FEATURES = 3 * 64 * 64   # 12288
OUT_FEATURES = 6
_LANE = 128                  # VMEM lane padding of the last dim


def _linear_kernel(x_ref, w_ref, b_ref, o_ref, *, compute_dtype):
    x = x_ref[...]
    if x.dtype != compute_dtype:
        x = x.astype(compute_dtype)          # cast in VMEM, not in HBM
    acc = jnp.dot(x, w_ref[...], preferred_element_type=jnp.float32)
    o_ref[...] = (acc + b_ref[...]).astype(o_ref.dtype)


def _vmem_capacity_bytes():
    """Physical VMEM of the attached TPU; conservative (64 MiB) if unknown."""
    try:
        return int(pltpu.get_tpu_info().vmem_capacity_bytes)
    except Exception:
        pass
    try:
        kind = jax.devices()[0].device_kind.lower()
        if "v5" in kind or "v6" in kind:
            return 128 << 20
    except Exception:
        pass
    return 64 << 20  # v7x / unknown: conservative


def _pick_tiling(B, x_itemsize, compute_itemsize, x_needs_cast):
    """Batch-tile rows + scoped-VMEM request from a per-generation byte budget."""
    vmem = _vmem_capacity_bytes()
    vmem_limit = int(min(vmem * 3 // 4, 96 << 20))   # ~96 MiB v5e/v6e, ~48 MiB v7x
    # Resident weight, lane-padded to 128.  Budgeted as double-buffered so the
    # Buffered(1)-rejected fallback still fits.
    w_bytes = IN_FEATURES * _LANE * compute_itemsize * 2
    # Per batch row: double-buffered native-dtype x (+ one in-kernel cast temp).
    per_row = IN_FEATURES * (2 * x_itemsize +
                             (compute_itemsize if x_needs_cast else 0))
    headroom = 8 << 20                               # outputs, bias, compiler scratch
    avail = max(vmem_limit - w_bytes - headroom, per_row * 8)
    b_tile = int(min(1024, max(8, (avail // per_row) // 8 * 8)))
    if B <= b_tile:
        b_tile = B                                   # single tile covers the batch
    return b_tile, vmem_limit


def _pallas_linear(x_flat, w, b2d, *, b_tile, vmem_limit, compute_dtype,
                   single_buffer_resident):
    B, K = x_flat.shape
    resident_kwargs = (
        {"pipeline_mode": pl.Buffered(1)} if single_buffer_resident else {})

    cost = pl.CostEstimate(
        flops=2 * B * K * OUT_FEATURES,
        transcendentals=0,
        bytes_accessed=(B * K * x_flat.dtype.itemsize        # x stream (native dtype)
                        + K * OUT_FEATURES * w.dtype.itemsize  # resident weight
                        + OUT_FEATURES * 4                      # bias
                        + B * OUT_FEATURES * 4),                # output
    )

    return pl.pallas_call(
        functools.partial(_linear_kernel, compute_dtype=compute_dtype),
        out_shape=jax.ShapeDtypeStruct((B, OUT_FEATURES), jnp.float32),
        grid_spec=pltpu.PrefetchScalarGridSpec(
            num_scalar_prefetch=0,
            grid=(pl.cdiv(B, b_tile),),              # ragged last tile handled by Pallas
            in_specs=[
                pl.BlockSpec((b_tile, K), lambda i: (i, 0)),        # x rows (streamed)
                pl.BlockSpec((K, OUT_FEATURES), lambda i: (0, 0),   # resident W
                             **resident_kwargs),
                pl.BlockSpec((1, OUT_FEATURES), lambda i: (0, 0),   # resident bias
                             **resident_kwargs),
            ],
            out_specs=pl.BlockSpec((b_tile, OUT_FEATURES), lambda i: (i, 0)),
        ),
        compiler_params=pltpu.CompilerParams(
            # Batch axis only; "parallel" lets v7x shard grid steps across its 2 TCs.
            # TODO(synk): profile on v7x; switch to pltpu.CORE_PARALLEL if a single
            # TC cannot saturate the 3.2 TB/s HBM stream.
            dimension_semantics=("parallel",),
            vmem_limit_bytes=vmem_limit,
        ),
        cost_estimate=cost,
    )(x_flat, w, b2d)


def linear_classifier_forward(x, weight_t, bias, *, compute_dtype=jnp.bfloat16):
    """x: [B, 3, 64, 64] (any float dtype); weight_t: [K, 6]; bias: [6] -> [B, 6] f32.

    x is streamed from HBM in its native dtype; MXU operands are compute_dtype
    (bf16 default), accumulation is always f32.  Pass compute_dtype=jnp.float32
    for exact nn.Linear f32 parity.
    """
    B = x.shape[0]
    x_flat = x.reshape(B, -1)        # torch x.view(B, -1); layout-only, no HBM pass
    K = x_flat.shape[1]
    assert K == IN_FEATURES

    # Weight/bias are tiny (~288 KiB f32 in HBM): wrapper-side cast is free and
    # halves the resident VMEM footprint.  x stays in its native dtype.
    w = weight_t.astype(compute_dtype)
    b2d = bias.reshape(1, OUT_FEATURES).astype(jnp.float32)

    x_needs_cast = x_flat.dtype != jnp.dtype(compute_dtype)
    b_tile, vmem_limit = _pick_tiling(
        B, x_flat.dtype.itemsize, jnp.dtype(compute_dtype).itemsize, x_needs_cast)

    kwargs = dict(b_tile=b_tile, vmem_limit=vmem_limit, compute_dtype=compute_dtype)
    try:
        return _pallas_linear(x_flat, w, b2d, single_buffer_resident=True, **kwargs)
    except Exception:
        # Fallback if this JAX build rejects pl.Buffered(1); the double-buffered
        # resident weight is already accounted for in the tile budget.
        return _pallas_linear(x_flat, w, b2d, single_buffer_resident=False, **kwargs)


def init_params(key):
    """Deterministic init mimicking torch.nn.Linear default (U[-1/sqrt(K), 1/sqrt(K)])."""
    kw, kb = jax.random.split(key)
    bound = 1.0 / jnp.sqrt(float(IN_FEATURES))
    # torch stores weight as [out, in]; keep the transposed [in, out] for the kernel.
    weight = jax.random.uniform(
        kw, (OUT_FEATURES, IN_FEATURES), jnp.float32, -bound, bound)
    bias = jax.random.uniform(kb, (OUT_FEATURES,), jnp.float32, -bound, bound)
    return weight.T, bias  # [K, 6], [6]


if __name__ == "__main__":
    key = jax.random.PRNGKey(0)
    kx, kp = jax.random.split(key)

    B = 2
    x = jax.random.normal(kx, (B, 3, 64, 64), jnp.float32)
    weight_t, bias = init_params(kp)

    # Exact f32 path: matches the plain-JAX (== torch f32) reference tightly.
    out_f32 = jax.block_until_ready(
        linear_classifier_forward(x, weight_t, bias, compute_dtype=jnp.float32))
    ref_f32 = x.reshape(B, -1) @ weight_t + bias
    assert out_f32.shape == (B, OUT_FEATURES)
    assert jnp.allclose(out_f32, ref_f32, atol=1e-4, rtol=1e-4)

    # Default path: f32 x streamed from HBM, cast to bf16 in VMEM, f32 accumulation.
    out_bf16 = jax.block_until_ready(linear_classifier_forward(x, weight_t, bias))
    ref_bf16 = (x.reshape(B, -1).astype(jnp.bfloat16).astype(jnp.float32)
                @ weight_t.astype(jnp.bfloat16).astype(jnp.float32)) + bias
    assert out_bf16.shape == (B, OUT_FEATURES)
    assert jnp.allclose(out_bf16, ref_bf16, atol=1e-2, rtol=1e-2)

    print("KERNEL_OK")
</pallas_src>

<mosaic_0001>
module attributes {stable_mosaic.version = 11 : i64} {
  func.func @_linear_kernel(%arg0: i32, %arg1: memref<2x12288xf32, #tpu.memory_space<vmem>>, %arg2: memref<12288x6xf32, #tpu.memory_space<vmem>>, %arg3: memref<1x6xf32, #tpu.memory_space<vmem>>, %arg4: memref<2x6xf32, #tpu.memory_space<vmem>>) attributes {dimension_semantics = [#tpu.dimension_semantics<parallel>], iteration_bounds = array<i64: 1>, scalar_prefetch = 0 : i64, scratch_operands = 0 : i64, tpu.core_type = #tpu.core_type<tc>, window_params = [{transform_indices = @transform_0, window_bounds = array<i64: 2, 12288>}, {pipeline_mode = #tpu.pipeline_mode<synchronous>, transform_indices = @transform_1, window_bounds = array<i64: 12288, 6>}, {pipeline_mode = #tpu.pipeline_mode<synchronous>, transform_indices = @transform_2, window_bounds = array<i64: 1, 6>}, {transform_indices = @transform_3, window_bounds = array<i64: 2, 6>}]} {
    %c0 = arith.constant 0 : index
    %c0_0 = arith.constant 0 : index
    %0 = vector.load %arg1[%c0, %c0_0] : memref<2x12288xf32, #tpu.memory_space<vmem>>, vector<2x12288xf32>
    %c0_1 = arith.constant 0 : index
    %c0_2 = arith.constant 0 : index
    %1 = vector.load %arg2[%c0_1, %c0_2] : memref<12288x6xf32, #tpu.memory_space<vmem>>, vector<12288x6xf32>
    %cst = arith.constant dense<0.000000e+00> : vector<2x6xf32>
    %2 = tpu.matmul %0, %1, %cst {dimension_numbers = #tpu.dot_dimension_numbers<[1], [0], [0], [1], [0, 0, 1, 1], [], []>} : vector<2x12288xf32>, vector<12288x6xf32>, vector<2x6xf32> -> vector<2x6xf32>
    %c0_3 = arith.constant 0 : index
    %c0_4 = arith.constant 0 : index
    %3 = vector.load %arg3[%c0_3, %c0_4] : memref<1x6xf32, #tpu.memory_space<vmem>>, vector<1x6xf32>
    %4 = vector.broadcast %3 : vector<1x6xf32> to vector<2x6xf32>
    %5 = arith.addf %2, %4 : vector<2x6xf32>
    %c0_5 = arith.constant 0 : index
    %c0_6 = arith.constant 0 : index
    %6 = vector.load %arg4[%c0_5, %c0_6] : memref<2x6xf32, #tpu.memory_space<vmem>>, vector<2x6xf32>
    tpu.vector_store %arg4[%c0_5, %c0_6], %5 {strides = array<i32>} : memref<2x6xf32, #tpu.memory_space<vmem>>, vector<2x6xf32>,
    return
  }
  func.func @transform_0(%arg0: i32) -> (i32, i32) {
    %c0_i32 = arith.constant 0 : i32
    %c0_i32_0 = arith.constant 0 : i32
    return %arg0, %c0_i32 : i32, i32
  }
  func.func @transform_1(%arg0: i32) -> (i32, i32) {
    %c0_i32 = arith.constant 0 : i32
    %c0_i32_0 = arith.constant 0 : i32
    %c0_i32_1 = arith.constant 0 : i32
    return %c0_i32, %c0_i32_0 : i32, i32
  }
  func.func @transform_2(%arg0: i32) -> (i32, i32) {
    %c0_i32 = arith.constant 0 : i32
    %c0_i32_0 = arith.constant 0 : i32
    %c0_i32_1 = arith.constant 0 : i32
    return %c0_i32, %c0_i32_0 : i32, i32
  }
  func.func @transform_3(%arg0: i32) -> (i32, i32) {
    %c0_i32 = arith.constant 0 : i32
    %c0_i32_0 = arith.constant 0 : i32
    return %arg0, %c0_i32 : i32, i32
  }
}

module attributes {stable_mosaic.version = 11 : i64} {
  func.func @_linear_kernel(%arg0: i32, %arg1: memref<2x12288xf32, #tpu.memory_space<vmem>>, %arg2: memref<12288x6xf32, #tpu.memory_space<vmem>>, %arg3: memref<1x6xf32, #tpu.memory_space<vmem>>, %arg4: memref<2x6xf32, #tpu.memory_space<vmem>>) attributes {dimension_semantics = [#tpu.dimension_semantics<parallel>], iteration_bounds = array<i64: 1>, scalar_prefetch = 0 : i64, scratch_operands = 0 : i64, tpu.core_type = #tpu.core_type<tc>, window_params = [{transform_indices = @transform_0, window_bounds = array<i64: 2, 12288>}, {pipeline_mode = #tpu.pipeline_mode<synchronous>, transform_indices = @transform_1, window_bounds = array<i64: 12288, 6>}, {pipeline_mode = #tpu.pipeline_mode<synchronous>, transform_indices = @transform_2, window_bounds = array<i64: 1, 6>}, {transform_indices = @transform_3, window_bounds = array<i64: 2, 6>}]} {
    %c0 = arith.constant 0 : index
    %c0_0 = arith.constant 0 : index
    %0 = vector.load %arg1[%c0, %c0_0] : memref<2x12288xf32, #tpu.memory_space<vmem>>, vector<2x12288xf32>
    %c0_1 = arith.constant 0 : index
    %c0_2 = arith.constant 0 : index
    %1 = vector.load %arg2[%c0_1, %c0_2] : memref<12288x6xf32, #tpu.memory_space<vmem>>, vector<12288x6xf32>
    %cst = arith.constant dense<0.000000e+00> : vector<2x6xf32>
    %2 = tpu.matmul %0, %1, %cst {dimension_numbers = #tpu.dot_dimension_numbers<[1], [0], [0], [1], [0, 0, 1, 1], [], []>} : vector<2x12288xf32>, vector<12288x6xf32>, vector<2x6xf32> -> vector<2x6xf32>
    %c0_3 = arith.constant 0 : index
    %c0_4 = arith.constant 0 : index
    %3 = vector.load %arg3[%c0_3, %c0_4] : memref<1x6xf32, #tpu.memory_space<vmem>>, vector<1x6xf32>
    %4 = vector.broadcast %3 : vector<1x6xf32> to vector<2x6xf32>
    %5 = arith.addf %2, %4 : vector<2x6xf32>
    %c0_5 = arith.constant 0 : index
    %c0_6 = arith.constant 0 : index
    %6 = vector.load %arg4[%c0_5, %c0_6] : memref<2x6xf32, #tpu.memory_space<vmem>>, vector<2x6xf32>
    tpu.vector_store %arg4[%c0_5, %c0_6], %5 {strides = array<i32>} : memref<2x6xf32, #tpu.memory_space<vmem>>, vector<2x6xf32>,
    return
  }
  func.func @transform_0(%arg0: i32) -> (i32, i32) {
    %c0_i32 = arith.constant 0 : i32
    %c0_i32_0 = arith.constant 0 : i32
    return %arg0, %c0_i32 : i32, i32
  }
  func.func @transform_1(%arg0: i32) -> (i32, i32) {
    %c0_i32 = arith.constant 0 : i32
    %c0_i32_0 = arith.constant 0 : i32
    %c0_i32_1 = arith.constant 0 : i32
    return %c0_i32, %c0_i32_0 : i32, i32
  }
  func.func @transform_2(%arg0: i32) -> (i32, i32) {
    %c0_i32 = arith.constant 0 : i32
    %c0_i32_0 = arith.constant 0 : i32
    %c0_i32_1 = arith.constant 0 : i32
    return %c0_i32, %c0_i32_0 : i32, i32
  }
  func.func @transform_3(%arg0: i32) -> (i32, i32) {
    %c0_i32 = arith.constant 0 : i32
    %c0_i32_0 = arith.constant 0 : i32
    return %arg0, %c0_i32 : i32, i32
  }
}

</mosaic_0001>

<llo_original>
// kernel: tpu_custom_call.1
$region0: #{tpu_custom_call.1}
  #allocation0 [shape = 'u32[]', space=smem, size = 0x4, offset = 0x4, fixed_abs, tag = 'smem constant byte address 0x4 - core index']
  #allocation1 [shape = 'u32[144,128]{1,0:T(1,128)}', space=vmem, size = 0x12000, scoped, tag = 'internal scratch']
  %s0 = inlined_call_operand.vmem [shape: f32[2,12288], index: 0, kind: input, shape index: {}]
  %s1 = inlined_call_operand.vmem [shape: f32[12288,6], index: 1, kind: input, shape index: {}]
  %s2 = inlined_call_operand.vmem [shape: f32[1,6], index: 2, kind: input, shape index: {}]
  %s3 = inlined_call_operand.hbm [shape: f32[2,6], index: 3, kind: output, shape index: {}]
  %s4 = sld [smem:[#allocation0]]
  $region22: #{tpu_custom_call.1} parent=0
    _
  %s6 = ssub.s32 1, %s4
  %s7 = scalar_select 0, %s6, %s4
  $region1: #{tpu_custom_call.1} parent=0
    #allocation2 [shape = 'u8[1024]{0}', space=vmem, size = 0x400, scoped, tag = 'output window, operand 0, single buffered']
    #allocation3 [shape = 's32[1]{0}', space=sflag, size = 0x4, scoped, tag = 'scoped memory for tpu_custom_call.1']
    %8 = vsyncpa [#allocation3], 0
    // Predicated region
    $region2: #{tpu_custom_call.1} parent=1 // pred_check
      _
    $region3: #{tpu_custom_call.1} parent=1 // pred_check_branch
      %10 = sbr.rel (0) target = $region5
    $region4: #{tpu_custom_call.1} parent=1 // pred_region
      _
    $region5: #{tpu_custom_call.1} parent=1 // pred_fallthru
      _
    // Predicated region
    $region6: #{tpu_custom_call.1} parent=1 // pred_check
      _
    $region7: #{tpu_custom_call.1} parent=1 // pred_check_branch
      %12 = sbr.rel (0) target = $region9
    $region8: #{tpu_custom_call.1} parent=1 // pred_region
      _
    $region9: #{tpu_custom_call.1} parent=1 // pred_fallthru
      _
    // Predicated region
    $region10: #{tpu_custom_call.1} parent=1 // pred_check
      _
    $region11: #{tpu_custom_call.1} parent=1 // pred_check_branch
      %14 = sbr.rel (0) target = $region13
    $region12: #{tpu_custom_call.1} parent=1 // pred_region
      _
    $region13: #{tpu_custom_call.1} parent=1 // pred_fallthru
      _
    %v15 = vld [vmem:[%s0] sm:$0xff]
    %v16 = vld [vmem:[%s0 + $0x8] sm:$0xff]
    %v17 = vld [vmem:[%s0 + $0x10] sm:$0xff]
    %v18 = vld [vmem:[%s0 + $0x18] sm:$0xff]
    %v19 = vld [vmem:[%s0 + $0x20] sm:$0xff]
    %v20 = vld [vmem:[%s0 + $0x28] sm:$0xff]
    %v21 = vld [vmem:[%s0 + $0x30] sm:$0xff]
    %v22 = vld [vmem:[%s0 + $0x38] sm:$0xff]
    %v23 = vld [vmem:[%s0 + $0x40] sm:$0xff]
    %v24 = vld [vmem:[%s0 + $0x48] sm:$0xff]
    %v25 = vld [vmem:[%s0 + $0x50] sm:$0xff]
    %v26 = vld [vmem:[%s0 + $0x58] sm:$0xff]
    %v27 = vld [vmem:[%s0 + $0x60] sm:$0xff]
    %v28 = vld [vmem:[%s0 + $0x68] sm:$0xff]
    %v29 = vld [vmem:[%s0 + $0x70] sm:$0xff]
    %v30 = vld [vmem:[%s0 + $0x78] sm:$0xff]
    %v31 = vld [vmem:[%s0 + $0x80] sm:$0xff]
    %v32 = vld [vmem:[%s0 + $0x88] sm:$0xff]
    %v33 = vld [vmem:[%s0 + $0x90] sm:$0xff]
    %v34 = vld [vmem:[%s0 + $0x98] sm:$0xff]
    %v35 = vld [vmem:[%s0 + $0xa0] sm:$0xff]
    %v36 = vld [vmem:[%s0 + $0xa8] sm:$0xff]
    %v37 = vld [vmem:[%s0 + $0xb0] sm:$0xff]
    %v38 = vld [vmem:[%s0 + $0xb8] sm:$0xff]
    %v39 = vld [vmem:[%s1] sm:$0xff]
    %v40 = vld [vmem:[%s1 + $0x8] sm:$0xff]
    %v41 = vld [vmem:[%s1 + $0x10] sm:$0xff]
    %v42 = vld [vmem:[%s1 + $0x18] sm:$0xff]
    %v43 = vld [vmem:[%s1 + $0x20] sm:$0xff]
    %v44 = vld [vmem:[%s1 + $0x28] sm:$0xff]
    %v45 = vld [vmem:[%s1 + $0x30] sm:$0xff]
    %v46 = vld [vmem:[%s1 + $0x38] sm:$0xff]
    %v47 = vld [vmem:[%s1 + $0x40] sm:$0xff]
    %v48 = vld [vmem:[%s1 + $0x48] sm:$0xff]
    %v49 = vld [vmem:[%s1 + $0x50] sm:$0xff]
    %v50 = vld [vmem:[%s1 + $0x58] sm:$0xff]
    %v51 = vld [vmem:[%s1 + $0x60] sm:$0xff]
    %v52 = vld [vmem:[%s1 + $0x68] sm:$0xff]
    %v53 = vld [vmem:[%s1 + $0x70] sm:$0xff]
    %v54 = vld [vmem:[%s1 + $0x78] sm:$0xff]
    %v55 = vld [vmem:[%s1 + $0x80] sm:$0xff]
    %v56 = vld [vmem:[%s1 + $0x88] sm:$0xff]
    %v57 = vld [vmem:[%s1 + $0x90] sm:$0xff]
    %v58 = vld [vmem:[%s1 + $0x98] sm:$0xff]
    %v59 = vld [vmem:[%s1 + $0xa0] sm:$0xff]
    %v60 = vld [vmem:[%s1 + $0xa8] sm:$0xff]
    %v61 = vld [vmem:[%s1 + $0xb0] sm:$0xff]
    %v62 = vld [vmem:[%s1 + $0xb8] sm:$0xff]
    %v63 = vld [vmem:[%s1 + $0xc0] sm:$0xff]
    %v64 = vld [vmem:[%s1 + $0xc8] sm:$0xff]
    %v65 = vld [vmem:[%s1 + $0xd0] sm:$0xff]
    %v66 = vld [vmem:[%s1 + $0xd8] sm:$0xff]
    %v67 = vld [vmem:[%s1 + $0xe0] sm:$0xff]
    %v68 = vld [vmem:[%s1 + $0xe8] sm:$0xff]
    %v69 = vld [vmem:[%s1 + $0xf0] sm:$0xff]
    %v70 = vld [vmem:[%s1 + $0xf8] sm:$0xff]
    %v71 = vld [vmem:[%s1 + $0x100] sm:$0xff]
    %v72 = vld [vmem:[%s1 + $0x108] sm:$0xff]
    %v73 = vld [vmem:[%s1 + $0x110] sm:$0xff]
    %v74 = vld [vmem:[%s1 + $0x118] sm:$0xff]
    %v75 = vld [vmem:[%s1 + $0x120] sm:$0xff]
    %v76 = vld [vmem:[%s1 + $0x128] sm:$0xff]
    %v77 = vld [vmem:[%s1 + $0x130] sm:$0xff]
    %v78 = vld [vmem:[%s1 + $0x138] sm:$0xff]
    %v79 = vld [vmem:[%s1 + $0x140] sm:$0xff]
    %v80 = vld [vmem:[%s1 + $0x148] sm:$0xff]
    %v81 = vld [vmem:[%s1 + $0x150] sm:$0xff]
    %v82 = vld [vmem:[%s1 + $0x158] sm:$0xff]
    %v83 = vld [vmem:[%s1 + $0x160] sm:$0xff]
    %v84 = vld [vmem:[%s1 + $0x168] sm:$0xff]
    %v85 = vld [vmem:[%s1 + $0x170] sm:$0xff]
    %v86 = vld [vmem:[%s1 + $0x178] sm:$0xff]
    %v87 = vld [vmem:[%s1 + $0x180] sm:$0xff]
    %v88 = vld [vmem:[%s1 + $0x188] sm:$0xff]
    %v89 = vld [vmem:[%s1 + $0x190] sm:$0xff]
    %v90 = vld [vmem:[%s1 + $0x198] sm:$0xff]
    %v91 = vld [vmem:[%s1 + $0x1a0] sm:$0xff]
    %v92 = vld [vmem:[%s1 + $0x1a8] sm:$0xff]
    %v93 = vld [vmem:[%s1 + $0x1b0] sm:$0xff]
    %v94 = vld [vmem:[%s1 + $0x1b8] sm:$0xff]
    %v95 = vld [vmem:[%s1 + $0x1c0] sm:$0xff]
    %v96 = vld [vmem:[%s1 + $0x1c8] sm:$0xff]
    %v97 = vld [vmem:[%s1 + $0x1d0] sm:$0xff]
    %v98 = vld [vmem:[%s1 + $0x1d8] sm:$0xff]
    %v99 = vld [vmem:[%s1 + $0x1e0] sm:$0xff]
    %v100 = vld [vmem:[%s1 + $0x1e8] sm:$0xff]
    %v101 = vld [vmem:[%s1 + $0x1f0] sm:$0xff]
    %v102 = vld [vmem:[%s1 + $0x1f8] sm:$0xff]
    %v103 = vld [vmem:[%s1 + $0x200] sm:$0xff]
    %v104 = vld [vmem:[%s1 + $0x208] sm:$0xff]
    %v105 = vld [vmem:[%s1 + $0x210] sm:$0xff]
    %v106 = vld [vmem:[%s1 + $0x218] sm:$0xff]
    %v107 = vld [vmem:[%s1 + $0x220] sm:$0xff]
    %v108 = vld [vmem:[%s1 + $0x228] sm:$0xff]
    %v109 = vld [vmem:[%s1 + $0x230] sm:$0xff]
    %v110 = vld [vmem:[%s1 + $0x238] sm:$0xff]
    %v111 = vld [vmem:[%s1 + $0x240] sm:$0xff]
    %v112 = vld [vmem:[%s1 + $0x248] sm:$0xff]
    %v113 = vld [vmem:[%s1 + $0x250] sm:$0xff]
    %v114 = vld [vmem:[%s1 + $0x258] sm:$0xff]
    %v115 = vld [vmem:[%s1 + $0x260] sm:$0xff]
    %v116 = vld [vmem:[%s1 + $0x268] sm:$0xff]
    %v117 = vld [vmem:[%s1 + $0x270] sm:$0xff]
    %v118 = vld [vmem:[%s1 + $0x278] sm:$0xff]
    %v119 = vld [vmem:[%s1 + $0x280] sm:$0xff]
    %v120 = vld [vmem:[%s1 + $0x288] sm:$0xff]
    %v121 = vld [vmem:[%s1 + $0x290] sm:$0xff]
    %v122 = vld [vmem:[%s1 + $0x298] sm:$0xff]
    %v123 = vld [vmem:[%s1 + $0x2a0] sm:$0xff]
    %v124 = vld [vmem:[%s1 + $0x2a8] sm:$0xff]
    %v125 = vld [vmem:[%s1 + $0x2b0] sm:$0xff]
    %v126 = vld [vmem:[%s1 + $0x2b8] sm:$0xff]
    %v127 = vld [vmem:[%s1 + $0x2c0] sm:$0xff]
    %v128 = vld [vmem:[%s1 + $0x2c8] sm:$0xff]
    %v129 = vld [vmem:[%s1 + $0x2d0] sm:$0xff]
    %v130 = vld [vmem:[%s1 + $0x2d8] sm:$0xff]
    %v131 = vld [vmem:[%s1 + $0x2e0] sm:$0xff]
    %v132 = vld [vmem:[%s1 + $0x2e8] sm:$0xff]
    %v133 = vld [vmem:[%s1 + $0x2f0] sm:$0xff]
    %v134 = vld [vmem:[%s1 + $0x2f8] sm:$0xff]
    %v135 = vld [vmem:[%s1 + $0x300] sm:$0xff]
    %v136 = vld [vmem:[%s1 + $0x308] sm:$0xff]
    %v137 = vld [vmem:[%s1 + $0x310] sm:$0xff]
    %v138 = vld [vmem:[%s1 + $0x318] sm:$0xff]
    %v139 = vld [vmem:[%s1 + $0x320] sm:$0xff]
    %v140 = vld [vmem:[%s1 + $0x328] sm:$0xff]
    %v141 = vld [vmem:[%s1 + $0x330] sm:$0xff]
    %v142 = vld [vmem:[%s1 + $0x338] sm:$0xff]
    %v143 = vld [vmem:[%s1 + $0x340] sm:$0xff]
    %v144 = vld [vmem:[%s1 + $0x348] sm:$0xff]
    %v145 = vld [vmem:[%s1 + $0x350] sm:$0xff]
    %v146 = vld [vmem:[%s1 + $0x358] sm:$0xff]
    %v147 = vld [vmem:[%s1 + $0x360] sm:$0xff]
    %v148 = vld [vmem:[%s1 + $0x368] sm:$0xff]
    %v149 = vld [vmem:[%s1 + $0x370] sm:$0xff]
    %v150 = vld [vmem:[%s1 + $0x378] sm:$0xff]
    %v151 = vld [vmem:[%s1 + $0x380] sm:$0xff]
    %v152 = vld [vmem:[%s1 + $0x388] sm:$0xff]
    %v153 = vld [vmem:[%s1 + $0x390] sm:$0xff]
    %v154 = vld [vmem:[%s1 + $0x398] sm:$0xff]
    %v155 = vld [vmem:[%s1 + $0x3a0] sm:$0xff]
    %v156 = vld [vmem:[%s1 + $0x3a8] sm:$0xff]
    %v157 = vld [vmem:[%s1 + $0x3b0] sm:$0xff]
    %v158 = vld [vmem:[%s1 + $0x3b8] sm:$0xff]
    %v159 = vld [vmem:[%s1 + $0x3c0] sm:$0xff]
    %v160 = vld [vmem:[%s1 + $0x3c8] sm:$0xff]
    %v161 = vld [vmem:[%s1 + $0x3d0] sm:$0xff]
    %v162 = vld [vmem:[%s1 + $0x3d8] sm:$0xff]
    %v163 = vld [vmem:[%s1 + $0x3e0] sm:$0xff]
    %v164 = vld [vmem:[%s1 + $0x3e8] sm:$0xff]
    %v165 = vld [vmem:[%s1 + $0x3f0] sm:$0xff]
    %v166 = vld [vmem:[%s1 + $0x3f8] sm:$0xff]
    %v167 = vld [vmem:[%s1 + $0x400] sm:$0xff]
    %v168 = vld [vmem:[%s1 + $0x408] sm:$0xff]
    %v169 = vld [vmem:[%s1 + $0x410] sm:$0xff]
    %v170 = vld [vmem:[%s1 + $0x418] sm:$0xff]
    %v171 = vld [vmem:[%s1 + $0x420] sm:$0xff]
    %v172 = vld [vmem:[%s1 + $0x428] sm:$0xff]
    %v173 = vld [vmem:[%s1 + $0x430] sm:$0xff]
    %v174 = vld [vmem:[%s1 + $0x438] sm:$0xff]
    %v175 = vld [vmem:[%s1 + $0x440] sm:$0xff]
    %v176 = vld [vmem:[%s1 + $0x448] sm:$0xff]
    %v177 = vld [vmem:[%s1 + $0x450] sm:$0xff]
    %v178 = vld [vmem:[%s1 + $0x458] sm:$0xff]
    %v179 = vld [vmem:[%s1 + $0x460] sm:$0xff]
    %v180 = vld [vmem:[%s1 + $0x468] sm:$0xff]
    %v181 = vld [vmem:[%s1 + $0x470] sm:$0xff]
    %v182 = vld [vmem:[%s1 + $0x478] sm:$0xff]
    %v183 = vld [vmem:[%s1 + $0x480] sm:$0xff]
    %v184 = vld [vmem:[%s1 + $0x488] sm:$0xff]
    %v185 = vld [vmem:[%s1 + $0x490] sm:$0xff]
    %v186 = vld [vmem:[%s1 + $0x498] sm:$0xff]
    %v187 = vld [vmem:[%s1 + $0x4a0] sm:$0xff]
    %v188 = vld [vmem:[%s1 + $0x4a8] sm:$0xff]
    %v189 = vld [vmem:[%s1 + $0x4b0] sm:$0xff]
    %v190 = vld [vmem:[%s1 + $0x4b8] sm:$0xff]
    %v191 = vld [vmem:[%s1 + $0x4c0] sm:$0xff]
    %v192 = vld [vmem:[%s1 + $0x4c8] sm:$0xff]
    %v193 = vld [vmem:[%s1 + $0x4d0] sm:$0xff]
    %v194 = vld [vmem:[%s1 + $0x4d8] sm:$0xff]
    %v195 = vld [vmem:[%s1 + $0x4e0] sm:$0xff]
    %v196 = vld [vmem:[%s1 + $0x4e8] sm:$0xff]
    %v197 = vld [vmem:[%s1 + $0x4f0] sm:$0xff]
    %v198 = vld [vmem:[%s1 + $0x4f8] sm:$0xff]
    %v199 = vld [vmem:[%s1 + $0x500] sm:$0xff]
    %v200 = vld [vmem:[%s1 + $0x508] sm:$0xff]
    %v201 = vld [vmem:[%s1 + $0x510] sm:$0xff]
    %v202 = vld [vmem:[%s1 + $0x518] sm:$0xff]
    %v203 = vld [vmem:[%s1 + $0x520] sm:$0xff]
    %v204 = vld [vmem:[%s1 + $0x528] sm:$0xff]
    %v205 = vld [vmem:[%s1 + $0x530] sm:$0xff]
    %v206 = vld [vmem:[%s1 + $0x538] sm:$0xff]
    %v207 = vld [vmem:[%s1 + $0x540] sm:$0xff]
    %v208 = vld [vmem:[%s1 + $0x548] sm:$0xff]
    %v209 = vld [vmem:[%s1 + $0x550] sm:$0xff]
    %v210 = vld [vmem:[%s1 + $0x558] sm:$0xff]
    %v211 = vld [vmem:[%s1 + $0x560] sm:$0xff]
    %v212 = vld [vmem:[%s1 + $0x568] sm:$0xff]
    %v213 = vld [vmem:[%s1 + $0x570] sm:$0xff]
    %v214 = vld [vmem:[%s1 + $0x578] sm:$0xff]
    %v215 = vld [vmem:[%s1 + $0x580] sm:$0xff]
    %v216 = vld [vmem:[%s1 + $0x588] sm:$0xff]
    %v217 = vld [vmem:[%s1 + $0x590] sm:$0xff]
    %v218 = vld [vmem:[%s1 + $0x598] sm:$0xff]
    %v219 = vld [vmem:[%s1 + $0x5a0] sm:$0xff]
    %v220 = vld [vmem:[%s1 + $0x5a8] sm:$0xff]
    %v221 = vld [vmem:[%s1 + $0x5b0] sm:$0xff]
    %v222 = vld [vmem:[%s1 + $0x5b8] sm:$0xff]
    %v223 = vld [vmem:[%s1 + $0x5c0] sm:$0xff]
    %v224 = vld [vmem:[%s1 + $0x5c8] sm:$0xff]
    %v225 = vld [vmem:[%s1 + $0x5d0] sm:$0xff]
    %v226 = vld [vmem:[%s1 + $0x5d8] sm:$0xff]
    %v227 = vld [vmem:[%s1 + $0x5e0] sm:$0xff]
    %v228 = vld [vmem:[%s1 + $0x5e8] sm:$0xff]
    %v229 = vld [vmem:[%s1 + $0x5f0] sm:$0xff]
    %v230 = vld [vmem:[%s1 + $0x5f8] sm:$0xff]
    %v231 = vld [vmem:[%s1 + $0x600] sm:$0xff]
    %v232 = vld [vmem:[%s1 + $0x608] sm:$0xff]
    %v233 = vld [vmem:[%s1 + $0x610] sm:$0xff]
    %v234 = vld [vmem:[%s1 + $0x618] sm:$0xff]
    %v235 = vld [vmem:[%s1 + $0x620] sm:$0xff]
    %v236 = vld [vmem:[%s1 + $0x628] sm:$0xff]
    %v237 = vld [vmem:[%s1 + $0x630] sm:$0xff]
    %v238 = vld [vmem:[%s1 + $0x638] sm:$0xff]
    %v239 = vld [vmem:[%s1 + $0x640] sm:$0xff]
    %v240 = vld [vmem:[%s1 + $0x648] sm:$0xff]
    %v241 = vld [vmem:[%s1 + $0x650] sm:$0xff]
    %v242 = vld [vmem:[%s1 + $0x658] sm:$0xff]
    %v243 = vld [vmem:[%s1 + $0x660] sm:$0xff]
    %v244 = vld [vmem:[%s1 + $0x668] sm:$0xff]
    %v245 = vld [vmem:[%s1 + $0x670] sm:$0xff]
    %v246 = vld [vmem:[%s1 + $0x678] sm:$0xff]
    %v247 = vld [vmem:[%s1 + $0x680] sm:$0xff]
    %v248 = vld [vmem:[%s1 + $0x688] sm:$0xff]
    %v249 = vld [vmem:[%s1 + $0x690] sm:$0xff]
    %v250 = vld [vmem:[%s1 + $0x698] sm:$0xff]
    %v251 = vld [vmem:[%s1 + $0x6a0] sm:$0xff]
    %v252 = vld [vmem:[%s1 + $0x6a8] sm:$0xff]
    %v253 = vld [vmem:[%s1 + $0x6b0] sm:$0xff]
    %v254 = vld [vmem:[%s1 + $0x6b8] sm:$0xff]
    %v255 = vld [vmem:[%s1 + $0x6c0] sm:$0xff]
    %v256 = vld [vmem:[%s1 + $0x6c8] sm:$0xff]
    %v257 = vld [vmem:[%s1 + $0x6d0] sm:$0xff]
    %v258 = vld [vmem:[%s1 + $0x6d8] sm:$0xff]
    %v259 = vld [vmem:[%s1 + $0x6e0] sm:$0xff]
    %v260 = vld [vmem:[%s1 + $0x6e8] sm:$0xff]
    %v261 = vld [vmem:[%s1 + $0x6f0] sm:$0xff]
    %v262 = vld [vmem:[%s1 + $0x6f8] sm:$0xff]
    %v263 = vld [vmem:[%s1 + $0x700] sm:$0xff]
    %v264 = vld [vmem:[%s1 + $0x708] sm:$0xff]
    %v265 = vld [vmem:[%s1 + $0x710] sm:$0xff]
    %v266 = vld [vmem:[%s1 + $0x718] sm:$0xff]
    %v267 = vld [vmem:[%s1 + $0x720] sm:$0xff]
    %v268 = vld [vmem:[%s1 + $0x728] sm:$0xff]
    %v269 = vld [vmem:[%s1 + $0x730] sm:$0xff]
    %v270 = vld [vmem:[%s1 + $0x738] sm:$0xff]
    %v271 = vld [vmem:[%s1 + $0x740] sm:$0xff]
    %v272 = vld [vmem:[%s1 + $0x748] sm:$0xff]
    %v273 = vld [vmem:[%s1 + $0x750] sm:$0xff]
    %v274 = vld [vmem:[%s1 + $0x758] sm:$0xff]
    %v275 = vld [vmem:[%s1 + $0x760] sm:$0xff]
    %v276 = vld [vmem:[%s1 + $0x768] sm:$0xff]
    %v277 = vld [vmem:[%s1 + $0x770] sm:$0xff]
    %v278 = vld [vmem:[%s1 + $0x778] sm:$0xff]
    %v279 = vld [vmem:[%s1 + $0x780] sm:$0xff]
    %v280 = vld [vmem:[%s1 + $0x788] sm:$0xff]
    %v281 = vld [vmem:[%s1 + $0x790] sm:$0xff]
    %v282 = vld [vmem:[%s1 + $0x798] sm:$0xff]
    %v283 = vld [vmem:[%s1 + $0x7a0] sm:$0xff]
    %v284 = vld [vmem:[%s1 + $0x7a8] sm:$0xff]
    %v285 = vld [vmem:[%s1 + $0x7b0] sm:$0xff]
    %v286 = vld [vmem:[%s1 + $0x7b8] sm:$0xff]
    %v287 = vld [vmem:[%s1 + $0x7c0] sm:$0xff]
    %v288 = vld [vmem:[%s1 + $0x7c8] sm:$0xff]
    %v289 = vld [vmem:[%s1 + $0x7d0] sm:$0xff]
    %v290 = vld [vmem:[%s1 + $0x7d8] sm:$0xff]
    %v291 = vld [vmem:[%s1 + $0x7e0] sm:$0xff]
    %v292 = vld [vmem:[%s1 + $0x7e8] sm:$0xff]
    %v293 = vld [vmem:[%s1 + $0x7f0] sm:$0xff]
    %v294 = vld [vmem:[%s1 + $0x7f8] sm:$0xff]
    %v295 = vld [vmem:[%s1 + $0x800] sm:$0xff]
    %v296 = vld [vmem:[%s1 + $0x808] sm:$0xff]
    %v297 = vld [vmem:[%s1 + $0x810] sm:$0xff]
    %v298 = vld [vmem:[%s1 + $0x818] sm:$0xff]
    %v299 = vld [vmem:[%s1 + $0x820] sm:$0xff]
    %v300 = vld [vmem:[%s1 + $0x828] sm:$0xff]
    %v301 = vld [vmem:[%s1 + $0x830] sm:$0xff]
    %v302 = vld [vmem:[%s1 + $0x838] sm:$0xff]
    %v303 = vld [vmem:[%s1 + $0x840] sm:$0xff]
    %v304 = vld [vmem:[%s1 + $0x848] sm:$0xff]
    %v305 = vld [vmem:[%s1 + $0x850] sm:$0xff]
    %v306 = vld [vmem:[%s1 + $0x858] sm:$0xff]
    %v307 = vld [vmem:[%s1 + $0x860] sm:$0xff]
    %v308 = vld [vmem:[%s1 + $0x868] sm:$0xff]
    %v309 = vld [vmem:[%s1 + $0x870] sm:$0xff]
    %v310 = vld [vmem:[%s1 + $0x878] sm:$0xff]
    %v311 = vld [vmem:[%s1 + $0x880] sm:$0xff]
    %v312 = vld [vmem:[%s1 + $0x888] sm:$0xff]
    %v313 = vld [vmem:[%s1 + $0x890] sm:$0xff]
    %v314 = vld [vmem:[%s1 + $0x898] sm:$0xff]
    %v315 = vld [vmem:[%s1 + $0x8a0] sm:$0xff]
    %v316 = vld [vmem:[%s1 + $0x8a8] sm:$0xff]
    %v317 = vld [vmem:[%s1 + $0x8b0] sm:$0xff]
    %v318 = vld [vmem:[%s1 + $0x8b8] sm:$0xff]
    %v319 = vld [vmem:[%s1 + $0x8c0] sm:$0xff]
    %v320 = vld [vmem:[%s1 + $0x8c8] sm:$0xff]
    %v321 = vld [vmem:[%s1 + $0x8d0] sm:$0xff]
    %v322 = vld [vmem:[%s1 + $0x8d8] sm:$0xff]
    %v323 = vld [vmem:[%s1 + $0x8e0] sm:$0xff]
    %v324 = vld [vmem:[%s1 + $0x8e8] sm:$0xff]
    %v325 = vld [vmem:[%s1 + $0x8f0] sm:$0xff]
    %v326 = vld [vmem:[%s1 + $0x8f8] sm:$0xff]
    %v327 = vld [vmem:[%s1 + $0x900] sm:$0xff]
    %v328 = vld [vmem:[%s1 + $0x908] sm:$0xff]
    %v329 = vld [vmem:[%s1 + $0x910] sm:$0xff]
    %v330 = vld [vmem:[%s1 + $0x918] sm:$0xff]
    %v331 = vld [vmem:[%s1 + $0x920] sm:$0xff]
    %v332 = vld [vmem:[%s1 + $0x928] sm:$0xff]
    %v333 = vld [vmem:[%s1 + $0x930] sm:$0xff]
    %v334 = vld [vmem:[%s1 + $0x938] sm:$0xff]
    %v335 = vld [vmem:[%s1 + $0x940] sm:$0xff]
    %v336 = vld [vmem:[%s1 + $0x948] sm:$0xff]
    %v337 = vld [vmem:[%s1 + $0x950] sm:$0xff]
    %v338 = vld [vmem:[%s1 + $0x958] sm:$0xff]
    %v339 = vld [vmem:[%s1 + $0x960] sm:$0xff]
    %v340 = vld [vmem:[%s1 + $0x968] sm:$0xff]
    %v341 = vld [vmem:[%s1 + $0x970] sm:$0xff]
    %v342 = vld [vmem:[%s1 + $0x978] sm:$0xff]
    %v343 = vld [vmem:[%s1 + $0x980] sm:$0xff]
    %v344 = vld [vmem:[%s1 + $0x988] sm:$0xff]
    %v345 = vld [vmem:[%s1 + $0x990] sm:$0xff]
    %v346 = vld [vmem:[%s1 + $0x998] sm:$0xff]
    %v347 = vld [vmem:[%s1 + $0x9a0] sm:$0xff]
    %v348 = vld [vmem:[%s1 + $0x9a8] sm:$0xff]
    %v349 = vld [vmem:[%s1 + $0x9b0] sm:$0xff]
    %v350 = vld [vmem:[%s1 + $0x9b8] sm:$0xff]
    %v351 = vld [vmem:[%s1 + $0x9c0] sm:$0xff]
    %v352 = vld [vmem:[%s1 + $0x9c8] sm:$0xff]
    %v353 = vld [vmem:[%s1 + $0x9d0] sm:$0xff]
    %v354 = vld [vmem:[%s1 + $0x9d8] sm:$0xff]
    %v355 = vld [vmem:[%s1 + $0x9e0] sm:$0xff]
    %v356 = vld [vmem:[%s1 + $0x9e8] sm:$0xff]
    %v357 = vld [vmem:[%s1 + $0x9f0] sm:$0xff]
    %v358 = vld [vmem:[%s1 + $0x9f8] sm:$0xff]
    %v359 = vld [vmem:[%s1 + $0xa00] sm:$0xff]
    %v360 = vld [vmem:[%s1 + $0xa08] sm:$0xff]
    %v361 = vld [vmem:[%s1 + $0xa10] sm:$0xff]
    %v362 = vld [vmem:[%s1 + $0xa18] sm:$0xff]
    %v363 = vld [vmem:[%s1 + $0xa20] sm:$0xff]
    %v364 = vld [vmem:[%s1 + $0xa28] sm:$0xff]
    %v365 = vld [vmem:[%s1 + $0xa30] sm:$0xff]
    %v366 = vld [vmem:[%s1 + $0xa38] sm:$0xff]
    %v367 = vld [vmem:[%s1 + $0xa40] sm:$0xff]
    %v368 = vld [vmem:[%s1 + $0xa48] sm:$0xff]
    %v369 = vld [vmem:[%s1 + $0xa50] sm:$0xff]
    %v370 = vld [vmem:[%s1 + $0xa58] sm:$0xff]
    %v371 = vld [vmem:[%s1 + $0xa60] sm:$0xff]
    %v372 = vld [vmem:[%s1 + $0xa68] sm:$0xff]
    %v373 = vld [vmem:[%s1 + $0xa70] sm:$0xff]
    %v374 = vld [vmem:[%s1 + $0xa78] sm:$0xff]
    %v375 = vld [vmem:[%s1 + $0xa80] sm:$0xff]
    %v376 = vld [vmem:[%s1 + $0xa88] sm:$0xff]
    %v377 = vld [vmem:[%s1 + $0xa90] sm:$0xff]
    %v378 = vld [vmem:[%s1 + $0xa98] sm:$0xff]
    %v379 = vld [vmem:[%s1 + $0xaa0] sm:$0xff]
    %v380 = vld [vmem:[%s1 + $0xaa8] sm:$0xff]
    %v381 = vld [vmem:[%s1 + $0xab0] sm:$0xff]
    %v382 = vld [vmem:[%s1 + $0xab8] sm:$0xff]
    %v383 = vld [vmem:[%s1 + $0xac0] sm:$0xff]
    %v384 = vld [vmem:[%s1 + $0xac8] sm:$0xff]
    %v385 = vld [vmem:[%s1 + $0xad0] sm:$0xff]
    %v386 = vld [vmem:[%s1 + $0xad8] sm:$0xff]
    %v387 = vld [vmem:[%s1 + $0xae0] sm:$0xff]
    %v388 = vld [vmem:[%s1 + $0xae8] sm:$0xff]
    %v389 = vld [vmem:[%s1 + $0xaf0] sm:$0xff]
    %v390 = vld [vmem:[%s1 + $0xaf8] sm:$0xff]
    %v391 = vld [vmem:[%s1 + $0xb00] sm:$0xff]
    %v392 = vld [vmem:[%s1 + $0xb08] sm:$0xff]
    %v393 = vld [vmem:[%s1 + $0xb10] sm:$0xff]
    %v394 = vld [vmem:[%s1 + $0xb18] sm:$0xff]
    %v395 = vld [vmem:[%s1 + $0xb20] sm:$0xff]
    %v396 = vld [vmem:[%s1 + $0xb28] sm:$0xff]
    %v397 = vld [vmem:[%s1 + $0xb30] sm:$0xff]
    %v398 = vld [vmem:[%s1 + $0xb38] sm:$0xff]
    %v399 = vld [vmem:[%s1 + $0xb40] sm:$0xff]
    %v400 = vld [vmem:[%s1 + $0xb48] sm:$0xff]
    %v401 = vld [vmem:[%s1 + $0xb50] sm:$0xff]
    %v402 = vld [vmem:[%s1 + $0xb58] sm:$0xff]
    %v403 = vld [vmem:[%s1 + $0xb60] sm:$0xff]
    %v404 = vld [vmem:[%s1 + $0xb68] sm:$0xff]
    %v405 = vld [vmem:[%s1 + $0xb70] sm:$0xff]
    %v406 = vld [vmem:[%s1 + $0xb78] sm:$0xff]
    %v407 = vld [vmem:[%s1 + $0xb80] sm:$0xff]
    %v408 = vld [vmem:[%s1 + $0xb88] sm:$0xff]
    %v409 = vld [vmem:[%s1 + $0xb90] sm:$0xff]
    %v410 = vld [vmem:[%s1 + $0xb98] sm:$0xff]
    %v411 = vld [vmem:[%s1 + $0xba0] sm:$0xff]
    %v412 = vld [vmem:[%s1 + $0xba8] sm:$0xff]
    %v413 = vld [vmem:[%s1 + $0xbb0] sm:$0xff]
    %v414 = vld [vmem:[%s1 + $0xbb8] sm:$0xff]
    %v415 = vld [vmem:[%s1 + $0xbc0] sm:$0xff]
    %v416 = vld [vmem:[%s1 + $0xbc8] sm:$0xff]
    %v417 = vld [vmem:[%s1 + $0xbd0] sm:$0xff]
    %v418 = vld [vmem:[%s1 + $0xbd8] sm:$0xff]
    %v419 = vld [vmem:[%s1 + $0xbe0] sm:$0xff]
    %v420 = vld [vmem:[%s1 + $0xbe8] sm:$0xff]
    %v421 = vld [vmem:[%s1 + $0xbf0] sm:$0xff]
    %v422 = vld [vmem:[%s1 + $0xbf8] sm:$0xff]
    %v423 = vld [vmem:[%s1 + $0xc00] sm:$0xff]
    %v424 = vld [vmem:[%s1 + $0xc08] sm:$0xff]
    %v425 = vld [vmem:[%s1 + $0xc10] sm:$0xff]
    %v426 = vld [vmem:[%s1 + $0xc18] sm:$0xff]
    %v427 = vld [vmem:[%s1 + $0xc20] sm:$0xff]
    %v428 = vld [vmem:[%s1 + $0xc28] sm:$0xff]
    %v429 = vld [vmem:[%s1 + $0xc30] sm:$0xff]
    %v430 = vld [vmem:[%s1 + $0xc38] sm:$0xff]
    %v431 = vld [vmem:[%s1 + $0xc40] sm:$0xff]
    %v432 = vld [vmem:[%s1 + $0xc48] sm:$0xff]
    %v433 = vld [vmem:[%s1 + $0xc50] sm:$0xff]
    %v434 = vld [vmem:[%s1 + $0xc58] sm:$0xff]
    %v435 = vld [vmem:[%s1 + $0xc60] sm:$0xff]
    %v436 = vld [vmem:[%s1 + $0xc68] sm:$0xff]
    %v437 = vld [vmem:[%s1 + $0xc70] sm:$0xff]
    %v438 = vld [vmem:[%s1 + $0xc78] sm:$0xff]
    %v439 = vld [vmem:[%s1 + $0xc80] sm:$0xff]
    %v440 = vld [vmem:[%s1 + $0xc88] sm:$0xff]
    %v441 = vld [vmem:[%s1 + $0xc90] sm:$0xff]
    %v442 = vld [vmem:[%s1 + $0xc98] sm:$0xff]
    %v443 = vld [vmem:[%s1 + $0xca0] sm:$0xff]
    %v444 = vld [vmem:[%s1 + $0xca8] sm:$0xff]
    %v445 = vld [vmem:[%s1 + $0xcb0] sm:$0xff]
    %v446 = vld [vmem:[%s1 + $0xcb8] sm:$0xff]
    %v447 = vld [vmem:[%s1 + $0xcc0] sm:$0xff]
    %v448 = vld [vmem:[%s1 + $0xcc8] sm:$0xff]
    %v449 = vld [vmem:[%s1 + $0xcd0] sm:$0xff]
    %v450 = vld [vmem:[%s1 + $0xcd8] sm:$0xff]
    %v451 = vld [vmem:[%s1 + $0xce0] sm:$0xff]
    %v452 = vld [vmem:[%s1 + $0xce8] sm:$0xff]
    %v453 = vld [vmem:[%s1 + $0xcf0] sm:$0xff]
    %v454 = vld [vmem:[%s1 + $0xcf8] sm:$0xff]
    %v455 = vld [vmem:[%s1 + $0xd00] sm:$0xff]
    %v456 = vld [vmem:[%s1 + $0xd08] sm:$0xff]
    %v457 = vld [vmem:[%s1 + $0xd10] sm:$0xff]
    %v458 = vld [vmem:[%s1 + $0xd18] sm:$0xff]
    %v459 = vld [vmem:[%s1 + $0xd20] sm:$0xff]
    %v460 = vld [vmem:[%s1 + $0xd28] sm:$0xff]
    %v461 = vld [vmem:[%s1 + $0xd30] sm:$0xff]
    %v462 = vld [vmem:[%s1 + $0xd38] sm:$0xff]
    %v463 = vld [vmem:[%s1 + $0xd40] sm:$0xff]
    %v464 = vld [vmem:[%s1 + $0xd48] sm:$0xff]
    %v465 = vld [vmem:[%s1 + $0xd50] sm:$0xff]
    %v466 = vld [vmem:[%s1 + $0xd58] sm:$0xff]
    %v467 = vld [vmem:[%s1 + $0xd60] sm:$0xff]
    %v468 = vld [vmem:[%s1 + $0xd68] sm:$0xff]
    %v469 = vld [vmem:[%s1 + $0xd70] sm:$0xff]
    %v470 = vld [vmem:[%s1 + $0xd78] sm:$0xff]
    %v471 = vld [vmem:[%s1 + $0xd80] sm:$0xff]
    %v472 = vld [vmem:[%s1 + $0xd88] sm:$0xff]
    %v473 = vld [vmem:[%s1 + $0xd90] sm:$0xff]
    %v474 = vld [vmem:[%s1 + $0xd98] sm:$0xff]
    %v475 = vld [vmem:[%s1 + $0xda0] sm:$0xff]
    %v476 = vld [vmem:[%s1 + $0xda8] sm:$0xff]
    %v477 = vld [vmem:[%s1 + $0xdb0] sm:$0xff]
    %v478 = vld [vmem:[%s1 + $0xdb8] sm:$0xff]
    %v479 = vld [vmem:[%s1 + $0xdc0] sm:$0xff]
    %v480 = vld [vmem:[%s1 + $0xdc8] sm:$0xff]
    %v481 = vld [vmem:[%s1 + $0xdd0] sm:$0xff]
    %v482 = vld [vmem:[%s1 + $0xdd8] sm:$0xff]
    %v483 = vld [vmem:[%s1 + $0xde0] sm:$0xff]
    %v484 = vld [vmem:[%s1 + $0xde8] sm:$0xff]
    %v485 = vld [vmem:[%s1 + $0xdf0] sm:$0xff]
    %v486 = vld [vmem:[%s1 + $0xdf8] sm:$0xff]
    %v487 = vld [vmem:[%s1 + $0xe00] sm:$0xff]
    %v488 = vld [vmem:[%s1 + $0xe08] sm:$0xff]
    %v489 = vld [vmem:[%s1 + $0xe10] sm:$0xff]
    %v490 = vld [vmem:[%s1 + $0xe18] sm:$0xff]
    %v491 = vld [vmem:[%s1 + $0xe20] sm:$0xff]
    %v492 = vld [vmem:[%s1 + $0xe28] sm:$0xff]
    %v493 = vld [vmem:[%s1 + $0xe30] sm:$0xff]
    %v494 = vld [vmem:[%s1 + $0xe38] sm:$0xff]
    %v495 = vld [vmem:[%s1 + $0xe40] sm:$0xff]
    %v496 = vld [vmem:[%s1 + $0xe48] sm:$0xff]
    %v497 = vld [vmem:[%s1 + $0xe50] sm:$0xff]
    %v498 = vld [vmem:[%s1 + $0xe58] sm:$0xff]
    %v499 = vld [vmem:[%s1 + $0xe60] sm:$0xff]
    %v500 = vld [vmem:[%s1 + $0xe68] sm:$0xff]
    %v501 = vld [vmem:[%s1 + $0xe70] sm:$0xff]
    %v502 = vld [vmem:[%s1 + $0xe78] sm:$0xff]
    %v503 = vld [vmem:[%s1 + $0xe80] sm:$0xff]
    %v504 = vld [vmem:[%s1 + $0xe88] sm:$0xff]
    %v505 = vld [vmem:[%s1 + $0xe90] sm:$0xff]
    %v506 = vld [vmem:[%s1 + $0xe98] sm:$0xff]
    %v507 = vld [vmem:[%s1 + $0xea0] sm:$0xff]
    %v508 = vld [vmem:[%s1 + $0xea8] sm:$0xff]
    %v509 = vld [vmem:[%s1 + $0xeb0] sm:$0xff]
    %v510 = vld [vmem:[%s1 + $0xeb8] sm:$0xff]
    %v511 = vld [vmem:[%s1 + $0xec0] sm:$0xff]
    %v512 = vld [vmem:[%s1 + $0xec8] sm:$0xff]
    %v513 = vld [vmem:[%s1 + $0xed0] sm:$0xff]
    %v514 = vld [vmem:[%s1 + $0xed8] sm:$0xff]
    %v515 = vld [vmem:[%s1 + $0xee0] sm:$0xff]
    %v516 = vld [vmem:[%s1 + $0xee8] sm:$0xff]
    %v517 = vld [vmem:[%s1 + $0xef0] sm:$0xff]
    %v518 = vld [vmem:[%s1 + $0xef8] sm:$0xff]
    %v519 = vld [vmem:[%s1 + $0xf00] sm:$0xff]
    %v520 = vld [vmem:[%s1 + $0xf08] sm:$0xff]
    %v521 = vld [vmem:[%s1 + $0xf10] sm:$0xff]
    %v522 = vld [vmem:[%s1 + $0xf18] sm:$0xff]
    %v523 = vld [vmem:[%s1 + $0xf20] sm:$0xff]
    %v524 = vld [vmem:[%s1 + $0xf28] sm:$0xff]
    %v525 = vld [vmem:[%s1 + $0xf30] sm:$0xff]
    %v526 = vld [vmem:[%s1 + $0xf38] sm:$0xff]
    %v527 = vld [vmem:[%s1 + $0xf40] sm:$0xff]
    %v528 = vld [vmem:[%s1 + $0xf48] sm:$0xff]
    %v529 = vld [vmem:[%s1 + $0xf50] sm:$0xff]
    %v530 = vld [vmem:[%s1 + $0xf58] sm:$0xff]
    %v531 = vld [vmem:[%s1 + $0xf60] sm:$0xff]
    %v532 = vld [vmem:[%s1 + $0xf68] sm:$0xff]
    %v533 = vld [vmem:[%s1 + $0xf70] sm:$0xff]
    %v534 = vld [vmem:[%s1 + $0xf78] sm:$0xff]
    %v535 = vld [vmem:[%s1 + $0xf80] sm:$0xff]
    %v536 = vld [vmem:[%s1 + $0xf88] sm:$0xff]
    %v537 = vld [vmem:[%s1 + $0xf90] sm:$0xff]
    %v538 = vld [vmem:[%s1 + $0xf98] sm:$0xff]
    %v539 = vld [vmem:[%s1 + $0xfa0] sm:$0xff]
    %v540 = vld [vmem:[%s1 + $0xfa8] sm:$0xff]
    %v541 = vld [vmem:[%s1 + $0xfb0] sm:$0xff]
    %v542 = vld [vmem:[%s1 + $0xfb8] sm:$0xff]
    %v543 = vld [vmem:[%s1 + $0xfc0] sm:$0xff]
    %v544 = vld [vmem:[%s1 + $0xfc8] sm:$0xff]
    %v545 = vld [vmem:[%s1 + $0xfd0] sm:$0xff]
    %v546 = vld [vmem:[%s1 + $0xfd8] sm:$0xff]
    %v547 = vld [vmem:[%s1 + $0xfe0] sm:$0xff]
    %v548 = vld [vmem:[%s1 + $0xfe8] sm:$0xff]
    %v549 = vld [vmem:[%s1 + $0xff0] sm:$0xff]
    %v550 = vld [vmem:[%s1 + $0xff8] sm:$0xff]
    %v551 = vld [vmem:[%s1 + $0x1000] sm:$0xff]
    %v552 = vld [vmem:[%s1 + $0x1008] sm:$0xff]
    %v553 = vld [vmem:[%s1 + $0x1010] sm:$0xff]
    %v554 = vld [vmem:[%s1 + $0x1018] sm:$0xff]
    %v555 = vld [vmem:[%s1 + $0x1020] sm:$0xff]
    %v556 = vld [vmem:[%s1 + $0x1028] sm:$0xff]
    %v557 = vld [vmem:[%s1 + $0x1030] sm:$0xff]
    %v558 = vld [vmem:[%s1 + $0x1038] sm:$0xff]
    %v559 = vld [vmem:[%s1 + $0x1040] sm:$0xff]
    %v560 = vld [vmem:[%s1 + $0x1048] sm:$0xff]
    %v561 = vld [vmem:[%s1 + $0x1050] sm:$0xff]
    %v562 = vld [vmem:[%s1 + $0x1058] sm:$0xff]
    %v563 = vld [vmem:[%s1 + $0x1060] sm:$0xff]
    %v564 = vld [vmem:[%s1 + $0x1068] sm:$0xff]
    %v565 = vld [vmem:[%s1 + $0x1070] sm:$0xff]
    %v566 = vld [vmem:[%s1 + $0x1078] sm:$0xff]
    %v567 = vld [vmem:[%s1 + $0x1080] sm:$0xff]
    %v568 = vld [vmem:[%s1 + $0x1088] sm:$0xff]
    %v569 = vld [vmem:[%s1 + $0x1090] sm:$0xff]
    %v570 = vld [vmem:[%s1 + $0x1098] sm:$0xff]
    %v571 = vld [vmem:[%s1 + $0x10a0] sm:$0xff]
    %v572 = vld [vmem:[%s1 + $0x10a8] sm:$0xff]
    %v573 = vld [vmem:[%s1 + $0x10b0] sm:$0xff]
    %v574 = vld [vmem:[%s1 + $0x10b8] sm:$0xff]
    %v575 = vld [vmem:[%s1 + $0x10c0] sm:$0xff]
    %v576 = vld [vmem:[%s1 + $0x10c8] sm:$0xff]
    %v577 = vld [vmem:[%s1 + $0x10d0] sm:$0xff]
    %v578 = vld [vmem:[%s1 + $0x10d8] sm:$0xff]
    %v579 = vld [vmem:[%s1 + $0x10e0] sm:$0xff]
    %v580 = vld [vmem:[%s1 + $0x10e8] sm:$0xff]
    %v581 = vld [vmem:[%s1 + $0x10f0] sm:$0xff]
    %v582 = vld [vmem:[%s1 + $0x10f8] sm:$0xff]
    %v583 = vld [vmem:[%s1 + $0x1100] sm:$0xff]
    %v584 = vld [vmem:[%s1 + $0x1108] sm:$0xff]
    %v585 = vld [vmem:[%s1 + $0x1110] sm:$0xff]
    %v586 = vld [vmem:[%s1 + $0x1118] sm:$0xff]
    %v587 = vld [vmem:[%s1 + $0x1120] sm:$0xff]
    %v588 = vld [vmem:[%s1 + $0x1128] sm:$0xff]
    %v589 = vld [vmem:[%s1 + $0x1130] sm:$0xff]
    %v590 = vld [vmem:[%s1 + $0x1138] sm:$0xff]
    %v591 = vld [vmem:[%s1 + $0x1140] sm:$0xff]
    %v592 = vld [vmem:[%s1 + $0x1148] sm:$0xff]
    %v593 = vld [vmem:[%s1 + $0x1150] sm:$0xff]
    %v594 = vld [vmem:[%s1 + $0x1158] sm:$0xff]
    %v595 = vld [vmem:[%s1 + $0x1160] sm:$0xff]
    %v596 = vld [vmem:[%s1 + $0x1168] sm:$0xff]
    %v597 = vld [vmem:[%s1 + $0x1170] sm:$0xff]
    %v598 = vld [vmem:[%s1 + $0x1178] sm:$0xff]
    %v599 = vld [vmem:[%s1 + $0x1180] sm:$0xff]
    %v600 = vld [vmem:[%s1 + $0x1188] sm:$0xff]
    %v601 = vld [vmem:[%s1 + $0x1190] sm:$0xff]
    %v602 = vld [vmem:[%s1 + $0x1198] sm:$0xff]
    %v603 = vld [vmem:[%s1 + $0x11a0] sm:$0xff]
    %v604 = vld [vmem:[%s1 + $0x11a8] sm:$0xff]
    %v605 = vld [vmem:[%s1 + $0x11b0] sm:$0xff]
    %v606 = vld [vmem:[%s1 + $0x11b8] sm:$0xff]
    %v607 = vld [vmem:[%s1 + $0x11c0] sm:$0xff]
    %v608 = vld [vmem:[%s1 + $0x11c8] sm:$0xff]
    %v609 = vld [vmem:[%s1 + $0x11d0] sm:$0xff]
    %v610 = vld [vmem:[%s1 + $0x11d8] sm:$0xff]
    %v611 = vld [vmem:[%s1 + $0x11e0] sm:$0xff]
    %v612 = vld [vmem:[%s1 + $0x11e8] sm:$0xff]
    %v613 = vld [vmem:[%s1 + $0x11f0] sm:$0xff]
    %v614 = vld [vmem:[%s1 + $0x11f8] sm:$0xff]
    %v615 = vld [vmem:[%s1 + $0x1200] sm:$0xff]
    %v616 = vld [vmem:[%s1 + $0x1208] sm:$0xff]
    %v617 = vld [vmem:[%s1 + $0x1210] sm:$0xff]
    %v618 = vld [vmem:[%s1 + $0x1218] sm:$0xff]
    %v619 = vld [vmem:[%s1 + $0x1220] sm:$0xff]
    %v620 = vld [vmem:[%s1 + $0x1228] sm:$0xff]
    %v621 = vld [vmem:[%s1 + $0x1230] sm:$0xff]
    %v622 = vld [vmem:[%s1 + $0x1238] sm:$0xff]
    %v623 = vld [vmem:[%s1 + $0x1240] sm:$0xff]
    %v624 = vld [vmem:[%s1 + $0x1248] sm:$0xff]
    %v625 = vld [vmem:[%s1 + $0x1250] sm:$0xff]
    %v626 = vld [vmem:[%s1 + $0x1258] sm:$0xff]
    %v627 = vld [vmem:[%s1 + $0x1260] sm:$0xff]
    %v628 = vld [vmem:[%s1 + $0x1268] sm:$0xff]
    %v629 = vld [vmem:[%s1 + $0x1270] sm:$0xff]
    %v630 = vld [vmem:[%s1 + $0x1278] sm:$0xff]
    %v631 = vld [vmem:[%s1 + $0x1280] sm:$0xff]
    %v632 = vld [vmem:[%s1 + $0x1288] sm:$0xff]
    %v633 = vld [vmem:[%s1 + $0x1290] sm:$0xff]
    %v634 = vld [vmem:[%s1 + $0x1298] sm:$0xff]
    %v635 = vld [vmem:[%s1 + $0x12a0] sm:$0xff]
    %v636 = vld [vmem:[%s1 + $0x12a8] sm:$0xff]
    %v637 = vld [vmem:[%s1 + $0x12b0] sm:$0xff]
    %v638 = vld [vmem:[%s1 + $0x12b8] sm:$0xff]
    %v639 = vld [vmem:[%s1 + $0x12c0] sm:$0xff]
    %v640 = vld [vmem:[%s1 + $0x12c8] sm:$0xff]
    %v641 = vld [vmem:[%s1 + $0x12d0] sm:$0xff]
    %v642 = vld [vmem:[%s1 + $0x12d8] sm:$0xff]
    %v643 = vld [vmem:[%s1 + $0x12e0] sm:$0xff]
    %v644 = vld [vmem:[%s1 + $0x12e8] sm:$0xff]
    %v645 = vld [vmem:[%s1 + $0x12f0] sm:$0xff]
    %v646 = vld [vmem:[%s1 + $0x12f8] sm:$0xff]
    %v647 = vld [vmem:[%s1 + $0x1300] sm:$0xff]
    %v648 = vld [vmem:[%s1 + $0x1308] sm:$0xff]
    %v649 = vld [vmem:[%s1 + $0x1310] sm:$0xff]
    %v650 = vld [vmem:[%s1 + $0x1318] sm:$0xff]
    %v651 = vld [vmem:[%s1 + $0x1320] sm:$0xff]
    %v652 = vld [vmem:[%s1 + $0x1328] sm:$0xff]
    %v653 = vld [vmem:[%s1 + $0x1330] sm:$0xff]
    %v654 = vld [vmem:[%s1 + $0x1338] sm:$0xff]
    %v655 = vld [vmem:[%s1 + $0x1340] sm:$0xff]
    %v656 = vld [vmem:[%s1 + $0x1348] sm:$0xff]
    %v657 = vld [vmem:[%s1 + $0x1350] sm:$0xff]
    %v658 = vld [vmem:[%s1 + $0x1358] sm:$0xff]
    %v659 = vld [vmem:[%s1 + $0x1360] sm:$0xff]
    %v660 = vld [vmem:[%s1 + $0x1368] sm:$0xff]
    %v661 = vld [vmem:[%s1 + $0x1370] sm:$0xff]
    %v662 = vld [vmem:[%s1 + $0x1378] sm:$0xff]
    %v663 = vld [vmem:[%s1 + $0x1380] sm:$0xff]
    %v664 = vld [vmem:[%s1 + $0x1388] sm:$0xff]
    %v665 = vld [vmem:[%s1 + $0x1390] sm:$0xff]
    %v666 = vld [vmem:[%s1 + $0x1398] sm:$0xff]
    %v667 = vld [vmem:[%s1 + $0x13a0] sm:$0xff]
    %v668 = vld [vmem:[%s1 + $0x13a8] sm:$0xff]
    %v669 = vld [vmem:[%s1 + $0x13b0] sm:$0xff]
    %v670 = vld [vmem:[%s1 + $0x13b8] sm:$0xff]
    %v671 = vld [vmem:[%s1 + $0x13c0] sm:$0xff]
    %v672 = vld [vmem:[%s1 + $0x13c8] sm:$0xff]
    %v673 = vld [vmem:[%s1 + $0x13d0] sm:$0xff]
    %v674 = vld [vmem:[%s1 + $0x13d8] sm:$0xff]
    %v675 = vld [vmem:[%s1 + $0x13e0] sm:$0xff]
    %v676 = vld [vmem:[%s1 + $0x13e8] sm:$0xff]
    %v677 = vld [vmem:[%s1 + $0x13f0] sm:$0xff]
    %v678 = vld [vmem:[%s1 + $0x13f8] sm:$0xff]
    %v679 = vld [vmem:[%s1 + $0x1400] sm:$0xff]
    %v680 = vld [vmem:[%s1 + $0x1408] sm:$0xff]
    %v681 = vld [vmem:[%s1 + $0x1410] sm:$0xff]
    %v682 = vld [vmem:[%s1 + $0x1418] sm:$0xff]
    %v683 = vld [vmem:[%s1 + $0x1420] sm:$0xff]
    %v684 = vld [vmem:[%s1 + $0x1428] sm:$0xff]
    %v685 = vld [vmem:[%s1 + $0x1430] sm:$0xff]
    %v686 = vld [vmem:[%s1 + $0x1438] sm:$0xff]
    %v687 = vld [vmem:[%s1 + $0x1440] sm:$0xff]
    %v688 = vld [vmem:[%s1 + $0x1448] sm:$0xff]
    %v689 = vld [vmem:[%s1 + $0x1450] sm:$0xff]
    %v690 = vld [vmem:[%s1 + $0x1458] sm:$0xff]
    %v691 = vld [vmem:[%s1 + $0x1460] sm:$0xff]
    %v692 = vld [vmem:[%s1 + $0x1468] sm:$0xff]
    %v693 = vld [vmem:[%s1 + $0x1470] sm:$0xff]
    %v694 = vld [vmem:[%s1 + $0x1478] sm:$0xff]
    %v695 = vld [vmem:[%s1 + $0x1480] sm:$0xff]
    %v696 = vld [vmem:[%s1 + $0x1488] sm:$0xff]
    %v697 = vld [vmem:[%s1 + $0x1490] sm:$0xff]
    %v698 = vld [vmem:[%s1 + $0x1498] sm:$0xff]
    %v699 = vld [vmem:[%s1 + $0x14a0] sm:$0xff]
    %v700 = vld [vmem:[%s1 + $0x14a8] sm:$0xff]
    %v701 = vld [vmem:[%s1 + $0x14b0] sm:$0xff]
    %v702 = vld [vmem:[%s1 + $0x14b8] sm:$0xff]
    %v703 = vld [vmem:[%s1 + $0x14c0] sm:$0xff]
    %v704 = vld [vmem:[%s1 + $0x14c8] sm:$0xff]
    %v705 = vld [vmem:[%s1 + $0x14d0] sm:$0xff]
    %v706 = vld [vmem:[%s1 + $0x14d8] sm:$0xff]
    %v707 = vld [vmem:[%s1 + $0x14e0] sm:$0xff]
    %v708 = vld [vmem:[%s1 + $0x14e8] sm:$0xff]
    %v709 = vld [vmem:[%s1 + $0x14f0] sm:$0xff]
    %v710 = vld [vmem:[%s1 + $0x14f8] sm:$0xff]
    %v711 = vld [vmem:[%s1 + $0x1500] sm:$0xff]
    %v712 = vld [vmem:[%s1 + $0x1508] sm:$0xff]
    %v713 = vld [vmem:[%s1 + $0x1510] sm:$0xff]
    %v714 = vld [vmem:[%s1 + $0x1518] sm:$0xff]
    %v715 = vld [vmem:[%s1 + $0x1520] sm:$0xff]
    %v716 = vld [vmem:[%s1 + $0x1528] sm:$0xff]
    %v717 = vld [vmem:[%s1 + $0x1530] sm:$0xff]
    %v718 = vld [vmem:[%s1 + $0x1538] sm:$0xff]
    %v719 = vld [vmem:[%s1 + $0x1540] sm:$0xff]
    %v720 = vld [vmem:[%s1 + $0x1548] sm:$0xff]
    %v721 = vld [vmem:[%s1 + $0x1550] sm:$0xff]
    %v722 = vld [vmem:[%s1 + $0x1558] sm:$0xff]
    %v723 = vld [vmem:[%s1 + $0x1560] sm:$0xff]
    %v724 = vld [vmem:[%s1 + $0x1568] sm:$0xff]
    %v725 = vld [vmem:[%s1 + $0x1570] sm:$0xff]
    %v726 = vld [vmem:[%s1 + $0x1578] sm:$0xff]
    %v727 = vld [vmem:[%s1 + $0x1580] sm:$0xff]
    %v728 = vld [vmem:[%s1 + $0x1588] sm:$0xff]
    %v729 = vld [vmem:[%s1 + $0x1590] sm:$0xff]
    %v730 = vld [vmem:[%s1 + $0x1598] sm:$0xff]
    %v731 = vld [vmem:[%s1 + $0x15a0] sm:$0xff]
    %v732 = vld [vmem:[%s1 + $0x15a8] sm:$0xff]
    %v733 = vld [vmem:[%s1 + $0x15b0] sm:$0xff]
    %v734 = vld [vmem:[%s1 + $0x15b8] sm:$0xff]
    %v735 = vld [vmem:[%s1 + $0x15c0] sm:$0xff]
    %v736 = vld [vmem:[%s1 + $0x15c8] sm:$0xff]
    %v737 = vld [vmem:[%s1 + $0x15d0] sm:$0xff]
    %v738 = vld [vmem:[%s1 + $0x15d8] sm:$0xff]
    %v739 = vld [vmem:[%s1 + $0x15e0] sm:$0xff]
    %v740 = vld [vmem:[%s1 + $0x15e8] sm:$0xff]
    %v741 = vld [vmem:[%s1 + $0x15f0] sm:$0xff]
    %v742 = vld [vmem:[%s1 + $0x15f8] sm:$0xff]
    %v743 = vld [vmem:[%s1 + $0x1600] sm:$0xff]
    %v744 = vld [vmem:[%s1 + $0x1608] sm:$0xff]
    %v745 = vld [vmem:[%s1 + $0x1610] sm:$0xff]
    %v746 = vld [vmem:[%s1 + $0x1618] sm:$0xff]
    %v747 = vld [vmem:[%s1 + $0x1620] sm:$0xff]
    %v748 = vld [vmem:[%s1 + $0x1628] sm:$0xff]
    %v749 = vld [vmem:[%s1 + $0x1630] sm:$0xff]
    %v750 = vld [vmem:[%s1 + $0x1638] sm:$0xff]
    %v751 = vld [vmem:[%s1 + $0x1640] sm:$0xff]
    %v752 = vld [vmem:[%s1 + $0x1648] sm:$0xff]
    %v753 = vld [vmem:[%s1 + $0x1650] sm:$0xff]
    %v754 = vld [vmem:[%s1 + $0x1658] sm:$0xff]
    %v755 = vld [vmem:[%s1 + $0x1660] sm:$0xff]
    %v756 = vld [vmem:[%s1 + $0x1668] sm:$0xff]
    %v757 = vld [vmem:[%s1 + $0x1670] sm:$0xff]
    %v758 = vld [vmem:[%s1 + $0x1678] sm:$0xff]
    %v759 = vld [vmem:[%s1 + $0x1680] sm:$0xff]
    %v760 = vld [vmem:[%s1 + $0x1688] sm:$0xff]
    %v761 = vld [vmem:[%s1 + $0x1690] sm:$0xff]
    %v762 = vld [vmem:[%s1 + $0x1698] sm:$0xff]
    %v763 = vld [vmem:[%s1 + $0x16a0] sm:$0xff]
    %v764 = vld [vmem:[%s1 + $0x16a8] sm:$0xff]
    %v765 = vld [vmem:[%s1 + $0x16b0] sm:$0xff]
    %v766 = vld [vmem:[%s1 + $0x16b8] sm:$0xff]
    %v767 = vld [vmem:[%s1 + $0x16c0] sm:$0xff]
    %v768 = vld [vmem:[%s1 + $0x16c8] sm:$0xff]
    %v769 = vld [vmem:[%s1 + $0x16d0] sm:$0xff]
    %v770 = vld [vmem:[%s1 + $0x16d8] sm:$0xff]
    %v771 = vld [vmem:[%s1 + $0x16e0] sm:$0xff]
    %v772 = vld [vmem:[%s1 + $0x16e8] sm:$0xff]
    %v773 = vld [vmem:[%s1 + $0x16f0] sm:$0xff]
    %v774 = vld [vmem:[%s1 + $0x16f8] sm:$0xff]
    %v775 = vld [vmem:[%s1 + $0x1700] sm:$0xff]
    %v776 = vld [vmem:[%s1 + $0x1708] sm:$0xff]
    %v777 = vld [vmem:[%s1 + $0x1710] sm:$0xff]
    %v778 = vld [vmem:[%s1 + $0x1718] sm:$0xff]
    %v779 = vld [vmem:[%s1 + $0x1720] sm:$0xff]
    %v780 = vld [vmem:[%s1 + $0x1728] sm:$0xff]
    %v781 = vld [vmem:[%s1 + $0x1730] sm:$0xff]
    %v782 = vld [vmem:[%s1 + $0x1738] sm:$0xff]
    %v783 = vld [vmem:[%s1 + $0x1740] sm:$0xff]
    %v784 = vld [vmem:[%s1 + $0x1748] sm:$0xff]
    %v785 = vld [vmem:[%s1 + $0x1750] sm:$0xff]
    %v786 = vld [vmem:[%s1 + $0x1758] sm:$0xff]
    %v787 = vld [vmem:[%s1 + $0x1760] sm:$0xff]
    %v788 = vld [vmem:[%s1 + $0x1768] sm:$0xff]
    %v789 = vld [vmem:[%s1 + $0x1770] sm:$0xff]
    %v790 = vld [vmem:[%s1 + $0x1778] sm:$0xff]
    %v791 = vld [vmem:[%s1 + $0x1780] sm:$0xff]
    %v792 = vld [vmem:[%s1 + $0x1788] sm:$0xff]
    %v793 = vld [vmem:[%s1 + $0x1790] sm:$0xff]
    %v794 = vld [vmem:[%s1 + $0x1798] sm:$0xff]
    %v795 = vld [vmem:[%s1 + $0x17a0] sm:$0xff]
    %v796 = vld [vmem:[%s1 + $0x17a8] sm:$0xff]
    %v797 = vld [vmem:[%s1 + $0x17b0] sm:$0xff]
    %v798 = vld [vmem:[%s1 + $0x17b8] sm:$0xff]
    %v799 = vld [vmem:[%s1 + $0x17c0] sm:$0xff]
    %v800 = vld [vmem:[%s1 + $0x17c8] sm:$0xff]
    %v801 = vld [vmem:[%s1 + $0x17d0] sm:$0xff]
    %v802 = vld [vmem:[%s1 + $0x17d8] sm:$0xff]
    %v803 = vld [vmem:[%s1 + $0x17e0] sm:$0xff]
    %v804 = vld [vmem:[%s1 + $0x17e8] sm:$0xff]
    %v805 = vld [vmem:[%s1 + $0x17f0] sm:$0xff]
    %v806 = vld [vmem:[%s1 + $0x17f8] sm:$0xff]
    %v807 = vld [vmem:[%s1 + $0x1800] sm:$0xff]
    %v808 = vld [vmem:[%s1 + $0x1808] sm:$0xff]
    %v809 = vld [vmem:[%s1 + $0x1810] sm:$0xff]
    %v810 = vld [vmem:[%s1 + $0x1818] sm:$0xff]
    %v811 = vld [vmem:[%s1 + $0x1820] sm:$0xff]
    %v812 = vld [vmem:[%s1 + $0x1828] sm:$0xff]
    %v813 = vld [vmem:[%s1 + $0x1830] sm:$0xff]
    %v814 = vld [vmem:[%s1 + $0x1838] sm:$0xff]
    %v815 = vld [vmem:[%s1 + $0x1840] sm:$0xff]
    %v816 = vld [vmem:[%s1 + $0x1848] sm:$0xff]
    %v817 = vld [vmem:[%s1 + $0x1850] sm:$0xff]
    %v818 = vld [vmem:[%s1 + $0x1858] sm:$0xff]
    %v819 = vld [vmem:[%s1 + $0x1860] sm:$0xff]
    %v820 = vld [vmem:[%s1 + $0x1868] sm:$0xff]
    %v821 = vld [vmem:[%s1 + $0x1870] sm:$0xff]
    %v822 = vld [vmem:[%s1 + $0x1878] sm:$0xff]
    %v823 = vld [vmem:[%s1 + $0x1880] sm:$0xff]
    %v824 = vld [vmem:[%s1 + $0x1888] sm:$0xff]
    %v825 = vld [vmem:[%s1 + $0x1890] sm:$0xff]
    %v826 = vld [vmem:[%s1 + $0x1898] sm:$0xff]
    %v827 = vld [vmem:[%s1 + $0x18a0] sm:$0xff]
    %v828 = vld [vmem:[%s1 + $0x18a8] sm:$0xff]
    %v829 = vld [vmem:[%s1 + $0x18b0] sm:$0xff]
    %v830 = vld [vmem:[%s1 + $0x18b8] sm:$0xff]
    %v831 = vld [vmem:[%s1 + $0x18c0] sm:$0xff]
    %v832 = vld [vmem:[%s1 + $0x18c8] sm:$0xff]
    %v833 = vld [vmem:[%s1 + $0x18d0] sm:$0xff]
    %v834 = vld [vmem:[%s1 + $0x18d8] sm:$0xff]
    %v835 = vld [vmem:[%s1 + $0x18e0] sm:$0xff]
    %v836 = vld [vmem:[%s1 + $0x18e8] sm:$0xff]
    %v837 = vld [vmem:[%s1 + $0x18f0] sm:$0xff]
    %v838 = vld [vmem:[%s1 + $0x18f8] sm:$0xff]
    %v839 = vld [vmem:[%s1 + $0x1900] sm:$0xff]
    %v840 = vld [vmem:[%s1 + $0x1908] sm:$0xff]
    %v841 = vld [vmem:[%s1 + $0x1910] sm:$0xff]
    %v842 = vld [vmem:[%s1 + $0x1918] sm:$0xff]
    %v843 = vld [vmem:[%s1 + $0x1920] sm:$0xff]
    %v844 = vld [vmem:[%s1 + $0x1928] sm:$0xff]
    %v845 = vld [vmem:[%s1 + $0x1930] sm:$0xff]
    %v846 = vld [vmem:[%s1 + $0x1938] sm:$0xff]
    %v847 = vld [vmem:[%s1 + $0x1940] sm:$0xff]
    %v848 = vld [vmem:[%s1 + $0x1948] sm:$0xff]
    %v849 = vld [vmem:[%s1 + $0x1950] sm:$0xff]
    %v850 = vld [vmem:[%s1 + $0x1958] sm:$0xff]
    %v851 = vld [vmem:[%s1 + $0x1960] sm:$0xff]
    %v852 = vld [vmem:[%s1 + $0x1968] sm:$0xff]
    %v853 = vld [vmem:[%s1 + $0x1970] sm:$0xff]
    %v854 = vld [vmem:[%s1 + $0x1978] sm:$0xff]
    %v855 = vld [vmem:[%s1 + $0x1980] sm:$0xff]
    %v856 = vld [vmem:[%s1 + $0x1988] sm:$0xff]
    %v857 = vld [vmem:[%s1 + $0x1990] sm:$0xff]
    %v858 = vld [vmem:[%s1 + $0x1998] sm:$0xff]
    %v859 = vld [vmem:[%s1 + $0x19a0] sm:$0xff]
    %v860 = vld [vmem:[%s1 + $0x19a8] sm:$0xff]
    %v861 = vld [vmem:[%s1 + $0x19b0] sm:$0xff]
    %v862 = vld [vmem:[%s1 + $0x19b8] sm:$0xff]
    %v863 = vld [vmem:[%s1 + $0x19c0] sm:$0xff]
    %v864 = vld [vmem:[%s1 + $0x19c8] sm:$0xff]
    %v865 = vld [vmem:[%s1 + $0x19d0] sm:$0xff]
    %v866 = vld [vmem:[%s1 + $0x19d8] sm:$0xff]
    %v867 = vld [vmem:[%s1 + $0x19e0] sm:$0xff]
    %v868 = vld [vmem:[%s1 + $0x19e8] sm:$0xff]
    %v869 = vld [vmem:[%s1 + $0x19f0] sm:$0xff]
    %v870 = vld [vmem:[%s1 + $0x19f8] sm:$0xff]
    %v871 = vld [vmem:[%s1 + $0x1a00] sm:$0xff]
    %v872 = vld [vmem:[%s1 + $0x1a08] sm:$0xff]
    %v873 = vld [vmem:[%s1 + $0x1a10] sm:$0xff]
    %v874 = vld [vmem:[%s1 + $0x1a18] sm:$0xff]
    %v875 = vld [vmem:[%s1 + $0x1a20] sm:$0xff]
    %v876 = vld [vmem:[%s1 + $0x1a28] sm:$0xff]
    %v877 = vld [vmem:[%s1 + $0x1a30] sm:$0xff]
    %v878 = vld [vmem:[%s1 + $0x1a38] sm:$0xff]
    %v879 = vld [vmem:[%s1 + $0x1a40] sm:$0xff]
    %v880 = vld [vmem:[%s1 + $0x1a48] sm:$0xff]
    %v881 = vld [vmem:[%s1 + $0x1a50] sm:$0xff]
    %v882 = vld [vmem:[%s1 + $0x1a58] sm:$0xff]
    %v883 = vld [vmem:[%s1 + $0x1a60] sm:$0xff]
    %v884 = vld [vmem:[%s1 + $0x1a68] sm:$0xff]
    %v885 = vld [vmem:[%s1 + $0x1a70] sm:$0xff]
    %v886 = vld [vmem:[%s1 + $0x1a78] sm:$0xff]
    %v887 = vld [vmem:[%s1 + $0x1a80] sm:$0xff]
    %v888 = vld [vmem:[%s1 + $0x1a88] sm:$0xff]
    %v889 = vld [vmem:[%s1 + $0x1a90] sm:$0xff]
    %v890 = vld [vmem:[%s1 + $0x1a98] sm:$0xff]
    %v891 = vld [vmem:[%s1 + $0x1aa0] sm:$0xff]
    %v892 = vld [vmem:[%s1 + $0x1aa8] sm:$0xff]
    %v893 = vld [vmem:[%s1 + $0x1ab0] sm:$0xff]
    %v894 = vld [vmem:[%s1 + $0x1ab8] sm:$0xff]
    %v895 = vld [vmem:[%s1 + $0x1ac0] sm:$0xff]
    %v896 = vld [vmem:[%s1 + $0x1ac8] sm:$0xff]
    %v897 = vld [vmem:[%s1 + $0x1ad0] sm:$0xff]
    %v898 = vld [vmem:[%s1 + $0x1ad8] sm:$0xff]
    %v899 = vld [vmem:[%s1 + $0x1ae0] sm:$0xff]
    %v900 = vld [vmem:[%s1 + $0x1ae8] sm:$0xff]
    %v901 = vld [vmem:[%s1 + $0x1af0] sm:$0xff]
    %v902 = vld [vmem:[%s1 + $0x1af8] sm:$0xff]
    %v903 = vld [vmem:[%s1 + $0x1b00] sm:$0xff]
    %v904 = vld [vmem:[%s1 + $0x1b08] sm:$0xff]
    %v905 = vld [vmem:[%s1 + $0x1b10] sm:$0xff]
    %v906 = vld [vmem:[%s1 + $0x1b18] sm:$0xff]
    %v907 = vld [vmem:[%s1 + $0x1b20] sm:$0xff]
    %v908 = vld [vmem:[%s1 + $0x1b28] sm:$0xff]
    %v909 = vld [vmem:[%s1 + $0x1b30] sm:$0xff]
    %v910 = vld [vmem:[%s1 + $0x1b38] sm:$0xff]
    %v911 = vld [vmem:[%s1 + $0x1b40] sm:$0xff]
    %v912 = vld [vmem:[%s1 + $0x1b48] sm:$0xff]
    %v913 = vld [vmem:[%s1 + $0x1b50] sm:$0xff]
    %v914 = vld [vmem:[%s1 + $0x1b58] sm:$0xff]
    %v915 = vld [vmem:[%s1 + $0x1b60] sm:$0xff]
    %v916 = vld [vmem:[%s1 + $0x1b68] sm:$0xff]
    %v917 = vld [vmem:[%s1 + $0x1b70] sm:$0xff]
    %v918 = vld [vmem:[%s1 + $0x1b78] sm:$0xff]
    %v919 = vld [vmem:[%s1 + $0x1b80] sm:$0xff]
    %v920 = vld [vmem:[%s1 + $0x1b88] sm:$0xff]
    %v921 = vld [vmem:[%s1 + $0x1b90] sm:$0xff]
    %v922 = vld [vmem:[%s1 + $0x1b98] sm:$0xff]
    %v923 = vld [vmem:[%s1 + $0x1ba0] sm:$0xff]
    %v924 = vld [vmem:[%s1 + $0x1ba8] sm:$0xff]
    %v925 = vld [vmem:[%s1 + $0x1bb0] sm:$0xff]
    %v926 = vld [vmem:[%s1 + $0x1bb8] sm:$0xff]
    %v927 = vld [vmem:[%s1 + $0x1bc0] sm:$0xff]
    %v928 = vld [vmem:[%s1 + $0x1bc8] sm:$0xff]
    %v929 = vld [vmem:[%s1 + $0x1bd0] sm:$0xff]
    %v930 = vld [vmem:[%s1 + $0x1bd8] sm:$0xff]
    %v931 = vld [vmem:[%s1 + $0x1be0] sm:$0xff]
    %v932 = vld [vmem:[%s1 + $0x1be8] sm:$0xff]
    %v933 = vld [vmem:[%s1 + $0x1bf0] sm:$0xff]
    %v934 = vld [vmem:[%s1 + $0x1bf8] sm:$0xff]
    %v935 = vld [vmem:[%s1 + $0x1c00] sm:$0xff]
    %v936 = vld [vmem:[%s1 + $0x1c08] sm:$0xff]
    %v937 = vld [vmem:[%s1 + $0x1c10] sm:$0xff]
    %v938 = vld [vmem:[%s1 + $0x1c18] sm:$0xff]
    %v939 = vld [vmem:[%s1 + $0x1c20] sm:$0xff]
    %v940 = vld [vmem:[%s1 + $0x1c28] sm:$0xff]
    %v941 = vld [vmem:[%s1 + $0x1c30] sm:$0xff]
    %v942 = vld [vmem:[%s1 + $0x1c38] sm:$0xff]
    %v943 = vld [vmem:[%s1 + $0x1c40] sm:$0xff]
    %v944 = vld [vmem:[%s1 + $0x1c48] sm:$0xff]
    %v945 = vld [vmem:[%s1 + $0x1c50] sm:$0xff]
    %v946 = vld [vmem:[%s1 + $0x1c58] sm:$0xff]
    %v947 = vld [vmem:[%s1 + $0x1c60] sm:$0xff]
    %v948 = vld [vmem:[%s1 + $0x1c68] sm:$0xff]
    %v949 = vld [vmem:[%s1 + $0x1c70] sm:$0xff]
    %v950 = vld [vmem:[%s1 + $0x1c78] sm:$0xff]
    %v951 = vld [vmem:[%s1 + $0x1c80] sm:$0xff]
    %v952 = vld [vmem:[%s1 + $0x1c88] sm:$0xff]
    %v953 = vld [vmem:[%s1 + $0x1c90] sm:$0xff]
    %v954 = vld [vmem:[%s1 + $0x1c98] sm:$0xff]
    %v955 = vld [vmem:[%s1 + $0x1ca0] sm:$0xff]
    %v956 = vld [vmem:[%s1 + $0x1ca8] sm:$0xff]
    %v957 = vld [vmem:[%s1 + $0x1cb0] sm:$0xff]
    %v958 = vld [vmem:[%s1 + $0x1cb8] sm:$0xff]
    %v959 = vld [vmem:[%s1 + $0x1cc0] sm:$0xff]
    %v960 = vld [vmem:[%s1 + $0x1cc8] sm:$0xff]
    %v961 = vld [vmem:[%s1 + $0x1cd0] sm:$0xff]
    %v962 = vld [vmem:[%s1 + $0x1cd8] sm:$0xff]
    %v963 = vld [vmem:[%s1 + $0x1ce0] sm:$0xff]
    %v964 = vld [vmem:[%s1 + $0x1ce8] sm:$0xff]
    %v965 = vld [vmem:[%s1 + $0x1cf0] sm:$0xff]
    %v966 = vld [vmem:[%s1 + $0x1cf8] sm:$0xff]
    %v967 = vld [vmem:[%s1 + $0x1d00] sm:$0xff]
    %v968 = vld [vmem:[%s1 + $0x1d08] sm:$0xff]
    %v969 = vld [vmem:[%s1 + $0x1d10] sm:$0xff]
    %v970 = vld [vmem:[%s1 + $0x1d18] sm:$0xff]
    %v971 = vld [vmem:[%s1 + $0x1d20] sm:$0xff]
    %v972 = vld [vmem:[%s1 + $0x1d28] sm:$0xff]
    %v973 = vld [vmem:[%s1 + $0x1d30] sm:$0xff]
    %v974 = vld [vmem:[%s1 + $0x1d38] sm:$0xff]
    %v975 = vld [vmem:[%s1 + $0x1d40] sm:$0xff]
    %v976 = vld [vmem:[%s1 + $0x1d48] sm:$0xff]
    %v977 = vld [vmem:[%s1 + $0x1d50] sm:$0xff]
    %v978 = vld [vmem:[%s1 + $0x1d58] sm:$0xff]
    %v979 = vld [vmem:[%s1 + $0x1d60] sm:$0xff]
    %v980 = vld [vmem:[%s1 + $0x1d68] sm:$0xff]
    %v981 = vld [vmem:[%s1 + $0x1d70] sm:$0xff]
    %v982 = vld [vmem:[%s1 + $0x1d78] sm:$0xff]
    %v983 = vld [vmem:[%s1 + $0x1d80] sm:$0xff]
    %v984 = vld [vmem:[%s1 + $0x1d88] sm:$0xff]
    %v985 = vld [vmem:[%s1 + $0x1d90] sm:$0xff]
    %v986 = vld [vmem:[%s1 + $0x1d98] sm:$0xff]
    %v987 = vld [vmem:[%s1 + $0x1da0] sm:$0xff]
    %v988 = vld [vmem:[%s1 + $0x1da8] sm:$0xff]
    %v989 = vld [vmem:[%s1 + $0x1db0] sm:$0xff]
    %v990 = vld [vmem:[%s1 + $0x1db8] sm:$0xff]
    %v991 = vld [vmem:[%s1 + $0x1dc0] sm:$0xff]
    %v992 = vld [vmem:[%s1 + $0x1dc8] sm:$0xff]
    %v993 = vld [vmem:[%s1 + $0x1dd0] sm:$0xff]
    %v994 = vld [vmem:[%s1 + $0x1dd8] sm:$0xff]
    %v995 = vld [vmem:[%s1 + $0x1de0] sm:$0xff]
    %v996 = vld [vmem:[%s1 + $0x1de8] sm:$0xff]
    %v997 = vld [vmem:[%s1 + $0x1df0] sm:$0xff]
    %v998 = vld [vmem:[%s1 + $0x1df8] sm:$0xff]
    %v999 = vld [vmem:[%s1 + $0x1e00] sm:$0xff]
    %v1000 = vld [vmem:[%s1 + $0x1e08] sm:$0xff]
    %v1001 = vld [vmem:[%s1 + $0x1e10] sm:$0xff]
    %v1002 = vld [vmem:[%s1 + $0x1e18] sm:$0xff]
    %v1003 = vld [vmem:[%s1 + $0x1e20] sm:$0xff]
    %v1004 = vld [vmem:[%s1 + $0x1e28] sm:$0xff]
    %v1005 = vld [vmem:[%s1 + $0x1e30] sm:$0xff]
    %v1006 = vld [vmem:[%s1 + $0x1e38] sm:$0xff]
    %v1007 = vld [vmem:[%s1 + $0x1e40] sm:$0xff]
    %v1008 = vld [vmem:[%s1 + $0x1e48] sm:$0xff]
    %v1009 = vld [vmem:[%s1 + $0x1e50] sm:$0xff]
    %v1010 = vld [vmem:[%s1 + $0x1e58] sm:$0xff]
    %v1011 = vld [vmem:[%s1 + $0x1e60] sm:$0xff]
    %v1012 = vld [vmem:[%s1 + $0x1e68] sm:$0xff]
    %v1013 = vld [vmem:[%s1 + $0x1e70] sm:$0xff]
    %v1014 = vld [vmem:[%s1 + $0x1e78] sm:$0xff]
    %v1015 = vld [vmem:[%s1 + $0x1e80] sm:$0xff]
    %v1016 = vld [vmem:[%s1 + $0x1e88] sm:$0xff]
    %v1017 = vld [vmem:[%s1 + $0x1e90] sm:$0xff]
    %v1018 = vld [vmem:[%s1 + $0x1e98] sm:$0xff]
    %v1019 = vld [vmem:[%s1 + $0x1ea0] sm:$0xff]
    %v1020 = vld [vmem:[%s1 + $0x1ea8] sm:$0xff]
    %v1021 = vld [vmem:[%s1 + $0x1eb0] sm:$0xff]
    %v1022 = vld [vmem:[%s1 + $0x1eb8] sm:$0xff]
    %v1023 = vld [vmem:[%s1 + $0x1ec0] sm:$0xff]
    %v1024 = vld [vmem:[%s1 + $0x1ec8] sm:$0xff]
    %v1025 = vld [vmem:[%s1 + $0x1ed0] sm:$0xff]
    %v1026 = vld [vmem:[%s1 + $0x1ed8] sm:$0xff]
    %v1027 = vld [vmem:[%s1 + $0x1ee0] sm:$0xff]
    %v1028 = vld [vmem:[%s1 + $0x1ee8] sm:$0xff]
    %v1029 = vld [vmem:[%s1 + $0x1ef0] sm:$0xff]
    %v1030 = vld [vmem:[%s1 + $0x1ef8] sm:$0xff]
    %v1031 = vld [vmem:[%s1 + $0x1f00] sm:$0xff]
    %v1032 = vld [vmem:[%s1 + $0x1f08] sm:$0xff]
    %v1033 = vld [vmem:[%s1 + $0x1f10] sm:$0xff]
    %v1034 = vld [vmem:[%s1 + $0x1f18] sm:$0xff]
    %v1035 = vld [vmem:[%s1 + $0x1f20] sm:$0xff]
    %v1036 = vld [vmem:[%s1 + $0x1f28] sm:$0xff]
    %v1037 = vld [vmem:[%s1 + $0x1f30] sm:$0xff]
    %v1038 = vld [vmem:[%s1 + $0x1f38] sm:$0xff]
    %v1039 = vld [vmem:[%s1 + $0x1f40] sm:$0xff]
    %v1040 = vld [vmem:[%s1 + $0x1f48] sm:$0xff]
    %v1041 = vld [vmem:[%s1 + $0x1f50] sm:$0xff]
    %v1042 = vld [vmem:[%s1 + $0x1f58] sm:$0xff]
    %v1043 = vld [vmem:[%s1 + $0x1f60] sm:$0xff]
    %v1044 = vld [vmem:[%s1 + $0x1f68] sm:$0xff]
    %v1045 = vld [vmem:[%s1 + $0x1f70] sm:$0xff]
    %v1046 = vld [vmem:[%s1 + $0x1f78] sm:$0xff]
    %v1047 = vld [vmem:[%s1 + $0x1f80] sm:$0xff]
    %v1048 = vld [vmem:[%s1 + $0x1f88] sm:$0xff]
    %v1049 = vld [vmem:[%s1 + $0x1f90] sm:$0xff]
    %v1050 = vld [vmem:[%s1 + $0x1f98] sm:$0xff]
    %v1051 = vld [vmem:[%s1 + $0x1fa0] sm:$0xff]
    %v1052 = vld [vmem:[%s1 + $0x1fa8] sm:$0xff]
    %v1053 = vld [vmem:[%s1 + $0x1fb0] sm:$0xff]
    %v1054 = vld [vmem:[%s1 + $0x1fb8] sm:$0xff]
    %v1055 = vld [vmem:[%s1 + $0x1fc0] sm:$0xff]
    %v1056 = vld [vmem:[%s1 + $0x1fc8] sm:$0xff]
    %v1057 = vld [vmem:[%s1 + $0x1fd0] sm:$0xff]
    %v1058 = vld [vmem:[%s1 + $0x1fd8] sm:$0xff]
    %v1059 = vld [vmem:[%s1 + $0x1fe0] sm:$0xff]
    %v1060 = vld [vmem:[%s1 + $0x1fe8] sm:$0xff]
    %v1061 = vld [vmem:[%s1 + $0x1ff0] sm:$0xff]
    %v1062 = vld [vmem:[%s1 + $0x1ff8] sm:$0xff]
    %v1063 = vld [vmem:[%s1 + $0x2000] sm:$0xff]
    %v1064 = vld [vmem:[%s1 + $0x2008] sm:$0xff]
    %v1065 = vld [vmem:[%s1 + $0x2010] sm:$0xff]
    %v1066 = vld [vmem:[%s1 + $0x2018] sm:$0xff]
    %v1067 = vld [vmem:[%s1 + $0x2020] sm:$0xff]
    %v1068 = vld [vmem:[%s1 + $0x2028] sm:$0xff]
    %v1069 = vld [vmem:[%s1 + $0x2030] sm:$0xff]
    %v1070 = vld [vmem:[%s1 + $0x2038] sm:$0xff]
    %v1071 = vld [vmem:[%s1 + $0x2040] sm:$0xff]
    %v1072 = vld [vmem:[%s1 + $0x2048] sm:$0xff]
    %v1073 = vld [vmem:[%s1 + $0x2050] sm:$0xff]
    %v1074 = vld [vmem:[%s1 + $0x2058] sm:$0xff]
    %v1075 = vld [vmem:[%s1 + $0x2060] sm:$0xff]
    %v1076 = vld [vmem:[%s1 + $0x2068] sm:$0xff]
    %v1077 = vld [vmem:[%s1 + $0x2070] sm:$0xff]
    %v1078 = vld [vmem:[%s1 + $0x2078] sm:$0xff]
    %v1079 = vld [vmem:[%s1 + $0x2080] sm:$0xff]
    %v1080 = vld [vmem:[%s1 + $0x2088] sm:$0xff]
    %v1081 = vld [vmem:[%s1 + $0x2090] sm:$0xff]
    %v1082 = vld [vmem:[%s1 + $0x2098] sm:$0xff]
    %v1083 = vld [vmem:[%s1 + $0x20a0] sm:$0xff]
    %v1084 = vld [vmem:[%s1 + $0x20a8] sm:$0xff]
    %v1085 = vld [vmem:[%s1 + $0x20b0] sm:$0xff]
    %v1086 = vld [vmem:[%s1 + $0x20b8] sm:$0xff]
    %v1087 = vld [vmem:[%s1 + $0x20c0] sm:$0xff]
    %v1088 = vld [vmem:[%s1 + $0x20c8] sm:$0xff]
    %v1089 = vld [vmem:[%s1 + $0x20d0] sm:$0xff]
    %v1090 = vld [vmem:[%s1 + $0x20d8] sm:$0xff]
    %v1091 = vld [vmem:[%s1 + $0x20e0] sm:$0xff]
    %v1092 = vld [vmem:[%s1 + $0x20e8] sm:$0xff]
    %v1093 = vld [vmem:[%s1 + $0x20f0] sm:$0xff]
    %v1094 = vld [vmem:[%s1 + $0x20f8] sm:$0xff]
    %v1095 = vld [vmem:[%s1 + $0x2100] sm:$0xff]
    %v1096 = vld [vmem:[%s1 + $0x2108] sm:$0xff]
    %v1097 = vld [vmem:[%s1 + $0x2110] sm:$0xff]
    %v1098 = vld [vmem:[%s1 + $0x2118] sm:$0xff]
    %v1099 = vld [vmem:[%s1 + $0x2120] sm:$0xff]
    %v1100 = vld [vmem:[%s1 + $0x2128] sm:$0xff]
    %v1101 = vld [vmem:[%s1 + $0x2130] sm:$0xff]
    %v1102 = vld [vmem:[%s1 + $0x2138] sm:$0xff]
    %v1103 = vld [vmem:[%s1 + $0x2140] sm:$0xff]
    %v1104 = vld [vmem:[%s1 + $0x2148] sm:$0xff]
    %v1105 = vld [vmem:[%s1 + $0x2150] sm:$0xff]
    %v1106 = vld [vmem:[%s1 + $0x2158] sm:$0xff]
    %v1107 = vld [vmem:[%s1 + $0x2160] sm:$0xff]
    %v1108 = vld [vmem:[%s1 + $0x2168] sm:$0xff]
    %v1109 = vld [vmem:[%s1 + $0x2170] sm:$0xff]
    %v1110 = vld [vmem:[%s1 + $0x2178] sm:$0xff]
    %v1111 = vld [vmem:[%s1 + $0x2180] sm:$0xff]
    %v1112 = vld [vmem:[%s1 + $0x2188] sm:$0xff]
    %v1113 = vld [vmem:[%s1 + $0x2190] sm:$0xff]
    %v1114 = vld [vmem:[%s1 + $0x2198] sm:$0xff]
    %v1115 = vld [vmem:[%s1 + $0x21a0] sm:$0xff]
    %v1116 = vld [vmem:[%s1 + $0x21a8] sm:$0xff]
    %v1117 = vld [vmem:[%s1 + $0x21b0] sm:$0xff]
    %v1118 = vld [vmem:[%s1 + $0x21b8] sm:$0xff]
    %v1119 = vld [vmem:[%s1 + $0x21c0] sm:$0xff]
    %v1120 = vld [vmem:[%s1 + $0x21c8] sm:$0xff]
    %v1121 = vld [vmem:[%s1 + $0x21d0] sm:$0xff]
    %v1122 = vld [vmem:[%s1 + $0x21d8] sm:$0xff]
    %v1123 = vld [vmem:[%s1 + $0x21e0] sm:$0xff]
    %v1124 = vld [vmem:[%s1 + $0x21e8] sm:$0xff]
    %v1125 = vld [vmem:[%s1 + $0x21f0] sm:$0xff]
    %v1126 = vld [vmem:[%s1 + $0x21f8] sm:$0xff]
    %v1127 = vld [vmem:[%s1 + $0x2200] sm:$0xff]
    %v1128 = vld [vmem:[%s1 + $0x2208] sm:$0xff]
    %v1129 = vld [vmem:[%s1 + $0x2210] sm:$0xff]
    %v1130 = vld [vmem:[%s1 + $0x2218] sm:$0xff]
    %v1131 = vld [vmem:[%s1 + $0x2220] sm:$0xff]
    %v1132 = vld [vmem:[%s1 + $0x2228] sm:$0xff]
    %v1133 = vld [vmem:[%s1 + $0x2230] sm:$0xff]
    %v1134 = vld [vmem:[%s1 + $0x2238] sm:$0xff]
    %v1135 = vld [vmem:[%s1 + $0x2240] sm:$0xff]
    %v1136 = vld [vmem:[%s1 + $0x2248] sm:$0xff]
    %v1137 = vld [vmem:[%s1 + $0x2250] sm:$0xff]
    %v1138 = vld [vmem:[%s1 + $0x2258] sm:$0xff]
    %v1139 = vld [vmem:[%s1 + $0x2260] sm:$0xff]
    %v1140 = vld [vmem:[%s1 + $0x2268] sm:$0xff]
    %v1141 = vld [vmem:[%s1 + $0x2270] sm:$0xff]
    %v1142 = vld [vmem:[%s1 + $0x2278] sm:$0xff]
    %v1143 = vld [vmem:[%s1 + $0x2280] sm:$0xff]
    %v1144 = vld [vmem:[%s1 + $0x2288] sm:$0xff]
    %v1145 = vld [vmem:[%s1 + $0x2290] sm:$0xff]
    %v1146 = vld [vmem:[%s1 + $0x2298] sm:$0xff]
    %v1147 = vld [vmem:[%s1 + $0x22a0] sm:$0xff]
    %v1148 = vld [vmem:[%s1 + $0x22a8] sm:$0xff]
    %v1149 = vld [vmem:[%s1 + $0x22b0] sm:$0xff]
    %v1150 = vld [vmem:[%s1 + $0x22b8] sm:$0xff]
    %v1151 = vld [vmem:[%s1 + $0x22c0] sm:$0xff]
    %v1152 = vld [vmem:[%s1 + $0x22c8] sm:$0xff]
    %v1153 = vld [vmem:[%s1 + $0x22d0] sm:$0xff]
    %v1154 = vld [vmem:[%s1 + $0x22d8] sm:$0xff]
    %v1155 = vld [vmem:[%s1 + $0x22e0] sm:$0xff]
    %v1156 = vld [vmem:[%s1 + $0x22e8] sm:$0xff]
    %v1157 = vld [vmem:[%s1 + $0x22f0] sm:$0xff]
    %v1158 = vld [vmem:[%s1 + $0x22f8] sm:$0xff]
    %v1159 = vld [vmem:[%s1 + $0x2300] sm:$0xff]
    %v1160 = vld [vmem:[%s1 + $0x2308] sm:$0xff]
    %v1161 = vld [vmem:[%s1 + $0x2310] sm:$0xff]
    %v1162 = vld [vmem:[%s1 + $0x2318] sm:$0xff]
    %v1163 = vld [vmem:[%s1 + $0x2320] sm:$0xff]
    %v1164 = vld [vmem:[%s1 + $0x2328] sm:$0xff]
    %v1165 = vld [vmem:[%s1 + $0x2330] sm:$0xff]
    %v1166 = vld [vmem:[%s1 + $0x2338] sm:$0xff]
    %v1167 = vld [vmem:[%s1 + $0x2340] sm:$0xff]
    %v1168 = vld [vmem:[%s1 + $0x2348] sm:$0xff]
    %v1169 = vld [vmem:[%s1 + $0x2350] sm:$0xff]
    %v1170 = vld [vmem:[%s1 + $0x2358] sm:$0xff]
    %v1171 = vld [vmem:[%s1 + $0x2360] sm:$0xff]
    %v1172 = vld [vmem:[%s1 + $0x2368] sm:$0xff]
    %v1173 = vld [vmem:[%s1 + $0x2370] sm:$0xff]
    %v1174 = vld [vmem:[%s1 + $0x2378] sm:$0xff]
    %v1175 = vld [vmem:[%s1 + $0x2380] sm:$0xff]
    %v1176 = vld [vmem:[%s1 + $0x2388] sm:$0xff]
    %v1177 = vld [vmem:[%s1 + $0x2390] sm:$0xff]
    %v1178 = vld [vmem:[%s1 + $0x2398] sm:$0xff]
    %v1179 = vld [vmem:[%s1 + $0x23a0] sm:$0xff]
    %v1180 = vld [vmem:[%s1 + $0x23a8] sm:$0xff]
    %v1181 = vld [vmem:[%s1 + $0x23b0] sm:$0xff]
    %v1182 = vld [vmem:[%s1 + $0x23b8] sm:$0xff]
    %v1183 = vld [vmem:[%s1 + $0x23c0] sm:$0xff]
    %v1184 = vld [vmem:[%s1 + $0x23c8] sm:$0xff]
    %v1185 = vld [vmem:[%s1 + $0x23d0] sm:$0xff]
    %v1186 = vld [vmem:[%s1 + $0x23d8] sm:$0xff]
    %v1187 = vld [vmem:[%s1 + $0x23e0] sm:$0xff]
    %v1188 = vld [vmem:[%s1 + $0x23e8] sm:$0xff]
    %v1189 = vld [vmem:[%s1 + $0x23f0] sm:$0xff]
    %v1190 = vld [vmem:[%s1 + $0x23f8] sm:$0xff]
    %v1191 = vld [vmem:[%s1 + $0x2400] sm:$0xff]
    %v1192 = vld [vmem:[%s1 + $0x2408] sm:$0xff]
    %v1193 = vld [vmem:[%s1 + $0x2410] sm:$0xff]
    %v1194 = vld [vmem:[%s1 + $0x2418] sm:$0xff]
    %v1195 = vld [vmem:[%s1 + $0x2420] sm:$0xff]
    %v1196 = vld [vmem:[%s1 + $0x2428] sm:$0xff]
    %v1197 = vld [vmem:[%s1 + $0x2430] sm:$0xff]
    %v1198 = vld [vmem:[%s1 + $0x2438] sm:$0xff]
    %v1199 = vld [vmem:[%s1 + $0x2440] sm:$0xff]
    %v1200 = vld [vmem:[%s1 + $0x2448] sm:$0xff]
    %v1201 = vld [vmem:[%s1 + $0x2450] sm:$0xff]
    %v1202 = vld [vmem:[%s1 + $0x2458] sm:$0xff]
    %v1203 = vld [vmem:[%s1 + $0x2460] sm:$0xff]
    %v1204 = vld [vmem:[%s1 + $0x2468] sm:$0xff]
    %v1205 = vld [vmem:[%s1 + $0x2470] sm:$0xff]
    %v1206 = vld [vmem:[%s1 + $0x2478] sm:$0xff]
    %v1207 = vld [vmem:[%s1 + $0x2480] sm:$0xff]
    %v1208 = vld [vmem:[%s1 + $0x2488] sm:$0xff]
    %v1209 = vld [vmem:[%s1 + $0x2490] sm:$0xff]
    %v1210 = vld [vmem:[%s1 + $0x2498] sm:$0xff]
    %v1211 = vld [vmem:[%s1 + $0x24a0] sm:$0xff]
    %v1212 = vld [vmem:[%s1 + $0x24a8] sm:$0xff]
    %v1213 = vld [vmem:[%s1 + $0x24b0] sm:$0xff]
    %v1214 = vld [vmem:[%s1 + $0x24b8] sm:$0xff]
    %v1215 = vld [vmem:[%s1 + $0x24c0] sm:$0xff]
    %v1216 = vld [vmem:[%s1 + $0x24c8] sm:$0xff]
    %v1217 = vld [vmem:[%s1 + $0x24d0] sm:$0xff]
    %v1218 = vld [vmem:[%s1 + $0x24d8] sm:$0xff]
    %v1219 = vld [vmem:[%s1 + $0x24e0] sm:$0xff]
    %v1220 = vld [vmem:[%s1 + $0x24e8] sm:$0xff]
    %v1221 = vld [vmem:[%s1 + $0x24f0] sm:$0xff]
    %v1222 = vld [vmem:[%s1 + $0x24f8] sm:$0xff]
    %v1223 = vld [vmem:[%s1 + $0x2500] sm:$0xff]
    %v1224 = vld [vmem:[%s1 + $0x2508] sm:$0xff]
    %v1225 = vld [vmem:[%s1 + $0x2510] sm:$0xff]
    %v1226 = vld [vmem:[%s1 + $0x2518] sm:$0xff]
    %v1227 = vld [vmem:[%s1 + $0x2520] sm:$0xff]
    %v1228 = vld [vmem:[%s1 + $0x2528] sm:$0xff]
    %v1229 = vld [vmem:[%s1 + $0x2530] sm:$0xff]
    %v1230 = vld [vmem:[%s1 + $0x2538] sm:$0xff]
    %v1231 = vld [vmem:[%s1 + $0x2540] sm:$0xff]
    %v1232 = vld [vmem:[%s1 + $0x2548] sm:$0xff]
    %v1233 = vld [vmem:[%s1 + $0x2550] sm:$0xff]
    %v1234 = vld [vmem:[%s1 + $0x2558] sm:$0xff]
    %v1235 = vld [vmem:[%s1 + $0x2560] sm:$0xff]
    %v1236 = vld [vmem:[%s1 + $0x2568] sm:$0xff]
    %v1237 = vld [vmem:[%s1 + $0x2570] sm:$0xff]
    %v1238 = vld [vmem:[%s1 + $0x2578] sm:$0xff]
    %v1239 = vld [vmem:[%s1 + $0x2580] sm:$0xff]
    %v1240 = vld [vmem:[%s1 + $0x2588] sm:$0xff]
    %v1241 = vld [vmem:[%s1 + $0x2590] sm:$0xff]
    %v1242 = vld [vmem:[%s1 + $0x2598] sm:$0xff]
    %v1243 = vld [vmem:[%s1 + $0x25a0] sm:$0xff]
    %v1244 = vld [vmem:[%s1 + $0x25a8] sm:$0xff]
    %v1245 = vld [vmem:[%s1 + $0x25b0] sm:$0xff]
    %v1246 = vld [vmem:[%s1 + $0x25b8] sm:$0xff]
    %v1247 = vld [vmem:[%s1 + $0x25c0] sm:$0xff]
    %v1248 = vld [vmem:[%s1 + $0x25c8] sm:$0xff]
    %v1249 = vld [vmem:[%s1 + $0x25d0] sm:$0xff]
    %v1250 = vld [vmem:[%s1 + $0x25d8] sm:$0xff]
    %v1251 = vld [vmem:[%s1 + $0x25e0] sm:$0xff]
    %v1252 = vld [vmem:[%s1 + $0x25e8] sm:$0xff]
    %v1253 = vld [vmem:[%s1 + $0x25f0] sm:$0xff]
    %v1254 = vld [vmem:[%s1 + $0x25f8] sm:$0xff]
    %v1255 = vld [vmem:[%s1 + $0x2600] sm:$0xff]
    %v1256 = vld [vmem:[%s1 + $0x2608] sm:$0xff]
    %v1257 = vld [vmem:[%s1 + $0x2610] sm:$0xff]
    %v1258 = vld [vmem:[%s1 + $0x2618] sm:$0xff]
    %v1259 = vld [vmem:[%s1 + $0x2620] sm:$0xff]
    %v1260 = vld [vmem:[%s1 + $0x2628] sm:$0xff]
    %v1261 = vld [vmem:[%s1 + $0x2630] sm:$0xff]
    %v1262 = vld [vmem:[%s1 + $0x2638] sm:$0xff]
    %v1263 = vld [vmem:[%s1 + $0x2640] sm:$0xff]
    %v1264 = vld [vmem:[%s1 + $0x2648] sm:$0xff]
    %v1265 = vld [vmem:[%s1 + $0x2650] sm:$0xff]
    %v1266 = vld [vmem:[%s1 + $0x2658] sm:$0xff]
    %v1267 = vld [vmem:[%s1 + $0x2660] sm:$0xff]
    %v1268 = vld [vmem:[%s1 + $0x2668] sm:$0xff]
    %v1269 = vld [vmem:[%s1 + $0x2670] sm:$0xff]
    %v1270 = vld [vmem:[%s1 + $0x2678] sm:$0xff]
    %v1271 = vld [vmem:[%s1 + $0x2680] sm:$0xff]
    %v1272 = vld [vmem:[%s1 + $0x2688] sm:$0xff]
    %v1273 = vld [vmem:[%s1 + $0x2690] sm:$0xff]
    %v1274 = vld [vmem:[%s1 + $0x2698] sm:$0xff]
    %v1275 = vld [vmem:[%s1 + $0x26a0] sm:$0xff]
    %v1276 = vld [vmem:[%s1 + $0x26a8] sm:$0xff]
    %v1277 = vld [vmem:[%s1 + $0x26b0] sm:$0xff]
    %v1278 = vld [vmem:[%s1 + $0x26b8] sm:$0xff]
    %v1279 = vld [vmem:[%s1 + $0x26c0] sm:$0xff]
    %v1280 = vld [vmem:[%s1 + $0x26c8] sm:$0xff]
    %v1281 = vld [vmem:[%s1 + $0x26d0] sm:$0xff]
    %v1282 = vld [vmem:[%s1 + $0x26d8] sm:$0xff]
    %v1283 = vld [vmem:[%s1 + $0x26e0] sm:$0xff]
    %v1284 = vld [vmem:[%s1 + $0x26e8] sm:$0xff]
    %v1285 = vld [vmem:[%s1 + $0x26f0] sm:$0xff]
    %v1286 = vld [vmem:[%s1 + $0x26f8] sm:$0xff]
    %v1287 = vld [vmem:[%s1 + $0x2700] sm:$0xff]
    %v1288 = vld [vmem:[%s1 + $0x2708] sm:$0xff]
    %v1289 = vld [vmem:[%s1 + $0x2710] sm:$0xff]
    %v1290 = vld [vmem:[%s1 + $0x2718] sm:$0xff]
    %v1291 = vld [vmem:[%s1 + $0x2720] sm:$0xff]
    %v1292 = vld [vmem:[%s1 + $0x2728] sm:$0xff]
    %v1293 = vld [vmem:[%s1 + $0x2730] sm:$0xff]
    %v1294 = vld [vmem:[%s1 + $0x2738] sm:$0xff]
    %v1295 = vld [vmem:[%s1 + $0x2740] sm:$0xff]
    %v1296 = vld [vmem:[%s1 + $0x2748] sm:$0xff]
    %v1297 = vld [vmem:[%s1 + $0x2750] sm:$0xff]
    %v1298 = vld [vmem:[%s1 + $0x2758] sm:$0xff]
    %v1299 = vld [vmem:[%s1 + $0x2760] sm:$0xff]
    %v1300 = vld [vmem:[%s1 + $0x2768] sm:$0xff]
    %v1301 = vld [vmem:[%s1 + $0x2770] sm:$0xff]
    %v1302 = vld [vmem:[%s1 + $0x2778] sm:$0xff]
    %v1303 = vld [vmem:[%s1 + $0x2780] sm:$0xff]
    %v1304 = vld [vmem:[%s1 + $0x2788] sm:$0xff]
    %v1305 = vld [vmem:[%s1 + $0x2790] sm:$0xff]
    %v1306 = vld [vmem:[%s1 + $0x2798] sm:$0xff]
    %v1307 = vld [vmem:[%s1 + $0x27a0] sm:$0xff]
    %v1308 = vld [vmem:[%s1 + $0x27a8] sm:$0xff]
    %v1309 = vld [vmem:[%s1 + $0x27b0] sm:$0xff]
    %v1310 = vld [vmem:[%s1 + $0x27b8] sm:$0xff]
    %v1311 = vld [vmem:[%s1 + $0x27c0] sm:$0xff]
    %v1312 = vld [vmem:[%s1 + $0x27c8] sm:$0xff]
    %v1313 = vld [vmem:[%s1 + $0x27d0] sm:$0xff]
    %v1314 = vld [vmem:[%s1 + $0x27d8] sm:$0xff]
    %v1315 = vld [vmem:[%s1 + $0x27e0] sm:$0xff]
    %v1316 = vld [vmem:[%s1 + $0x27e8] sm:$0xff]
    %v1317 = vld [vmem:[%s1 + $0x27f0] sm:$0xff]
    %v1318 = vld [vmem:[%s1 + $0x27f8] sm:$0xff]
    %v1319 = vld [vmem:[%s1 + $0x2800] sm:$0xff]
    %v1320 = vld [vmem:[%s1 + $0x2808] sm:$0xff]
    %v1321 = vld [vmem:[%s1 + $0x2810] sm:$0xff]
    %v1322 = vld [vmem:[%s1 + $0x2818] sm:$0xff]
    %v1323 = vld [vmem:[%s1 + $0x2820] sm:$0xff]
    %v1324 = vld [vmem:[%s1 + $0x2828] sm:$0xff]
    %v1325 = vld [vmem:[%s1 + $0x2830] sm:$0xff]
    %v1326 = vld [vmem:[%s1 + $0x2838] sm:$0xff]
    %v1327 = vld [vmem:[%s1 + $0x2840] sm:$0xff]
    %v1328 = vld [vmem:[%s1 + $0x2848] sm:$0xff]
    %v1329 = vld [vmem:[%s1 + $0x2850] sm:$0xff]
    %v1330 = vld [vmem:[%s1 + $0x2858] sm:$0xff]
    %v1331 = vld [vmem:[%s1 + $0x2860] sm:$0xff]
    %v1332 = vld [vmem:[%s1 + $0x2868] sm:$0xff]
    %v1333 = vld [vmem:[%s1 + $0x2870] sm:$0xff]
    %v1334 = vld [vmem:[%s1 + $0x2878] sm:$0xff]
    %v1335 = vld [vmem:[%s1 + $0x2880] sm:$0xff]
    %v1336 = vld [vmem:[%s1 + $0x2888] sm:$0xff]
    %v1337 = vld [vmem:[%s1 + $0x2890] sm:$0xff]
    %v1338 = vld [vmem:[%s1 + $0x2898] sm:$0xff]
    %v1339 = vld [vmem:[%s1 + $0x28a0] sm:$0xff]
    %v1340 = vld [vmem:[%s1 + $0x28a8] sm:$0xff]
    %v1341 = vld [vmem:[%s1 + $0x28b0] sm:$0xff]
    %v1342 = vld [vmem:[%s1 + $0x28b8] sm:$0xff]
    %v1343 = vld [vmem:[%s1 + $0x28c0] sm:$0xff]
    %v1344 = vld [vmem:[%s1 + $0x28c8] sm:$0xff]
    %v1345 = vld [vmem:[%s1 + $0x28d0] sm:$0xff]
    %v1346 = vld [vmem:[%s1 + $0x28d8] sm:$0xff]
    %v1347 = vld [vmem:[%s1 + $0x28e0] sm:$0xff]
    %v1348 = vld [vmem:[%s1 + $0x28e8] sm:$0xff]
    %v1349 = vld [vmem:[%s1 + $0x28f0] sm:$0xff]
    %v1350 = vld [vmem:[%s1 + $0x28f8] sm:$0xff]
    %v1351 = vld [vmem:[%s1 + $0x2900] sm:$0xff]
    %v1352 = vld [vmem:[%s1 + $0x2908] sm:$0xff]
    %v1353 = vld [vmem:[%s1 + $0x2910] sm:$0xff]
    %v1354 = vld [vmem:[%s1 + $0x2918] sm:$0xff]
    %v1355 = vld [vmem:[%s1 + $0x2920] sm:$0xff]
    %v1356 = vld [vmem:[%s1 + $0x2928] sm:$0xff]
    %v1357 = vld [vmem:[%s1 + $0x2930] sm:$0xff]
    %v1358 = vld [vmem:[%s1 + $0x2938] sm:$0xff]
    %v1359 = vld [vmem:[%s1 + $0x2940] sm:$0xff]
    %v1360 = vld [vmem:[%s1 + $0x2948] sm:$0xff]
    %v1361 = vld [vmem:[%s1 + $0x2950] sm:$0xff]
    %v1362 = vld [vmem:[%s1 + $0x2958] sm:$0xff]
    %v1363 = vld [vmem:[%s1 + $0x2960] sm:$0xff]
    %v1364 = vld [vmem:[%s1 + $0x2968] sm:$0xff]
    %v1365 = vld [vmem:[%s1 + $0x2970] sm:$0xff]
    %v1366 = vld [vmem:[%s1 + $0x2978] sm:$0xff]
    %v1367 = vld [vmem:[%s1 + $0x2980] sm:$0xff]
    %v1368 = vld [vmem:[%s1 + $0x2988] sm:$0xff]
    %v1369 = vld [vmem:[%s1 + $0x2990] sm:$0xff]
    %v1370 = vld [vmem:[%s1 + $0x2998] sm:$0xff]
    %v1371 = vld [vmem:[%s1 + $0x29a0] sm:$0xff]
    %v1372 = vld [vmem:[%s1 + $0x29a8] sm:$0xff]
    %v1373 = vld [vmem:[%s1 + $0x29b0] sm:$0xff]
    %v1374 = vld [vmem:[%s1 + $0x29b8] sm:$0xff]
    %v1375 = vld [vmem:[%s1 + $0x29c0] sm:$0xff]
    %v1376 = vld [vmem:[%s1 + $0x29c8] sm:$0xff]
    %v1377 = vld [vmem:[%s1 + $0x29d0] sm:$0xff]
    %v1378 = vld [vmem:[%s1 + $0x29d8] sm:$0xff]
    %v1379 = vld [vmem:[%s1 + $0x29e0] sm:$0xff]
    %v1380 = vld [vmem:[%s1 + $0x29e8] sm:$0xff]
    %v1381 = vld [vmem:[%s1 + $0x29f0] sm:$0xff]
    %v1382 = vld [vmem:[%s1 + $0x29f8] sm:$0xff]
    %v1383 = vld [vmem:[%s1 + $0x2a00] sm:$0xff]
    %v1384 = vld [vmem:[%s1 + $0x2a08] sm:$0xff]
    %v1385 = vld [vmem:[%s1 + $0x2a10] sm:$0xff]
    %v1386 = vld [vmem:[%s1 + $0x2a18] sm:$0xff]
    %v1387 = vld [vmem:[%s1 + $0x2a20] sm:$0xff]
    %v1388 = vld [vmem:[%s1 + $0x2a28] sm:$0xff]
    %v1389 = vld [vmem:[%s1 + $0x2a30] sm:$0xff]
    %v1390 = vld [vmem:[%s1 + $0x2a38] sm:$0xff]
    %v1391 = vld [vmem:[%s1 + $0x2a40] sm:$0xff]
    %v1392 = vld [vmem:[%s1 + $0x2a48] sm:$0xff]
    %v1393 = vld [vmem:[%s1 + $0x2a50] sm:$0xff]
    %v1394 = vld [vmem:[%s1 + $0x2a58] sm:$0xff]
    %v1395 = vld [vmem:[%s1 + $0x2a60] sm:$0xff]
    %v1396 = vld [vmem:[%s1 + $0x2a68] sm:$0xff]
    %v1397 = vld [vmem:[%s1 + $0x2a70] sm:$0xff]
    %v1398 = vld [vmem:[%s1 + $0x2a78] sm:$0xff]
    %v1399 = vld [vmem:[%s1 + $0x2a80] sm:$0xff]
    %v1400 = vld [vmem:[%s1 + $0x2a88] sm:$0xff]
    %v1401 = vld [vmem:[%s1 + $0x2a90] sm:$0xff]
    %v1402 = vld [vmem:[%s1 + $0x2a98] sm:$0xff]
    %v1403 = vld [vmem:[%s1 + $0x2aa0] sm:$0xff]
    %v1404 = vld [vmem:[%s1 + $0x2aa8] sm:$0xff]
    %v1405 = vld [vmem:[%s1 + $0x2ab0] sm:$0xff]
    %v1406 = vld [vmem:[%s1 + $0x2ab8] sm:$0xff]
    %v1407 = vld [vmem:[%s1 + $0x2ac0] sm:$0xff]
    %v1408 = vld [vmem:[%s1 + $0x2ac8] sm:$0xff]
    %v1409 = vld [vmem:[%s1 + $0x2ad0] sm:$0xff]
    %v1410 = vld [vmem:[%s1 + $0x2ad8] sm:$0xff]
    %v1411 = vld [vmem:[%s1 + $0x2ae0] sm:$0xff]
    %v1412 = vld [vmem:[%s1 + $0x2ae8] sm:$0xff]
    %v1413 = vld [vmem:[%s1 + $0x2af0] sm:$0xff]
    %v1414 = vld [vmem:[%s1 + $0x2af8] sm:$0xff]
    %v1415 = vld [vmem:[%s1 + $0x2b00] sm:$0xff]
    %v1416 = vld [vmem:[%s1 + $0x2b08] sm:$0xff]
    %v1417 = vld [vmem:[%s1 + $0x2b10] sm:$0xff]
    %v1418 = vld [vmem:[%s1 + $0x2b18] sm:$0xff]
    %v1419 = vld [vmem:[%s1 + $0x2b20] sm:$0xff]
    %v1420 = vld [vmem:[%s1 + $0x2b28] sm:$0xff]
    %v1421 = vld [vmem:[%s1 + $0x2b30] sm:$0xff]
    %v1422 = vld [vmem:[%s1 + $0x2b38] sm:$0xff]
    %v1423 = vld [vmem:[%s1 + $0x2b40] sm:$0xff]
    %v1424 = vld [vmem:[%s1 + $0x2b48] sm:$0xff]
    %v1425 = vld [vmem:[%s1 + $0x2b50] sm:$0xff]
    %v1426 = vld [vmem:[%s1 + $0x2b58] sm:$0xff]
    %v1427 = vld [vmem:[%s1 + $0x2b60] sm:$0xff]
    %v1428 = vld [vmem:[%s1 + $0x2b68] sm:$0xff]
    %v1429 = vld [vmem:[%s1 + $0x2b70] sm:$0xff]
    %v1430 = vld [vmem:[%s1 + $0x2b78] sm:$0xff]
    %v1431 = vld [vmem:[%s1 + $0x2b80] sm:$0xff]
    %v1432 = vld [vmem:[%s1 + $0x2b88] sm:$0xff]
    %v1433 = vld [vmem:[%s1 + $0x2b90] sm:$0xff]
    %v1434 = vld [vmem:[%s1 + $0x2b98] sm:$0xff]
    %v1435 = vld [vmem:[%s1 + $0x2ba0] sm:$0xff]
    %v1436 = vld [vmem:[%s1 + $0x2ba8] sm:$0xff]
    %v1437 = vld [vmem:[%s1 + $0x2bb0] sm:$0xff]
    %v1438 = vld [vmem:[%s1 + $0x2bb8] sm:$0xff]
    %v1439 = vld [vmem:[%s1 + $0x2bc0] sm:$0xff]
    %v1440 = vld [vmem:[%s1 + $0x2bc8] sm:$0xff]
    %v1441 = vld [vmem:[%s1 + $0x2bd0] sm:$0xff]
    %v1442 = vld [vmem:[%s1 + $0x2bd8] sm:$0xff]
    %v1443 = vld [vmem:[%s1 + $0x2be0] sm:$0xff]
    %v1444 = vld [vmem:[%s1 + $0x2be8] sm:$0xff]
    %v1445 = vld [vmem:[%s1 + $0x2bf0] sm:$0xff]
    %v1446 = vld [vmem:[%s1 + $0x2bf8] sm:$0xff]
    %v1447 = vld [vmem:[%s1 + $0x2c00] sm:$0xff]
    %v1448 = vld [vmem:[%s1 + $0x2c08] sm:$0xff]
    %v1449 = vld [vmem:[%s1 + $0x2c10] sm:$0xff]
    %v1450 = vld [vmem:[%s1 + $0x2c18] sm:$0xff]
    %v1451 = vld [vmem:[%s1 + $0x2c20] sm:$0xff]
    %v1452 = vld [vmem:[%s1 + $0x2c28] sm:$0xff]
    %v1453 = vld [vmem:[%s1 + $0x2c30] sm:$0xff]
    %v1454 = vld [vmem:[%s1 + $0x2c38] sm:$0xff]
    %v1455 = vld [vmem:[%s1 + $0x2c40] sm:$0xff]
    %v1456 = vld [vmem:[%s1 + $0x2c48] sm:$0xff]
    %v1457 = vld [vmem:[%s1 + $0x2c50] sm:$0xff]
    %v1458 = vld [vmem:[%s1 + $0x2c58] sm:$0xff]
    %v1459 = vld [vmem:[%s1 + $0x2c60] sm:$0xff]
    %v1460 = vld [vmem:[%s1 + $0x2c68] sm:$0xff]
    %v1461 = vld [vmem:[%s1 + $0x2c70] sm:$0xff]
    %v1462 = vld [vmem:[%s1 + $0x2c78] sm:$0xff]
    %v1463 = vld [vmem:[%s1 + $0x2c80] sm:$0xff]
    %v1464 = vld [vmem:[%s1 + $0x2c88] sm:$0xff]
    %v1465 = vld [vmem:[%s1 + $0x2c90] sm:$0xff]
    %v1466 = vld [vmem:[%s1 + $0x2c98] sm:$0xff]
    %v1467 = vld [vmem:[%s1 + $0x2ca0] sm:$0xff]
    %v1468 = vld [vmem:[%s1 + $0x2ca8] sm:$0xff]
    %v1469 = vld [vmem:[%s1 + $0x2cb0] sm:$0xff]
    %v1470 = vld [vmem:[%s1 + $0x2cb8] sm:$0xff]
    %v1471 = vld [vmem:[%s1 + $0x2cc0] sm:$0xff]
    %v1472 = vld [vmem:[%s1 + $0x2cc8] sm:$0xff]
    %v1473 = vld [vmem:[%s1 + $0x2cd0] sm:$0xff]
    %v1474 = vld [vmem:[%s1 + $0x2cd8] sm:$0xff]
    %v1475 = vld [vmem:[%s1 + $0x2ce0] sm:$0xff]
    %v1476 = vld [vmem:[%s1 + $0x2ce8] sm:$0xff]
    %v1477 = vld [vmem:[%s1 + $0x2cf0] sm:$0xff]
    %v1478 = vld [vmem:[%s1 + $0x2cf8] sm:$0xff]
    %v1479 = vld [vmem:[%s1 + $0x2d00] sm:$0xff]
    %v1480 = vld [vmem:[%s1 + $0x2d08] sm:$0xff]
    %v1481 = vld [vmem:[%s1 + $0x2d10] sm:$0xff]
    %v1482 = vld [vmem:[%s1 + $0x2d18] sm:$0xff]
    %v1483 = vld [vmem:[%s1 + $0x2d20] sm:$0xff]
    %v1484 = vld [vmem:[%s1 + $0x2d28] sm:$0xff]
    %v1485 = vld [vmem:[%s1 + $0x2d30] sm:$0xff]
    %v1486 = vld [vmem:[%s1 + $0x2d38] sm:$0xff]
    %v1487 = vld [vmem:[%s1 + $0x2d40] sm:$0xff]
    %v1488 = vld [vmem:[%s1 + $0x2d48] sm:$0xff]
    %v1489 = vld [vmem:[%s1 + $0x2d50] sm:$0xff]
    %v1490 = vld [vmem:[%s1 + $0x2d58] sm:$0xff]
    %v1491 = vld [vmem:[%s1 + $0x2d60] sm:$0xff]
    %v1492 = vld [vmem:[%s1 + $0x2d68] sm:$0xff]
    %v1493 = vld [vmem:[%s1 + $0x2d70] sm:$0xff]
    %v1494 = vld [vmem:[%s1 + $0x2d78] sm:$0xff]
    %v1495 = vld [vmem:[%s1 + $0x2d80] sm:$0xff]
    %v1496 = vld [vmem:[%s1 + $0x2d88] sm:$0xff]
    %v1497 = vld [vmem:[%s1 + $0x2d90] sm:$0xff]
    %v1498 = vld [vmem:[%s1 + $0x2d98] sm:$0xff]
    %v1499 = vld [vmem:[%s1 + $0x2da0] sm:$0xff]
    %v1500 = vld [vmem:[%s1 + $0x2da8] sm:$0xff]
    %v1501 = vld [vmem:[%s1 + $0x2db0] sm:$0xff]
    %v1502 = vld [vmem:[%s1 + $0x2db8] sm:$0xff]
    %v1503 = vld [vmem:[%s1 + $0x2dc0] sm:$0xff]
    %v1504 = vld [vmem:[%s1 + $0x2dc8] sm:$0xff]
    %v1505 = vld [vmem:[%s1 + $0x2dd0] sm:$0xff]
    %v1506 = vld [vmem:[%s1 + $0x2dd8] sm:$0xff]
    %v1507 = vld [vmem:[%s1 + $0x2de0] sm:$0xff]
    %v1508 = vld [vmem:[%s1 + $0x2de8] sm:$0xff]
    %v1509 = vld [vmem:[%s1 + $0x2df0] sm:$0xff]
    %v1510 = vld [vmem:[%s1 + $0x2df8] sm:$0xff]
    %v1511 = vld [vmem:[%s1 + $0x2e00] sm:$0xff]
    %v1512 = vld [vmem:[%s1 + $0x2e08] sm:$0xff]
    %v1513 = vld [vmem:[%s1 + $0x2e10] sm:$0xff]
    %v1514 = vld [vmem:[%s1 + $0x2e18] sm:$0xff]
    %v1515 = vld [vmem:[%s1 + $0x2e20] sm:$0xff]
    %v1516 = vld [vmem:[%s1 + $0x2e28] sm:$0xff]
    %v1517 = vld [vmem:[%s1 + $0x2e30] sm:$0xff]
    %v1518 = vld [vmem:[%s1 + $0x2e38] sm:$0xff]
    %v1519 = vld [vmem:[%s1 + $0x2e40] sm:$0xff]
    %v1520 = vld [vmem:[%s1 + $0x2e48] sm:$0xff]
    %v1521 = vld [vmem:[%s1 + $0x2e50] sm:$0xff]
    %v1522 = vld [vmem:[%s1 + $0x2e58] sm:$0xff]
    %v1523 = vld [vmem:[%s1 + $0x2e60] sm:$0xff]
    %v1524 = vld [vmem:[%s1 + $0x2e68] sm:$0xff]
    %v1525 = vld [vmem:[%s1 + $0x2e70] sm:$0xff]
    %v1526 = vld [vmem:[%s1 + $0x2e78] sm:$0xff]
    %v1527 = vld [vmem:[%s1 + $0x2e80] sm:$0xff]
    %v1528 = vld [vmem:[%s1 + $0x2e88] sm:$0xff]
    %v1529 = vld [vmem:[%s1 + $0x2e90] sm:$0xff]
    %v1530 = vld [vmem:[%s1 + $0x2e98] sm:$0xff]
    %v1531 = vld [vmem:[%s1 + $0x2ea0] sm:$0xff]
    %v1532 = vld [vmem:[%s1 + $0x2ea8] sm:$0xff]
    %v1533 = vld [vmem:[%s1 + $0x2eb0] sm:$0xff]
    %v1534 = vld [vmem:[%s1 + $0x2eb8] sm:$0xff]
    %v1535 = vld [vmem:[%s1 + $0x2ec0] sm:$0xff]
    %v1536 = vld [vmem:[%s1 + $0x2ec8] sm:$0xff]
    %v1537 = vld [vmem:[%s1 + $0x2ed0] sm:$0xff]
    %v1538 = vld [vmem:[%s1 + $0x2ed8] sm:$0xff]
    %v1539 = vld [vmem:[%s1 + $0x2ee0] sm:$0xff]
    %v1540 = vld [vmem:[%s1 + $0x2ee8] sm:$0xff]
    %v1541 = vld [vmem:[%s1 + $0x2ef0] sm:$0xff]
    %v1542 = vld [vmem:[%s1 + $0x2ef8] sm:$0xff]
    %v1543 = vld [vmem:[%s1 + $0x2f00] sm:$0xff]
    %v1544 = vld [vmem:[%s1 + $0x2f08] sm:$0xff]
    %v1545 = vld [vmem:[%s1 + $0x2f10] sm:$0xff]
    %v1546 = vld [vmem:[%s1 + $0x2f18] sm:$0xff]
    %v1547 = vld [vmem:[%s1 + $0x2f20] sm:$0xff]
    %v1548 = vld [vmem:[%s1 + $0x2f28] sm:$0xff]
    %v1549 = vld [vmem:[%s1 + $0x2f30] sm:$0xff]
    %v1550 = vld [vmem:[%s1 + $0x2f38] sm:$0xff]
    %v1551 = vld [vmem:[%s1 + $0x2f40] sm:$0xff]
    %v1552 = vld [vmem:[%s1 + $0x2f48] sm:$0xff]
    %v1553 = vld [vmem:[%s1 + $0x2f50] sm:$0xff]
    %v1554 = vld [vmem:[%s1 + $0x2f58] sm:$0xff]
    %v1555 = vld [vmem:[%s1 + $0x2f60] sm:$0xff]
    %v1556 = vld [vmem:[%s1 + $0x2f68] sm:$0xff]
    %v1557 = vld [vmem:[%s1 + $0x2f70] sm:$0xff]
    %v1558 = vld [vmem:[%s1 + $0x2f78] sm:$0xff]
    %v1559 = vld [vmem:[%s1 + $0x2f80] sm:$0xff]
    %v1560 = vld [vmem:[%s1 + $0x2f88] sm:$0xff]
    %v1561 = vld [vmem:[%s1 + $0x2f90] sm:$0xff]
    %v1562 = vld [vmem:[%s1 + $0x2f98] sm:$0xff]
    %v1563 = vld [vmem:[%s1 + $0x2fa0] sm:$0xff]
    %v1564 = vld [vmem:[%s1 + $0x2fa8] sm:$0xff]
    %v1565 = vld [vmem:[%s1 + $0x2fb0] sm:$0xff]
    %v1566 = vld [vmem:[%s1 + $0x2fb8] sm:$0xff]
    %v1567 = vld [vmem:[%s1 + $0x2fc0] sm:$0xff]
    %v1568 = vld [vmem:[%s1 + $0x2fc8] sm:$0xff]
    %v1569 = vld [vmem:[%s1 + $0x2fd0] sm:$0xff]
    %v1570 = vld [vmem:[%s1 + $0x2fd8] sm:$0xff]
    %v1571 = vld [vmem:[%s1 + $0x2fe0] sm:$0xff]
    %v1572 = vld [vmem:[%s1 + $0x2fe8] sm:$0xff]
    %v1573 = vld [vmem:[%s1 + $0x2ff0] sm:$0xff]
    %v1574 = vld [vmem:[%s1 + $0x2ff8] sm:$0xff]
    %v1575 = vld [vmem:[%s2] sm:$0x1]
    %v1577 = vlaneseq
    %v1578 = vshrl.u32 %v1577, 7
    %v1579 = vsub.s32 0, %v1578
    %v1580 = vrot.slane %v1575, %v1579
    %v1606 = vcombine.high %v15, %v15
    %v1608 = vunpack.c.l.s4 1983009808
    %v1609 = vunpack.c.0.s8 %v1608
    %v1610 = vlaneseq
    %v1611 = vshrl.u32 %v1610, 7
    %v1612 = vsub.s32 %v1609, %v1611
    %v1613 = vrot.slane %v15, %v1612
    %v1615 = vunpack.c.l.s4 1983009808
    %v1616 = vunpack.c.0.s8 %v1615
    %v1617 = vlaneseq
    %v1618 = vshrl.u32 %v1617, 7
    %v1619 = vsub.s32 %v1616, %v1618
    %v1620 = vrot.slane %v1606, %v1619
    %v1621 = vcombine.high %v1613, %v1613
    %v1622 = vcombine.high %v1620, %v1620
    %v1623 = vcombine.high %v16, %v16
    %v1625 = vunpack.c.l.s4 1983009808
    %v1626 = vunpack.c.0.s8 %v1625
    %v1627 = vlaneseq
    %v1628 = vshrl.u32 %v1627, 7
    %v1629 = vsub.s32 %v1626, %v1628
    %v1630 = vrot.slane %v16, %v1629
    %v1632 = vunpack.c.l.s4 1983009808
    %v1633 = vunpack.c.0.s8 %v1632
    %v1634 = vlaneseq
    %v1635 = vshrl.u32 %v1634, 7
    %v1636 = vsub.s32 %v1633, %v1635
    %v1637 = vrot.slane %v1623, %v1636
    %v1638 = vcombine.high %v1630, %v1630
    %v1639 = vcombine.high %v1637, %v1637
    %v1640 = vcombine.high %v17, %v17
    %v1642 = vunpack.c.l.s4 1983009808
    %v1643 = vunpack.c.0.s8 %v1642
    %v1644 = vlaneseq
    %v1645 = vshrl.u32 %v1644, 7
    %v1646 = vsub.s32 %v1643, %v1645
    %v1647 = vrot.slane %v17, %v1646
    %v1649 = vunpack.c.l.s4 1983009808
    %v1650 = vunpack.c.0.s8 %v1649
    %v1651 = vlaneseq
    %v1652 = vshrl.u32 %v1651, 7
    %v1653 = vsub.s32 %v1650, %v1652
    %v1654 = vrot.slane %v1640, %v1653
    %v1655 = vcombine.high %v1647, %v1647
    %v1656 = vcombine.high %v1654, %v1654
    %v1657 = vcombine.high %v18, %v18
    %v1659 = vunpack.c.l.s4 1983009808
    %v1660 = vunpack.c.0.s8 %v1659
    %v1661 = vlaneseq
    %v1662 = vshrl.u32 %v1661, 7
    %v1663 = vsub.s32 %v1660, %v1662
    %v1664 = vrot.slane %v18, %v1663
    %v1666 = vunpack.c.l.s4 1983009808
    %v1667 = vunpack.c.0.s8 %v1666
    %v1668 = vlaneseq
    %v1669 = vshrl.u32 %v1668, 7
    %v1670 = vsub.s32 %v1667, %v1669
    %v1671 = vrot.slane %v1657, %v1670
    %v1672 = vcombine.high %v1664, %v1664
    %v1673 = vcombine.high %v1671, %v1671
    %v1674 = vcombine.high %v19, %v19
    %v1676 = vunpack.c.l.s4 1983009808
    %v1677 = vunpack.c.0.s8 %v1676
    %v1678 = vlaneseq
    %v1679 = vshrl.u32 %v1678, 7
    %v1680 = vsub.s32 %v1677, %v1679
    %v1681 = vrot.slane %v19, %v1680
    %v1683 = vunpack.c.l.s4 1983009808
    %v1684 = vunpack.c.0.s8 %v1683
    %v1685 = vlaneseq
    %v1686 = vshrl.u32 %v1685, 7
    %v1687 = vsub.s32 %v1684, %v1686
    %v1688 = vrot.slane %v1674, %v1687
    %v1689 = vcombine.high %v1681, %v1681
    %v1690 = vcombine.high %v1688, %v1688
    %v1691 = vcombine.high %v20, %v20
    %v1693 = vunpack.c.l.s4 1983009808
    %v1694 = vunpack.c.0.s8 %v1693
    %v1695 = vlaneseq
    %v1696 = vshrl.u32 %v1695, 7
    %v1697 = vsub.s32 %v1694, %v1696
    %v1698 = vrot.slane %v20, %v1697
    %v1700 = vunpack.c.l.s4 1983009808
    %v1701 = vunpack.c.0.s8 %v1700
    %v1702 = vlaneseq
    %v1703 = vshrl.u32 %v1702, 7
    %v1704 = vsub.s32 %v1701, %v1703
    %v1705 = vrot.slane %v1691, %v1704
    %v1706 = vcombine.high %v1698, %v1698
    %v1707 = vcombine.high %v1705, %v1705
    %v1708 = vcombine.high %v21, %v21
    %v1710 = vunpack.c.l.s4 1983009808
    %v1711 = vunpack.c.0.s8 %v1710
    %v1712 = vlaneseq
    %v1713 = vshrl.u32 %v1712, 7
    %v1714 = vsub.s32 %v1711, %v1713
    %v1715 = vrot.slane %v21, %v1714
    %v1717 = vunpack.c.l.s4 1983009808
    %v1718 = vunpack.c.0.s8 %v1717
    %v1719 = vlaneseq
    %v1720 = vshrl.u32 %v1719, 7
    %v1721 = vsub.s32 %v1718, %v1720
    %v1722 = vrot.slane %v1708, %v1721
    %v1723 = vcombine.high %v1715, %v1715
    %v1724 = vcombine.high %v1722, %v1722
    %v1725 = vcombine.high %v22, %v22
    %v1727 = vunpack.c.l.s4 1983009808
    %v1728 = vunpack.c.0.s8 %v1727
    %v1729 = vlaneseq
    %v1730 = vshrl.u32 %v1729, 7
    %v1731 = vsub.s32 %v1728, %v1730
    %v1732 = vrot.slane %v22, %v1731
    %v1734 = vunpack.c.l.s4 1983009808
    %v1735 = vunpack.c.0.s8 %v1734
    %v1736 = vlaneseq
    %v1737 = vshrl.u32 %v1736, 7
    %v1738 = vsub.s32 %v1735, %v1737
    %v1739 = vrot.slane %v1725, %v1738
    %v1740 = vcombine.high %v1732, %v1732
    %v1741 = vcombine.high %v1739, %v1739
    %v1742 = vcombine.high %v23, %v23
    %v1744 = vunpack.c.l.s4 1983009808
    %v1745 = vunpack.c.0.s8 %v1744
    %v1746 = vlaneseq
    %v1747 = vshrl.u32 %v1746, 7
    %v1748 = vsub.s32 %v1745, %v1747
    %v1749 = vrot.slane %v23, %v1748
    %v1751 = vunpack.c.l.s4 1983009808
    %v1752 = vunpack.c.0.s8 %v1751
    %v1753 = vlaneseq
    %v1754 = vshrl.u32 %v1753, 7
    %v1755 = vsub.s32 %v1752, %v1754
    %v1756 = vrot.slane %v1742, %v1755
    %v1757 = vcombine.high %v1749, %v1749
    %v1758 = vcombine.high %v1756, %v1756
    %v1759 = vcombine.high %v24, %v24
    %v1761 = vunpack.c.l.s4 1983009808
    %v1762 = vunpack.c.0.s8 %v1761
    %v1763 = vlaneseq
    %v1764 = vshrl.u32 %v1763, 7
    %v1765 = vsub.s32 %v1762, %v1764
    %v1766 = vrot.slane %v24, %v1765
    %v1768 = vunpack.c.l.s4 1983009808
    %v1769 = vunpack.c.0.s8 %v1768
    %v1770 = vlaneseq
    %v1771 = vshrl.u32 %v1770, 7
    %v1772 = vsub.s32 %v1769, %v1771
    %v1773 = vrot.slane %v1759, %v1772
    %v1774 = vcombine.high %v1766, %v1766
    %v1775 = vcombine.high %v1773, %v1773
    %v1776 = vcombine.high %v25, %v25
    %v1778 = vunpack.c.l.s4 1983009808
    %v1779 = vunpack.c.0.s8 %v1778
    %v1780 = vlaneseq
    %v1781 = vshrl.u32 %v1780, 7
    %v1782 = vsub.s32 %v1779, %v1781
    %v1783 = vrot.slane %v25, %v1782
    %v1785 = vunpack.c.l.s4 1983009808
    %v1786 = vunpack.c.0.s8 %v1785
    %v1787 = vlaneseq
    %v1788 = vshrl.u32 %v1787, 7
    %v1789 = vsub.s32 %v1786, %v1788
    %v1790 = vrot.slane %v1776, %v1789
    %v1791 = vcombine.high %v1783, %v1783
    %v1792 = vcombine.high %v1790, %v1790
    %v1793 = vcombine.high %v26, %v26
    %v1795 = vunpack.c.l.s4 1983009808
    %v1796 = vunpack.c.0.s8 %v1795
    %v1797 = vlaneseq
    %v1798 = vshrl.u32 %v1797, 7
    %v1799 = vsub.s32 %v1796, %v1798
    %v1800 = vrot.slane %v26, %v1799
    %v1802 = vunpack.c.l.s4 1983009808
    %v1803 = vunpack.c.0.s8 %v1802
    %v1804 = vlaneseq
    %v1805 = vshrl.u32 %v1804, 7
    %v1806 = vsub.s32 %v1803, %v1805
    %v1807 = vrot.slane %v1793, %v1806
    %v1808 = vcombine.high %v1800, %v1800
    %v1809 = vcombine.high %v1807, %v1807
    %v1810 = vcombine.high %v27, %v27
    %v1812 = vunpack.c.l.s4 1983009808
    %v1813 = vunpack.c.0.s8 %v1812
    %v1814 = vlaneseq
    %v1815 = vshrl.u32 %v1814, 7
    %v1816 = vsub.s32 %v1813, %v1815
    %v1817 = vrot.slane %v27, %v1816
    %v1819 = vunpack.c.l.s4 1983009808
    %v1820 = vunpack.c.0.s8 %v1819
    %v1821 = vlaneseq
    %v1822 = vshrl.u32 %v1821, 7
    %v1823 = vsub.s32 %v1820, %v1822
    %v1824 = vrot.slane %v1810, %v1823
    %v1825 = vcombine.high %v1817, %v1817
    %v1826 = vcombine.high %v1824, %v1824
    %v1827 = vcombine.high %v28, %v28
    %v1829 = vunpack.c.l.s4 1983009808
    %v1830 = vunpack.c.0.s8 %v1829
    %v1831 = vlaneseq
    %v1832 = vshrl.u32 %v1831, 7
    %v1833 = vsub.s32 %v1830, %v1832
    %v1834 = vrot.slane %v28, %v1833
    %v1836 = vunpack.c.l.s4 1983009808
    %v1837 = vunpack.c.0.s8 %v1836
    %v1838 = vlaneseq
    %v1839 = vshrl.u32 %v1838, 7
    %v1840 = vsub.s32 %v1837, %v1839
    %v1841 = vrot.slane %v1827, %v1840
    %v1842 = vcombine.high %v1834, %v1834
    %v1843 = vcombine.high %v1841, %v1841
    %v1844 = vcombine.high %v29, %v29
    %v1846 = vunpack.c.l.s4 1983009808
    %v1847 = vunpack.c.0.s8 %v1846
    %v1848 = vlaneseq
    %v1849 = vshrl.u32 %v1848, 7
    %v1850 = vsub.s32 %v1847, %v1849
    %v1851 = vrot.slane %v29, %v1850
    %v1853 = vunpack.c.l.s4 1983009808
    %v1854 = vunpack.c.0.s8 %v1853
    %v1855 = vlaneseq
    %v1856 = vshrl.u32 %v1855, 7
    %v1857 = vsub.s32 %v1854, %v1856
    %v1858 = vrot.slane %v1844, %v1857
    %v1859 = vcombine.high %v1851, %v1851
    %v1860 = vcombine.high %v1858, %v1858
    %v1861 = vcombine.high %v30, %v30
    %v1863 = vunpack.c.l.s4 1983009808
    %v1864 = vunpack.c.0.s8 %v1863
    %v1865 = vlaneseq
    %v1866 = vshrl.u32 %v1865, 7
    %v1867 = vsub.s32 %v1864, %v1866
    %v1868 = vrot.slane %v30, %v1867
    %v1870 = vunpack.c.l.s4 1983009808
    %v1871 = vunpack.c.0.s8 %v1870
    %v1872 = vlaneseq
    %v1873 = vshrl.u32 %v1872, 7
    %v1874 = vsub.s32 %v1871, %v1873
    %v1875 = vrot.slane %v1861, %v1874
    %v1876 = vcombine.high %v1868, %v1868
    %v1877 = vcombine.high %v1875, %v1875
    %v1878 = vcombine.high %v31, %v31
    %v1880 = vunpack.c.l.s4 1983009808
    %v1881 = vunpack.c.0.s8 %v1880
    %v1882 = vlaneseq
    %v1883 = vshrl.u32 %v1882, 7
    %v1884 = vsub.s32 %v1881, %v1883
    %v1885 = vrot.slane %v31, %v1884
    %v1887 = vunpack.c.l.s4 1983009808
    %v1888 = vunpack.c.0.s8 %v1887
    %v1889 = vlaneseq
    %v1890 = vshrl.u32 %v1889, 7
    %v1891 = vsub.s32 %v1888, %v1890
    %v1892 = vrot.slane %v1878, %v1891
    %v1893 = vcombine.high %v1885, %v1885
    %v1894 = vcombine.high %v1892, %v1892
    %v1895 = vcombine.high %v32, %v32
    %v1897 = vunpack.c.l.s4 1983009808
    %v1898 = vunpack.c.0.s8 %v1897
    %v1899 = vlaneseq
    %v1900 = vshrl.u32 %v1899, 7
    %v1901 = vsub.s32 %v1898, %v1900
    %v1902 = vrot.slane %v32, %v1901
    %v1904 = vunpack.c.l.s4 1983009808
    %v1905 = vunpack.c.0.s8 %v1904
    %v1906 = vlaneseq
    %v1907 = vshrl.u32 %v1906, 7
    %v1908 = vsub.s32 %v1905, %v1907
    %v1909 = vrot.slane %v1895, %v1908
    %v1910 = vcombine.high %v1902, %v1902
    %v1911 = vcombine.high %v1909, %v1909
    %v1912 = vcombine.high %v33, %v33
    %v1914 = vunpack.c.l.s4 1983009808
    %v1915 = vunpack.c.0.s8 %v1914
    %v1916 = vlaneseq
    %v1917 = vshrl.u32 %v1916, 7
    %v1918 = vsub.s32 %v1915, %v1917
    %v1919 = vrot.slane %v33, %v1918
    %v1921 = vunpack.c.l.s4 1983009808
    %v1922 = vunpack.c.0.s8 %v1921
    %v1923 = vlaneseq
    %v1924 = vshrl.u32 %v1923, 7
    %v1925 = vsub.s32 %v1922, %v1924
    %v1926 = vrot.slane %v1912, %v1925
    %v1927 = vcombine.high %v1919, %v1919
    %v1928 = vcombine.high %v1926, %v1926
    %v1929 = vcombine.high %v34, %v34
    %v1931 = vunpack.c.l.s4 1983009808
    %v1932 = vunpack.c.0.s8 %v1931
    %v1933 = vlaneseq
    %v1934 = vshrl.u32 %v1933, 7
    %v1935 = vsub.s32 %v1932, %v1934
    %v1936 = vrot.slane %v34, %v1935
    %v1938 = vunpack.c.l.s4 1983009808
    %v1939 = vunpack.c.0.s8 %v1938
    %v1940 = vlaneseq
    %v1941 = vshrl.u32 %v1940, 7
    %v1942 = vsub.s32 %v1939, %v1941
    %v1943 = vrot.slane %v1929, %v1942
    %v1944 = vcombine.high %v1936, %v1936
    %v1945 = vcombine.high %v1943, %v1943
    %v1946 = vcombine.high %v35, %v35
    %v1948 = vunpack.c.l.s4 1983009808
    %v1949 = vunpack.c.0.s8 %v1948
    %v1950 = vlaneseq
    %v1951 = vshrl.u32 %v1950, 7
    %v1952 = vsub.s32 %v1949, %v1951
    %v1953 = vrot.slane %v35, %v1952
    %v1955 = vunpack.c.l.s4 1983009808
    %v1956 = vunpack.c.0.s8 %v1955
    %v1957 = vlaneseq
    %v1958 = vshrl.u32 %v1957, 7
    %v1959 = vsub.s32 %v1956, %v1958
    %v1960 = vrot.slane %v1946, %v1959
    %v1961 = vcombine.high %v1953, %v1953
    %v1962 = vcombine.high %v1960, %v1960
    %v1963 = vcombine.high %v36, %v36
    %v1965 = vunpack.c.l.s4 1983009808
    %v1966 = vunpack.c.0.s8 %v1965
    %v1967 = vlaneseq
    %v1968 = vshrl.u32 %v1967, 7
    %v1969 = vsub.s32 %v1966, %v1968
    %v1970 = vrot.slane %v36, %v1969
    %v1972 = vunpack.c.l.s4 1983009808
    %v1973 = vunpack.c.0.s8 %v1972
    %v1974 = vlaneseq
    %v1975 = vshrl.u32 %v1974, 7
    %v1976 = vsub.s32 %v1973, %v1975
    %v1977 = vrot.slane %v1963, %v1976
    %v1978 = vcombine.high %v1970, %v1970
    %v1979 = vcombine.high %v1977, %v1977
    %v1980 = vcombine.high %v37, %v37
    %v1982 = vunpack.c.l.s4 1983009808
    %v1983 = vunpack.c.0.s8 %v1982
    %v1984 = vlaneseq
    %v1985 = vshrl.u32 %v1984, 7
    %v1986 = vsub.s32 %v1983, %v1985
    %v1987 = vrot.slane %v37, %v1986
    %v1989 = vunpack.c.l.s4 1983009808
    %v1990 = vunpack.c.0.s8 %v1989
    %v1991 = vlaneseq
    %v1992 = vshrl.u32 %v1991, 7
    %v1993 = vsub.s32 %v1990, %v1992
    %v1994 = vrot.slane %v1980, %v1993
    %v1995 = vcombine.high %v1987, %v1987
    %v1996 = vcombine.high %v1994, %v1994
    %v1997 = vcombine.high %v38, %v38
    %v1999 = vunpack.c.l.s4 1983009808
    %v2000 = vunpack.c.0.s8 %v1999
    %v2001 = vlaneseq
    %v2002 = vshrl.u32 %v2001, 7
    %v2003 = vsub.s32 %v2000, %v2002
    %v2004 = vrot.slane %v38, %v2003
    %v2006 = vunpack.c.l.s4 1983009808
    %v2007 = vunpack.c.0.s8 %v2006
    %v2008 = vlaneseq
    %v2009 = vshrl.u32 %v2008, 7
    %v2010 = vsub.s32 %v2007, %v2009
    %v2011 = vrot.slane %v1997, %v2010
    %v2012 = vcombine.high %v2004, %v2004
    %v2013 = vcombine.high %v2011, %v2011
    %2110 = vmatprep.subr.mxu0 0.0
    %2111 = vmatpush1.msra.mxu0 %v39
    %2112 = vmatprep.subr.mxu0 0.0
    %2113 = vmatpush1.msra.mxu0 %v40
    %2114 = vmatprep.subr.mxu0 0.0
    %2115 = vmatpush1.msra.mxu0 %v41
    %2116 = vmatprep.subr.mxu0 0.0
    %2117 = vmatpush1.msra.mxu0 %v42
    %2118 = vmatprep.subr.mxu0 0.0
    %2119 = vmatpush1.msra.mxu0 %v43
    %2120 = vmatprep.subr.mxu0 0.0
    %2121 = vmatpush1.msra.mxu0 %v44
    %2122 = vmatprep.subr.mxu0 0.0
    %2123 = vmatpush1.msra.mxu0 %v45
    %2124 = vmatprep.subr.mxu0 0.0
    %2125 = vmatpush1.msra.mxu0 %v46
    %2126 = vmatprep.subr.mxu0 0.0
    %2127 = vmatpush1.msra.mxu0 %v47
    %2128 = vmatprep.subr.mxu0 0.0
    %2129 = vmatpush1.msra.mxu0 %v48
    %2130 = vmatprep.subr.mxu0 0.0
    %2131 = vmatpush1.msra.mxu0 %v49
    %2132 = vmatprep.subr.mxu0 0.0
    %2133 = vmatpush1.msra.mxu0 %v50
    %2134 = vmatprep.subr.mxu0 0.0
    %2135 = vmatpush1.msra.mxu0 %v51
    %2136 = vmatprep.subr.mxu0 0.0
    %2137 = vmatpush1.msra.mxu0 %v52
    %2138 = vmatprep.subr.mxu0 0.0
    %2139 = vmatpush1.msra.mxu0 %v53
    %2140 = vmatprep.subr.mxu0 0.0
    %2141 = vmatpush1.msra.mxu0 %v54
    %2142 = vmatprep.subr.mxu0 0.0
    %2143 = vmatpush1.msra.mxu0 %v55
    %2144 = vmatprep.subr.mxu0 0.0
    %2145 = vmatpush1.msra.mxu0 %v56
    %2146 = vmatprep.subr.mxu0 0.0
    %2147 = vmatpush1.msra.mxu0 %v57
    %2148 = vmatprep.subr.mxu0 0.0
    %2149 = vmatpush1.msra.mxu0 %v58
    %2150 = vmatprep.subr.mxu0 0.0
    %2151 = vmatpush1.msra.mxu0 %v59
    %2152 = vmatprep.subr.mxu0 0.0
    %2153 = vmatpush1.msra.mxu0 %v60
    %2154 = vmatprep.subr.mxu0 0.0
    %2155 = vmatpush1.msra.mxu0 %v61
    %2156 = vmatprep.subr.mxu0 0.0
    %2157 = vmatpush1.msra.mxu0 %v62
    %2158 = vmatprep.subr.mxu0 0.0
    %2159 = vmatpush1.msra.mxu0 %v63
    %2160 = vmatprep.subr.mxu0 0.0
    %2161 = vmatpush1.msra.mxu0 %v64
    %2162 = vmatprep.subr.mxu0 0.0
    %2163 = vmatpush1.msra.mxu0 %v65
    %2164 = vmatprep.subr.mxu0 0.0
    %2165 = vmatpush1.msra.mxu0 %v66
    %2166 = vmatprep.subr.mxu0 0.0
    %2167 = vmatpush1.msra.mxu0 %v67
    %2168 = vmatprep.subr.mxu0 0.0
    %2169 = vmatpush1.msra.mxu0 %v68
    %2170 = vmatprep.subr.mxu0 0.0
    %2171 = vmatpush1.msra.mxu0 %v69
    %2172 = vmatprep.subr.mxu0 0.0
    %2173 = vmatpush1.msra.mxu0 %v70
    %2174 = vmatprep.mubr.f32.mxu0 %v1621
    %2175 = vmatmul.mubr.f32.gmra.mrb[0].mxu0 %v1613
    %v2176 = vpop.f32.mrb[0].mxu0
    %v2177 = vadd.f32 %v1580, %v2176
    %v2178 = vpop.f32.mrb[0].mxu0
    %2179 = vdwg.mxu0
    %2180 = vmatprep.subr.mxu0 0.0
    %2181 = vmatpush1.msra.mxu0 %v71
    %2182 = vmatprep.subr.mxu0 0.0
    %2183 = vmatpush1.msra.mxu0 %v72
    %2184 = vmatprep.subr.mxu0 0.0
    %2185 = vmatpush1.msra.mxu0 %v73
    %2186 = vmatprep.subr.mxu0 0.0
    %2187 = vmatpush1.msra.mxu0 %v74
    %2188 = vmatprep.subr.mxu0 0.0
    %2189 = vmatpush1.msra.mxu0 %v75
    %2190 = vmatprep.subr.mxu0 0.0
    %2191 = vmatpush1.msra.mxu0 %v76
    %2192 = vmatprep.subr.mxu0 0.0
    %2193 = vmatpush1.msra.mxu0 %v77
    %2194 = vmatprep.subr.mxu0 0.0
    %2195 = vmatpush1.msra.mxu0 %v78
    %2196 = vmatprep.subr.mxu0 0.0
    %2197 = vmatpush1.msra.mxu0 %v79
    %2198 = vmatprep.subr.mxu0 0.0
    %2199 = vmatpush1.msra.mxu0 %v80
    %2200 = vmatprep.subr.mxu0 0.0
    %2201 = vmatpush1.msra.mxu0 %v81
    %2202 = vmatprep.subr.mxu0 0.0
    %2203 = vmatpush1.msra.mxu0 %v82
    %2204 = vmatprep.subr.mxu0 0.0
    %2205 = vmatpush1.msra.mxu0 %v83
    %2206 = vmatprep.subr.mxu0 0.0
    %2207 = vmatpush1.msra.mxu0 %v84
    %2208 = vmatprep.subr.mxu0 0.0
    %2209 = vmatpush1.msra.mxu0 %v85
    %2210 = vmatprep.subr.mxu0 0.0
    %2211 = vmatpush1.msra.mxu0 %v86
    %2212 = vmatprep.subr.mxu0 0.0
    %2213 = vmatpush1.msra.mxu0 %v87
    %2214 = vmatprep.subr.mxu0 0.0
    %2215 = vmatpush1.msra.mxu0 %v88
    %2216 = vmatprep.subr.mxu0 0.0
    %2217 = vmatpush1.msra.mxu0 %v89
    %2218 = vmatprep.subr.mxu0 0.0
    %2219 = vmatpush1.msra.mxu0 %v90
    %2220 = vmatprep.subr.mxu0 0.0
    %2221 = vmatpush1.msra.mxu0 %v91
    %2222 = vmatprep.subr.mxu0 0.0
    %2223 = vmatpush1.msra.mxu0 %v92
    %2224 = vmatprep.subr.mxu0 0.0
    %2225 = vmatpush1.msra.mxu0 %v93
    %2226 = vmatprep.subr.mxu0 0.0
    %2227 = vmatpush1.msra.mxu0 %v94
    %2228 = vmatprep.subr.mxu0 0.0
    %2229 = vmatpush1.msra.mxu0 %v95
    %2230 = vmatprep.subr.mxu0 0.0
    %2231 = vmatpush1.msra.mxu0 %v96
    %2232 = vmatprep.subr.mxu0 0.0
    %2233 = vmatpush1.msra.mxu0 %v97
    %2234 = vmatprep.subr.mxu0 0.0
    %2235 = vmatpush1.msra.mxu0 %v98
    %2236 = vmatprep.subr.mxu0 0.0
    %2237 = vmatpush1.msra.mxu0 %v99
    %2238 = vmatprep.subr.mxu0 0.0
    %2239 = vmatpush1.msra.mxu0 %v100
    %2240 = vmatprep.subr.mxu0 0.0
    %2241 = vmatpush1.msra.mxu0 %v101
    %2242 = vmatprep.subr.mxu0 0.0
    %2243 = vmatpush1.msra.mxu0 %v102
    %2244 = vmatprep.mubr.f32.mxu0 %v1622
    %2245 = vmatmul.mubr.f32.gmra.mrb[0].mxu0 %v1620
    %v2246 = vpop.f32.mrb[0].mxu0
    %v2247 = vadd.f32 %v2177, %v2246
    %v2248 = vpop.f32.mrb[0].mxu0
    %2249 = vdwg.mxu0
    %2250 = vmatprep.subr.mxu0 0.0
    %2251 = vmatpush1.msra.mxu0 %v103
    %2252 = vmatprep.subr.mxu0 0.0
    %2253 = vmatpush1.msra.mxu0 %v104
    %2254 = vmatprep.subr.mxu0 0.0
    %2255 = vmatpush1.msra.mxu0 %v105
    %2256 = vmatprep.subr.mxu0 0.0
    %2257 = vmatpush1.msra.mxu0 %v106
    %2258 = vmatprep.subr.mxu0 0.0
    %2259 = vmatpush1.msra.mxu0 %v107
    %2260 = vmatprep.subr.mxu0 0.0
    %2261 = vmatpush1.msra.mxu0 %v108
    %2262 = vmatprep.subr.mxu0 0.0
    %2263 = vmatpush1.msra.mxu0 %v109
    %2264 = vmatprep.subr.mxu0 0.0
    %2265 = vmatpush1.msra.mxu0 %v110
    %2266 = vmatprep.subr.mxu0 0.0
    %2267 = vmatpush1.msra.mxu0 %v111
    %2268 = vmatprep.subr.mxu0 0.0
    %2269 = vmatpush1.msra.mxu0 %v112
    %2270 = vmatprep.subr.mxu0 0.0
    %2271 = vmatpush1.msra.mxu0 %v113
    %2272 = vmatprep.subr.mxu0 0.0
    %2273 = vmatpush1.msra.mxu0 %v114
    %2274 = vmatprep.subr.mxu0 0.0
    %2275 = vmatpush1.msra.mxu0 %v115
    %2276 = vmatprep.subr.mxu0 0.0
    %2277 = vmatpush1.msra.mxu0 %v116
    %2278 = vmatprep.subr.mxu0 0.0
    %2279 = vmatpush1.msra.mxu0 %v117
    %2280 = vmatprep.subr.mxu0 0.0
    %2281 = vmatpush1.msra.mxu0 %v118
    %2282 = vmatprep.subr.mxu0 0.0
    %2283 = vmatpush1.msra.mxu0 %v119
    %2284 = vmatprep.subr.mxu0 0.0
    %2285 = vmatpush1.msra.mxu0 %v120
    %2286 = vmatprep.subr.mxu0 0.0
    %2287 = vmatpush1.msra.mxu0 %v121
    %2288 = vmatprep.subr.mxu0 0.0
    %2289 = vmatpush1.msra.mxu0 %v122
    %2290 = vmatprep.subr.mxu0 0.0
    %2291 = vmatpush1.msra.mxu0 %v123
    %2292 = vmatprep.subr.mxu0 0.0
    %2293 = vmatpush1.msra.mxu0 %v124
    %2294 = vmatprep.subr.mxu0 0.0
    %2295 = vmatpush1.msra.mxu0 %v125
    %2296 = vmatprep.subr.mxu0 0.0
    %2297 = vmatpush1.msra.mxu0 %v126
    %2298 = vmatprep.subr.mxu0 0.0
    %2299 = vmatpush1.msra.mxu0 %v127
    %2300 = vmatprep.subr.mxu0 0.0
    %2301 = vmatpush1.msra.mxu0 %v128
    %2302 = vmatprep.subr.mxu0 0.0
    %2303 = vmatpush1.msra.mxu0 %v129
    %2304 = vmatprep.subr.mxu0 0.0
    %2305 = vmatpush1.msra.mxu0 %v130
    %2306 = vmatprep.subr.mxu0 0.0
    %2307 = vmatpush1.msra.mxu0 %v131
    %2308 = vmatprep.subr.mxu0 0.0
    %2309 = vmatpush1.msra.mxu0 %v132
    %2310 = vmatprep.subr.mxu0 0.0
    %2311 = vmatpush1.msra.mxu0 %v133
    %2312 = vmatprep.subr.mxu0 0.0
    %2313 = vmatpush1.msra.mxu0 %v134
    %2314 = vmatprep.mubr.f32.mxu0 %v1638
    %2315 = vmatmul.mubr.f32.gmra.mrb[0].mxu0 %v1630
    %v2316 = vpop.f32.mrb[0].mxu0
    %v2317 = vadd.f32 %v2247, %v2316
    %v2318 = vpop.f32.mrb[0].mxu0
    %2319 = vdwg.mxu0
    %2320 = vmatprep.subr.mxu0 0.0
    %2321 = vmatpush1.msra.mxu0 %v135
    %2322 = vmatprep.subr.mxu0 0.0
    %2323 = vmatpush1.msra.mxu0 %v136
    %2324 = vmatprep.subr.mxu0 0.0
    %2325 = vmatpush1.msra.mxu0 %v137
    %2326 = vmatprep.subr.mxu0 0.0
    %2327 = vmatpush1.msra.mxu0 %v138
    %2328 = vmatprep.subr.mxu0 0.0
    %2329 = vmatpush1.msra.mxu0 %v139
    %2330 = vmatprep.subr.mxu0 0.0
    %2331 = vmatpush1.msra.mxu0 %v140
    %2332 = vmatprep.subr.mxu0 0.0
    %2333 = vmatpush1.msra.mxu0 %v141
    %2334 = vmatprep.subr.mxu0 0.0
    %2335 = vmatpush1.msra.mxu0 %v142
    %2336 = vmatprep.subr.mxu0 0.0
    %2337 = vmatpush1.msra.mxu0 %v143
    %2338 = vmatprep.subr.mxu0 0.0
    %2339 = vmatpush1.msra.mxu0 %v144
    %2340 = vmatprep.subr.mxu0 0.0
    %2341 = vmatpush1.msra.mxu0 %v145
    %2342 = vmatprep.subr.mxu0 0.0
    %2343 = vmatpush1.msra.mxu0 %v146
    %2344 = vmatprep.subr.mxu0 0.0
    %2345 = vmatpush1.msra.mxu0 %v147
    %2346 = vmatprep.subr.mxu0 0.0
    %2347 = vmatpush1.msra.mxu0 %v148
    %2348 = vmatprep.subr.mxu0 0.0
    %2349 = vmatpush1.msra.mxu0 %v149
    %2350 = vmatprep.subr.mxu0 0.0
    %2351 = vmatpush1.msra.mxu0 %v150
    %2352 = vmatprep.subr.mxu0 0.0
    %2353 = vmatpush1.msra.mxu0 %v151
    %2354 = vmatprep.subr.mxu0 0.0
    %2355 = vmatpush1.msra.mxu0 %v152
    %2356 = vmatprep.subr.mxu0 0.0
    %2357 = vmatpush1.msra.mxu0 %v153
    %2358 = vmatprep.subr.mxu0 0.0
    %2359 = vmatpush1.msra.mxu0 %v154
    %2360 = vmatprep.subr.mxu0 0.0
    %2361 = vmatpush1.msra.mxu0 %v155
    %2362 = vmatprep.subr.mxu0 0.0
    %2363 = vmatpush1.msra.mxu0 %v156
    %2364 = vmatprep.subr.mxu0 0.0
    %2365 = vmatpush1.msra.mxu0 %v157
    %2366 = vmatprep.subr.mxu0 0.0
    %2367 = vmatpush1.msra.mxu0 %v158
    %2368 = vmatprep.subr.mxu0 0.0
    %2369 = vmatpush1.msra.mxu0 %v159
    %2370 = vmatprep.subr.mxu0 0.0
    %2371 = vmatpush1.msra.mxu0 %v160
    %2372 = vmatprep.subr.mxu0 0.0
    %2373 = vmatpush1.msra.mxu0 %v161
    %2374 = vmatprep.subr.mxu0 0.0
    %2375 = vmatpush1.msra.mxu0 %v162
    %2376 = vmatprep.subr.mxu0 0.0
    %2377 = vmatpush1.msra.mxu0 %v163
    %2378 = vmatprep.subr.mxu0 0.0
    %2379 = vmatpush1.msra.mxu0 %v164
    %2380 = vmatprep.subr.mxu0 0.0
    %2381 = vmatpush1.msra.mxu0 %v165
    %2382 = vmatprep.subr.mxu0 0.0
    %2383 = vmatpush1.msra.mxu0 %v166
    %2384 = vmatprep.mubr.f32.mxu0 %v1639
    %2385 = vmatmul.mubr.f32.gmra.mrb[0].mxu0 %v1637
    %v2386 = vpop.f32.mrb[0].mxu0
    %v2387 = vadd.f32 %v2317, %v2386
    %v2388 = vpop.f32.mrb[0].mxu0
    %2389 = vdwg.mxu0
    %2390 = vmatprep.subr.mxu0 0.0
    %2391 = vmatpush1.msra.mxu0 %v167
    %2392 = vmatprep.subr.mxu0 0.0
    %2393 = vmatpush1.msra.mxu0 %v168
    %2394 = vmatprep.subr.mxu0 0.0
    %2395 = vmatpush1.msra.mxu0 %v169
    %2396 = vmatprep.subr.mxu0 0.0
    %2397 = vmatpush1.msra.mxu0 %v170
    %2398 = vmatprep.subr.mxu0 0.0
    %2399 = vmatpush1.msra.mxu0 %v171
    %2400 = vmatprep.subr.mxu0 0.0
    %2401 = vmatpush1.msra.mxu0 %v172
    %2402 = vmatprep.subr.mxu0 0.0
    %2403 = vmatpush1.msra.mxu0 %v173
    %2404 = vmatprep.subr.mxu0 0.0
    %2405 = vmatpush1.msra.mxu0 %v174
    %2406 = vmatprep.subr.mxu0 0.0
    %2407 = vmatpush1.msra.mxu0 %v175
    %2408 = vmatprep.subr.mxu0 0.0
    %2409 = vmatpush1.msra.mxu0 %v176
    %2410 = vmatprep.subr.mxu0 0.0
    %2411 = vmatpush1.msra.mxu0 %v177
    %2412 = vmatprep.subr.mxu0 0.0
    %2413 = vmatpush1.msra.mxu0 %v178
    %2414 = vmatprep.subr.mxu0 0.0
    %2415 = vmatpush1.msra.mxu0 %v179
    %2416 = vmatprep.subr.mxu0 0.0
    %2417 = vmatpush1.msra.mxu0 %v180
    %2418 = vmatprep.subr.mxu0 0.0
    %2419 = vmatpush1.msra.mxu0 %v181
    %2420 = vmatprep.subr.mxu0 0.0
    %2421 = vmatpush1.msra.mxu0 %v182
    %2422 = vmatprep.subr.mxu0 0.0
    %2423 = vmatpush1.msra.mxu0 %v183
    %2424 = vmatprep.subr.mxu0 0.0
    %2425 = vmatpush1.msra.mxu0 %v184
    %2426 = vmatprep.subr.mxu0 0.0
    %2427 = vmatpush1.msra.mxu0 %v185
    %2428 = vmatprep.subr.mxu0 0.0
    %2429 = vmatpush1.msra.mxu0 %v186
    %2430 = vmatprep.subr.mxu0 0.0
    %2431 = vmatpush1.msra.mxu0 %v187
    %2432 = vmatprep.subr.mxu0 0.0
    %2433 = vmatpush1.msra.mxu0 %v188
    %2434 = vmatprep.subr.mxu0 0.0
    %2435 = vmatpush1.msra.mxu0 %v189
    %2436 = vmatprep.subr.mxu0 0.0
    %2437 = vmatpush1.msra.mxu0 %v190
    %2438 = vmatprep.subr.mxu0 0.0
    %2439 = vmatpush1.msra.mxu0 %v191
    %2440 = vmatprep.subr.mxu0 0.0
    %2441 = vmatpush1.msra.mxu0 %v192
    %2442 = vmatprep.subr.mxu0 0.0
    %2443 = vmatpush1.msra.mxu0 %v193
    %2444 = vmatprep.subr.mxu0 0.0
    %2445 = vmatpush1.msra.mxu0 %v194
    %2446 = vmatprep.subr.mxu0 0.0
    %2447 = vmatpush1.msra.mxu0 %v195
    %2448 = vmatprep.subr.mxu0 0.0
    %2449 = vmatpush1.msra.mxu0 %v196
    %2450 = vmatprep.subr.mxu0 0.0
    %2451 = vmatpush1.msra.mxu0 %v197
    %2452 = vmatprep.subr.mxu0 0.0
    %2453 = vmatpush1.msra.mxu0 %v198
    %2454 = vmatprep.mubr.f32.mxu0 %v1655
    %2455 = vmatmul.mubr.f32.gmra.mrb[0].mxu0 %v1647
    %v2456 = vpop.f32.mrb[0].mxu0
    %v2457 = vadd.f32 %v2387, %v2456
    %v2458 = vpop.f32.mrb[0].mxu0
    %2459 = vdwg.mxu0
    %2460 = vmatprep.subr.mxu0 0.0
    %2461 = vmatpush1.msra.mxu0 %v199
    %2462 = vmatprep.subr.mxu0 0.0
    %2463 = vmatpush1.msra.mxu0 %v200
    %2464 = vmatprep.subr.mxu0 0.0
    %2465 = vmatpush1.msra.mxu0 %v201
    %2466 = vmatprep.subr.mxu0 0.0
    %2467 = vmatpush1.msra.mxu0 %v202
    %2468 = vmatprep.subr.mxu0 0.0
    %2469 = vmatpush1.msra.mxu0 %v203
    %2470 = vmatprep.subr.mxu0 0.0
    %2471 = vmatpush1.msra.mxu0 %v204
    %2472 = vmatprep.subr.mxu0 0.0
    %2473 = vmatpush1.msra.mxu0 %v205
    %2474 = vmatprep.subr.mxu0 0.0
    %2475 = vmatpush1.msra.mxu0 %v206
    %2476 = vmatprep.subr.mxu0 0.0
    %2477 = vmatpush1.msra.mxu0 %v207
    %2478 = vmatprep.subr.mxu0 0.0
    %2479 = vmatpush1.msra.mxu0 %v208
    %2480 = vmatprep.subr.mxu0 0.0
    %2481 = vmatpush1.msra.mxu0 %v209
    %2482 = vmatprep.subr.mxu0 0.0
    %2483 = vmatpush1.msra.mxu0 %v210
    %2484 = vmatprep.subr.mxu0 0.0
    %2485 = vmatpush1.msra.mxu0 %v211
    %2486 = vmatprep.subr.mxu0 0.0
    %2487 = vmatpush1.msra.mxu0 %v212
    %2488 = vmatprep.subr.mxu0 0.0
    %2489 = vmatpush1.msra.mxu0 %v213
    %2490 = vmatprep.subr.mxu0 0.0
    %2491 = vmatpush1.msra.mxu0 %v214
    %2492 = vmatprep.subr.mxu0 0.0
    %2493 = vmatpush1.msra.mxu0 %v215
    %2494 = vmatprep.subr.mxu0 0.0
    %2495 = vmatpush1.msra.mxu0 %v216
    %2496 = vmatprep.subr.mxu0 0.0
    %2497 = vmatpush1.msra.mxu0 %v217
    %2498 = vmatprep.subr.mxu0 0.0
    %2499 = vmatpush1.msra.mxu0 %v218
    %2500 = vmatprep.subr.mxu0 0.0
    %2501 = vmatpush1.msra.mxu0 %v219
    %2502 = vmatprep.subr.mxu0 0.0
    %2503 = vmatpush1.msra.mxu0 %v220
    %2504 = vmatprep.subr.mxu0 0.0
    %2505 = vmatpush1.msra.mxu0 %v221
    %2506 = vmatprep.subr.mxu0 0.0
    %2507 = vmatpush1.msra.mxu0 %v222
    %2508 = vmatprep.subr.mxu0 0.0
    %2509 = vmatpush1.msra.mxu0 %v223
    %2510 = vmatprep.subr.mxu0 0.0
    %2511 = vmatpush1.msra.mxu0 %v224
    %2512 = vmatprep.subr.mxu0 0.0
    %2513 = vmatpush1.msra.mxu0 %v225
    %2514 = vmatprep.subr.mxu0 0.0
    %2515 = vmatpush1.msra.mxu0 %v226
    %2516 = vmatprep.subr.mxu0 0.0
    %2517 = vmatpush1.msra.mxu0 %v227
    %2518 = vmatprep.subr.mxu0 0.0
    %2519 = vmatpush1.msra.mxu0 %v228
    %2520 = vmatprep.subr.mxu0 0.0
    %2521 = vmatpush1.msra.mxu0 %v229
    %2522 = vmatprep.subr.mxu0 0.0
    %2523 = vmatpush1.msra.mxu0 %v230
    %2524 = vmatprep.mubr.f32.mxu0 %v1656
    %2525 = vmatmul.mubr.f32.gmra.mrb[0].mxu0 %v1654
    %v2526 = vpop.f32.mrb[0].mxu0
    %v2527 = vadd.f32 %v2457, %v2526
    %v2528 = vpop.f32.mrb[0].mxu0
    %2529 = vdwg.mxu0
    %2530 = vmatprep.subr.mxu0 0.0
    %2531 = vmatpush1.msra.mxu0 %v231
    %2532 = vmatprep.subr.mxu0 0.0
    %2533 = vmatpush1.msra.mxu0 %v232
    %2534 = vmatprep.subr.mxu0 0.0
    %2535 = vmatpush1.msra.mxu0 %v233
    %2536 = vmatprep.subr.mxu0 0.0
    %2537 = vmatpush1.msra.mxu0 %v234
    %2538 = vmatprep.subr.mxu0 0.0
    %2539 = vmatpush1.msra.mxu0 %v235
    %2540 = vmatprep.subr.mxu0 0.0
    %2541 = vmatpush1.msra.mxu0 %v236
    %2542 = vmatprep.subr.mxu0 0.0
    %2543 = vmatpush1.msra.mxu0 %v237
    %2544 = vmatprep.subr.mxu0 0.0
    %2545 = vmatpush1.msra.mxu0 %v238
    %2546 = vmatprep.subr.mxu0 0.0
    %2547 = vmatpush1.msra.mxu0 %v239
    %2548 = vmatprep.subr.mxu0 0.0
    %2549 = vmatpush1.msra.mxu0 %v240
    %2550 = vmatprep.subr.mxu0 0.0
    %2551 = vmatpush1.msra.mxu0 %v241
    %2552 = vmatprep.subr.mxu0 0.0
    %2553 = vmatpush1.msra.mxu0 %v242
    %2554 = vmatprep.subr.mxu0 0.0
    %2555 = vmatpush1.msra.mxu0 %v243
    %2556 = vmatprep.subr.mxu0 0.0
    %2557 = vmatpush1.msra.mxu0 %v244
    %2558 = vmatprep.subr.mxu0 0.0
    %2559 = vmatpush1.msra.mxu0 %v245
    %2560 = vmatprep.subr.mxu0 0.0
    %2561 = vmatpush1.msra.mxu0 %v246
    %2562 = vmatprep.subr.mxu0 0.0
    %2563 = vmatpush1.msra.mxu0 %v247
    %2564 = vmatprep.subr.mxu0 0.0
    %2565 = vmatpush1.msra.mxu0 %v248
    %2566 = vmatprep.subr.mxu0 0.0
    %2567 = vmatpush1.msra.mxu0 %v249
    %2568 = vmatprep.subr.mxu0 0.0
    %2569 = vmatpush1.msra.mxu0 %v250
    %2570 = vmatprep.subr.mxu0 0.0
    %2571 = vmatpush1.msra.mxu0 %v251
    %2572 = vmatprep.subr.mxu0 0.0
    %2573 = vmatpush1.msra.mxu0 %v252
    %2574 = vmatprep.subr.mxu0 0.0
    %2575 = vmatpush1.msra.mxu0 %v253
    %2576 = vmatprep.subr.mxu0 0.0
    %2577 = vmatpush1.msra.mxu0 %v254
    %2578 = vmatprep.subr.mxu0 0.0
    %2579 = vmatpush1.msra.mxu0 %v255
    %2580 = vmatprep.subr.mxu0 0.0
    %2581 = vmatpush1.msra.mxu0 %v256
    %2582 = vmatprep.subr.mxu0 0.0
    %2583 = vmatpush1.msra.mxu0 %v257
    %2584 = vmatprep.subr.mxu0 0.0
    %2585 = vmatpush1.msra.mxu0 %v258
    %2586 = vmatprep.subr.mxu0 0.0
    %2587 = vmatpush1.msra.mxu0 %v259
    %2588 = vmatprep.subr.mxu0 0.0
    %2589 = vmatpush1.msra.mxu0 %v260
    %2590 = vmatprep.subr.mxu0 0.0
    %2591 = vmatpush1.msra.mxu0 %v261
    %2592 = vmatprep.subr.mxu0 0.0
    %2593 = vmatpush1.msra.mxu0 %v262
    %2594 = vmatprep.mubr.f32.mxu0 %v1672
    %2595 = vmatmul.mubr.f32.gmra.mrb[0].mxu0 %v1664
    %v2596 = vpop.f32.mrb[0].mxu0
    %v2597 = vadd.f32 %v2527, %v2596
    %v2598 = vpop.f32.mrb[0].mxu0
    %2599 = vdwg.mxu0
    %2600 = vmatprep.subr.mxu0 0.0
    %2601 = vmatpush1.msra.mxu0 %v263
    %2602 = vmatprep.subr.mxu0 0.0
    %2603 = vmatpush1.msra.mxu0 %v264
    %2604 = vmatprep.subr.mxu0 0.0
    %2605 = vmatpush1.msra.mxu0 %v265
    %2606 = vmatprep.subr.mxu0 0.0
    %2607 = vmatpush1.msra.mxu0 %v266
    %2608 = vmatprep.subr.mxu0 0.0
    %2609 = vmatpush1.msra.mxu0 %v267
    %2610 = vmatprep.subr.mxu0 0.0
    %2611 = vmatpush1.msra.mxu0 %v268
    %2612 = vmatprep.subr.mxu0 0.0
    %2613 = vmatpush1.msra.mxu0 %v269
    %2614 = vmatprep.subr.mxu0 0.0
    %2615 = vmatpush1.msra.mxu0 %v270
    %2616 = vmatprep.subr.mxu0 0.0
    %2617 = vmatpush1.msra.mxu0 %v271
    %2618 = vmatprep.subr.mxu0 0.0
    %2619 = vmatpush1.msra.mxu0 %v272
    %2620 = vmatprep.subr.mxu0 0.0
    %2621 = vmatpush1.msra.mxu0 %v273
    %2622 = vmatprep.subr.mxu0 0.0
    %2623 = vmatpush1.msra.mxu0 %v274
    %2624 = vmatprep.subr.mxu0 0.0
    %2625 = vmatpush1.msra.mxu0 %v275
    %2626 = vmatprep.subr.mxu0 0.0
    %2627 = vmatpush1.msra.mxu0 %v276
    %2628 = vmatprep.subr.mxu0 0.0
    %2629 = vmatpush1.msra.mxu0 %v277
    %2630 = vmatprep.subr.mxu0 0.0
    %2631 = vmatpush1.msra.mxu0 %v278
    %2632 = vmatprep.subr.mxu0 0.0
    %2633 = vmatpush1.msra.mxu0 %v279
    %2634 = vmatprep.subr.mxu0 0.0
    %2635 = vmatpush1.msra.mxu0 %v280
    %2636 = vmatprep.subr.mxu0 0.0
    %2637 = vmatpush1.msra.mxu0 %v281
    %2638 = vmatprep.subr.mxu0 0.0
    %2639 = vmatpush1.msra.mxu0 %v282
    %2640 = vmatprep.subr.mxu0 0.0
    %2641 = vmatpush1.msra.mxu0 %v283
    %2642 = vmatprep.subr.mxu0 0.0
    %2643 = vmatpush1.msra.mxu0 %v284
    %2644 = vmatprep.subr.mxu0 0.0
    %2645 = vmatpush1.msra.mxu0 %v285
    %2646 = vmatprep.subr.mxu0 0.0
    %2647 = vmatpush1.msra.mxu0 %v286
    %2648 = vmatprep.subr.mxu0 0.0
    %2649 = vmatpush1.msra.mxu0 %v287
    %2650 = vmatprep.subr.mxu0 0.0
    %2651 = vmatpush1.msra.mxu0 %v288
    %2652 = vmatprep.subr.mxu0 0.0
    %2653 = vmatpush1.msra.mxu0 %v289
    %2654 = vmatprep.subr.mxu0 0.0
    %2655 = vmatpush1.msra.mxu0 %v290
    %2656 = vmatprep.subr.mxu0 0.0
    %2657 = vmatpush1.msra.mxu0 %v291
    %2658 = vmatprep.subr.mxu0 0.0
    %2659 = vmatpush1.msra.mxu0 %v292
    %2660 = vmatprep.subr.mxu0 0.0
    %2661 = vmatpush1.msra.mxu0 %v293
    %2662 = vmatprep.subr.mxu0 0.0
    %2663 = vmatpush1.msra.mxu0 %v294
    %2664 = vmatprep.mubr.f32.mxu0 %v1673
    %2665 = vmatmul.mubr.f32.gmra.mrb[0].mxu0 %v1671
    %v2666 = vpop.f32.mrb[0].mxu0
    %v2667 = vadd.f32 %v2597, %v2666
    %v2668 = vpop.f32.mrb[0].mxu0
    %2669 = vdwg.mxu0
    %2670 = vmatprep.subr.mxu0 0.0
    %2671 = vmatpush1.msra.mxu0 %v295
    %2672 = vmatprep.subr.mxu0 0.0
    %2673 = vmatpush1.msra.mxu0 %v296
    %2674 = vmatprep.subr.mxu0 0.0
    %2675 = vmatpush1.msra.mxu0 %v297
    %2676 = vmatprep.subr.mxu0 0.0
    %2677 = vmatpush1.msra.mxu0 %v298
    %2678 = vmatprep.subr.mxu0 0.0
    %2679 = vmatpush1.msra.mxu0 %v299
    %2680 = vmatprep.subr.mxu0 0.0
    %2681 = vmatpush1.msra.mxu0 %v300
    %2682 = vmatprep.subr.mxu0 0.0
    %2683 = vmatpush1.msra.mxu0 %v301
    %2684 = vmatprep.subr.mxu0 0.0
    %2685 = vmatpush1.msra.mxu0 %v302
    %2686 = vmatprep.subr.mxu0 0.0
    %2687 = vmatpush1.msra.mxu0 %v303
    %2688 = vmatprep.subr.mxu0 0.0
    %2689 = vmatpush1.msra.mxu0 %v304
    %2690 = vmatprep.subr.mxu0 0.0
    %2691 = vmatpush1.msra.mxu0 %v305
    %2692 = vmatprep.subr.mxu0 0.0
    %2693 = vmatpush1.msra.mxu0 %v306
    %2694 = vmatprep.subr.mxu0 0.0
    %2695 = vmatpush1.msra.mxu0 %v307
    %2696 = vmatprep.subr.mxu0 0.0
    %2697 = vmatpush1.msra.mxu0 %v308
    %2698 = vmatprep.subr.mxu0 0.0
    %2699 = vmatpush1.msra.mxu0 %v309
    %2700 = vmatprep.subr.mxu0 0.0
    %2701 = vmatpush1.msra.mxu0 %v310
    %2702 = vmatprep.subr.mxu0 0.0
    %2703 = vmatpush1.msra.mxu0 %v311
    %2704 = vmatprep.subr.mxu0 0.0
    %2705 = vmatpush1.msra.mxu0 %v312
    %2706 = vmatprep.subr.mxu0 0.0
    %2707 = vmatpush1.msra.mxu0 %v313
    %2708 = vmatprep.subr.mxu0 0.0
    %2709 = vmatpush1.msra.mxu0 %v314
    %2710 = vmatprep.subr.mxu0 0.0
    %2711 = vmatpush1.msra.mxu0 %v315
    %2712 = vmatprep.subr.mxu0 0.0
    %2713 = vmatpush1.msra.mxu0 %v316
    %2714 = vmatprep.subr.mxu0 0.0
    %2715 = vmatpush1.msra.mxu0 %v317
    %2716 = vmatprep.subr.mxu0 0.0
    %2717 = vmatpush1.msra.mxu0 %v318
    %2718 = vmatprep.subr.mxu0 0.0
    %2719 = vmatpush1.msra.mxu0 %v319
    %2720 = vmatprep.subr.mxu0 0.0
    %2721 = vmatpush1.msra.mxu0 %v320
    %2722 = vmatprep.subr.mxu0 0.0
    %2723 = vmatpush1.msra.mxu0 %v321
    %2724 = vmatprep.subr.mxu0 0.0
    %2725 = vmatpush1.msra.mxu0 %v322
    %2726 = vmatprep.subr.mxu0 0.0
    %2727 = vmatpush1.msra.mxu0 %v323
    %2728 = vmatprep.subr.mxu0 0.0
    %2729 = vmatpush1.msra.mxu0 %v324
    %2730 = vmatprep.subr.mxu0 0.0
    %2731 = vmatpush1.msra.mxu0 %v325
    %2732 = vmatprep.subr.mxu0 0.0
    %2733 = vmatpush1.msra.mxu0 %v326
    %2734 = vmatprep.mubr.f32.mxu0 %v1689
    %2735 = vmatmul.mubr.f32.gmra.mrb[0].mxu0 %v1681
    %v2736 = vpop.f32.mrb[0].mxu0
    %v2737 = vadd.f32 %v2667, %v2736
    %v2738 = vpop.f32.mrb[0].mxu0
    %2739 = vdwg.mxu0
    %2740 = vmatprep.subr.mxu0 0.0
    %2741 = vmatpush1.msra.mxu0 %v327
    %2742 = vmatprep.subr.mxu0 0.0
    %2743 = vmatpush1.msra.mxu0 %v328
    %2744 = vmatprep.subr.mxu0 0.0
    %2745 = vmatpush1.msra.mxu0 %v329
    %2746 = vmatprep.subr.mxu0 0.0
    %2747 = vmatpush1.msra.mxu0 %v330
    %2748 = vmatprep.subr.mxu0 0.0
    %2749 = vmatpush1.msra.mxu0 %v331
    %2750 = vmatprep.subr.mxu0 0.0
    %2751 = vmatpush1.msra.mxu0 %v332
    %2752 = vmatprep.subr.mxu0 0.0
    %2753 = vmatpush1.msra.mxu0 %v333
    %2754 = vmatprep.subr.mxu0 0.0
    %2755 = vmatpush1.msra.mxu0 %v334
    %2756 = vmatprep.subr.mxu0 0.0
    %2757 = vmatpush1.msra.mxu0 %v335
    %2758 = vmatprep.subr.mxu0 0.0
    %2759 = vmatpush1.msra.mxu0 %v336
    %2760 = vmatprep.subr.mxu0 0.0
    %2761 = vmatpush1.msra.mxu0 %v337
    %2762 = vmatprep.subr.mxu0 0.0
    %2763 = vmatpush1.msra.mxu0 %v338
    %2764 = vmatprep.subr.mxu0 0.0
    %2765 = vmatpush1.msra.mxu0 %v339
    %2766 = vmatprep.subr.mxu0 0.0
    %2767 = vmatpush1.msra.mxu0 %v340
    %2768 = vmatprep.subr.mxu0 0.0
    %2769 = vmatpush1.msra.mxu0 %v341
    %2770 = vmatprep.subr.mxu0 0.0
    %2771 = vmatpush1.msra.mxu0 %v342
    %2772 = vmatprep.subr.mxu0 0.0
    %2773 = vmatpush1.msra.mxu0 %v343
    %2774 = vmatprep.subr.mxu0 0.0
    %2775 = vmatpush1.msra.mxu0 %v344
    %2776 = vmatprep.subr.mxu0 0.0
    %2777 = vmatpush1.msra.mxu0 %v345
    %2778 = vmatprep.subr.mxu0 0.0
    %2779 = vmatpush1.msra.mxu0 %v346
    %2780 = vmatprep.subr.mxu0 0.0
    %2781 = vmatpush1.msra.mxu0 %v347
    %2782 = vmatprep.subr.mxu0 0.0
    %2783 = vmatpush1.msra.mxu0 %v348
    %2784 = vmatprep.subr.mxu0 0.0
    %2785 = vmatpush1.msra.mxu0 %v349
    %2786 = vmatprep.subr.mxu0 0.0
    %2787 = vmatpush1.msra.mxu0 %v350
    %2788 = vmatprep.subr.mxu0 0.0
    %2789 = vmatpush1.msra.mxu0 %v351
    %2790 = vmatprep.subr.mxu0 0.0
    %2791 = vmatpush1.msra.mxu0 %v352
    %2792 = vmatprep.subr.mxu0 0.0
    %2793 = vmatpush1.msra.mxu0 %v353
    %2794 = vmatprep.subr.mxu0 0.0
    %2795 = vmatpush1.msra.mxu0 %v354
    %2796 = vmatprep.subr.mxu0 0.0
    %2797 = vmatpush1.msra.mxu0 %v355
    %2798 = vmatprep.subr.mxu0 0.0
    %2799 = vmatpush1.msra.mxu0 %v356
    %2800 = vmatprep.subr.mxu0 0.0
    %2801 = vmatpush1.msra.mxu0 %v357
    %2802 = vmatprep.subr.mxu0 0.0
    %2803 = vmatpush1.msra.mxu0 %v358
    %2804 = vmatprep.mubr.f32.mxu0 %v1690
    %2805 = vmatmul.mubr.f32.gmra.mrb[0].mxu0 %v1688
    %v2806 = vpop.f32.mrb[0].mxu0
    %v2807 = vadd.f32 %v2737, %v2806
    %v2808 = vpop.f32.mrb[0].mxu0
    %2809 = vdwg.mxu0
    %2810 = vmatprep.subr.mxu0 0.0
    %2811 = vmatpush1.msra.mxu0 %v359
    %2812 = vmatprep.subr.mxu0 0.0
    %2813 = vmatpush1.msra.mxu0 %v360
    %2814 = vmatprep.subr.mxu0 0.0
    %2815 = vmatpush1.msra.mxu0 %v361
    %2816 = vmatprep.subr.mxu0 0.0
    %2817 = vmatpush1.msra.mxu0 %v362
    %2818 = vmatprep.subr.mxu0 0.0
    %2819 = vmatpush1.msra.mxu0 %v363
    %2820 = vmatprep.subr.mxu0 0.0
    %2821 = vmatpush1.msra.mxu0 %v364
    %2822 = vmatprep.subr.mxu0 0.0
    %2823 = vmatpush1.msra.mxu0 %v365
    %2824 = vmatprep.subr.mxu0 0.0
    %2825 = vmatpush1.msra.mxu0 %v366
    %2826 = vmatprep.subr.mxu0 0.0
    %2827 = vmatpush1.msra.mxu0 %v367
    %2828 = vmatprep.subr.mxu0 0.0
    %2829 = vmatpush1.msra.mxu0 %v368
    %2830 = vmatprep.subr.mxu0 0.0
    %2831 = vmatpush1.msra.mxu0 %v369
    %2832 = vmatprep.subr.mxu0 0.0
    %2833 = vmatpush1.msra.mxu0 %v370
    %2834 = vmatprep.subr.mxu0 0.0
    %2835 = vmatpush1.msra.mxu0 %v371
    %2836 = vmatprep.subr.mxu0 0.0
    %2837 = vmatpush1.msra.mxu0 %v372
    %2838 = vmatprep.subr.mxu0 0.0
    %2839 = vmatpush1.msra.mxu0 %v373
    %2840 = vmatprep.subr.mxu0 0.0
    %2841 = vmatpush1.msra.mxu0 %v374
    %2842 = vmatprep.subr.mxu0 0.0
    %2843 = vmatpush1.msra.mxu0 %v375
    %2844 = vmatprep.subr.mxu0 0.0
    %2845 = vmatpush1.msra.mxu0 %v376
    %2846 = vmatprep.subr.mxu0 0.0
    %2847 = vmatpush1.msra.mxu0 %v377
    %2848 = vmatprep.subr.mxu0 0.0
    %2849 = vmatpush1.msra.mxu0 %v378
    %2850 = vmatprep.subr.mxu0 0.0
    %2851 = vmatpush1.msra.mxu0 %v379
    %2852 = vmatprep.subr.mxu0 0.0
    %2853 = vmatpush1.msra.mxu0 %v380
    %2854 = vmatprep.subr.mxu0 0.0
    %2855 = vmatpush1.msra.mxu0 %v381
    %2856 = vmatprep.subr.mxu0 0.0
    %2857 = vmatpush1.msra.mxu0 %v382
    %2858 = vmatprep.subr.mxu0 0.0
    %2859 = vmatpush1.msra.mxu0 %v383
    %2860 = vmatprep.subr.mxu0 0.0
    %2861 = vmatpush1.msra.mxu0 %v384
    %2862 = vmatprep.subr.mxu0 0.0
    %2863 = vmatpush1.msra.mxu0 %v385
    %2864 = vmatprep.subr.mxu0 0.0
    %2865 = vmatpush1.msra.mxu0 %v386
    %2866 = vmatprep.subr.mxu0 0.0
    %2867 = vmatpush1.msra.mxu0 %v387
    %2868 = vmatprep.subr.mxu0 0.0
    %2869 = vmatpush1.msra.mxu0 %v388
    %2870 = vmatprep.subr.mxu0 0.0
    %2871 = vmatpush1.msra.mxu0 %v389
    %2872 = vmatprep.subr.mxu0 0.0
    %2873 = vmatpush1.msra.mxu0 %v390
    %2874 = vmatprep.mubr.f32.mxu0 %v1706
    %2875 = vmatmul.mubr.f32.gmra.mrb[0].mxu0 %v1698
    %v2876 = vpop.f32.mrb[0].mxu0
    %v2877 = vadd.f32 %v2807, %v2876
    %v2878 = vpop.f32.mrb[0].mxu0
    %2879 = vdwg.mxu0
    %2880 = vmatprep.subr.mxu0 0.0
    %2881 = vmatpush1.msra.mxu0 %v391
    %2882 = vmatprep.subr.mxu0 0.0
    %2883 = vmatpush1.msra.mxu0 %v392
    %2884 = vmatprep.subr.mxu0 0.0
    %2885 = vmatpush1.msra.mxu0 %v393
    %2886 = vmatprep.subr.mxu0 0.0
    %2887 = vmatpush1.msra.mxu0 %v394
    %2888 = vmatprep.subr.mxu0 0.0
    %2889 = vmatpush1.msra.mxu0 %v395
    %2890 = vmatprep.subr.mxu0 0.0
    %2891 = vmatpush1.msra.mxu0 %v396
    %2892 = vmatprep.subr.mxu0 0.0
    %2893 = vmatpush1.msra.mxu0 %v397
    %2894 = vmatprep.subr.mxu0 0.0
    %2895 = vmatpush1.msra.mxu0 %v398
    %2896 = vmatprep.subr.mxu0 0.0
    %2897 = vmatpush1.msra.mxu0 %v399
    %2898 = vmatprep.subr.mxu0 0.0
    %2899 = vmatpush1.msra.mxu0 %v400
    %2900 = vmatprep.subr.mxu0 0.0
    %2901 = vmatpush1.msra.mxu0 %v401
    %2902 = vmatprep.subr.mxu0 0.0
    %2903 = vmatpush1.msra.mxu0 %v402
    %2904 = vmatprep.subr.mxu0 0.0
    %2905 = vmatpush1.msra.mxu0 %v403
    %2906 = vmatprep.subr.mxu0 0.0
    %2907 = vmatpush1.msra.mxu0 %v404
    %2908 = vmatprep.subr.mxu0 0.0
    %2909 = vmatpush1.msra.mxu0 %v405
    %2910 = vmatprep.subr.mxu0 0.0
    %2911 = vmatpush1.msra.mxu0 %v406
    %2912 = vmatprep.subr.mxu0 0.0
    %2913 = vmatpush1.msra.mxu0 %v407
    %2914 = vmatprep.subr.mxu0 0.0
    %2915 = vmatpush1.msra.mxu0 %v408
    %2916 = vmatprep.subr.mxu0 0.0
    %2917 = vmatpush1.msra.mxu0 %v409
    %2918 = vmatprep.subr.mxu0 0.0
    %2919 = vmatpush1.msra.mxu0 %v410
    %2920 = vmatprep.subr.mxu0 0.0
    %2921 = vmatpush1.msra.mxu0 %v411
    %2922 = vmatprep.subr.mxu0 0.0
    %2923 = vmatpush1.msra.mxu0 %v412
    %2924 = vmatprep.subr.mxu0 0.0
    %2925 = vmatpush1.msra.mxu0 %v413
    %2926 = vmatprep.subr.mxu0 0.0
    %2927 = vmatpush1.msra.mxu0 %v414
    %2928 = vmatprep.subr.mxu0 0.0
    %2929 = vmatpush1.msra.mxu0 %v415
    %2930 = vmatprep.subr.mxu0 0.0
    %2931 = vmatpush1.msra.mxu0 %v416
    %2932 = vmatprep.subr.mxu0 0.0
    %2933 = vmatpush1.msra.mxu0 %v417
    %2934 = vmatprep.subr.mxu0 0.0
    %2935 = vmatpush1.msra.mxu0 %v418
    %2936 = vmatprep.subr.mxu0 0.0
    %2937 = vmatpush1.msra.mxu0 %v419
    %2938 = vmatprep.subr.mxu0 0.0
    %2939 = vmatpush1.msra.mxu0 %v420
    %2940 = vmatprep.subr.mxu0 0.0
    %2941 = vmatpush1.msra.mxu0 %v421
    %2942 = vmatprep.subr.mxu0 0.0
    %2943 = vmatpush1.msra.mxu0 %v422
    %2944 = vmatprep.mubr.f32.mxu0 %v1707
    %2945 = vmatmul.mubr.f32.gmra.mrb[0].mxu0 %v1705
    %v2946 = vpop.f32.mrb[0].mxu0
    %v2947 = vadd.f32 %v2877, %v2946
    %v2948 = vpop.f32.mrb[0].mxu0
    %2949 = vdwg.mxu0
    %2950 = vmatprep.subr.mxu0 0.0
    %2951 = vmatpush1.msra.mxu0 %v423
    %2952 = vmatprep.subr.mxu0 0.0
    %2953 = vmatpush1.msra.mxu0 %v424
    %2954 = vmatprep.subr.mxu0 0.0
    %2955 = vmatpush1.msra.mxu0 %v425
    %2956 = vmatprep.subr.mxu0 0.0
    %2957 = vmatpush1.msra.mxu0 %v426
    %2958 = vmatprep.subr.mxu0 0.0
    %2959 = vmatpush1.msra.mxu0 %v427
    %2960 = vmatprep.subr.mxu0 0.0
    %2961 = vmatpush1.msra.mxu0 %v428
    %2962 = vmatprep.subr.mxu0 0.0
    %2963 = vmatpush1.msra.mxu0 %v429
    %2964 = vmatprep.subr.mxu0 0.0
    %2965 = vmatpush1.msra.mxu0 %v430
    %2966 = vmatprep.subr.mxu0 0.0
    %2967 = vmatpush1.msra.mxu0 %v431
    %2968 = vmatprep.subr.mxu0 0.0
    %2969 = vmatpush1.msra.mxu0 %v432
    %2970 = vmatprep.subr.mxu0 0.0
    %2971 = vmatpush1.msra.mxu0 %v433
    %2972 = vmatprep.subr.mxu0 0.0
    %2973 = vmatpush1.msra.mxu0 %v434
    %2974 = vmatprep.subr.mxu0 0.0
    %2975 = vmatpush1.msra.mxu0 %v435
    %2976 = vmatprep.subr.mxu0 0.0
    %2977 = vmatpush1.msra.mxu0 %v436
    %2978 = vmatprep.subr.mxu0 0.0
    %2979 = vmatpush1.msra.mxu0 %v437
    %2980 = vmatprep.subr.mxu0 0.0
    %2981 = vmatpush1.msra.mxu0 %v438
    %2982 = vmatprep.subr.mxu0 0.0
    %2983 = vmatpush1.msra.mxu0 %v439
    %2984 = vmatprep.subr.mxu0 0.0
    %2985 = vmatpush1.msra.mxu0 %v440
    %2986 = vmatprep.subr.mxu0 0.0
    %2987 = vmatpush1.msra.mxu0 %v441
    %2988 = vmatprep.subr.mxu0 0.0
    %2989 = vmatpush1.msra.mxu0 %v442
    %2990 = vmatprep.subr.mxu0 0.0
    %2991 = vmatpush1.msra.mxu0 %v443
    %2992 = vmatprep.subr.mxu0 0.0
    %2993 = vmatpush1.msra.mxu0 %v444
    %2994 = vmatprep.subr.mxu0 0.0
    %2995 = vmatpush1.msra.mxu0 %v445
    %2996 = vmatprep.subr.mxu0 0.0
    %2997 = vmatpush1.msra.mxu0 %v446
    %2998 = vmatprep.subr.mxu0 0.0
    %2999 = vmatpush1.msra.mxu0 %v447
    %3000 = vmatprep.subr.mxu0 0.0
    %3001 = vmatpush1.msra.mxu0 %v448
    %3002 = vmatprep.subr.mxu0 0.0
    %3003 = vmatpush1.msra.mxu0 %v449
    %3004 = vmatprep.subr.mxu0 0.0
    %3005 = vmatpush1.msra.mxu0 %v450
    %3006 = vmatprep.subr.mxu0 0.0
    %3007 = vmatpush1.msra.mxu0 %v451
    %3008 = vmatprep.subr.mxu0 0.0
    %3009 = vmatpush1.msra.mxu0 %v452
    %3010 = vmatprep.subr.mxu0 0.0
    %3011 = vmatpush1.msra.mxu0 %v453
    %3012 = vmatprep.subr.mxu0 0.0
    %3013 = vmatpush1.msra.mxu0 %v454
    %3014 = vmatprep.mubr.f32.mxu0 %v1723
    %3015 = vmatmul.mubr.f32.gmra.mrb[0].mxu0 %v1715
    %v3016 = vpop.f32.mrb[0].mxu0
    %v3017 = vadd.f32 %v2947, %v3016
    %v3018 = vpop.f32.mrb[0].mxu0
    %3019 = vdwg.mxu0
    %3020 = vmatprep.subr.mxu0 0.0
    %3021 = vmatpush1.msra.mxu0 %v455
    %3022 = vmatprep.subr.mxu0 0.0
    %3023 = vmatpush1.msra.mxu0 %v456
    %3024 = vmatprep.subr.mxu0 0.0
    %3025 = vmatpush1.msra.mxu0 %v457
    %3026 = vmatprep.subr.mxu0 0.0
    %3027 = vmatpush1.msra.mxu0 %v458
    %3028 = vmatprep.subr.mxu0 0.0
    %3029 = vmatpush1.msra.mxu0 %v459
    %3030 = vmatprep.subr.mxu0 0.0
    %3031 = vmatpush1.msra.mxu0 %v460
    %3032 = vmatprep.subr.mxu0 0.0
    %3033 = vmatpush1.msra.mxu0 %v461
    %3034 = vmatprep.subr.mxu0 0.0
    %3035 = vmatpush1.msra.mxu0 %v462
    %3036 = vmatprep.subr.mxu0 0.0
    %3037 = vmatpush1.msra.mxu0 %v463
    %3038 = vmatprep.subr.mxu0 0.0
    %3039 = vmatpush1.msra.mxu0 %v464
    %3040 = vmatprep.subr.mxu0 0.0
    %3041 = vmatpush1.msra.mxu0 %v465
    %3042 = vmatprep.subr.mxu0 0.0
    %3043 = vmatpush1.msra.mxu0 %v466
    %3044 = vmatprep.subr.mxu0 0.0
    %3045 = vmatpush1.msra.mxu0 %v467
    %3046 = vmatprep.subr.mxu0 0.0
    %3047 = vmatpush1.msra.mxu0 %v468
    %3048 = vmatprep.subr.mxu0 0.0
    %3049 = vmatpush1.msra.mxu0 %v469
    %3050 = vmatprep.subr.mxu0 0.0
    %3051 = vmatpush1.msra.mxu0 %v470
    %3052 = vmatprep.subr.mxu0 0.0
    %3053 = vmatpush1.msra.mxu0 %v471
    %3054 = vmatprep.subr.mxu0 0.0
    %3055 = vmatpush1.msra.mxu0 %v472
    %3056 = vmatprep.subr.mxu0 0.0
    %3057 = vmatpush1.msra.mxu0 %v473
    %3058 = vmatprep.subr.mxu0 0.0
    %3059 = vmatpush1.msra.mxu0 %v474
    %3060 = vmatprep.subr.mxu0 0.0
    %3061 = vmatpush1.msra.mxu0 %v475
    %3062 = vmatprep.subr.mxu0 0.0
    %3063 = vmatpush1.msra.mxu0 %v476
    %3064 = vmatprep.subr.mxu0 0.0
    %3065 = vmatpush1.msra.mxu0 %v477
    %3066 = vmatprep.subr.mxu0 0.0
    %3067 = vmatpush1.msra.mxu0 %v478
    %3068 = vmatprep.subr.mxu0 0.0
    %3069 = vmatpush1.msra.mxu0 %v479
    %3070 = vmatprep.subr.mxu0 0.0
    %3071 = vmatpush1.msra.mxu0 %v480
    %3072 = vmatprep.subr.mxu0 0.0
    %3073 = vmatpush1.msra.mxu0 %v481
    %3074 = vmatprep.subr.mxu0 0.0
    %3075 = vmatpush1.msra.mxu0 %v482
    %3076 = vmatprep.subr.mxu0 0.0
    %3077 = vmatpush1.msra.mxu0 %v483
    %3078 = vmatprep.subr.mxu0 0.0
    %3079 = vmatpush1.msra.mxu0 %v484
    %3080 = vmatprep.subr.mxu0 0.0
    %3081 = vmatpush1.msra.mxu0 %v485
    %3082 = vmatprep.subr.mxu0 0.0
    %3083 = vmatpush1.msra.mxu0 %v486
    %3084 = vmatprep.mubr.f32.mxu0 %v1724
    %3085 = vmatmul.mubr.f32.gmra.mrb[0].mxu0 %v1722
    %v3086 = vpop.f32.mrb[0].mxu0
    %v3087 = vadd.f32 %v3017, %v3086
    %v3088 = vpop.f32.mrb[0].mxu0
    %3089 = vdwg.mxu0
    %3090 = vmatprep.subr.mxu0 0.0
    %3091 = vmatpush1.msra.mxu0 %v487
    %3092 = vmatprep.subr.mxu0 0.0
    %3093 = vmatpush1.msra.mxu0 %v488
    %3094 = vmatprep.subr.mxu0 0.0
    %3095 = vmatpush1.msra.mxu0 %v489
    %3096 = vmatprep.subr.mxu0 0.0
    %3097 = vmatpush1.msra.mxu0 %v490
    %3098 = vmatprep.subr.mxu0 0.0
    %3099 = vmatpush1.msra.mxu0 %v491
    %3100 = vmatprep.subr.mxu0 0.0
    %3101 = vmatpush1.msra.mxu0 %v492
    %3102 = vmatprep.subr.mxu0 0.0
    %3103 = vmatpush1.msra.mxu0 %v493
    %3104 = vmatprep.subr.mxu0 0.0
    %3105 = vmatpush1.msra.mxu0 %v494
    %3106 = vmatprep.subr.mxu0 0.0
    %3107 = vmatpush1.msra.mxu0 %v495
    %3108 = vmatprep.subr.mxu0 0.0
    %3109 = vmatpush1.msra.mxu0 %v496
    %3110 = vmatprep.subr.mxu0 0.0
    %3111 = vmatpush1.msra.mxu0 %v497
    %3112 = vmatprep.subr.mxu0 0.0
    %3113 = vmatpush1.msra.mxu0 %v498
    %3114 = vmatprep.subr.mxu0 0.0
    %3115 = vmatpush1.msra.mxu0 %v499
    %3116 = vmatprep.subr.mxu0 0.0
    %3117 = vmatpush1.msra.mxu0 %v500
    %3118 = vmatprep.subr.mxu0 0.0
    %3119 = vmatpush1.msra.mxu0 %v501
    %3120 = vmatprep.subr.mxu0 0.0
    %3121 = vmatpush1.msra.mxu0 %v502
    %3122 = vmatprep.subr.mxu0 0.0
    %3123 = vmatpush1.msra.mxu0 %v503
    %3124 = vmatprep.subr.mxu0 0.0
    %3125 = vmatpush1.msra.mxu0 %v504
    %3126 = vmatprep.subr.mxu0 0.0
    %3127 = vmatpush1.msra.mxu0 %v505
    %3128 = vmatprep.subr.mxu0 0.0
    %3129 = vmatpush1.msra.mxu0 %v506
    %3130 = vmatprep.subr.mxu0 0.0
    %3131 = vmatpush1.msra.mxu0 %v507
    %3132 = vmatprep.subr.mxu0 0.0
    %3133 = vmatpush1.msra.mxu0 %v508
    %3134 = vmatprep.subr.mxu0 0.0
    %3135 = vmatpush1.msra.mxu0 %v509
    %3136 = vmatprep.subr.mxu0 0.0
    %3137 = vmatpush1.msra.mxu0 %v510
    %3138 = vmatprep.subr.mxu0 0.0
    %3139 = vmatpush1.msra.mxu0 %v511
    %3140 = vmatprep.subr.mxu0 0.0
    %3141 = vmatpush1.msra.mxu0 %v512
    %3142 = vmatprep.subr.mxu0 0.0
    %3143 = vmatpush1.msra.mxu0 %v513
    %3144 = vmatprep.subr.mxu0 0.0
    %3145 = vmatpush1.msra.mxu0 %v514
    %3146 = vmatprep.subr.mxu0 0.0
    %3147 = vmatpush1.msra.mxu0 %v515
    %3148 = vmatprep.subr.mxu0 0.0
    %3149 = vmatpush1.msra.mxu0 %v516
    %3150 = vmatprep.subr.mxu0 0.0
    %3151 = vmatpush1.msra.mxu0 %v517
    %3152 = vmatprep.subr.mxu0 0.0
    %3153 = vmatpush1.msra.mxu0 %v518
    %3154 = vmatprep.mubr.f32.mxu0 %v1740
    %3155 = vmatmul.mubr.f32.gmra.mrb[0].mxu0 %v1732
    %v3156 = vpop.f32.mrb[0].mxu0
    %v3157 = vadd.f32 %v3087, %v3156
    %v3158 = vpop.f32.mrb[0].mxu0
    %3159 = vdwg.mxu0
    %3160 = vmatprep.subr.mxu0 0.0
    %3161 = vmatpush1.msra.mxu0 %v519
    %3162 = vmatprep.subr.mxu0 0.0
    %3163 = vmatpush1.msra.mxu0 %v520
    %3164 = vmatprep.subr.mxu0 0.0
    %3165 = vmatpush1.msra.mxu0 %v521
    %3166 = vmatprep.subr.mxu0 0.0
    %3167 = vmatpush1.msra.mxu0 %v522
    %3168 = vmatprep.subr.mxu0 0.0
    %3169 = vmatpush1.msra.mxu0 %v523
    %3170 = vmatprep.subr.mxu0 0.0
    %3171 = vmatpush1.msra.mxu0 %v524
    %3172 = vmatprep.subr.mxu0 0.0
    %3173 = vmatpush1.msra.mxu0 %v525
    %3174 = vmatprep.subr.mxu0 0.0
    %3175 = vmatpush1.msra.mxu0 %v526
    %3176 = vmatprep.subr.mxu0 0.0
    %3177 = vmatpush1.msra.mxu0 %v527
    %3178 = vmatprep.subr.mxu0 0.0
    %3179 = vmatpush1.msra.mxu0 %v528
    %3180 = vmatprep.subr.mxu0 0.0
    %3181 = vmatpush1.msra.mxu0 %v529
    %3182 = vmatprep.subr.mxu0 0.0
    %3183 = vmatpush1.msra.mxu0 %v530
    %3184 = vmatprep.subr.mxu0 0.0
    %3185 = vmatpush1.msra.mxu0 %v531
    %3186 = vmatprep.subr.mxu0 0.0
    %3187 = vmatpush1.msra.mxu0 %v532
    %3188 = vmatprep.subr.mxu0 0.0
    %3189 = vmatpush1.msra.mxu0 %v533
    %3190 = vmatprep.subr.mxu0 0.0
    %3191 = vmatpush1.msra.mxu0 %v534
    %3192 = vmatprep.subr.mxu0 0.0
    %3193 = vmatpush1.msra.mxu0 %v535
    %3194 = vmatprep.subr.mxu0 0.0
    %3195 = vmatpush1.msra.mxu0 %v536
    %3196 = vmatprep.subr.mxu0 0.0
    %3197 = vmatpush1.msra.mxu0 %v537
    %3198 = vmatprep.subr.mxu0 0.0
    %3199 = vmatpush1.msra.mxu0 %v538
    %3200 = vmatprep.subr.mxu0 0.0
    %3201 = vmatpush1.msra.mxu0 %v539
    %3202 = vmatprep.subr.mxu0 0.0
    %3203 = vmatpush1.msra.mxu0 %v540
    %3204 = vmatprep.subr.mxu0 0.0
    %3205 = vmatpush1.msra.mxu0 %v541
    %3206 = vmatprep.subr.mxu0 0.0
    %3207 = vmatpush1.msra.mxu0 %v542
    %3208 = vmatprep.subr.mxu0 0.0
    %3209 = vmatpush1.msra.mxu0 %v543
    %3210 = vmatprep.subr.mxu0 0.0
    %3211 = vmatpush1.msra.mxu0 %v544
    %3212 = vmatprep.subr.mxu0 0.0
    %3213 = vmatpush1.msra.mxu0 %v545
    %3214 = vmatprep.subr.mxu0 0.0
    %3215 = vmatpush1.msra.mxu0 %v546
    %3216 = vmatprep.subr.mxu0 0.0
    %3217 = vmatpush1.msra.mxu0 %v547
    %3218 = vmatprep.subr.mxu0 0.0
    %3219 = vmatpush1.msra.mxu0 %v548
    %3220 = vmatprep.subr.mxu0 0.0
    %3221 = vmatpush1.msra.mxu0 %v549
    %3222 = vmatprep.subr.mxu0 0.0
    %3223 = vmatpush1.msra.mxu0 %v550
    %3224 = vmatprep.mubr.f32.mxu0 %v1741
    %3225 = vmatmul.mubr.f32.gmra.mrb[0].mxu0 %v1739
    %v3226 = vpop.f32.mrb[0].mxu0
    %v3227 = vadd.f32 %v3157, %v3226
    %v3228 = vpop.f32.mrb[0].mxu0
    %3229 = vdwg.mxu0
    %3230 = vmatprep.subr.mxu0 0.0
    %3231 = vmatpush1.msra.mxu0 %v551
    %3232 = vmatprep.subr.mxu0 0.0
    %3233 = vmatpush1.msra.mxu0 %v552
    %3234 = vmatprep.subr.mxu0 0.0
    %3235 = vmatpush1.msra.mxu0 %v553
    %3236 = vmatprep.subr.mxu0 0.0
    %3237 = vmatpush1.msra.mxu0 %v554
    %3238 = vmatprep.subr.mxu0 0.0
    %3239 = vmatpush1.msra.mxu0 %v555
    %3240 = vmatprep.subr.mxu0 0.0
    %3241 = vmatpush1.msra.mxu0 %v556
    %3242 = vmatprep.subr.mxu0 0.0
    %3243 = vmatpush1.msra.mxu0 %v557
    %3244 = vmatprep.subr.mxu0 0.0
    %3245 = vmatpush1.msra.mxu0 %v558
    %3246 = vmatprep.subr.mxu0 0.0
    %3247 = vmatpush1.msra.mxu0 %v559
    %3248 = vmatprep.subr.mxu0 0.0
    %3249 = vmatpush1.msra.mxu0 %v560
    %3250 = vmatprep.subr.mxu0 0.0
    %3251 = vmatpush1.msra.mxu0 %v561
    %3252 = vmatprep.subr.mxu0 0.0
    %3253 = vmatpush1.msra.mxu0 %v562
    %3254 = vmatprep.subr.mxu0 0.0
    %3255 = vmatpush1.msra.mxu0 %v563
    %3256 = vmatprep.subr.mxu0 0.0
    %3257 = vmatpush1.msra.mxu0 %v564
    %3258 = vmatprep.subr.mxu0 0.0
    %3259 = vmatpush1.msra.mxu0 %v565
    %3260 = vmatprep.subr.mxu0 0.0
    %3261 = vmatpush1.msra.mxu0 %v566
    %3262 = vmatprep.subr.mxu0 0.0
    %3263 = vmatpush1.msra.mxu0 %v567
    %3264 = vmatprep.subr.mxu0 0.0
    %3265 = vmatpush1.msra.mxu0 %v568
    %3266 = vmatprep.subr.mxu0 0.0
    %3267 = vmatpush1.msra.mxu0 %v569
    %3268 = vmatprep.subr.mxu0 0.0
    %3269 = vmatpush1.msra.mxu0 %v570
    %3270 = vmatprep.subr.mxu0 0.0
    %3271 = vmatpush1.msra.mxu0 %v571
    %3272 = vmatprep.subr.mxu0 0.0
    %3273 = vmatpush1.msra.mxu0 %v572
    %3274 = vmatprep.subr.mxu0 0.0
    %3275 = vmatpush1.msra.mxu0 %v573
    %3276 = vmatprep.subr.mxu0 0.0
    %3277 = vmatpush1.msra.mxu0 %v574
    %3278 = vmatprep.subr.mxu0 0.0
    %3279 = vmatpush1.msra.mxu0 %v575
    %3280 = vmatprep.subr.mxu0 0.0
    %3281 = vmatpush1.msra.mxu0 %v576
    %3282 = vmatprep.subr.mxu0 0.0
    %3283 = vmatpush1.msra.mxu0 %v577
    %3284 = vmatprep.subr.mxu0 0.0
    %3285 = vmatpush1.msra.mxu0 %v578
    %3286 = vmatprep.subr.mxu0 0.0
    %3287 = vmatpush1.msra.mxu0 %v579
    %3288 = vmatprep.subr.mxu0 0.0
    %3289 = vmatpush1.msra.mxu0 %v580
    %3290 = vmatprep.subr.mxu0 0.0
    %3291 = vmatpush1.msra.mxu0 %v581
    %3292 = vmatprep.subr.mxu0 0.0
    %3293 = vmatpush1.msra.mxu0 %v582
    %3294 = vmatprep.mubr.f32.mxu0 %v1757
    %3295 = vmatmul.mubr.f32.gmra.mrb[0].mxu0 %v1749
    %v3296 = vpop.f32.mrb[0].mxu0
    %v3297 = vadd.f32 %v3227, %v3296
    %v3298 = vpop.f32.mrb[0].mxu0
    %3299 = vdwg.mxu0
    %3300 = vmatprep.subr.mxu0 0.0
    %3301 = vmatpush1.msra.mxu0 %v583
    %3302 = vmatprep.subr.mxu0 0.0
    %3303 = vmatpush1.msra.mxu0 %v584
    %3304 = vmatprep.subr.mxu0 0.0
    %3305 = vmatpush1.msra.mxu0 %v585
    %3306 = vmatprep.subr.mxu0 0.0
    %3307 = vmatpush1.msra.mxu0 %v586
    %3308 = vmatprep.subr.mxu0 0.0
    %3309 = vmatpush1.msra.mxu0 %v587
    %3310 = vmatprep.subr.mxu0 0.0
    %3311 = vmatpush1.msra.mxu0 %v588
    %3312 = vmatprep.subr.mxu0 0.0
    %3313 = vmatpush1.msra.mxu0 %v589
    %3314 = vmatprep.subr.mxu0 0.0
    %3315 = vmatpush1.msra.mxu0 %v590
    %3316 = vmatprep.subr.mxu0 0.0
    %3317 = vmatpush1.msra.mxu0 %v591
    %3318 = vmatprep.subr.mxu0 0.0
    %3319 = vmatpush1.msra.mxu0 %v592
    %3320 = vmatprep.subr.mxu0 0.0
    %3321 = vmatpush1.msra.mxu0 %v593
    %3322 = vmatprep.subr.mxu0 0.0
    %3323 = vmatpush1.msra.mxu0 %v594
    %3324 = vmatprep.subr.mxu0 0.0
    %3325 = vmatpush1.msra.mxu0 %v595
    %3326 = vmatprep.subr.mxu0 0.0
    %3327 = vmatpush1.msra.mxu0 %v596
    %3328 = vmatprep.subr.mxu0 0.0
    %3329 = vmatpush1.msra.mxu0 %v597
    %3330 = vmatprep.subr.mxu0 0.0
    %3331 = vmatpush1.msra.mxu0 %v598
    %3332 = vmatprep.subr.mxu0 0.0
    %3333 = vmatpush1.msra.mxu0 %v599
    %3334 = vmatprep.subr.mxu0 0.0
    %3335 = vmatpush1.msra.mxu0 %v600
    %3336 = vmatprep.subr.mxu0 0.0
    %3337 = vmatpush1.msra.mxu0 %v601
    %3338 = vmatprep.subr.mxu0 0.0
    %3339 = vmatpush1.msra.mxu0 %v602
    %3340 = vmatprep.subr.mxu0 0.0
    %3341 = vmatpush1.msra.mxu0 %v603
    %3342 = vmatprep.subr.mxu0 0.0
    %3343 = vmatpush1.msra.mxu0 %v604
    %3344 = vmatprep.subr.mxu0 0.0
    %3345 = vmatpush1.msra.mxu0 %v605
    %3346 = vmatprep.subr.mxu0 0.0
    %3347 = vmatpush1.msra.mxu0 %v606
    %3348 = vmatprep.subr.mxu0 0.0
    %3349 = vmatpush1.msra.mxu0 %v607
    %3350 = vmatprep.subr.mxu0 0.0
    %3351 = vmatpush1.msra.mxu0 %v608
    %3352 = vmatprep.subr.mxu0 0.0
    %3353 = vmatpush1.msra.mxu0 %v609
    %3354 = vmatprep.subr.mxu0 0.0
    %3355 = vmatpush1.msra.mxu0 %v610
    %3356 = vmatprep.subr.mxu0 0.0
    %3357 = vmatpush1.msra.mxu0 %v611
    %3358 = vmatprep.subr.mxu0 0.0
    %3359 = vmatpush1.msra.mxu0 %v612
    %3360 = vmatprep.subr.mxu0 0.0
    %3361 = vmatpush1.msra.mxu0 %v613
    %3362 = vmatprep.subr.mxu0 0.0
    %3363 = vmatpush1.msra.mxu0 %v614
    %3364 = vmatprep.mubr.f32.mxu0 %v1758
    %3365 = vmatmul.mubr.f32.gmra.mrb[0].mxu0 %v1756
    %v3366 = vpop.f32.mrb[0].mxu0
    %v3367 = vadd.f32 %v3297, %v3366
    %v3368 = vpop.f32.mrb[0].mxu0
    %3369 = vdwg.mxu0
    %3370 = vmatprep.subr.mxu0 0.0
    %3371 = vmatpush1.msra.mxu0 %v615
    %3372 = vmatprep.subr.mxu0 0.0
    %3373 = vmatpush1.msra.mxu0 %v616
    %3374 = vmatprep.subr.mxu0 0.0
    %3375 = vmatpush1.msra.mxu0 %v617
    %3376 = vmatprep.subr.mxu0 0.0
    %3377 = vmatpush1.msra.mxu0 %v618
    %3378 = vmatprep.subr.mxu0 0.0
    %3379 = vmatpush1.msra.mxu0 %v619
    %3380 = vmatprep.subr.mxu0 0.0
    %3381 = vmatpush1.msra.mxu0 %v620
    %3382 = vmatprep.subr.mxu0 0.0
    %3383 = vmatpush1.msra.mxu0 %v621
    %3384 = vmatprep.subr.mxu0 0.0
    %3385 = vmatpush1.msra.mxu0 %v622
    %3386 = vmatprep.subr.mxu0 0.0
    %3387 = vmatpush1.msra.mxu0 %v623
    %3388 = vmatprep.subr.mxu0 0.0
    %3389 = vmatpush1.msra.mxu0 %v624
    %3390 = vmatprep.subr.mxu0 0.0
    %3391 = vmatpush1.msra.mxu0 %v625
    %3392 = vmatprep.subr.mxu0 0.0
    %3393 = vmatpush1.msra.mxu0 %v626
    %3394 = vmatprep.subr.mxu0 0.0
    %3395 = vmatpush1.msra.mxu0 %v627
    %3396 = vmatprep.subr.mxu0 0.0
    %3397 = vmatpush1.msra.mxu0 %v628
    %3398 = vmatprep.subr.mxu0 0.0
    %3399 = vmatpush1.msra.mxu0 %v629
    %3400 = vmatprep.subr.mxu0 0.0
    %3401 = vmatpush1.msra.mxu0 %v630
    %3402 = vmatprep.subr.mxu0 0.0
    %3403 = vmatpush1.msra.mxu0 %v631
    %3404 = vmatprep.subr.mxu0 0.0
    %3405 = vmatpush1.msra.mxu0 %v632
    %3406 = vmatprep.subr.mxu0 0.0
    %3407 = vmatpush1.msra.mxu0 %v633
    %3408 = vmatprep.subr.mxu0 0.0
    %3409 = vmatpush1.msra.mxu0 %v634
    %3410 = vmatprep.subr.mxu0 0.0
    %3411 = vmatpush1.msra.mxu0 %v635
    %3412 = vmatprep.subr.mxu0 0.0
    %3413 = vmatpush1.msra.mxu0 %v636
    %3414 = vmatprep.subr.mxu0 0.0
    %3415 = vmatpush1.msra.mxu0 %v637
    %3416 = vmatprep.subr.mxu0 0.0
    %3417 = vmatpush1.msra.mxu0 %v638
    %3418 = vmatprep.subr.mxu0 0.0
    %3419 = vmatpush1.msra.mxu0 %v639
    %3420 = vmatprep.subr.mxu0 0.0
    %3421 = vmatpush1.msra.mxu0 %v640
    %3422 = vmatprep.subr.mxu0 0.0
    %3423 = vmatpush1.msra.mxu0 %v641
    %3424 = vmatprep.subr.mxu0 0.0
    %3425 = vmatpush1.msra.mxu0 %v642
    %3426 = vmatprep.subr.mxu0 0.0
    %3427 = vmatpush1.msra.mxu0 %v643
    %3428 = vmatprep.subr.mxu0 0.0
    %3429 = vmatpush1.msra.mxu0 %v644
    %3430 = vmatprep.subr.mxu0 0.0
    %3431 = vmatpush1.msra.mxu0 %v645
    %3432 = vmatprep.subr.mxu0 0.0
    %3433 = vmatpush1.msra.mxu0 %v646
    %3434 = vmatprep.mubr.f32.mxu0 %v1774
    %3435 = vmatmul.mubr.f32.gmra.mrb[0].mxu0 %v1766
    %v3436 = vpop.f32.mrb[0].mxu0
    %v3437 = vadd.f32 %v3367, %v3436
    %v3438 = vpop.f32.mrb[0].mxu0
    %3439 = vdwg.mxu0
    %3440 = vmatprep.subr.mxu0 0.0
    %3441 = vmatpush1.msra.mxu0 %v647
    %3442 = vmatprep.subr.mxu0 0.0
    %3443 = vmatpush1.msra.mxu0 %v648
    %3444 = vmatprep.subr.mxu0 0.0
    %3445 = vmatpush1.msra.mxu0 %v649
    %3446 = vmatprep.subr.mxu0 0.0
    %3447 = vmatpush1.msra.mxu0 %v650
    %3448 = vmatprep.subr.mxu0 0.0
    %3449 = vmatpush1.msra.mxu0 %v651
    %3450 = vmatprep.subr.mxu0 0.0
    %3451 = vmatpush1.msra.mxu0 %v652
    %3452 = vmatprep.subr.mxu0 0.0
    %3453 = vmatpush1.msra.mxu0 %v653
    %3454 = vmatprep.subr.mxu0 0.0
    %3455 = vmatpush1.msra.mxu0 %v654
    %3456 = vmatprep.subr.mxu0 0.0
    %3457 = vmatpush1.msra.mxu0 %v655
    %3458 = vmatprep.subr.mxu0 0.0
    %3459 = vmatpush1.msra.mxu0 %v656
    %3460 = vmatprep.subr.mxu0 0.0
    %3461 = vmatpush1.msra.mxu0 %v657
    %3462 = vmatprep.subr.mxu0 0.0
    %3463 = vmatpush1.msra.mxu0 %v658
    %3464 = vmatprep.subr.mxu0 0.0
    %3465 = vmatpush1.msra.mxu0 %v659
    %3466 = vmatprep.subr.mxu0 0.0
    %3467 = vmatpush1.msra.mxu0 %v660
    %3468 = vmatprep.subr.mxu0 0.0
    %3469 = vmatpush1.msra.mxu0 %v661
    %3470 = vmatprep.subr.mxu0 0.0
    %3471 = vmatpush1.msra.mxu0 %v662
    %3472 = vmatprep.subr.mxu0 0.0
    %3473 = vmatpush1.msra.mxu0 %v663
    %3474 = vmatprep.subr.mxu0 0.0
    %3475 = vmatpush1.msra.mxu0 %v664
    %3476 = vmatprep.subr.mxu0 0.0
    %3477 = vmatpush1.msra.mxu0 %v665
    %3478 = vmatprep.subr.mxu0 0.0
    %3479 = vmatpush1.msra.mxu0 %v666
    %3480 = vmatprep.subr.mxu0 0.0
    %3481 = vmatpush1.msra.mxu0 %v667
    %3482 = vmatprep.subr.mxu0 0.0
    %3483 = vmatpush1.msra.mxu0 %v668
    %3484 = vmatprep.subr.mxu0 0.0
    %3485 = vmatpush1.msra.mxu0 %v669
    %3486 = vmatprep.subr.mxu0 0.0
    %3487 = vmatpush1.msra.mxu0 %v670
    %3488 = vmatprep.subr.mxu0 0.0
    %3489 = vmatpush1.msra.mxu0 %v671
    %3490 = vmatprep.subr.mxu0 0.0
    %3491 = vmatpush1.msra.mxu0 %v672
    %3492 = vmatprep.subr.mxu0 0.0
    %3493 = vmatpush1.msra.mxu0 %v673
    %3494 = vmatprep.subr.mxu0 0.0
    %3495 = vmatpush1.msra.mxu0 %v674
    %3496 = vmatprep.subr.mxu0 0.0
    %3497 = vmatpush1.msra.mxu0 %v675
    %3498 = vmatprep.subr.mxu0 0.0
    %3499 = vmatpush1.msra.mxu0 %v676
    %3500 = vmatprep.subr.mxu0 0.0
    %3501 = vmatpush1.msra.mxu0 %v677
    %3502 = vmatprep.subr.mxu0 0.0
    %3503 = vmatpush1.msra.mxu0 %v678
    %3504 = vmatprep.mubr.f32.mxu0 %v1775
    %3505 = vmatmul.mubr.f32.gmra.mrb[0].mxu0 %v1773
    %v3506 = vpop.f32.mrb[0].mxu0
    %v3507 = vadd.f32 %v3437, %v3506
    %v3508 = vpop.f32.mrb[0].mxu0
    %3509 = vdwg.mxu0
    %3510 = vmatprep.subr.mxu0 0.0
    %3511 = vmatpush1.msra.mxu0 %v679
    %3512 = vmatprep.subr.mxu0 0.0
    %3513 = vmatpush1.msra.mxu0 %v680
    %3514 = vmatprep.subr.mxu0 0.0
    %3515 = vmatpush1.msra.mxu0 %v681
    %3516 = vmatprep.subr.mxu0 0.0
    %3517 = vmatpush1.msra.mxu0 %v682
    %3518 = vmatprep.subr.mxu0 0.0
    %3519 = vmatpush1.msra.mxu0 %v683
    %3520 = vmatprep.subr.mxu0 0.0
    %3521 = vmatpush1.msra.mxu0 %v684
    %3522 = vmatprep.subr.mxu0 0.0
    %3523 = vmatpush1.msra.mxu0 %v685
    %3524 = vmatprep.subr.mxu0 0.0
    %3525 = vmatpush1.msra.mxu0 %v686
    %3526 = vmatprep.subr.mxu0 0.0
    %3527 = vmatpush1.msra.mxu0 %v687
    %3528 = vmatprep.subr.mxu0 0.0
    %3529 = vmatpush1.msra.mxu0 %v688
    %3530 = vmatprep.subr.mxu0 0.0
    %3531 = vmatpush1.msra.mxu0 %v689
    %3532 = vmatprep.subr.mxu0 0.0
    %3533 = vmatpush1.msra.mxu0 %v690
    %3534 = vmatprep.subr.mxu0 0.0
    %3535 = vmatpush1.msra.mxu0 %v691
    %3536 = vmatprep.subr.mxu0 0.0
    %3537 = vmatpush1.msra.mxu0 %v692
    %3538 = vmatprep.subr.mxu0 0.0
    %3539 = vmatpush1.msra.mxu0 %v693
    %3540 = vmatprep.subr.mxu0 0.0
    %3541 = vmatpush1.msra.mxu0 %v694
    %3542 = vmatprep.subr.mxu0 0.0
    %3543 = vmatpush1.msra.mxu0 %v695
    %3544 = vmatprep.subr.mxu0 0.0
    %3545 = vmatpush1.msra.mxu0 %v696
    %3546 = vmatprep.subr.mxu0 0.0
    %3547 = vmatpush1.msra.mxu0 %v697
    %3548 = vmatprep.subr.mxu0 0.0
    %3549 = vmatpush1.msra.mxu0 %v698
    %3550 = vmatprep.subr.mxu0 0.0
    %3551 = vmatpush1.msra.mxu0 %v699
    %3552 = vmatprep.subr.mxu0 0.0
    %3553 = vmatpush1.msra.mxu0 %v700
    %3554 = vmatprep.subr.mxu0 0.0
    %3555 = vmatpush1.msra.mxu0 %v701
    %3556 = vmatprep.subr.mxu0 0.0
    %3557 = vmatpush1.msra.mxu0 %v702
    %3558 = vmatprep.subr.mxu0 0.0
    %3559 = vmatpush1.msra.mxu0 %v703
    %3560 = vmatprep.subr.mxu0 0.0
    %3561 = vmatpush1.msra.mxu0 %v704
    %3562 = vmatprep.subr.mxu0 0.0
    %3563 = vmatpush1.msra.mxu0 %v705
    %3564 = vmatprep.subr.mxu0 0.0
    %3565 = vmatpush1.msra.mxu0 %v706
    %3566 = vmatprep.subr.mxu0 0.0
    %3567 = vmatpush1.msra.mxu0 %v707
    %3568 = vmatprep.subr.mxu0 0.0
    %3569 = vmatpush1.msra.mxu0 %v708
    %3570 = vmatprep.subr.mxu0 0.0
    %3571 = vmatpush1.msra.mxu0 %v709
    %3572 = vmatprep.subr.mxu0 0.0
    %3573 = vmatpush1.msra.mxu0 %v710
    %3574 = vmatprep.mubr.f32.mxu0 %v1791
    %3575 = vmatmul.mubr.f32.gmra.mrb[0].mxu0 %v1783
    %v3576 = vpop.f32.mrb[0].mxu0
    %v3577 = vadd.f32 %v3507, %v3576
    %v3578 = vpop.f32.mrb[0].mxu0
    %3579 = vdwg.mxu0
    %3580 = vmatprep.subr.mxu0 0.0
    %3581 = vmatpush1.msra.mxu0 %v711
    %3582 = vmatprep.subr.mxu0 0.0
    %3583 = vmatpush1.msra.mxu0 %v712
    %3584 = vmatprep.subr.mxu0 0.0
    %3585 = vmatpush1.msra.mxu0 %v713
    %3586 = vmatprep.subr.mxu0 0.0
    %3587 = vmatpush1.msra.mxu0 %v714
    %3588 = vmatprep.subr.mxu0 0.0
    %3589 = vmatpush1.msra.mxu0 %v715
    %3590 = vmatprep.subr.mxu0 0.0
    %3591 = vmatpush1.msra.mxu0 %v716
    %3592 = vmatprep.subr.mxu0 0.0
    %3593 = vmatpush1.msra.mxu0 %v717
    %3594 = vmatprep.subr.mxu0 0.0
    %3595 = vmatpush1.msra.mxu0 %v718
    %3596 = vmatprep.subr.mxu0 0.0
    %3597 = vmatpush1.msra.mxu0 %v719
    %3598 = vmatprep.subr.mxu0 0.0
    %3599 = vmatpush1.msra.mxu0 %v720
    %3600 = vmatprep.subr.mxu0 0.0
    %3601 = vmatpush1.msra.mxu0 %v721
    %3602 = vmatprep.subr.mxu0 0.0
    %3603 = vmatpush1.msra.mxu0 %v722
    %3604 = vmatprep.subr.mxu0 0.0
    %3605 = vmatpush1.msra.mxu0 %v723
    %3606 = vmatprep.subr.mxu0 0.0
    %3607 = vmatpush1.msra.mxu0 %v724
    %3608 = vmatprep.subr.mxu0 0.0
    %3609 = vmatpush1.msra.mxu0 %v725
    %3610 = vmatprep.subr.mxu0 0.0
    %3611 = vmatpush1.msra.mxu0 %v726
    %3612 = vmatprep.subr.mxu0 0.0
    %3613 = vmatpush1.msra.mxu0 %v727
    %3614 = vmatprep.subr.mxu0 0.0
    %3615 = vmatpush1.msra.mxu0 %v728
    %3616 = vmatprep.subr.mxu0 0.0
    %3617 = vmatpush1.msra.mxu0 %v729
    %3618 = vmatprep.subr.mxu0 0.0
    %3619 = vmatpush1.msra.mxu0 %v730
    %3620 = vmatprep.subr.mxu0 0.0
    %3621 = vmatpush1.msra.mxu0 %v731
    %3622 = vmatprep.subr.mxu0 0.0
    %3623 = vmatpush1.msra.mxu0 %v732
    %3624 = vmatprep.subr.mxu0 0.0
    %3625 = vmatpush1.msra.mxu0 %v733
    %3626 = vmatprep.subr.mxu0 0.0
    %3627 = vmatpush1.msra.mxu0 %v734
    %3628 = vmatprep.subr.mxu0 0.0
    %3629 = vmatpush1.msra.mxu0 %v735
    %3630 = vmatprep.subr.mxu0 0.0
    %3631 = vmatpush1.msra.mxu0 %v736
    %3632 = vmatprep.subr.mxu0 0.0
    %3633 = vmatpush1.msra.mxu0 %v737
    %3634 = vmatprep.subr.mxu0 0.0
    %3635 = vmatpush1.msra.mxu0 %v738
    %3636 = vmatprep.subr.mxu0 0.0
    %3637 = vmatpush1.msra.mxu0 %v739
    %3638 = vmatprep.subr.mxu0 0.0
    %3639 = vmatpush1.msra.mxu0 %v740
    %3640 = vmatprep.subr.mxu0 0.0
    %3641 = vmatpush1.msra.mxu0 %v741
    %3642 = vmatprep.subr.mxu0 0.0
    %3643 = vmatpush1.msra.mxu0 %v742
    %3644 = vmatprep.mubr.f32.mxu0 %v1792
    %3645 = vmatmul.mubr.f32.gmra.mrb[0].mxu0 %v1790
    %v3646 = vpop.f32.mrb[0].mxu0
    %v3647 = vadd.f32 %v3577, %v3646
    %v3648 = vpop.f32.mrb[0].mxu0
    %3649 = vdwg.mxu0
    %3650 = vmatprep.subr.mxu0 0.0
    %3651 = vmatpush1.msra.mxu0 %v743
    %3652 = vmatprep.subr.mxu0 0.0
    %3653 = vmatpush1.msra.mxu0 %v744
    %3654 = vmatprep.subr.mxu0 0.0
    %3655 = vmatpush1.msra.mxu0 %v745
    %3656 = vmatprep.subr.mxu0 0.0
    %3657 = vmatpush1.msra.mxu0 %v746
    %3658 = vmatprep.subr.mxu0 0.0
    %3659 = vmatpush1.msra.mxu0 %v747
    %3660 = vmatprep.subr.mxu0 0.0
    %3661 = vmatpush1.msra.mxu0 %v748
    %3662 = vmatprep.subr.mxu0 0.0
    %3663 = vmatpush1.msra.mxu0 %v749
    %3664 = vmatprep.subr.mxu0 0.0
    %3665 = vmatpush1.msra.mxu0 %v750
    %3666 = vmatprep.subr.mxu0 0.0
    %3667 = vmatpush1.msra.mxu0 %v751
    %3668 = vmatprep.subr.mxu0 0.0
    %3669 = vmatpush1.msra.mxu0 %v752
    %3670 = vmatprep.subr.mxu0 0.0
    %3671 = vmatpush1.msra.mxu0 %v753
    %3672 = vmatprep.subr.mxu0 0.0
    %3673 = vmatpush1.msra.mxu0 %v754
    %3674 = vmatprep.subr.mxu0 0.0
    %3675 = vmatpush1.msra.mxu0 %v755
    %3676 = vmatprep.subr.mxu0 0.0
    %3677 = vmatpush1.msra.mxu0 %v756
    %3678 = vmatprep.subr.mxu0 0.0
    %3679 = vmatpush1.msra.mxu0 %v757
    %3680 = vmatprep.subr.mxu0 0.0
    %3681 = vmatpush1.msra.mxu0 %v758
    %3682 = vmatprep.subr.mxu0 0.0
    %3683 = vmatpush1.msra.mxu0 %v759
    %3684 = vmatprep.subr.mxu0 0.0
    %3685 = vmatpush1.msra.mxu0 %v760
    %3686 = vmatprep.subr.mxu0 0.0
    %3687 = vmatpush1.msra.mxu0 %v761
    %3688 = vmatprep.subr.mxu0 0.0
    %3689 = vmatpush1.msra.mxu0 %v762
    %3690 = vmatprep.subr.mxu0 0.0
    %3691 = vmatpush1.msra.mxu0 %v763
    %3692 = vmatprep.subr.mxu0 0.0
    %3693 = vmatpush1.msra.mxu0 %v764
    %3694 = vmatprep.subr.mxu0 0.0
    %3695 = vmatpush1.msra.mxu0 %v765
    %3696 = vmatprep.subr.mxu0 0.0
    %3697 = vmatpush1.msra.mxu0 %v766
    %3698 = vmatprep.subr.mxu0 0.0
    %3699 = vmatpush1.msra.mxu0 %v767
    %3700 = vmatprep.subr.mxu0 0.0
    %3701 = vmatpush1.msra.mxu0 %v768
    %3702 = vmatprep.subr.mxu0 0.0
    %3703 = vmatpush1.msra.mxu0 %v769
    %3704 = vmatprep.subr.mxu0 0.0
    %3705 = vmatpush1.msra.mxu0 %v770
    %3706 = vmatprep.subr.mxu0 0.0
    %3707 = vmatpush1.msra.mxu0 %v771
    %3708 = vmatprep.subr.mxu0 0.0
    %3709 = vmatpush1.msra.mxu0 %v772
    %3710 = vmatprep.subr.mxu0 0.0
    %3711 = vmatpush1.msra.mxu0 %v773
    %3712 = vmatprep.subr.mxu0 0.0
    %3713 = vmatpush1.msra.mxu0 %v774
    %3714 = vmatprep.mubr.f32.mxu0 %v1808
    %3715 = vmatmul.mubr.f32.gmra.mrb[0].mxu0 %v1800
    %v3716 = vpop.f32.mrb[0].mxu0
    %v3717 = vadd.f32 %v3647, %v3716
    %v3718 = vpop.f32.mrb[0].mxu0
    %3719 = vdwg.mxu0
    %3720 = vmatprep.subr.mxu0 0.0
    %3721 = vmatpush1.msra.mxu0 %v775
    %3722 = vmatprep.subr.mxu0 0.0
    %3723 = vmatpush1.msra.mxu0 %v776
    %3724 = vmatprep.subr.mxu0 0.0
    %3725 = vmatpush1.msra.mxu0 %v777
    %3726 = vmatprep.subr.mxu0 0.0
    %3727 = vmatpush1.msra.mxu0 %v778
    %3728 = vmatprep.subr.mxu0 0.0
    %3729 = vmatpush1.msra.mxu0 %v779
    %3730 = vmatprep.subr.mxu0 0.0
    %3731 = vmatpush1.msra.mxu0 %v780
    %3732 = vmatprep.subr.mxu0 0.0
    %3733 = vmatpush1.msra.mxu0 %v781
    %3734 = vmatprep.subr.mxu0 0.0
    %3735 = vmatpush1.msra.mxu0 %v782
    %3736 = vmatprep.subr.mxu0 0.0
    %3737 = vmatpush1.msra.mxu0 %v783
    %3738 = vmatprep.subr.mxu0 0.0
    %3739 = vmatpush1.msra.mxu0 %v784
    %3740 = vmatprep.subr.mxu0 0.0
    %3741 = vmatpush1.msra.mxu0 %v785
    %3742 = vmatprep.subr.mxu0 0.0
    %3743 = vmatpush1.msra.mxu0 %v786
    %3744 = vmatprep.subr.mxu0 0.0
    %3745 = vmatpush1.msra.mxu0 %v787
    %3746 = vmatprep.subr.mxu0 0.0
    %3747 = vmatpush1.msra.mxu0 %v788
    %3748 = vmatprep.subr.mxu0 0.0
    %3749 = vmatpush1.msra.mxu0 %v789
    %3750 = vmatprep.subr.mxu0 0.0
    %3751 = vmatpush1.msra.mxu0 %v790
    %3752 = vmatprep.subr.mxu0 0.0
    %3753 = vmatpush1.msra.mxu0 %v791
    %3754 = vmatprep.subr.mxu0 0.0
    %3755 = vmatpush1.msra.mxu0 %v792
    %3756 = vmatprep.subr.mxu0 0.0
    %3757 = vmatpush1.msra.mxu0 %v793
    %3758 = vmatprep.subr.mxu0 0.0
    %3759 = vmatpush1.msra.mxu0 %v794
    %3760 = vmatprep.subr.mxu0 0.0
    %3761 = vmatpush1.msra.mxu0 %v795
    %3762 = vmatprep.subr.mxu0 0.0
    %3763 = vmatpush1.msra.mxu0 %v796
    %3764 = vmatprep.subr.mxu0 0.0
    %3765 = vmatpush1.msra.mxu0 %v797
    %3766 = vmatprep.subr.mxu0 0.0
    %3767 = vmatpush1.msra.mxu0 %v798
    %3768 = vmatprep.subr.mxu0 0.0
    %3769 = vmatpush1.msra.mxu0 %v799
    %3770 = vmatprep.subr.mxu0 0.0
    %3771 = vmatpush1.msra.mxu0 %v800
    %3772 = vmatprep.subr.mxu0 0.0
    %3773 = vmatpush1.msra.mxu0 %v801
    %3774 = vmatprep.subr.mxu0 0.0
    %3775 = vmatpush1.msra.mxu0 %v802
    %3776 = vmatprep.subr.mxu0 0.0
    %3777 = vmatpush1.msra.mxu0 %v803
    %3778 = vmatprep.subr.mxu0 0.0
    %3779 = vmatpush1.msra.mxu0 %v804
    %3780 = vmatprep.subr.mxu0 0.0
    %3781 = vmatpush1.msra.mxu0 %v805
    %3782 = vmatprep.subr.mxu0 0.0
    %3783 = vmatpush1.msra.mxu0 %v806
    %3784 = vmatprep.mubr.f32.mxu0 %v1809
    %3785 = vmatmul.mubr.f32.gmra.mrb[0].mxu0 %v1807
    %v3786 = vpop.f32.mrb[0].mxu0
    %v3787 = vadd.f32 %v3717, %v3786
    %v3788 = vpop.f32.mrb[0].mxu0
    %3789 = vdwg.mxu0
    %3790 = vmatprep.subr.mxu0 0.0
    %3791 = vmatpush1.msra.mxu0 %v807
    %3792 = vmatprep.subr.mxu0 0.0
    %3793 = vmatpush1.msra.mxu0 %v808
    %3794 = vmatprep.subr.mxu0 0.0
    %3795 = vmatpush1.msra.mxu0 %v809
    %3796 = vmatprep.subr.mxu0 0.0
    %3797 = vmatpush1.msra.mxu0 %v810
    %3798 = vmatprep.subr.mxu0 0.0
    %3799 = vmatpush1.msra.mxu0 %v811
    %3800 = vmatprep.subr.mxu0 0.0
    %3801 = vmatpush1.msra.mxu0 %v812
    %3802 = vmatprep.subr.mxu0 0.0
    %3803 = vmatpush1.msra.mxu0 %v813
    %3804 = vmatprep.subr.mxu0 0.0
    %3805 = vmatpush1.msra.mxu0 %v814
    %3806 = vmatprep.subr.mxu0 0.0
    %3807 = vmatpush1.msra.mxu0 %v815
    %3808 = vmatprep.subr.mxu0 0.0
    %3809 = vmatpush1.msra.mxu0 %v816
    %3810 = vmatprep.subr.mxu0 0.0
    %3811 = vmatpush1.msra.mxu0 %v817
    %3812 = vmatprep.subr.mxu0 0.0
    %3813 = vmatpush1.msra.mxu0 %v818
    %3814 = vmatprep.subr.mxu0 0.0
    %3815 = vmatpush1.msra.mxu0 %v819
    %3816 = vmatprep.subr.mxu0 0.0
    %3817 = vmatpush1.msra.mxu0 %v820
    %3818 = vmatprep.subr.mxu0 0.0
    %3819 = vmatpush1.msra.mxu0 %v821
    %3820 = vmatprep.subr.mxu0 0.0
    %3821 = vmatpush1.msra.mxu0 %v822
    %3822 = vmatprep.subr.mxu0 0.0
    %3823 = vmatpush1.msra.mxu0 %v823
    %3824 = vmatprep.subr.mxu0 0.0
    %3825 = vmatpush1.msra.mxu0 %v824
    %3826 = vmatprep.subr.mxu0 0.0
    %3827 = vmatpush1.msra.mxu0 %v825
    %3828 = vmatprep.subr.mxu0 0.0
    %3829 = vmatpush1.msra.mxu0 %v826
    %3830 = vmatprep.subr.mxu0 0.0
    %3831 = vmatpush1.msra.mxu0 %v827
    %3832 = vmatprep.subr.mxu0 0.0
    %3833 = vmatpush1.msra.mxu0 %v828
    %3834 = vmatprep.subr.mxu0 0.0
    %3835 = vmatpush1.msra.mxu0 %v829
    %3836 = vmatprep.subr.mxu0 0.0
    %3837 = vmatpush1.msra.mxu0 %v830
    %3838 = vmatprep.subr.mxu0 0.0
    %3839 = vmatpush1.msra.mxu0 %v831
    %3840 = vmatprep.subr.mxu0 0.0
    %3841 = vmatpush1.msra.mxu0 %v832
    %3842 = vmatprep.subr.mxu0 0.0
    %3843 = vmatpush1.msra.mxu0 %v833
    %3844 = vmatprep.subr.mxu0 0.0
    %3845 = vmatpush1.msra.mxu0 %v834
    %3846 = vmatprep.subr.mxu0 0.0
    %3847 = vmatpush1.msra.mxu0 %v835
    %3848 = vmatprep.subr.mxu0 0.0
    %3849 = vmatpush1.msra.mxu0 %v836
    %3850 = vmatprep.subr.mxu0 0.0
    %3851 = vmatpush1.msra.mxu0 %v837
    %3852 = vmatprep.subr.mxu0 0.0
    %3853 = vmatpush1.msra.mxu0 %v838
    %3854 = vmatprep.mubr.f32.mxu0 %v1825
    %3855 = vmatmul.mubr.f32.gmra.mrb[0].mxu0 %v1817
    %v3856 = vpop.f32.mrb[0].mxu0
    %v3857 = vadd.f32 %v3787, %v3856
    %v3858 = vpop.f32.mrb[0].mxu0
    %3859 = vdwg.mxu0
    %3860 = vmatprep.subr.mxu0 0.0
    %3861 = vmatpush1.msra.mxu0 %v839
    %3862 = vmatprep.subr.mxu0 0.0
    %3863 = vmatpush1.msra.mxu0 %v840
    %3864 = vmatprep.subr.mxu0 0.0
    %3865 = vmatpush1.msra.mxu0 %v841
    %3866 = vmatprep.subr.mxu0 0.0
    %3867 = vmatpush1.msra.mxu0 %v842
    %3868 = vmatprep.subr.mxu0 0.0
    %3869 = vmatpush1.msra.mxu0 %v843
    %3870 = vmatprep.subr.mxu0 0.0
    %3871 = vmatpush1.msra.mxu0 %v844
    %3872 = vmatprep.subr.mxu0 0.0
    %3873 = vmatpush1.msra.mxu0 %v845
    %3874 = vmatprep.subr.mxu0 0.0
    %3875 = vmatpush1.msra.mxu0 %v846
    %3876 = vmatprep.subr.mxu0 0.0
    %3877 = vmatpush1.msra.mxu0 %v847
    %3878 = vmatprep.subr.mxu0 0.0
    %3879 = vmatpush1.msra.mxu0 %v848
    %3880 = vmatprep.subr.mxu0 0.0
    %3881 = vmatpush1.msra.mxu0 %v849
    %3882 = vmatprep.subr.mxu0 0.0
    %3883 = vmatpush1.msra.mxu0 %v850
    %3884 = vmatprep.subr.mxu0 0.0
    %3885 = vmatpush1.msra.mxu0 %v851
    %3886 = vmatprep.subr.mxu0 0.0
    %3887 = vmatpush1.msra.mxu0 %v852
    %3888 = vmatprep.subr.mxu0 0.0
    %3889 = vmatpush1.msra.mxu0 %v853
    %3890 = vmatprep.subr.mxu0 0.0
    %3891 = vmatpush1.msra.mxu0 %v854
    %3892 = vmatprep.subr.mxu0 0.0
    %3893 = vmatpush1.msra.mxu0 %v855
    %3894 = vmatprep.subr.mxu0 0.0
    %3895 = vmatpush1.msra.mxu0 %v856
    %3896 = vmatprep.subr.mxu0 0.0
    %3897 = vmatpush1.msra.mxu0 %v857
    %3898 = vmatprep.subr.mxu0 0.0
    %3899 = vmatpush1.msra.mxu0 %v858
    %3900 = vmatprep.subr.mxu0 0.0
    %3901 = vmatpush1.msra.mxu0 %v859
    %3902 = vmatprep.subr.mxu0 0.0
    %3903 = vmatpush1.msra.mxu0 %v860
    %3904 = vmatprep.subr.mxu0 0.0
    %3905 = vmatpush1.msra.mxu0 %v861
    %3906 = vmatprep.subr.mxu0 0.0
    %3907 = vmatpush1.msra.mxu0 %v862
    %3908 = vmatprep.subr.mxu0 0.0
    %3909 = vmatpush1.msra.mxu0 %v863
    %3910 = vmatprep.subr.mxu0 0.0
    %3911 = vmatpush1.msra.mxu0 %v864
    %3912 = vmatprep.subr.mxu0 0.0
    %3913 = vmatpush1.msra.mxu0 %v865
    %3914 = vmatprep.subr.mxu0 0.0
    %3915 = vmatpush1.msra.mxu0 %v866
    %3916 = vmatprep.subr.mxu0 0.0
    %3917 = vmatpush1.msra.mxu0 %v867
    %3918 = vmatprep.subr.mxu0 0.0
    %3919 = vmatpush1.msra.mxu0 %v868
    %3920 = vmatprep.subr.mxu0 0.0
    %3921 = vmatpush1.msra.mxu0 %v869
    %3922 = vmatprep.subr.mxu0 0.0
    %3923 = vmatpush1.msra.mxu0 %v870
    %3924 = vmatprep.mubr.f32.mxu0 %v1826
    %3925 = vmatmul.mubr.f32.gmra.mrb[0].mxu0 %v1824
    %v3926 = vpop.f32.mrb[0].mxu0
    %v3927 = vadd.f32 %v3857, %v3926
    %v3928 = vpop.f32.mrb[0].mxu0
    %3929 = vdwg.mxu0
    %3930 = vmatprep.subr.mxu0 0.0
    %3931 = vmatpush1.msra.mxu0 %v871
    %3932 = vmatprep.subr.mxu0 0.0
    %3933 = vmatpush1.msra.mxu0 %v872
    %3934 = vmatprep.subr.mxu0 0.0
    %3935 = vmatpush1.msra.mxu0 %v873
    %3936 = vmatprep.subr.mxu0 0.0
    %3937 = vmatpush1.msra.mxu0 %v874
    %3938 = vmatprep.subr.mxu0 0.0
    %3939 = vmatpush1.msra.mxu0 %v875
    %3940 = vmatprep.subr.mxu0 0.0
    %3941 = vmatpush1.msra.mxu0 %v876
    %3942 = vmatprep.subr.mxu0 0.0
    %3943 = vmatpush1.msra.mxu0 %v877
    %3944 = vmatprep.subr.mxu0 0.0
    %3945 = vmatpush1.msra.mxu0 %v878
    %3946 = vmatprep.subr.mxu0 0.0
    %3947 = vmatpush1.msra.mxu0 %v879
    %3948 = vmatprep.subr.mxu0 0.0
    %3949 = vmatpush1.msra.mxu0 %v880
    %3950 = vmatprep.subr.mxu0 0.0
    %3951 = vmatpush1.msra.mxu0 %v881
    %3952 = vmatprep.subr.mxu0 0.0
    %3953 = vmatpush1.msra.mxu0 %v882
    %3954 = vmatprep.subr.mxu0 0.0
    %3955 = vmatpush1.msra.mxu0 %v883
    %3956 = vmatprep.subr.mxu0 0.0
    %3957 = vmatpush1.msra.mxu0 %v884
    %3958 = vmatprep.subr.mxu0 0.0
    %3959 = vmatpush1.msra.mxu0 %v885
    %3960 = vmatprep.subr.mxu0 0.0
    %3961 = vmatpush1.msra.mxu0 %v886
    %3962 = vmatprep.subr.mxu0 0.0
    %3963 = vmatpush1.msra.mxu0 %v887
    %3964 = vmatprep.subr.mxu0 0.0
    %3965 = vmatpush1.msra.mxu0 %v888
    %3966 = vmatprep.subr.mxu0 0.0
    %3967 = vmatpush1.msra.mxu0 %v889
    %3968 = vmatprep.subr.mxu0 0.0
    %3969 = vmatpush1.msra.mxu0 %v890
    %3970 = vmatprep.subr.mxu0 0.0
    %3971 = vmatpush1.msra.mxu0 %v891
    %3972 = vmatprep.subr.mxu0 0.0
    %3973 = vmatpush1.msra.mxu0 %v892
    %3974 = vmatprep.subr.mxu0 0.0
    %3975 = vmatpush1.msra.mxu0 %v893
    %3976 = vmatprep.subr.mxu0 0.0
    %3977 = vmatpush1.msra.mxu0 %v894
    %3978 = vmatprep.subr.mxu0 0.0
    %3979 = vmatpush1.msra.mxu0 %v895
    %3980 = vmatprep.subr.mxu0 0.0
    %3981 = vmatpush1.msra.mxu0 %v896
    %3982 = vmatprep.subr.mxu0 0.0
    %3983 = vmatpush1.msra.mxu0 %v897
    %3984 = vmatprep.subr.mxu0 0.0
    %3985 = vmatpush1.msra.mxu0 %v898
    %3986 = vmatprep.subr.mxu0 0.0
    %3987 = vmatpush1.msra.mxu0 %v899
    %3988 = vmatprep.subr.mxu0 0.0
    %3989 = vmatpush1.msra.mxu0 %v900
    %3990 = vmatprep.subr.mxu0 0.0
    %3991 = vmatpush1.msra.mxu0 %v901
    %3992 = vmatprep.subr.mxu0 0.0
    %3993 = vmatpush1.msra.mxu0 %v902
    %3994 = vmatprep.mubr.f32.mxu0 %v1842
    %3995 = vmatmul.mubr.f32.gmra.mrb[0].mxu0 %v1834
    %v3996 = vpop.f32.mrb[0].mxu0
    %v3997 = vadd.f32 %v3927, %v3996
    %v3998 = vpop.f32.mrb[0].mxu0
    %3999 = vdwg.mxu0
    %4000 = vmatprep.subr.mxu0 0.0
    %4001 = vmatpush1.msra.mxu0 %v903
    %4002 = vmatprep.subr.mxu0 0.0
    %4003 = vmatpush1.msra.mxu0 %v904
    %4004 = vmatprep.subr.mxu0 0.0
    %4005 = vmatpush1.msra.mxu0 %v905
    %4006 = vmatprep.subr.mxu0 0.0
    %4007 = vmatpush1.msra.mxu0 %v906
    %4008 = vmatprep.subr.mxu0 0.0
    %4009 = vmatpush1.msra.mxu0 %v907
    %4010 = vmatprep.subr.mxu0 0.0
    %4011 = vmatpush1.msra.mxu0 %v908
    %4012 = vmatprep.subr.mxu0 0.0
    %4013 = vmatpush1.msra.mxu0 %v909
    %4014 = vmatprep.subr.mxu0 0.0
    %4015 = vmatpush1.msra.mxu0 %v910
    %4016 = vmatprep.subr.mxu0 0.0
    %4017 = vmatpush1.msra.mxu0 %v911
    %4018 = vmatprep.subr.mxu0 0.0
    %4019 = vmatpush1.msra.mxu0 %v912
    %4020 = vmatprep.subr.mxu0 0.0
    %4021 = vmatpush1.msra.mxu0 %v913
    %4022 = vmatprep.subr.mxu0 0.0
    %4023 = vmatpush1.msra.mxu0 %v914
    %4024 = vmatprep.subr.mxu0 0.0
    %4025 = vmatpush1.msra.mxu0 %v915
    %4026 = vmatprep.subr.mxu0 0.0
    %4027 = vmatpush1.msra.mxu0 %v916
    %4028 = vmatprep.subr.mxu0 0.0
    %4029 = vmatpush1.msra.mxu0 %v917
    %4030 = vmatprep.subr.mxu0 0.0
    %4031 = vmatpush1.msra.mxu0 %v918
    %4032 = vmatprep.subr.mxu0 0.0
    %4033 = vmatpush1.msra.mxu0 %v919
    %4034 = vmatprep.subr.mxu0 0.0
    %4035 = vmatpush1.msra.mxu0 %v920
    %4036 = vmatprep.subr.mxu0 0.0
    %4037 = vmatpush1.msra.mxu0 %v921
    %4038 = vmatprep.subr.mxu0 0.0
    %4039 = vmatpush1.msra.mxu0 %v922
    %4040 = vmatprep.subr.mxu0 0.0
    %4041 = vmatpush1.msra.mxu0 %v923
    %4042 = vmatprep.subr.mxu0 0.0
    %4043 = vmatpush1.msra.mxu0 %v924
    %4044 = vmatprep.subr.mxu0 0.0
    %4045 = vmatpush1.msra.mxu0 %v925
    %4046 = vmatprep.subr.mxu0 0.0
    %4047 = vmatpush1.msra.mxu0 %v926
    %4048 = vmatprep.subr.mxu0 0.0
    %4049 = vmatpush1.msra.mxu0 %v927
    %4050 = vmatprep.subr.mxu0 0.0
    %4051 = vmatpush1.msra.mxu0 %v928
    %4052 = vmatprep.subr.mxu0 0.0
    %4053 = vmatpush1.msra.mxu0 %v929
    %4054 = vmatprep.subr.mxu0 0.0
    %4055 = vmatpush1.msra.mxu0 %v930
    %4056 = vmatprep.subr.mxu0 0.0
    %4057 = vmatpush1.msra.mxu0 %v931
    %4058 = vmatprep.subr.mxu0 0.0
    %4059 = vmatpush1.msra.mxu0 %v932
    %4060 = vmatprep.subr.mxu0 0.0
    %4061 = vmatpush1.msra.mxu0 %v933
    %4062 = vmatprep.subr.mxu0 0.0
    %4063 = vmatpush1.msra.mxu0 %v934
    %4064 = vmatprep.mubr.f32.mxu0 %v1843
    %4065 = vmatmul.mubr.f32.gmra.mrb[0].mxu0 %v1841
    %v4066 = vpop.f32.mrb[0].mxu0
    %v4067 = vadd.f32 %v3997, %v4066
    %v4068 = vpop.f32.mrb[0].mxu0
    %4069 = vdwg.mxu0
    %4070 = vmatprep.subr.mxu0 0.0
    %4071 = vmatpush1.msra.mxu0 %v935
    %4072 = vmatprep.subr.mxu0 0.0
    %4073 = vmatpush1.msra.mxu0 %v936
    %4074 = vmatprep.subr.mxu0 0.0
    %4075 = vmatpush1.msra.mxu0 %v937
    %4076 = vmatprep.subr.mxu0 0.0
    %4077 = vmatpush1.msra.mxu0 %v938
    %4078 = vmatprep.subr.mxu0 0.0
    %4079 = vmatpush1.msra.mxu0 %v939
    %4080 = vmatprep.subr.mxu0 0.0
    %4081 = vmatpush1.msra.mxu0 %v940
    %4082 = vmatprep.subr.mxu0 0.0
    %4083 = vmatpush1.msra.mxu0 %v941
    %4084 = vmatprep.subr.mxu0 0.0
    %4085 = vmatpush1.msra.mxu0 %v942
    %4086 = vmatprep.subr.mxu0 0.0
    %4087 = vmatpush1.msra.mxu0 %v943
    %4088 = vmatprep.subr.mxu0 0.0
    %4089 = vmatpush1.msra.mxu0 %v944
    %4090 = vmatprep.subr.mxu0 0.0
    %4091 = vmatpush1.msra.mxu0 %v945
    %4092 = vmatprep.subr.mxu0 0.0
    %4093 = vmatpush1.msra.mxu0 %v946
    %4094 = vmatprep.subr.mxu0 0.0
    %4095 = vmatpush1.msra.mxu0 %v947
    %4096 = vmatprep.subr.mxu0 0.0
    %4097 = vmatpush1.msra.mxu0 %v948
    %4098 = vmatprep.subr.mxu0 0.0
    %4099 = vmatpush1.msra.mxu0 %v949
    %4100 = vmatprep.subr.mxu0 0.0
    %4101 = vmatpush1.msra.mxu0 %v950
    %4102 = vmatprep.subr.mxu0 0.0
    %4103 = vmatpush1.msra.mxu0 %v951
    %4104 = vmatprep.subr.mxu0 0.0
    %4105 = vmatpush1.msra.mxu0 %v952
    %4106 = vmatprep.subr.mxu0 0.0
    %4107 = vmatpush1.msra.mxu0 %v953
    %4108 = vmatprep.subr.mxu0 0.0
    %4109 = vmatpush1.msra.mxu0 %v954
    %4110 = vmatprep.subr.mxu0 0.0
    %4111 = vmatpush1.msra.mxu0 %v955
    %4112 = vmatprep.subr.mxu0 0.0
    %4113 = vmatpush1.msra.mxu0 %v956
    %4114 = vmatprep.subr.mxu0 0.0
    %4115 = vmatpush1.msra.mxu0 %v957
    %4116 = vmatprep.subr.mxu0 0.0
    %4117 = vmatpush1.msra.mxu0 %v958
    %4118 = vmatprep.subr.mxu0 0.0
    %4119 = vmatpush1.msra.mxu0 %v959
    %4120 = vmatprep.subr.mxu0 0.0
    %4121 = vmatpush1.msra.mxu0 %v960
    %4122 = vmatprep.subr.mxu0 0.0
    %4123 = vmatpush1.msra.mxu0 %v961
    %4124 = vmatprep.subr.mxu0 0.0
    %4125 = vmatpush1.msra.mxu0 %v962
    %4126 = vmatprep.subr.mxu0 0.0
    %4127 = vmatpush1.msra.mxu0 %v963
    %4128 = vmatprep.subr.mxu0 0.0
    %4129 = vmatpush1.msra.mxu0 %v964
    %4130 = vmatprep.subr.mxu0 0.0
    %4131 = vmatpush1.msra.mxu0 %v965
    %4132 = vmatprep.subr.mxu0 0.0
    %4133 = vmatpush1.msra.mxu0 %v966
    %4134 = vmatprep.mubr.f32.mxu0 %v1859
    %4135 = vmatmul.mubr.f32.gmra.mrb[0].mxu0 %v1851
    %v4136 = vpop.f32.mrb[0].mxu0
    %v4137 = vadd.f32 %v4067, %v4136
    %v4138 = vpop.f32.mrb[0].mxu0
    %4139 = vdwg.mxu0
    %4140 = vmatprep.subr.mxu0 0.0
    %4141 = vmatpush1.msra.mxu0 %v967
    %4142 = vmatprep.subr.mxu0 0.0
    %4143 = vmatpush1.msra.mxu0 %v968
    %4144 = vmatprep.subr.mxu0 0.0
    %4145 = vmatpush1.msra.mxu0 %v969
    %4146 = vmatprep.subr.mxu0 0.0
    %4147 = vmatpush1.msra.mxu0 %v970
    %4148 = vmatprep.subr.mxu0 0.0
    %4149 = vmatpush1.msra.mxu0 %v971
    %4150 = vmatprep.subr.mxu0 0.0
    %4151 = vmatpush1.msra.mxu0 %v972
    %4152 = vmatprep.subr.mxu0 0.0
    %4153 = vmatpush1.msra.mxu0 %v973
    %4154 = vmatprep.subr.mxu0 0.0
    %4155 = vmatpush1.msra.mxu0 %v974
    %4156 = vmatprep.subr.mxu0 0.0
    %4157 = vmatpush1.msra.mxu0 %v975
    %4158 = vmatprep.subr.mxu0 0.0
    %4159 = vmatpush1.msra.mxu0 %v976
    %4160 = vmatprep.subr.mxu0 0.0
    %4161 = vmatpush1.msra.mxu0 %v977
    %4162 = vmatprep.subr.mxu0 0.0
    %4163 = vmatpush1.msra.mxu0 %v978
    %4164 = vmatprep.subr.mxu0 0.0
    %4165 = vmatpush1.msra.mxu0 %v979
    %4166 = vmatprep.subr.mxu0 0.0
    %4167 = vmatpush1.msra.mxu0 %v980
    %4168 = vmatprep.subr.mxu0 0.0
    %4169 = vmatpush1.msra.mxu0 %v981
    %4170 = vmatprep.subr.mxu0 0.0
    %4171 = vmatpush1.msra.mxu0 %v982
    %4172 = vmatprep.subr.mxu0 0.0
    %4173 = vmatpush1.msra.mxu0 %v983
    %4174 = vmatprep.subr.mxu0 0.0
    %4175 = vmatpush1.msra.mxu0 %v984
    %4176 = vmatprep.subr.mxu0 0.0
    %4177 = vmatpush1.msra.mxu0 %v985
    %4178 = vmatprep.subr.mxu0 0.0
    %4179 = vmatpush1.msra.mxu0 %v986
    %4180 = vmatprep.subr.mxu0 0.0
    %4181 = vmatpush1.msra.mxu0 %v987
    %4182 = vmatprep.subr.mxu0 0.0
    %4183 = vmatpush1.msra.mxu0 %v988
    %4184 = vmatprep.subr.mxu0 0.0
    %4185 = vmatpush1.msra.mxu0 %v989
    %4186 = vmatprep.subr.mxu0 0.0
    %4187 = vmatpush1.msra.mxu0 %v990
    %4188 = vmatprep.subr.mxu0 0.0
    %4189 = vmatpush1.msra.mxu0 %v991
    %4190 = vmatprep.subr.mxu0 0.0
    %4191 = vmatpush1.msra.mxu0 %v992
    %4192 = vmatprep.subr.mxu0 0.0
    %4193 = vmatpush1.msra.mxu0 %v993
    %4194 = vmatprep.subr.mxu0 0.0
    %4195 = vmatpush1.msra.mxu0 %v994
    %4196 = vmatprep.subr.mxu0 0.0
    %4197 = vmatpush1.msra.mxu0 %v995
    %4198 = vmatprep.subr.mxu0 0.0
    %4199 = vmatpush1.msra.mxu0 %v996
    %4200 = vmatprep.subr.mxu0 0.0
    %4201 = vmatpush1.msra.mxu0 %v997
    %4202 = vmatprep.subr.mxu0 0.0
    %4203 = vmatpush1.msra.mxu0 %v998
    %4204 = vmatprep.mubr.f32.mxu0 %v1860
    %4205 = vmatmul.mubr.f32.gmra.mrb[0].mxu0 %v1858
    %v4206 = vpop.f32.mrb[0].mxu0
    %v4207 = vadd.f32 %v4137, %v4206
    %v4208 = vpop.f32.mrb[0].mxu0
    %4209 = vdwg.mxu0
    %4210 = vmatprep.subr.mxu0 0.0
    %4211 = vmatpush1.msra.mxu0 %v999
    %4212 = vmatprep.subr.mxu0 0.0
    %4213 = vmatpush1.msra.mxu0 %v1000
    %4214 = vmatprep.subr.mxu0 0.0
    %4215 = vmatpush1.msra.mxu0 %v1001
    %4216 = vmatprep.subr.mxu0 0.0
    %4217 = vmatpush1.msra.mxu0 %v1002
    %4218 = vmatprep.subr.mxu0 0.0
    %4219 = vmatpush1.msra.mxu0 %v1003
    %4220 = vmatprep.subr.mxu0 0.0
    %4221 = vmatpush1.msra.mxu0 %v1004
    %4222 = vmatprep.subr.mxu0 0.0
    %4223 = vmatpush1.msra.mxu0 %v1005
    %4224 = vmatprep.subr.mxu0 0.0
    %4225 = vmatpush1.msra.mxu0 %v1006
    %4226 = vmatprep.subr.mxu0 0.0
    %4227 = vmatpush1.msra.mxu0 %v1007
    %4228 = vmatprep.subr.mxu0 0.0
    %4229 = vmatpush1.msra.mxu0 %v1008
    %4230 = vmatprep.subr.mxu0 0.0
    %4231 = vmatpush1.msra.mxu0 %v1009
    %4232 = vmatprep.subr.mxu0 0.0
    %4233 = vmatpush1.msra.mxu0 %v1010
    %4234 = vmatprep.subr.mxu0 0.0
    %4235 = vmatpush1.msra.mxu0 %v1011
    %4236 = vmatprep.subr.mxu0 0.0
    %4237 = vmatpush1.msra.mxu0 %v1012
    %4238 = vmatprep.subr.mxu0 0.0
    %4239 = vmatpush1.msra.mxu0 %v1013
    %4240 = vmatprep.subr.mxu0 0.0
    %4241 = vmatpush1.msra.mxu0 %v1014
    %4242 = vmatprep.subr.mxu0 0.0
    %4243 = vmatpush1.msra.mxu0 %v1015
    %4244 = vmatprep.subr.mxu0 0.0
    %4245 = vmatpush1.msra.mxu0 %v1016
    %4246 = vmatprep.subr.mxu0 0.0
    %4247 = vmatpush1.msra.mxu0 %v1017
    %4248 = vmatprep.subr.mxu0 0.0
    %4249 = vmatpush1.msra.mxu0 %v1018
    %4250 = vmatprep.subr.mxu0 0.0
    %4251 = vmatpush1.msra.mxu0 %v1019
    %4252 = vmatprep.subr.mxu0 0.0
    %4253 = vmatpush1.msra.mxu0 %v1020
    %4254 = vmatprep.subr.mxu0 0.0
    %4255 = vmatpush1.msra.mxu0 %v1021
    %4256 = vmatprep.subr.mxu0 0.0
    %4257 = vmatpush1.msra.mxu0 %v1022
    %4258 = vmatprep.subr.mxu0 0.0
    %4259 = vmatpush1.msra.mxu0 %v1023
    %4260 = vmatprep.subr.mxu0 0.0
    %4261 = vmatpush1.msra.mxu0 %v1024
    %4262 = vmatprep.subr.mxu0 0.0
    %4263 = vmatpush1.msra.mxu0 %v1025
    %4264 = vmatprep.subr.mxu0 0.0
    %4265 = vmatpush1.msra.mxu0 %v1026
    %4266 = vmatprep.subr.mxu0 0.0
    %4267 = vmatpush1.msra.mxu0 %v1027
    %4268 = vmatprep.subr.mxu0 0.0
    %4269 = vmatpush1.msra.mxu0 %v1028
    %4270 = vmatprep.subr.mxu0 0.0
    %4271 = vmatpush1.msra.mxu0 %v1029
    %4272 = vmatprep.subr.mxu0 0.0
    %4273 = vmatpush1.msra.mxu0 %v1030
    %4274 = vmatprep.mubr.f32.mxu0 %v1876
    %4275 = vmatmul.mubr.f32.gmra.mrb[0].mxu0 %v1868
    %v4276 = vpop.f32.mrb[0].mxu0
    %v4277 = vadd.f32 %v4207, %v4276
    %v4278 = vpop.f32.mrb[0].mxu0
    %4279 = vdwg.mxu0
    %4280 = vmatprep.subr.mxu0 0.0
    %4281 = vmatpush1.msra.mxu0 %v1031
    %4282 = vmatprep.subr.mxu0 0.0
    %4283 = vmatpush1.msra.mxu0 %v1032
    %4284 = vmatprep.subr.mxu0 0.0
    %4285 = vmatpush1.msra.mxu0 %v1033
    %4286 = vmatprep.subr.mxu0 0.0
    %4287 = vmatpush1.msra.mxu0 %v1034
    %4288 = vmatprep.subr.mxu0 0.0
    %4289 = vmatpush1.msra.mxu0 %v1035
    %4290 = vmatprep.subr.mxu0 0.0
    %4291 = vmatpush1.msra.mxu0 %v1036
    %4292 = vmatprep.subr.mxu0 0.0
    %4293 = vmatpush1.msra.mxu0 %v1037
    %4294 = vmatprep.subr.mxu0 0.0
    %4295 = vmatpush1.msra.mxu0 %v1038
    %4296 = vmatprep.subr.mxu0 0.0
    %4297 = vmatpush1.msra.mxu0 %v1039
    %4298 = vmatprep.subr.mxu0 0.0
    %4299 = vmatpush1.msra.mxu0 %v1040
    %4300 = vmatprep.subr.mxu0 0.0
    %4301 = vmatpush1.msra.mxu0 %v1041
    %4302 = vmatprep.subr.mxu0 0.0
    %4303 = vmatpush1.msra.mxu0 %v1042
    %4304 = vmatprep.subr.mxu0 0.0
    %4305 = vmatpush1.msra.mxu0 %v1043
    %4306 = vmatprep.subr.mxu0 0.0
    %4307 = vmatpush1.msra.mxu0 %v1044
    %4308 = vmatprep.subr.mxu0 0.0
    %4309 = vmatpush1.msra.mxu0 %v1045
    %4310 = vmatprep.subr.mxu0 0.0
    %4311 = vmatpush1.msra.mxu0 %v1046
    %4312 = vmatprep.subr.mxu0 0.0
    %4313 = vmatpush1.msra.mxu0 %v1047
    %4314 = vmatprep.subr.mxu0 0.0
    %4315 = vmatpush1.msra.mxu0 %v1048
    %4316 = vmatprep.subr.mxu0 0.0
    %4317 = vmatpush1.msra.mxu0 %v1049
    %4318 = vmatprep.subr.mxu0 0.0
    %4319 = vmatpush1.msra.mxu0 %v1050
    %4320 = vmatprep.subr.mxu0 0.0
    %4321 = vmatpush1.msra.mxu0 %v1051
    %4322 = vmatprep.subr.mxu0 0.0
    %4323 = vmatpush1.msra.mxu0 %v1052
    %4324 = vmatprep.subr.mxu0 0.0
    %4325 = vmatpush1.msra.mxu0 %v1053
    %4326 = vmatprep.subr.mxu0 0.0
    %4327 = vmatpush1.msra.mxu0 %v1054
    %4328 = vmatprep.subr.mxu0 0.0
    %4329 = vmatpush1.msra.mxu0 %v1055
    %4330 = vmatprep.subr.mxu0 0.0
    %4331 = vmatpush1.msra.mxu0 %v1056
    %4332 = vmatprep.subr.mxu0 0.0
    %4333 = vmatpush1.msra.mxu0 %v1057
    %4334 = vmatprep.subr.mxu0 0.0
    %4335 = vmatpush1.msra.mxu0 %v1058
    %4336 = vmatprep.subr.mxu0 0.0
    %4337 = vmatpush1.msra.mxu0 %v1059
    %4338 = vmatprep.subr.mxu0 0.0
    %4339 = vmatpush1.msra.mxu0 %v1060
    %4340 = vmatprep.subr.mxu0 0.0
    %4341 = vmatpush1.msra.mxu0 %v1061
    %4342 = vmatprep.subr.mxu0 0.0
    %4343 = vmatpush1.msra.mxu0 %v1062
    %4344 = vmatprep.mubr.f32.mxu0 %v1877
    %4345 = vmatmul.mubr.f32.gmra.mrb[0].mxu0 %v1875
    %v4346 = vpop.f32.mrb[0].mxu0
    %v4347 = vadd.f32 %v4277, %v4346
    %v4348 = vpop.f32.mrb[0].mxu0
    %4349 = vdwg.mxu0
    %4350 = vmatprep.subr.mxu0 0.0
    %4351 = vmatpush1.msra.mxu0 %v1063
    %4352 = vmatprep.subr.mxu0 0.0
    %4353 = vmatpush1.msra.mxu0 %v1064
    %4354 = vmatprep.subr.mxu0 0.0
    %4355 = vmatpush1.msra.mxu0 %v1065
    %4356 = vmatprep.subr.mxu0 0.0
    %4357 = vmatpush1.msra.mxu0 %v1066
    %4358 = vmatprep.subr.mxu0 0.0
    %4359 = vmatpush1.msra.mxu0 %v1067
    %4360 = vmatprep.subr.mxu0 0.0
    %4361 = vmatpush1.msra.mxu0 %v1068
    %4362 = vmatprep.subr.mxu0 0.0
    %4363 = vmatpush1.msra.mxu0 %v1069
    %4364 = vmatprep.subr.mxu0 0.0
    %4365 = vmatpush1.msra.mxu0 %v1070
    %4366 = vmatprep.subr.mxu0 0.0
    %4367 = vmatpush1.msra.mxu0 %v1071
    %4368 = vmatprep.subr.mxu0 0.0
    %4369 = vmatpush1.msra.mxu0 %v1072
    %4370 = vmatprep.subr.mxu0 0.0
    %4371 = vmatpush1.msra.mxu0 %v1073
    %4372 = vmatprep.subr.mxu0 0.0
    %4373 = vmatpush1.msra.mxu0 %v1074
    %4374 = vmatprep.subr.mxu0 0.0
    %4375 = vmatpush1.msra.mxu0 %v1075
    %4376 = vmatprep.subr.mxu0 0.0
    %4377 = vmatpush1.msra.mxu0 %v1076
    %4378 = vmatprep.subr.mxu0 0.0
    %4379 = vmatpush1.msra.mxu0 %v1077
    %4380 = vmatprep.subr.mxu0 0.0
    %4381 = vmatpush1.msra.mxu0 %v1078
    %4382 = vmatprep.subr.mxu0 0.0
    %4383 = vmatpush1.msra.mxu0 %v1079
    %4384 = vmatprep.subr.mxu0 0.0
    %4385 = vmatpush1.msra.mxu0 %v1080
    %4386 = vmatprep.subr.mxu0 0.0
    %4387 = vmatpush1.msra.mxu0 %v1081
    %4388 = vmatprep.subr.mxu0 0.0
    %4389 = vmatpush1.msra.mxu0 %v1082
    %4390 = vmatprep.subr.mxu0 0.0
    %4391 = vmatpush1.msra.mxu0 %v1083
    %4392 = vmatprep.subr.mxu0 0.0
    %4393 = vmatpush1.msra.mxu0 %v1084
    %4394 = vmatprep.subr.mxu0 0.0
    %4395 = vmatpush1.msra.mxu0 %v1085
    %4396 = vmatprep.subr.mxu0 0.0
    %4397 = vmatpush1.msra.mxu0 %v1086
    %4398 = vmatprep.subr.mxu0 0.0
    %4399 = vmatpush1.msra.mxu0 %v1087
    %4400 = vmatprep.subr.mxu0 0.0
    %4401 = vmatpush1.msra.mxu0 %v1088
    %4402 = vmatprep.subr.mxu0 0.0
    %4403 = vmatpush1.msra.mxu0 %v1089
    %4404 = vmatprep.subr.mxu0 0.0
    %4405 = vmatpush1.msra.mxu0 %v1090
    %4406 = vmatprep.subr.mxu0 0.0
    %4407 = vmatpush1.msra.mxu0 %v1091
    %4408 = vmatprep.subr.mxu0 0.0
    %4409 = vmatpush1.msra.mxu0 %v1092
    %4410 = vmatprep.subr.mxu0 0.0
    %4411 = vmatpush1.msra.mxu0 %v1093
    %4412 = vmatprep.subr.mxu0 0.0
    %4413 = vmatpush1.msra.mxu0 %v1094
    %4414 = vmatprep.mubr.f32.mxu0 %v1893
    %4415 = vmatmul.mubr.f32.gmra.mrb[0].mxu0 %v1885
    %v4416 = vpop.f32.mrb[0].mxu0
    %v4417 = vadd.f32 %v4347, %v4416
    %v4418 = vpop.f32.mrb[0].mxu0
    %4419 = vdwg.mxu0
    %4420 = vmatprep.subr.mxu0 0.0
    %4421 = vmatpush1.msra.mxu0 %v1095
    %4422 = vmatprep.subr.mxu0 0.0
    %4423 = vmatpush1.msra.mxu0 %v1096
    %4424 = vmatprep.subr.mxu0 0.0
    %4425 = vmatpush1.msra.mxu0 %v1097
    %4426 = vmatprep.subr.mxu0 0.0
    %4427 = vmatpush1.msra.mxu0 %v1098
    %4428 = vmatprep.subr.mxu0 0.0
    %4429 = vmatpush1.msra.mxu0 %v1099
    %4430 = vmatprep.subr.mxu0 0.0
    %4431 = vmatpush1.msra.mxu0 %v1100
    %4432 = vmatprep.subr.mxu0 0.0
    %4433 = vmatpush1.msra.mxu0 %v1101
    %4434 = vmatprep.subr.mxu0 0.0
    %4435 = vmatpush1.msra.mxu0 %v1102
    %4436 = vmatprep.subr.mxu0 0.0
    %4437 = vmatpush1.msra.mxu0 %v1103
    %4438 = vmatprep.subr.mxu0 0.0
    %4439 = vmatpush1.msra.mxu0 %v1104
    %4440 = vmatprep.subr.mxu0 0.0
    %4441 = vmatpush1.msra.mxu0 %v1105
    %4442 = vmatprep.subr.mxu0 0.0
    %4443 = vmatpush1.msra.mxu0 %v1106
    %4444 = vmatprep.subr.mxu0 0.0
    %4445 = vmatpush1.msra.mxu0 %v1107
    %4446 = vmatprep.subr.mxu0 0.0
    %4447 = vmatpush1.msra.mxu0 %v1108
    %4448 = vmatprep.subr.mxu0 0.0
    %4449 = vmatpush1.msra.mxu0 %v1109
    %4450 = vmatprep.subr.mxu0 0.0
    %4451 = vmatpush1.msra.mxu0 %v1110
    %4452 = vmatprep.subr.mxu0 0.0
    %4453 = vmatpush1.msra.mxu0 %v1111
    %4454 = vmatprep.subr.mxu0 0.0
    %4455 = vmatpush1.msra.mxu0 %v1112
    %4456 = vmatprep.subr.mxu0 0.0
    %4457 = vmatpush1.msra.mxu0 %v1113
    %4458 = vmatprep.subr.mxu0 0.0
    %4459 = vmatpush1.msra.mxu0 %v1114
    %4460 = vmatprep.subr.mxu0 0.0
    %4461 = vmatpush1.msra.mxu0 %v1115
    %4462 = vmatprep.subr.mxu0 0.0
    %4463 = vmatpush1.msra.mxu0 %v1116
    %4464 = vmatprep.subr.mxu0 0.0
    %4465 = vmatpush1.msra.mxu0 %v1117
    %4466 = vmatprep.subr.mxu0 0.0
    %4467 = vmatpush1.msra.mxu0 %v1118
    %4468 = vmatprep.subr.mxu0 0.0
    %4469 = vmatpush1.msra.mxu0 %v1119
    %4470 = vmatprep.subr.mxu0 0.0
    %4471 = vmatpush1.msra.mxu0 %v1120
    %4472 = vmatprep.subr.mxu0 0.0
    %4473 = vmatpush1.msra.mxu0 %v1121
    %4474 = vmatprep.subr.mxu0 0.0
    %4475 = vmatpush1.msra.mxu0 %v1122
    %4476 = vmatprep.subr.mxu0 0.0
    %4477 = vmatpush1.msra.mxu0 %v1123
    %4478 = vmatprep.subr.mxu0 0.0
    %4479 = vmatpush1.msra.mxu0 %v1124
    %4480 = vmatprep.subr.mxu0 0.0
    %4481 = vmatpush1.msra.mxu0 %v1125
    %4482 = vmatprep.subr.mxu0 0.0
    %4483 = vmatpush1.msra.mxu0 %v1126
    %4484 = vmatprep.mubr.f32.mxu0 %v1894
    %4485 = vmatmul.mubr.f32.gmra.mrb[0].mxu0 %v1892
    %v4486 = vpop.f32.mrb[0].mxu0
    %v4487 = vadd.f32 %v4417, %v4486
    %v4488 = vpop.f32.mrb[0].mxu0
    %4489 = vdwg.mxu0
    %4490 = vmatprep.subr.mxu0 0.0
    %4491 = vmatpush1.msra.mxu0 %v1127
    %4492 = vmatprep.subr.mxu0 0.0
    %4493 = vmatpush1.msra.mxu0 %v1128
    %4494 = vmatprep.subr.mxu0 0.0
    %4495 = vmatpush1.msra.mxu0 %v1129
    %4496 = vmatprep.subr.mxu0 0.0
    %4497 = vmatpush1.msra.mxu0 %v1130
    %4498 = vmatprep.subr.mxu0 0.0
    %4499 = vmatpush1.msra.mxu0 %v1131
    %4500 = vmatprep.subr.mxu0 0.0
    %4501 = vmatpush1.msra.mxu0 %v1132
    %4502 = vmatprep.subr.mxu0 0.0
    %4503 = vmatpush1.msra.mxu0 %v1133
    %4504 = vmatprep.subr.mxu0 0.0
    %4505 = vmatpush1.msra.mxu0 %v1134
    %4506 = vmatprep.subr.mxu0 0.0
    %4507 = vmatpush1.msra.mxu0 %v1135
    %4508 = vmatprep.subr.mxu0 0.0
    %4509 = vmatpush1.msra.mxu0 %v1136
    %4510 = vmatprep.subr.mxu0 0.0
    %4511 = vmatpush1.msra.mxu0 %v1137
    %4512 = vmatprep.subr.mxu0 0.0
    %4513 = vmatpush1.msra.mxu0 %v1138
    %4514 = vmatprep.subr.mxu0 0.0
    %4515 = vmatpush1.msra.mxu0 %v1139
    %4516 = vmatprep.subr.mxu0 0.0
    %4517 = vmatpush1.msra.mxu0 %v1140
    %4518 = vmatprep.subr.mxu0 0.0
    %4519 = vmatpush1.msra.mxu0 %v1141
    %4520 = vmatprep.subr.mxu0 0.0
    %4521 = vmatpush1.msra.mxu0 %v1142
    %4522 = vmatprep.subr.mxu0 0.0
    %4523 = vmatpush1.msra.mxu0 %v1143
    %4524 = vmatprep.subr.mxu0 0.0
    %4525 = vmatpush1.msra.mxu0 %v1144
    %4526 = vmatprep.subr.mxu0 0.0
    %4527 = vmatpush1.msra.mxu0 %v1145
    %4528 = vmatprep.subr.mxu0 0.0
    %4529 = vmatpush1.msra.mxu0 %v1146
    %4530 = vmatprep.subr.mxu0 0.0
    %4531 = vmatpush1.msra.mxu0 %v1147
    %4532 = vmatprep.subr.mxu0 0.0
    %4533 = vmatpush1.msra.mxu0 %v1148
    %4534 = vmatprep.subr.mxu0 0.0
    %4535 = vmatpush1.msra.mxu0 %v1149
    %4536 = vmatprep.subr.mxu0 0.0
    %4537 = vmatpush1.msra.mxu0 %v1150
    %4538 = vmatprep.subr.mxu0 0.0
    %4539 = vmatpush1.msra.mxu0 %v1151
    %4540 = vmatprep.subr.mxu0 0.0
    %4541 = vmatpush1.msra.mxu0 %v1152
    %4542 = vmatprep.subr.mxu0 0.0
    %4543 = vmatpush1.msra.mxu0 %v1153
    %4544 = vmatprep.subr.mxu0 0.0
    %4545 = vmatpush1.msra.mxu0 %v1154
    %4546 = vmatprep.subr.mxu0 0.0
    %4547 = vmatpush1.msra.mxu0 %v1155
    %4548 = vmatprep.subr.mxu0 0.0
    %4549 = vmatpush1.msra.mxu0 %v1156
    %4550 = vmatprep.subr.mxu0 0.0
    %4551 = vmatpush1.msra.mxu0 %v1157
    %4552 = vmatprep.subr.mxu0 0.0
    %4553 = vmatpush1.msra.mxu0 %v1158
    %4554 = vmatprep.mubr.f32.mxu0 %v1910
    %4555 = vmatmul.mubr.f32.gmra.mrb[0].mxu0 %v1902
    %v4556 = vpop.f32.mrb[0].mxu0
    %v4557 = vadd.f32 %v4487, %v4556
    %v4558 = vpop.f32.mrb[0].mxu0
    %4559 = vdwg.mxu0
    %4560 = vmatprep.subr.mxu0 0.0
    %4561 = vmatpush1.msra.mxu0 %v1159
    %4562 = vmatprep.subr.mxu0 0.0
    %4563 = vmatpush1.msra.mxu0 %v1160
    %4564 = vmatprep.subr.mxu0 0.0
    %4565 = vmatpush1.msra.mxu0 %v1161
    %4566 = vmatprep.subr.mxu0 0.0
    %4567 = vmatpush1.msra.mxu0 %v1162
    %4568 = vmatprep.subr.mxu0 0.0
    %4569 = vmatpush1.msra.mxu0 %v1163
    %4570 = vmatprep.subr.mxu0 0.0
    %4571 = vmatpush1.msra.mxu0 %v1164
    %4572 = vmatprep.subr.mxu0 0.0
    %4573 = vmatpush1.msra.mxu0 %v1165
    %4574 = vmatprep.subr.mxu0 0.0
    %4575 = vmatpush1.msra.mxu0 %v1166
    %4576 = vmatprep.subr.mxu0 0.0
    %4577 = vmatpush1.msra.mxu0 %v1167
    %4578 = vmatprep.subr.mxu0 0.0
    %4579 = vmatpush1.msra.mxu0 %v1168
    %4580 = vmatprep.subr.mxu0 0.0
    %4581 = vmatpush1.msra.mxu0 %v1169
    %4582 = vmatprep.subr.mxu0 0.0
    %4583 = vmatpush1.msra.mxu0 %v1170
    %4584 = vmatprep.subr.mxu0 0.0
    %4585 = vmatpush1.msra.mxu0 %v1171
    %4586 = vmatprep.subr.mxu0 0.0
    %4587 = vmatpush1.msra.mxu0 %v1172
    %4588 = vmatprep.subr.mxu0 0.0
    %4589 = vmatpush1.msra.mxu0 %v1173
    %4590 = vmatprep.subr.mxu0 0.0
    %4591 = vmatpush1.msra.mxu0 %v1174
    %4592 = vmatprep.subr.mxu0 0.0
    %4593 = vmatpush1.msra.mxu0 %v1175
    %4594 = vmatprep.subr.mxu0 0.0
    %4595 = vmatpush1.msra.mxu0 %v1176
    %4596 = vmatprep.subr.mxu0 0.0
    %4597 = vmatpush1.msra.mxu0 %v1177
    %4598 = vmatprep.subr.mxu0 0.0
    %4599 = vmatpush1.msra.mxu0 %v1178
    %4600 = vmatprep.subr.mxu0 0.0
    %4601 = vmatpush1.msra.mxu0 %v1179
    %4602 = vmatprep.subr.mxu0 0.0
    %4603 = vmatpush1.msra.mxu0 %v1180
    %4604 = vmatprep.subr.mxu0 0.0
    %4605 = vmatpush1.msra.mxu0 %v1181
    %4606 = vmatprep.subr.mxu0 0.0
    %4607 = vmatpush1.msra.mxu0 %v1182
    %4608 = vmatprep.subr.mxu0 0.0
    %4609 = vmatpush1.msra.mxu0 %v1183
    %4610 = vmatprep.subr.mxu0 0.0
    %4611 = vmatpush1.msra.mxu0 %v1184
    %4612 = vmatprep.subr.mxu0 0.0
    %4613 = vmatpush1.msra.mxu0 %v1185
    %4614 = vmatprep.subr.mxu0 0.0
    %4615 = vmatpush1.msra.mxu0 %v1186
    %4616 = vmatprep.subr.mxu0 0.0
    %4617 = vmatpush1.msra.mxu0 %v1187
    %4618 = vmatprep.subr.mxu0 0.0
    %4619 = vmatpush1.msra.mxu0 %v1188
    %4620 = vmatprep.subr.mxu0 0.0
    %4621 = vmatpush1.msra.mxu0 %v1189
    %4622 = vmatprep.subr.mxu0 0.0
    %4623 = vmatpush1.msra.mxu0 %v1190
    %4624 = vmatprep.mubr.f32.mxu0 %v1911
    %4625 = vmatmul.mubr.f32.gmra.mrb[0].mxu0 %v1909
    %v4626 = vpop.f32.mrb[0].mxu0
    %v4627 = vadd.f32 %v4557, %v4626
    %v4628 = vpop.f32.mrb[0].mxu0
    %4629 = vdwg.mxu0
    %4630 = vmatprep.subr.mxu0 0.0
    %4631 = vmatpush1.msra.mxu0 %v1191
    %4632 = vmatprep.subr.mxu0 0.0
    %4633 = vmatpush1.msra.mxu0 %v1192
    %4634 = vmatprep.subr.mxu0 0.0
    %4635 = vmatpush1.msra.mxu0 %v1193
    %4636 = vmatprep.subr.mxu0 0.0
    %4637 = vmatpush1.msra.mxu0 %v1194
    %4638 = vmatprep.subr.mxu0 0.0
    %4639 = vmatpush1.msra.mxu0 %v1195
    %4640 = vmatprep.subr.mxu0 0.0
    %4641 = vmatpush1.msra.mxu0 %v1196
    %4642 = vmatprep.subr.mxu0 0.0
    %4643 = vmatpush1.msra.mxu0 %v1197
    %4644 = vmatprep.subr.mxu0 0.0
    %4645 = vmatpush1.msra.mxu0 %v1198
    %4646 = vmatprep.subr.mxu0 0.0
    %4647 = vmatpush1.msra.mxu0 %v1199
    %4648 = vmatprep.subr.mxu0 0.0
    %4649 = vmatpush1.msra.mxu0 %v1200
    %4650 = vmatprep.subr.mxu0 0.0
    %4651 = vmatpush1.msra.mxu0 %v1201
    %4652 = vmatprep.subr.mxu0 0.0
    %4653 = vmatpush1.msra.mxu0 %v1202
    %4654 = vmatprep.subr.mxu0 0.0
    %4655 = vmatpush1.msra.mxu0 %v1203
    %4656 = vmatprep.subr.mxu0 0.0
    %4657 = vmatpush1.msra.mxu0 %v1204
    %4658 = vmatprep.subr.mxu0 0.0
    %4659 = vmatpush1.msra.mxu0 %v1205
    %4660 = vmatprep.subr.mxu0 0.0
    %4661 = vmatpush1.msra.mxu0 %v1206
    %4662 = vmatprep.subr.mxu0 0.0
    %4663 = vmatpush1.msra.mxu0 %v1207
    %4664 = vmatprep.subr.mxu0 0.0
    %4665 = vmatpush1.msra.mxu0 %v1208
    %4666 = vmatprep.subr.mxu0 0.0
    %4667 = vmatpush1.msra.mxu0 %v1209
    %4668 = vmatprep.subr.mxu0 0.0
    %4669 = vmatpush1.msra.mxu0 %v1210
    %4670 = vmatprep.subr.mxu0 0.0
    %4671 = vmatpush1.msra.mxu0 %v1211
    %4672 = vmatprep.subr.mxu0 0.0
    %4673 = vmatpush1.msra.mxu0 %v1212
    %4674 = vmatprep.subr.mxu0 0.0
    %4675 = vmatpush1.msra.mxu0 %v1213
    %4676 = vmatprep.subr.mxu0 0.0
    %4677 = vmatpush1.msra.mxu0 %v1214
    %4678 = vmatprep.subr.mxu0 0.0
    %4679 = vmatpush1.msra.mxu0 %v1215
    %4680 = vmatprep.subr.mxu0 0.0
    %4681 = vmatpush1.msra.mxu0 %v1216
    %4682 = vmatprep.subr.mxu0 0.0
    %4683 = vmatpush1.msra.mxu0 %v1217
    %4684 = vmatprep.subr.mxu0 0.0
    %4685 = vmatpush1.msra.mxu0 %v1218
    %4686 = vmatprep.subr.mxu0 0.0
    %4687 = vmatpush1.msra.mxu0 %v1219
    %4688 = vmatprep.subr.mxu0 0.0
    %4689 = vmatpush1.msra.mxu0 %v1220
    %4690 = vmatprep.subr.mxu0 0.0
    %4691 = vmatpush1.msra.mxu0 %v1221
    %4692 = vmatprep.subr.mxu0 0.0
    %4693 = vmatpush1.msra.mxu0 %v1222
    %4694 = vmatprep.mubr.f32.mxu0 %v1927
    %4695 = vmatmul.mubr.f32.gmra.mrb[0].mxu0 %v1919
    %v4696 = vpop.f32.mrb[0].mxu0
    %v4697 = vadd.f32 %v4627, %v4696
    %v4698 = vpop.f32.mrb[0].mxu0
    %4699 = vdwg.mxu0
    %4700 = vmatprep.subr.mxu0 0.0
    %4701 = vmatpush1.msra.mxu0 %v1223
    %4702 = vmatprep.subr.mxu0 0.0
    %4703 = vmatpush1.msra.mxu0 %v1224
    %4704 = vmatprep.subr.mxu0 0.0
    %4705 = vmatpush1.msra.mxu0 %v1225
    %4706 = vmatprep.subr.mxu0 0.0
    %4707 = vmatpush1.msra.mxu0 %v1226
    %4708 = vmatprep.subr.mxu0 0.0
    %4709 = vmatpush1.msra.mxu0 %v1227
    %4710 = vmatprep.subr.mxu0 0.0
    %4711 = vmatpush1.msra.mxu0 %v1228
    %4712 = vmatprep.subr.mxu0 0.0
    %4713 = vmatpush1.msra.mxu0 %v1229
    %4714 = vmatprep.subr.mxu0 0.0
    %4715 = vmatpush1.msra.mxu0 %v1230
    %4716 = vmatprep.subr.mxu0 0.0
    %4717 = vmatpush1.msra.mxu0 %v1231
    %4718 = vmatprep.subr.mxu0 0.0
    %4719 = vmatpush1.msra.mxu0 %v1232
    %4720 = vmatprep.subr.mxu0 0.0
    %4721 = vmatpush1.msra.mxu0 %v1233
    %4722 = vmatprep.subr.mxu0 0.0
    %4723 = vmatpush1.msra.mxu0 %v1234
    %4724 = vmatprep.subr.mxu0 0.0
    %4725 = vmatpush1.msra.mxu0 %v1235
    %4726 = vmatprep.subr.mxu0 0.0
    %4727 = vmatpush1.msra.mxu0 %v1236
    %4728 = vmatprep.subr.mxu0 0.0
    %4729 = vmatpush1.msra.mxu0 %v1237
    %4730 = vmatprep.subr.mxu0 0.0
    %4731 = vmatpush1.msra.mxu0 %v1238
    %4732 = vmatprep.subr.mxu0 0.0
    %4733 = vmatpush1.msra.mxu0 %v1239
    %4734 = vmatprep.subr.mxu0 0.0
    %4735 = vmatpush1.msra.mxu0 %v1240
    %4736 = vmatprep.subr.mxu0 0.0
    %4737 = vmatpush1.msra.mxu0 %v1241
    %4738 = vmatprep.subr.mxu0 0.0
    %4739 = vmatpush1.msra.mxu0 %v1242
    %4740 = vmatprep.subr.mxu0 0.0
    %4741 = vmatpush1.msra.mxu0 %v1243
    %4742 = vmatprep.subr.mxu0 0.0
    %4743 = vmatpush1.msra.mxu0 %v1244
    %4744 = vmatprep.subr.mxu0 0.0
    %4745 = vmatpush1.msra.mxu0 %v1245
    %4746 = vmatprep.subr.mxu0 0.0
    %4747 = vmatpush1.msra.mxu0 %v1246
    %4748 = vmatprep.subr.mxu0 0.0
    %4749 = vmatpush1.msra.mxu0 %v1247
    %4750 = vmatprep.subr.mxu0 0.0
    %4751 = vmatpush1.msra.mxu0 %v1248
    %4752 = vmatprep.subr.mxu0 0.0
    %4753 = vmatpush1.msra.mxu0 %v1249
    %4754 = vmatprep.subr.mxu0 0.0
    %4755 = vmatpush1.msra.mxu0 %v1250
    %4756 = vmatprep.subr.mxu0 0.0
    %4757 = vmatpush1.msra.mxu0 %v1251
    %4758 = vmatprep.subr.mxu0 0.0
    %4759 = vmatpush1.msra.mxu0 %v1252
    %4760 = vmatprep.subr.mxu0 0.0
    %4761 = vmatpush1.msra.mxu0 %v1253
    %4762 = vmatprep.subr.mxu0 0.0
    %4763 = vmatpush1.msra.mxu0 %v1254
    %4764 = vmatprep.mubr.f32.mxu0 %v1928
    %4765 = vmatmul.mubr.f32.gmra.mrb[0].mxu0 %v1926
    %v4766 = vpop.f32.mrb[0].mxu0
    %v4767 = vadd.f32 %v4697, %v4766
    %v4768 = vpop.f32.mrb[0].mxu0
    %4769 = vdwg.mxu0
    %4770 = vmatprep.subr.mxu0 0.0
    %4771 = vmatpush1.msra.mxu0 %v1255
    %4772 = vmatprep.subr.mxu0 0.0
    %4773 = vmatpush1.msra.mxu0 %v1256
    %4774 = vmatprep.subr.mxu0 0.0
    %4775 = vmatpush1.msra.mxu0 %v1257
    %4776 = vmatprep.subr.mxu0 0.0
    %4777 = vmatpush1.msra.mxu0 %v1258
    %4778 = vmatprep.subr.mxu0 0.0
    %4779 = vmatpush1.msra.mxu0 %v1259
    %4780 = vmatprep.subr.mxu0 0.0
    %4781 = vmatpush1.msra.mxu0 %v1260
    %4782 = vmatprep.subr.mxu0 0.0
    %4783 = vmatpush1.msra.mxu0 %v1261
    %4784 = vmatprep.subr.mxu0 0.0
    %4785 = vmatpush1.msra.mxu0 %v1262
    %4786 = vmatprep.subr.mxu0 0.0
    %4787 = vmatpush1.msra.mxu0 %v1263
    %4788 = vmatprep.subr.mxu0 0.0
    %4789 = vmatpush1.msra.mxu0 %v1264
    %4790 = vmatprep.subr.mxu0 0.0
    %4791 = vmatpush1.msra.mxu0 %v1265
    %4792 = vmatprep.subr.mxu0 0.0
    %4793 = vmatpush1.msra.mxu0 %v1266
    %4794 = vmatprep.subr.mxu0 0.0
    %4795 = vmatpush1.msra.mxu0 %v1267
    %4796 = vmatprep.subr.mxu0 0.0
    %4797 = vmatpush1.msra.mxu0 %v1268
    %4798 = vmatprep.subr.mxu0 0.0
    %4799 = vmatpush1.msra.mxu0 %v1269
    %4800 = vmatprep.subr.mxu0 0.0
    %4801 = vmatpush1.msra.mxu0 %v1270
    %4802 = vmatprep.subr.mxu0 0.0
    %4803 = vmatpush1.msra.mxu0 %v1271
    %4804 = vmatprep.subr.mxu0 0.0
    %4805 = vmatpush1.msra.mxu0 %v1272
    %4806 = vmatprep.subr.mxu0 0.0
    %4807 = vmatpush1.msra.mxu0 %v1273
    %4808 = vmatprep.subr.mxu0 0.0
    %4809 = vmatpush1.msra.mxu0 %v1274
    %4810 = vmatprep.subr.mxu0 0.0
    %4811 = vmatpush1.msra.mxu0 %v1275
    %4812 = vmatprep.subr.mxu0 0.0
    %4813 = vmatpush1.msra.mxu0 %v1276
    %4814 = vmatprep.subr.mxu0 0.0
    %4815 = vmatpush1.msra.mxu0 %v1277
    %4816 = vmatprep.subr.mxu0 0.0
    %4817 = vmatpush1.msra.mxu0 %v1278
    %4818 = vmatprep.subr.mxu0 0.0
    %4819 = vmatpush1.msra.mxu0 %v1279
    %4820 = vmatprep.subr.mxu0 0.0
    %4821 = vmatpush1.msra.mxu0 %v1280
    %4822 = vmatprep.subr.mxu0 0.0
    %4823 = vmatpush1.msra.mxu0 %v1281
    %4824 = vmatprep.subr.mxu0 0.0
    %4825 = vmatpush1.msra.mxu0 %v1282
    %4826 = vmatprep.subr.mxu0 0.0
    %4827 = vmatpush1.msra.mxu0 %v1283
    %4828 = vmatprep.subr.mxu0 0.0
    %4829 = vmatpush1.msra.mxu0 %v1284
    %4830 = vmatprep.subr.mxu0 0.0
    %4831 = vmatpush1.msra.mxu0 %v1285
    %4832 = vmatprep.subr.mxu0 0.0
    %4833 = vmatpush1.msra.mxu0 %v1286
    %4834 = vmatprep.mubr.f32.mxu0 %v1944
    %4835 = vmatmul.mubr.f32.gmra.mrb[0].mxu0 %v1936
    %v4836 = vpop.f32.mrb[0].mxu0
    %v4837 = vadd.f32 %v4767, %v4836
    %v4838 = vpop.f32.mrb[0].mxu0
    %4839 = vdwg.mxu0
    %4840 = vmatprep.subr.mxu0 0.0
    %4841 = vmatpush1.msra.mxu0 %v1287
    %4842 = vmatprep.subr.mxu0 0.0
    %4843 = vmatpush1.msra.mxu0 %v1288
    %4844 = vmatprep.subr.mxu0 0.0
    %4845 = vmatpush1.msra.mxu0 %v1289
    %4846 = vmatprep.subr.mxu0 0.0
    %4847 = vmatpush1.msra.mxu0 %v1290
    %4848 = vmatprep.subr.mxu0 0.0
    %4849 = vmatpush1.msra.mxu0 %v1291
    %4850 = vmatprep.subr.mxu0 0.0
    %4851 = vmatpush1.msra.mxu0 %v1292
    %4852 = vmatprep.subr.mxu0 0.0
    %4853 = vmatpush1.msra.mxu0 %v1293
    %4854 = vmatprep.subr.mxu0 0.0
    %4855 = vmatpush1.msra.mxu0 %v1294
    %4856 = vmatprep.subr.mxu0 0.0
    %4857 = vmatpush1.msra.mxu0 %v1295
    %4858 = vmatprep.subr.mxu0 0.0
    %4859 = vmatpush1.msra.mxu0 %v1296
    %4860 = vmatprep.subr.mxu0 0.0
    %4861 = vmatpush1.msra.mxu0 %v1297
    %4862 = vmatprep.subr.mxu0 0.0
    %4863 = vmatpush1.msra.mxu0 %v1298
    %4864 = vmatprep.subr.mxu0 0.0
    %4865 = vmatpush1.msra.mxu0 %v1299
    %4866 = vmatprep.subr.mxu0 0.0
    %4867 = vmatpush1.msra.mxu0 %v1300
    %4868 = vmatprep.subr.mxu0 0.0
    %4869 = vmatpush1.msra.mxu0 %v1301
    %4870 = vmatprep.subr.mxu0 0.0
    %4871 = vmatpush1.msra.mxu0 %v1302
    %4872 = vmatprep.subr.mxu0 0.0
    %4873 = vmatpush1.msra.mxu0 %v1303
    %4874 = vmatprep.subr.mxu0 0.0
    %4875 = vmatpush1.msra.mxu0 %v1304
    %4876 = vmatprep.subr.mxu0 0.0
    %4877 = vmatpush1.msra.mxu0 %v1305
    %4878 = vmatprep.subr.mxu0 0.0
    %4879 = vmatpush1.msra.mxu0 %v1306
    %4880 = vmatprep.subr.mxu0 0.0
    %4881 = vmatpush1.msra.mxu0 %v1307
    %4882 = vmatprep.subr.mxu0 0.0
    %4883 = vmatpush1.msra.mxu0 %v1308
    %4884 = vmatprep.subr.mxu0 0.0
    %4885 = vmatpush1.msra.mxu0 %v1309
    %4886 = vmatprep.subr.mxu0 0.0
    %4887 = vmatpush1.msra.mxu0 %v1310
    %4888 = vmatprep.subr.mxu0 0.0
    %4889 = vmatpush1.msra.mxu0 %v1311
    %4890 = vmatprep.subr.mxu0 0.0
    %4891 = vmatpush1.msra.mxu0 %v1312
    %4892 = vmatprep.subr.mxu0 0.0
    %4893 = vmatpush1.msra.mxu0 %v1313
    %4894 = vmatprep.subr.mxu0 0.0
    %4895 = vmatpush1.msra.mxu0 %v1314
    %4896 = vmatprep.subr.mxu0 0.0
    %4897 = vmatpush1.msra.mxu0 %v1315
    %4898 = vmatprep.subr.mxu0 0.0
    %4899 = vmatpush1.msra.mxu0 %v1316
    %4900 = vmatprep.subr.mxu0 0.0
    %4901 = vmatpush1.msra.mxu0 %v1317
    %4902 = vmatprep.subr.mxu0 0.0
    %4903 = vmatpush1.msra.mxu0 %v1318
    %4904 = vmatprep.mubr.f32.mxu0 %v1945
    %4905 = vmatmul.mubr.f32.gmra.mrb[0].mxu0 %v1943
    %v4906 = vpop.f32.mrb[0].mxu0
    %v4907 = vadd.f32 %v4837, %v4906
    %v4908 = vpop.f32.mrb[0].mxu0
    %4909 = vdwg.mxu0
    %4910 = vmatprep.subr.mxu0 0.0
    %4911 = vmatpush1.msra.mxu0 %v1319
    %4912 = vmatprep.subr.mxu0 0.0
    %4913 = vmatpush1.msra.mxu0 %v1320
    %4914 = vmatprep.subr.mxu0 0.0
    %4915 = vmatpush1.msra.mxu0 %v1321
    %4916 = vmatprep.subr.mxu0 0.0
    %4917 = vmatpush1.msra.mxu0 %v1322
    %4918 = vmatprep.subr.mxu0 0.0
    %4919 = vmatpush1.msra.mxu0 %v1323
    %4920 = vmatprep.subr.mxu0 0.0
    %4921 = vmatpush1.msra.mxu0 %v1324
    %4922 = vmatprep.subr.mxu0 0.0
    %4923 = vmatpush1.msra.mxu0 %v1325
    %4924 = vmatprep.subr.mxu0 0.0
    %4925 = vmatpush1.msra.mxu0 %v1326
    %4926 = vmatprep.subr.mxu0 0.0
    %4927 = vmatpush1.msra.mxu0 %v1327
    %4928 = vmatprep.subr.mxu0 0.0
    %4929 = vmatpush1.msra.mxu0 %v1328
    %4930 = vmatprep.subr.mxu0 0.0
    %4931 = vmatpush1.msra.mxu0 %v1329
    %4932 = vmatprep.subr.mxu0 0.0
    %4933 = vmatpush1.msra.mxu0 %v1330
    %4934 = vmatprep.subr.mxu0 0.0
    %4935 = vmatpush1.msra.mxu0 %v1331
    %4936 = vmatprep.subr.mxu0 0.0
    %4937 = vmatpush1.msra.mxu0 %v1332
    %4938 = vmatprep.subr.mxu0 0.0
    %4939 = vmatpush1.msra.mxu0 %v1333
    %4940 = vmatprep.subr.mxu0 0.0
    %4941 = vmatpush1.msra.mxu0 %v1334
    %4942 = vmatprep.subr.mxu0 0.0
    %4943 = vmatpush1.msra.mxu0 %v1335
    %4944 = vmatprep.subr.mxu0 0.0
    %4945 = vmatpush1.msra.mxu0 %v1336
    %4946 = vmatprep.subr.mxu0 0.0
    %4947 = vmatpush1.msra.mxu0 %v1337
    %4948 = vmatprep.subr.mxu0 0.0
    %4949 = vmatpush1.msra.mxu0 %v1338
    %4950 = vmatprep.subr.mxu0 0.0
    %4951 = vmatpush1.msra.mxu0 %v1339
    %4952 = vmatprep.subr.mxu0 0.0
    %4953 = vmatpush1.msra.mxu0 %v1340
    %4954 = vmatprep.subr.mxu0 0.0
    %4955 = vmatpush1.msra.mxu0 %v1341
    %4956 = vmatprep.subr.mxu0 0.0
    %4957 = vmatpush1.msra.mxu0 %v1342
    %4958 = vmatprep.subr.mxu0 0.0
    %4959 = vmatpush1.msra.mxu0 %v1343
    %4960 = vmatprep.subr.mxu0 0.0
    %4961 = vmatpush1.msra.mxu0 %v1344
    %4962 = vmatprep.subr.mxu0 0.0
    %4963 = vmatpush1.msra.mxu0 %v1345
    %4964 = vmatprep.subr.mxu0 0.0
    %4965 = vmatpush1.msra.mxu0 %v1346
    %4966 = vmatprep.subr.mxu0 0.0
    %4967 = vmatpush1.msra.mxu0 %v1347
    %4968 = vmatprep.subr.mxu0 0.0
    %4969 = vmatpush1.msra.mxu0 %v1348
    %4970 = vmatprep.subr.mxu0 0.0
    %4971 = vmatpush1.msra.mxu0 %v1349
    %4972 = vmatprep.subr.mxu0 0.0
    %4973 = vmatpush1.msra.mxu0 %v1350
    %4974 = vmatprep.mubr.f32.mxu0 %v1961
    %4975 = vmatmul.mubr.f32.gmra.mrb[0].mxu0 %v1953
    %v4976 = vpop.f32.mrb[0].mxu0
    %v4977 = vadd.f32 %v4907, %v4976
    %v4978 = vpop.f32.mrb[0].mxu0
    %4979 = vdwg.mxu0
    %4980 = vmatprep.subr.mxu0 0.0
    %4981 = vmatpush1.msra.mxu0 %v1351
    %4982 = vmatprep.subr.mxu0 0.0
    %4983 = vmatpush1.msra.mxu0 %v1352
    %4984 = vmatprep.subr.mxu0 0.0
    %4985 = vmatpush1.msra.mxu0 %v1353
    %4986 = vmatprep.subr.mxu0 0.0
    %4987 = vmatpush1.msra.mxu0 %v1354
    %4988 = vmatprep.subr.mxu0 0.0
    %4989 = vmatpush1.msra.mxu0 %v1355
    %4990 = vmatprep.subr.mxu0 0.0
    %4991 = vmatpush1.msra.mxu0 %v1356
    %4992 = vmatprep.subr.mxu0 0.0
    %4993 = vmatpush1.msra.mxu0 %v1357
    %4994 = vmatprep.subr.mxu0 0.0
    %4995 = vmatpush1.msra.mxu0 %v1358
    %4996 = vmatprep.subr.mxu0 0.0
    %4997 = vmatpush1.msra.mxu0 %v1359
    %4998 = vmatprep.subr.mxu0 0.0
    %4999 = vmatpush1.msra.mxu0 %v1360
    %5000 = vmatprep.subr.mxu0 0.0
    %5001 = vmatpush1.msra.mxu0 %v1361
    %5002 = vmatprep.subr.mxu0 0.0
    %5003 = vmatpush1.msra.mxu0 %v1362
    %5004 = vmatprep.subr.mxu0 0.0
    %5005 = vmatpush1.msra.mxu0 %v1363
    %5006 = vmatprep.subr.mxu0 0.0
    %5007 = vmatpush1.msra.mxu0 %v1364
    %5008 = vmatprep.subr.mxu0 0.0
    %5009 = vmatpush1.msra.mxu0 %v1365
    %5010 = vmatprep.subr.mxu0 0.0
    %5011 = vmatpush1.msra.mxu0 %v1366
    %5012 = vmatprep.subr.mxu0 0.0
    %5013 = vmatpush1.msra.mxu0 %v1367
    %5014 = vmatprep.subr.mxu0 0.0
    %5015 = vmatpush1.msra.mxu0 %v1368
    %5016 = vmatprep.subr.mxu0 0.0
    %5017 = vmatpush1.msra.mxu0 %v1369
    %5018 = vmatprep.subr.mxu0 0.0
    %5019 = vmatpush1.msra.mxu0 %v1370
    %5020 = vmatprep.subr.mxu0 0.0
    %5021 = vmatpush1.msra.mxu0 %v1371
    %5022 = vmatprep.subr.mxu0 0.0
    %5023 = vmatpush1.msra.mxu0 %v1372
    %5024 = vmatprep.subr.mxu0 0.0
    %5025 = vmatpush1.msra.mxu0 %v1373
    %5026 = vmatprep.subr.mxu0 0.0
    %5027 = vmatpush1.msra.mxu0 %v1374
    %5028 = vmatprep.subr.mxu0 0.0
    %5029 = vmatpush1.msra.mxu0 %v1375
    %5030 = vmatprep.subr.mxu0 0.0
    %5031 = vmatpush1.msra.mxu0 %v1376
    %5032 = vmatprep.subr.mxu0 0.0
    %5033 = vmatpush1.msra.mxu0 %v1377
    %5034 = vmatprep.subr.mxu0 0.0
    %5035 = vmatpush1.msra.mxu0 %v1378
    %5036 = vmatprep.subr.mxu0 0.0
    %5037 = vmatpush1.msra.mxu0 %v1379
    %5038 = vmatprep.subr.mxu0 0.0
    %5039 = vmatpush1.msra.mxu0 %v1380
    %5040 = vmatprep.subr.mxu0 0.0
    %5041 = vmatpush1.msra.mxu0 %v1381
    %5042 = vmatprep.subr.mxu0 0.0
    %5043 = vmatpush1.msra.mxu0 %v1382
    %5044 = vmatprep.mubr.f32.mxu0 %v1962
    %5045 = vmatmul.mubr.f32.gmra.mrb[0].mxu0 %v1960
    %v5046 = vpop.f32.mrb[0].mxu0
    %v5047 = vadd.f32 %v4977, %v5046
    %v5048 = vpop.f32.mrb[0].mxu0
    %5049 = vdwg.mxu0
    %5050 = vmatprep.subr.mxu0 0.0
    %5051 = vmatpush1.msra.mxu0 %v1383
    %5052 = vmatprep.subr.mxu0 0.0
    %5053 = vmatpush1.msra.mxu0 %v1384
    %5054 = vmatprep.subr.mxu0 0.0
    %5055 = vmatpush1.msra.mxu0 %v1385
    %5056 = vmatprep.subr.mxu0 0.0
    %5057 = vmatpush1.msra.mxu0 %v1386
    %5058 = vmatprep.subr.mxu0 0.0
    %5059 = vmatpush1.msra.mxu0 %v1387
    %5060 = vmatprep.subr.mxu0 0.0
    %5061 = vmatpush1.msra.mxu0 %v1388
    %5062 = vmatprep.subr.mxu0 0.0
    %5063 = vmatpush1.msra.mxu0 %v1389
    %5064 = vmatprep.subr.mxu0 0.0
    %5065 = vmatpush1.msra.mxu0 %v1390
    %5066 = vmatprep.subr.mxu0 0.0
    %5067 = vmatpush1.msra.mxu0 %v1391
    %5068 = vmatprep.subr.mxu0 0.0
    %5069 = vmatpush1.msra.mxu0 %v1392
    %5070 = vmatprep.subr.mxu0 0.0
    %5071 = vmatpush1.msra.mxu0 %v1393
    %5072 = vmatprep.subr.mxu0 0.0
    %5073 = vmatpush1.msra.mxu0 %v1394
    %5074 = vmatprep.subr.mxu0 0.0
    %5075 = vmatpush1.msra.mxu0 %v1395
    %5076 = vmatprep.subr.mxu0 0.0
    %5077 = vmatpush1.msra.mxu0 %v1396
    %5078 = vmatprep.subr.mxu0 0.0
    %5079 = vmatpush1.msra.mxu0 %v1397
    %5080 = vmatprep.subr.mxu0 0.0
    %5081 = vmatpush1.msra.mxu0 %v1398
    %5082 = vmatprep.subr.mxu0 0.0
    %5083 = vmatpush1.msra.mxu0 %v1399
    %5084 = vmatprep.subr.mxu0 0.0
    %5085 = vmatpush1.msra.mxu0 %v1400
    %5086 = vmatprep.subr.mxu0 0.0
    %5087 = vmatpush1.msra.mxu0 %v1401
    %5088 = vmatprep.subr.mxu0 0.0
    %5089 = vmatpush1.msra.mxu0 %v1402
    %5090 = vmatprep.subr.mxu0 0.0
    %5091 = vmatpush1.msra.mxu0 %v1403
    %5092 = vmatprep.subr.mxu0 0.0
    %5093 = vmatpush1.msra.mxu0 %v1404
    %5094 = vmatprep.subr.mxu0 0.0
    %5095 = vmatpush1.msra.mxu0 %v1405
    %5096 = vmatprep.subr.mxu0 0.0
    %5097 = vmatpush1.msra.mxu0 %v1406
    %5098 = vmatprep.subr.mxu0 0.0
    %5099 = vmatpush1.msra.mxu0 %v1407
    %5100 = vmatprep.subr.mxu0 0.0
    %5101 = vmatpush1.msra.mxu0 %v1408
    %5102 = vmatprep.subr.mxu0 0.0
    %5103 = vmatpush1.msra.mxu0 %v1409
    %5104 = vmatprep.subr.mxu0 0.0
    %5105 = vmatpush1.msra.mxu0 %v1410
    %5106 = vmatprep.subr.mxu0 0.0
    %5107 = vmatpush1.msra.mxu0 %v1411
    %5108 = vmatprep.subr.mxu0 0.0
    %5109 = vmatpush1.msra.mxu0 %v1412
    %5110 = vmatprep.subr.mxu0 0.0
    %5111 = vmatpush1.msra.mxu0 %v1413
    %5112 = vmatprep.subr.mxu0 0.0
    %5113 = vmatpush1.msra.mxu0 %v1414
    %5114 = vmatprep.mubr.f32.mxu0 %v1978
    %5115 = vmatmul.mubr.f32.gmra.mrb[0].mxu0 %v1970
    %v5116 = vpop.f32.mrb[0].mxu0
    %v5117 = vadd.f32 %v5047, %v5116
    %v5118 = vpop.f32.mrb[0].mxu0
    %5119 = vdwg.mxu0
    %5120 = vmatprep.subr.mxu0 0.0
    %5121 = vmatpush1.msra.mxu0 %v1415
    %5122 = vmatprep.subr.mxu0 0.0
    %5123 = vmatpush1.msra.mxu0 %v1416
    %5124 = vmatprep.subr.mxu0 0.0
    %5125 = vmatpush1.msra.mxu0 %v1417
    %5126 = vmatprep.subr.mxu0 0.0
    %5127 = vmatpush1.msra.mxu0 %v1418
    %5128 = vmatprep.subr.mxu0 0.0
    %5129 = vmatpush1.msra.mxu0 %v1419
    %5130 = vmatprep.subr.mxu0 0.0
    %5131 = vmatpush1.msra.mxu0 %v1420
    %5132 = vmatprep.subr.mxu0 0.0
    %5133 = vmatpush1.msra.mxu0 %v1421
    %5134 = vmatprep.subr.mxu0 0.0
    %5135 = vmatpush1.msra.mxu0 %v1422
    %5136 = vmatprep.subr.mxu0 0.0
    %5137 = vmatpush1.msra.mxu0 %v1423
    %5138 = vmatprep.subr.mxu0 0.0
    %5139 = vmatpush1.msra.mxu0 %v1424
    %5140 = vmatprep.subr.mxu0 0.0
    %5141 = vmatpush1.msra.mxu0 %v1425
    %5142 = vmatprep.subr.mxu0 0.0
    %5143 = vmatpush1.msra.mxu0 %v1426
    %5144 = vmatprep.subr.mxu0 0.0
    %5145 = vmatpush1.msra.mxu0 %v1427
    %5146 = vmatprep.subr.mxu0 0.0
    %5147 = vmatpush1.msra.mxu0 %v1428
    %5148 = vmatprep.subr.mxu0 0.0
    %5149 = vmatpush1.msra.mxu0 %v1429
    %5150 = vmatprep.subr.mxu0 0.0
    %5151 = vmatpush1.msra.mxu0 %v1430
    %5152 = vmatprep.subr.mxu0 0.0
    %5153 = vmatpush1.msra.mxu0 %v1431
    %5154 = vmatprep.subr.mxu0 0.0
    %5155 = vmatpush1.msra.mxu0 %v1432
    %5156 = vmatprep.subr.mxu0 0.0
    %5157 = vmatpush1.msra.mxu0 %v1433
    %5158 = vmatprep.subr.mxu0 0.0
    %5159 = vmatpush1.msra.mxu0 %v1434
    %5160 = vmatprep.subr.mxu0 0.0
    %5161 = vmatpush1.msra.mxu0 %v1435
    %5162 = vmatprep.subr.mxu0 0.0
    %5163 = vmatpush1.msra.mxu0 %v1436
    %5164 = vmatprep.subr.mxu0 0.0
    %5165 = vmatpush1.msra.mxu0 %v1437
    %5166 = vmatprep.subr.mxu0 0.0
    %5167 = vmatpush1.msra.mxu0 %v1438
    %5168 = vmatprep.subr.mxu0 0.0
    %5169 = vmatpush1.msra.mxu0 %v1439
    %5170 = vmatprep.subr.mxu0 0.0
    %5171 = vmatpush1.msra.mxu0 %v1440
    %5172 = vmatprep.subr.mxu0 0.0
    %5173 = vmatpush1.msra.mxu0 %v1441
    %5174 = vmatprep.subr.mxu0 0.0
    %5175 = vmatpush1.msra.mxu0 %v1442
    %5176 = vmatprep.subr.mxu0 0.0
    %5177 = vmatpush1.msra.mxu0 %v1443
    %5178 = vmatprep.subr.mxu0 0.0
    %5179 = vmatpush1.msra.mxu0 %v1444
    %5180 = vmatprep.subr.mxu0 0.0
    %5181 = vmatpush1.msra.mxu0 %v1445
    %5182 = vmatprep.subr.mxu0 0.0
    %5183 = vmatpush1.msra.mxu0 %v1446
    %5184 = vmatprep.mubr.f32.mxu0 %v1979
    %5185 = vmatmul.mubr.f32.gmra.mrb[0].mxu0 %v1977
    %v5186 = vpop.f32.mrb[0].mxu0
    %v5187 = vadd.f32 %v5117, %v5186
    %v5188 = vpop.f32.mrb[0].mxu0
    %5189 = vdwg.mxu0
    %5190 = vmatprep.subr.mxu0 0.0
    %5191 = vmatpush1.msra.mxu0 %v1447
    %5192 = vmatprep.subr.mxu0 0.0
    %5193 = vmatpush1.msra.mxu0 %v1448
    %5194 = vmatprep.subr.mxu0 0.0
    %5195 = vmatpush1.msra.mxu0 %v1449
    %5196 = vmatprep.subr.mxu0 0.0
    %5197 = vmatpush1.msra.mxu0 %v1450
    %5198 = vmatprep.subr.mxu0 0.0
    %5199 = vmatpush1.msra.mxu0 %v1451
    %5200 = vmatprep.subr.mxu0 0.0
    %5201 = vmatpush1.msra.mxu0 %v1452
    %5202 = vmatprep.subr.mxu0 0.0
    %5203 = vmatpush1.msra.mxu0 %v1453
    %5204 = vmatprep.subr.mxu0 0.0
    %5205 = vmatpush1.msra.mxu0 %v1454
    %5206 = vmatprep.subr.mxu0 0.0
    %5207 = vmatpush1.msra.mxu0 %v1455
    %5208 = vmatprep.subr.mxu0 0.0
    %5209 = vmatpush1.msra.mxu0 %v1456
    %5210 = vmatprep.subr.mxu0 0.0
    %5211 = vmatpush1.msra.mxu0 %v1457
    %5212 = vmatprep.subr.mxu0 0.0
    %5213 = vmatpush1.msra.mxu0 %v1458
    %5214 = vmatprep.subr.mxu0 0.0
    %5215 = vmatpush1.msra.mxu0 %v1459
    %5216 = vmatprep.subr.mxu0 0.0
    %5217 = vmatpush1.msra.mxu0 %v1460
    %5218 = vmatprep.subr.mxu0 0.0
    %5219 = vmatpush1.msra.mxu0 %v1461
    %5220 = vmatprep.subr.mxu0 0.0
    %5221 = vmatpush1.msra.mxu0 %v1462
    %5222 = vmatprep.subr.mxu0 0.0
    %5223 = vmatpush1.msra.mxu0 %v1463
    %5224 = vmatprep.subr.mxu0 0.0
    %5225 = vmatpush1.msra.mxu0 %v1464
    %5226 = vmatprep.subr.mxu0 0.0
    %5227 = vmatpush1.msra.mxu0 %v1465
    %5228 = vmatprep.subr.mxu0 0.0
    %5229 = vmatpush1.msra.mxu0 %v1466
    %5230 = vmatprep.subr.mxu0 0.0
    %5231 = vmatpush1.msra.mxu0 %v1467
    %5232 = vmatprep.subr.mxu0 0.0
    %5233 = vmatpush1.msra.mxu0 %v1468
    %5234 = vmatprep.subr.mxu0 0.0
    %5235 = vmatpush1.msra.mxu0 %v1469
    %5236 = vmatprep.subr.mxu0 0.0
    %5237 = vmatpush1.msra.mxu0 %v1470
    %5238 = vmatprep.subr.mxu0 0.0
    %5239 = vmatpush1.msra.mxu0 %v1471
    %5240 = vmatprep.subr.mxu0 0.0
    %5241 = vmatpush1.msra.mxu0 %v1472
    %5242 = vmatprep.subr.mxu0 0.0
    %5243 = vmatpush1.msra.mxu0 %v1473
    %5244 = vmatprep.subr.mxu0 0.0
    %5245 = vmatpush1.msra.mxu0 %v1474
    %5246 = vmatprep.subr.mxu0 0.0
    %5247 = vmatpush1.msra.mxu0 %v1475
    %5248 = vmatprep.subr.mxu0 0.0
    %5249 = vmatpush1.msra.mxu0 %v1476
    %5250 = vmatprep.subr.mxu0 0.0
    %5251 = vmatpush1.msra.mxu0 %v1477
    %5252 = vmatprep.subr.mxu0 0.0
    %5253 = vmatpush1.msra.mxu0 %v1478
    %5254 = vmatprep.mubr.f32.mxu0 %v1995
    %5255 = vmatmul.mubr.f32.gmra.mrb[0].mxu0 %v1987
    %v5256 = vpop.f32.mrb[0].mxu0
    %v5257 = vadd.f32 %v5187, %v5256
    %v5258 = vpop.f32.mrb[0].mxu0
    %5259 = vdwg.mxu0
    %5260 = vmatprep.subr.mxu0 0.0
    %5261 = vmatpush1.msra.mxu0 %v1479
    %5262 = vmatprep.subr.mxu0 0.0
    %5263 = vmatpush1.msra.mxu0 %v1480
    %5264 = vmatprep.subr.mxu0 0.0
    %5265 = vmatpush1.msra.mxu0 %v1481
    %5266 = vmatprep.subr.mxu0 0.0
    %5267 = vmatpush1.msra.mxu0 %v1482
    %5268 = vmatprep.subr.mxu0 0.0
    %5269 = vmatpush1.msra.mxu0 %v1483
    %5270 = vmatprep.subr.mxu0 0.0
    %5271 = vmatpush1.msra.mxu0 %v1484
    %5272 = vmatprep.subr.mxu0 0.0
    %5273 = vmatpush1.msra.mxu0 %v1485
    %5274 = vmatprep.subr.mxu0 0.0
    %5275 = vmatpush1.msra.mxu0 %v1486
    %5276 = vmatprep.subr.mxu0 0.0
    %5277 = vmatpush1.msra.mxu0 %v1487
    %5278 = vmatprep.subr.mxu0 0.0
    %5279 = vmatpush1.msra.mxu0 %v1488
    %5280 = vmatprep.subr.mxu0 0.0
    %5281 = vmatpush1.msra.mxu0 %v1489
    %5282 = vmatprep.subr.mxu0 0.0
    %5283 = vmatpush1.msra.mxu0 %v1490
    %5284 = vmatprep.subr.mxu0 0.0
    %5285 = vmatpush1.msra.mxu0 %v1491
    %5286 = vmatprep.subr.mxu0 0.0
    %5287 = vmatpush1.msra.mxu0 %v1492
    %5288 = vmatprep.subr.mxu0 0.0
    %5289 = vmatpush1.msra.mxu0 %v1493
    %5290 = vmatprep.subr.mxu0 0.0
    %5291 = vmatpush1.msra.mxu0 %v1494
    %5292 = vmatprep.subr.mxu0 0.0
    %5293 = vmatpush1.msra.mxu0 %v1495
    %5294 = vmatprep.subr.mxu0 0.0
    %5295 = vmatpush1.msra.mxu0 %v1496
    %5296 = vmatprep.subr.mxu0 0.0
    %5297 = vmatpush1.msra.mxu0 %v1497
    %5298 = vmatprep.subr.mxu0 0.0
    %5299 = vmatpush1.msra.mxu0 %v1498
    %5300 = vmatprep.subr.mxu0 0.0
    %5301 = vmatpush1.msra.mxu0 %v1499
    %5302 = vmatprep.subr.mxu0 0.0
    %5303 = vmatpush1.msra.mxu0 %v1500
    %5304 = vmatprep.subr.mxu0 0.0
    %5305 = vmatpush1.msra.mxu0 %v1501
    %5306 = vmatprep.subr.mxu0 0.0
    %5307 = vmatpush1.msra.mxu0 %v1502
    %5308 = vmatprep.subr.mxu0 0.0
    %5309 = vmatpush1.msra.mxu0 %v1503
    %5310 = vmatprep.subr.mxu0 0.0
    %5311 = vmatpush1.msra.mxu0 %v1504
    %5312 = vmatprep.subr.mxu0 0.0
    %5313 = vmatpush1.msra.mxu0 %v1505
    %5314 = vmatprep.subr.mxu0 0.0
    %5315 = vmatpush1.msra.mxu0 %v1506
    %5316 = vmatprep.subr.mxu0 0.0
    %5317 = vmatpush1.msra.mxu0 %v1507
    %5318 = vmatprep.subr.mxu0 0.0
    %5319 = vmatpush1.msra.mxu0 %v1508
    %5320 = vmatprep.subr.mxu0 0.0
    %5321 = vmatpush1.msra.mxu0 %v1509
    %5322 = vmatprep.subr.mxu0 0.0
    %5323 = vmatpush1.msra.mxu0 %v1510
    %5324 = vmatprep.mubr.f32.mxu0 %v1996
    %5325 = vmatmul.mubr.f32.gmra.mrb[0].mxu0 %v1994
    %v5326 = vpop.f32.mrb[0].mxu0
    %v5327 = vadd.f32 %v5257, %v5326
    %v5328 = vpop.f32.mrb[0].mxu0
    %5329 = vdwg.mxu0
    %5330 = vmatprep.subr.mxu0 0.0
    %5331 = vmatpush1.msra.mxu0 %v1511
    %5332 = vmatprep.subr.mxu0 0.0
    %5333 = vmatpush1.msra.mxu0 %v1512
    %5334 = vmatprep.subr.mxu0 0.0
    %5335 = vmatpush1.msra.mxu0 %v1513
    %5336 = vmatprep.subr.mxu0 0.0
    %5337 = vmatpush1.msra.mxu0 %v1514
    %5338 = vmatprep.subr.mxu0 0.0
    %5339 = vmatpush1.msra.mxu0 %v1515
    %5340 = vmatprep.subr.mxu0 0.0
    %5341 = vmatpush1.msra.mxu0 %v1516
    %5342 = vmatprep.subr.mxu0 0.0
    %5343 = vmatpush1.msra.mxu0 %v1517
    %5344 = vmatprep.subr.mxu0 0.0
    %5345 = vmatpush1.msra.mxu0 %v1518
    %5346 = vmatprep.subr.mxu0 0.0
    %5347 = vmatpush1.msra.mxu0 %v1519
    %5348 = vmatprep.subr.mxu0 0.0
    %5349 = vmatpush1.msra.mxu0 %v1520
    %5350 = vmatprep.subr.mxu0 0.0
    %5351 = vmatpush1.msra.mxu0 %v1521
    %5352 = vmatprep.subr.mxu0 0.0
    %5353 = vmatpush1.msra.mxu0 %v1522
    %5354 = vmatprep.subr.mxu0 0.0
    %5355 = vmatpush1.msra.mxu0 %v1523
    %5356 = vmatprep.subr.mxu0 0.0
    %5357 = vmatpush1.msra.mxu0 %v1524
    %5358 = vmatprep.subr.mxu0 0.0
    %5359 = vmatpush1.msra.mxu0 %v1525
    %5360 = vmatprep.subr.mxu0 0.0
    %5361 = vmatpush1.msra.mxu0 %v1526
    %5362 = vmatprep.subr.mxu0 0.0
    %5363 = vmatpush1.msra.mxu0 %v1527
    %5364 = vmatprep.subr.mxu0 0.0
    %5365 = vmatpush1.msra.mxu0 %v1528
    %5366 = vmatprep.subr.mxu0 0.0
    %5367 = vmatpush1.msra.mxu0 %v1529
    %5368 = vmatprep.subr.mxu0 0.0
    %5369 = vmatpush1.msra.mxu0 %v1530
    %5370 = vmatprep.subr.mxu0 0.0
    %5371 = vmatpush1.msra.mxu0 %v1531
    %5372 = vmatprep.subr.mxu0 0.0
    %5373 = vmatpush1.msra.mxu0 %v1532
    %5374 = vmatprep.subr.mxu0 0.0
    %5375 = vmatpush1.msra.mxu0 %v1533
    %5376 = vmatprep.subr.mxu0 0.0
    %5377 = vmatpush1.msra.mxu0 %v1534
    %5378 = vmatprep.subr.mxu0 0.0
    %5379 = vmatpush1.msra.mxu0 %v1535
    %5380 = vmatprep.subr.mxu0 0.0
    %5381 = vmatpush1.msra.mxu0 %v1536
    %5382 = vmatprep.subr.mxu0 0.0
    %5383 = vmatpush1.msra.mxu0 %v1537
    %5384 = vmatprep.subr.mxu0 0.0
    %5385 = vmatpush1.msra.mxu0 %v1538
    %5386 = vmatprep.subr.mxu0 0.0
    %5387 = vmatpush1.msra.mxu0 %v1539
    %5388 = vmatprep.subr.mxu0 0.0
    %5389 = vmatpush1.msra.mxu0 %v1540
    %5390 = vmatprep.subr.mxu0 0.0
    %5391 = vmatpush1.msra.mxu0 %v1541
    %5392 = vmatprep.subr.mxu0 0.0
    %5393 = vmatpush1.msra.mxu0 %v1542
    %5394 = vmatprep.mubr.f32.mxu0 %v2012
    %5395 = vmatmul.mubr.f32.gmra.mrb[0].mxu0 %v2004
    %v5396 = vpop.f32.mrb[0].mxu0
    %v5397 = vadd.f32 %v5327, %v5396
    %v5398 = vpop.f32.mrb[0].mxu0
    %5399 = vdwg.mxu0
    %5400 = vmatprep.subr.mxu0 0.0
    %5401 = vmatpush1.msra.mxu0 %v1543
    %5402 = vmatprep.subr.mxu0 0.0
    %5403 = vmatpush1.msra.mxu0 %v1544
    %5404 = vmatprep.subr.mxu0 0.0
    %5405 = vmatpush1.msra.mxu0 %v1545
    %5406 = vmatprep.subr.mxu0 0.0
    %5407 = vmatpush1.msra.mxu0 %v1546
    %5408 = vmatprep.subr.mxu0 0.0
    %5409 = vmatpush1.msra.mxu0 %v1547
    %5410 = vmatprep.subr.mxu0 0.0
    %5411 = vmatpush1.msra.mxu0 %v1548
    %5412 = vmatprep.subr.mxu0 0.0
    %5413 = vmatpush1.msra.mxu0 %v1549
    %5414 = vmatprep.subr.mxu0 0.0
    %5415 = vmatpush1.msra.mxu0 %v1550
    %5416 = vmatprep.subr.mxu0 0.0
    %5417 = vmatpush1.msra.mxu0 %v1551
    %5418 = vmatprep.subr.mxu0 0.0
    %5419 = vmatpush1.msra.mxu0 %v1552
    %5420 = vmatprep.subr.mxu0 0.0
    %5421 = vmatpush1.msra.mxu0 %v1553
    %5422 = vmatprep.subr.mxu0 0.0
    %5423 = vmatpush1.msra.mxu0 %v1554
    %5424 = vmatprep.subr.mxu0 0.0
    %5425 = vmatpush1.msra.mxu0 %v1555
    %5426 = vmatprep.subr.mxu0 0.0
    %5427 = vmatpush1.msra.mxu0 %v1556
    %5428 = vmatprep.subr.mxu0 0.0
    %5429 = vmatpush1.msra.mxu0 %v1557
    %5430 = vmatprep.subr.mxu0 0.0
    %5431 = vmatpush1.msra.mxu0 %v1558
    %5432 = vmatprep.subr.mxu0 0.0
    %5433 = vmatpush1.msra.mxu0 %v1559
    %5434 = vmatprep.subr.mxu0 0.0
    %5435 = vmatpush1.msra.mxu0 %v1560
    %5436 = vmatprep.subr.mxu0 0.0
    %5437 = vmatpush1.msra.mxu0 %v1561
    %5438 = vmatprep.subr.mxu0 0.0
    %5439 = vmatpush1.msra.mxu0 %v1562
    %5440 = vmatprep.subr.mxu0 0.0
    %5441 = vmatpush1.msra.mxu0 %v1563
    %5442 = vmatprep.subr.mxu0 0.0
    %5443 = vmatpush1.msra.mxu0 %v1564
    %5444 = vmatprep.subr.mxu0 0.0
    %5445 = vmatpush1.msra.mxu0 %v1565
    %5446 = vmatprep.subr.mxu0 0.0
    %5447 = vmatpush1.msra.mxu0 %v1566
    %5448 = vmatprep.subr.mxu0 0.0
    %5449 = vmatpush1.msra.mxu0 %v1567
    %5450 = vmatprep.subr.mxu0 0.0
    %5451 = vmatpush1.msra.mxu0 %v1568
    %5452 = vmatprep.subr.mxu0 0.0
    %5453 = vmatpush1.msra.mxu0 %v1569
    %5454 = vmatprep.subr.mxu0 0.0
    %5455 = vmatpush1.msra.mxu0 %v1570
    %5456 = vmatprep.subr.mxu0 0.0
    %5457 = vmatpush1.msra.mxu0 %v1571
    %5458 = vmatprep.subr.mxu0 0.0
    %5459 = vmatpush1.msra.mxu0 %v1572
    %5460 = vmatprep.subr.mxu0 0.0
    %5461 = vmatpush1.msra.mxu0 %v1573
    %5462 = vmatprep.subr.mxu0 0.0
    %5463 = vmatpush1.msra.mxu0 %v1574
    %5464 = vmatprep.mubr.f32.mxu0 %v2013
    %5465 = vmatmul.mubr.f32.gmra.mrb[0].mxu0 %v2011
    %v5466 = vpop.f32.mrb[0].mxu0
    %v5467 = vadd.f32 %v5397, %v5466
    %v5468 = vpop.f32.mrb[0].mxu0
    %5469 = vdwg.mxu0
    %vm5470 = vcmask 41984
    %5471 = vst.msk [vmem:[#allocation2] sm:$0x3] %vm5470, %v5467
    // Predicated region
    $region14: #{tpu_custom_call.1} parent=1 // pred_check
      _
    $region15: #{tpu_custom_call.1} parent=1 // pred_check_branch
      %5473 = sbr.rel (0) target = $region17
    $region16: #{tpu_custom_call.1} parent=1 // pred_region
      %s5475 = ssub.s32 32, 32
      %5476 = vsyncadd [#allocation3], %s5475
      %s5478 = sshll.u32 [#allocation2], 4
      %s5479 = int_to_ptr.vmem [resolvable:$true] %s5478
      %5481 = dma.vmem_to_hbm [thread:$0]  %s5479, 32, %s3, [#allocation3]
    $region17: #{tpu_custom_call.1} parent=1 // pred_fallthru
      _
    // Predicated region
    $region18: #{tpu_custom_call.1} parent=1 // pred_check
      _
    $region19: #{tpu_custom_call.1} parent=1 // pred_check_branch
      %5483 = sbr.rel (0) target = $region21
    $region20: #{tpu_custom_call.1} parent=1 // pred_region
      %5484 = dma.done [#allocation3], 32
    $region21: #{tpu_custom_call.1} parent=1 // pred_fallthru
      _
    %5485 = vsyncpa [#allocation3], 1

// kernel: tpu_custom_call.1
$region0: #{tpu_custom_call.1}
  #allocation0 [shape = 'u32[]', space=smem, size = 0x4, offset = 0x4, fixed_abs, tag = 'smem constant byte address 0x4 - core index']
  #allocation1 [shape = 'u32[144,128]{1,0:T(1,128)}', space=vmem, size = 0x12000, scoped, tag = 'internal scratch']
  %s0 = inlined_call_operand.vmem [shape: f32[2,12288], index: 0, kind: input, shape index: {}]
  %s1 = inlined_call_operand.vmem [shape: f32[12288,6], index: 1, kind: input, shape index: {}]
  %s2 = inlined_call_operand.vmem [shape: f32[1,6], index: 2, kind: input, shape index: {}]
  %s3 = inlined_call_operand.hbm [shape: f32[2,6], index: 3, kind: output, shape index: {}]
  %s4 = sld [smem:[#allocation0]]
  $region22: #{tpu_custom_call.1} parent=0
    _
  %s6 = ssub.s32 1, %s4
  %s7 = scalar_select 0, %s6, %s4
  $region1: #{tpu_custom_call.1} parent=0
    #allocation2 [shape = 'u8[1024]{0}', space=vmem, size = 0x400, scoped, tag = 'output window, operand 0, single buffered']
    #allocation3 [shape = 's32[1]{0}', space=sflag, size = 0x4, scoped, tag = 'scoped memory for tpu_custom_call.1']
    %8 = vsyncpa [#allocation3], 0
    // Predicated region
    $region2: #{tpu_custom_call.1} parent=1 // pred_check
      _
    $region3: #{tpu_custom_call.1} parent=1 // pred_check_branch
      %10 = sbr.rel (0) target = $region5
    $region4: #{tpu_custom_call.1} parent=1 // pred_region
      _
    $region5: #{tpu_custom_call.1} parent=1 // pred_fallthru
      _
    // Predicated region
    $region6: #{tpu_custom_call.1} parent=1 // pred_check
      _
    $region7: #{tpu_custom_call.1} parent=1 // pred_check_branch
      %12 = sbr.rel (0) target = $region9
    $region8: #{tpu_custom_call.1} parent=1 // pred_region
      _
    $region9: #{tpu_custom_call.1} parent=1 // pred_fallthru
      _
    // Predicated region
    $region10: #{tpu_custom_call.1} parent=1 // pred_check
      _
    $region11: #{tpu_custom_call.1} parent=1 // pred_check_branch
      %14 = sbr.rel (0) target = $region13
    $region12: #{tpu_custom_call.1} parent=1 // pred_region
      _
    $region13: #{tpu_custom_call.1} parent=1 // pred_fallthru
      _
    %v15 = vld [vmem:[%s0] sm:$0xff]
    %v16 = vld [vmem:[%s0 + $0x8] sm:$0xff]
    %v17 = vld [vmem:[%s0 + $0x10] sm:$0xff]
    %v18 = vld [vmem:[%s0 + $0x18] sm:$0xff]
    %v19 = vld [vmem:[%s0 + $0x20] sm:$0xff]
    %v20 = vld [vmem:[%s0 + $0x28] sm:$0xff]
    %v21 = vld [vmem:[%s0 + $0x30] sm:$0xff]
    %v22 = vld [vmem:[%s0 + $0x38] sm:$0xff]
    %v23 = vld [vmem:[%s0 + $0x40] sm:$0xff]
    %v24 = vld [vmem:[%s0 + $0x48] sm:$0xff]
    %v25 = vld [vmem:[%s0 + $0x50] sm:$0xff]
    %v26 = vld [vmem:[%s0 + $0x58] sm:$0xff]
    %v27 = vld [vmem:[%s0 + $0x60] sm:$0xff]
    %v28 = vld [vmem:[%s0 + $0x68] sm:$0xff]
    %v29 = vld [vmem:[%s0 + $0x70] sm:$0xff]
    %v30 = vld [vmem:[%s0 + $0x78] sm:$0xff]
    %v31 = vld [vmem:[%s0 + $0x80] sm:$0xff]
    %v32 = vld [vmem:[%s0 + $0x88] sm:$0xff]
    %v33 = vld [vmem:[%s0 + $0x90] sm:$0xff]
    %v34 = vld [vmem:[%s0 + $0x98] sm:$0xff]
    %v35 = vld [vmem:[%s0 + $0xa0] sm:$0xff]
    %v36 = vld [vmem:[%s0 + $0xa8] sm:$0xff]
    %v37 = vld [vmem:[%s0 + $0xb0] sm:$0xff]
    %v38 = vld [vmem:[%s0 + $0xb8] sm:$0xff]
    %v39 = vld [vmem:[%s1] sm:$0xff]
    %v40 = vld [vmem:[%s1 + $0x8] sm:$0xff]
    %v41 = vld [vmem:[%s1 + $0x10] sm:$0xff]
    %v42 = vld [vmem:[%s1 + $0x18] sm:$0xff]
    %v43 = vld [vmem:[%s1 + $0x20] sm:$0xff]
    %v44 = vld [vmem:[%s1 + $0x28] sm:$0xff]
    %v45 = vld [vmem:[%s1 + $0x30] sm:$0xff]
    %v46 = vld [vmem:[%s1 + $0x38] sm:$0xff]
    %v47 = vld [vmem:[%s1 + $0x40] sm:$0xff]
    %v48 = vld [vmem:[%s1 + $0x48] sm:$0xff]
    %v49 = vld [vmem:[%s1 + $0x50] sm:$0xff]
    %v50 = vld [vmem:[%s1 + $0x58] sm:$0xff]
    %v51 = vld [vmem:[%s1 + $0x60] sm:$0xff]
    %v52 = vld [vmem:[%s1 + $0x68] sm:$0xff]
    %v53 = vld [vmem:[%s1 + $0x70] sm:$0xff]
    %v54 = vld [vmem:[%s1 + $0x78] sm:$0xff]
    %v55 = vld [vmem:[%s1 + $0x80] sm:$0xff]
    %v56 = vld [vmem:[%s1 + $0x88] sm:$0xff]
    %v57 = vld [vmem:[%s1 + $0x90] sm:$0xff]
    %v58 = vld [vmem:[%s1 + $0x98] sm:$0xff]
    %v59 = vld [vmem:[%s1 + $0xa0] sm:$0xff]
    %v60 = vld [vmem:[%s1 + $0xa8] sm:$0xff]
    %v61 = vld [vmem:[%s1 + $0xb0] sm:$0xff]
    %v62 = vld [vmem:[%s1 + $0xb8] sm:$0xff]
    %v63 = vld [vmem:[%s1 + $0xc0] sm:$0xff]
    %v64 = vld [vmem:[%s1 + $0xc8] sm:$0xff]
    %v65 = vld [vmem:[%s1 + $0xd0] sm:$0xff]
    %v66 = vld [vmem:[%s1 + $0xd8] sm:$0xff]
    %v67 = vld [vmem:[%s1 + $0xe0] sm:$0xff]
    %v68 = vld [vmem:[%s1 + $0xe8] sm:$0xff]
    %v69 = vld [vmem:[%s1 + $0xf0] sm:$0xff]
    %v70 = vld [vmem:[%s1 + $0xf8] sm:$0xff]
    %v71 = vld [vmem:[%s1 + $0x100] sm:$0xff]
    %v72 = vld [vmem:[%s1 + $0x108] sm:$0xff]
    %v73 = vld [vmem:[%s1 + $0x110] sm:$0xff]
    %v74 = vld [vmem:[%s1 + $0x118] sm:$0xff]
    %v75 = vld [vmem:[%s1 + $0x120] sm:$0xff]
    %v76 = vld [vmem:[%s1 + $0x128] sm:$0xff]
    %v77 = vld [vmem:[%s1 + $0x130] sm:$0xff]
    %v78 = vld [vmem:[%s1 + $0x138] sm:$0xff]
    %v79 = vld [vmem:[%s1 + $0x140] sm:$0xff]
    %v80 = vld [vmem:[%s1 + $0x148] sm:$0xff]
    %v81 = vld [vmem:[%s1 + $0x150] sm:$0xff]
    %v82 = vld [vmem:[%s1 + $0x158] sm:$0xff]
    %v83 = vld [vmem:[%s1 + $0x160] sm:$0xff]
    %v84 = vld [vmem:[%s1 + $0x168] sm:$0xff]
    %v85 = vld [vmem:[%s1 + $0x170] sm:$0xff]
    %v86 = vld [vmem:[%s1 + $0x178] sm:$0xff]
    %v87 = vld [vmem:[%s1 + $0x180] sm:$0xff]
    %v88 = vld [vmem:[%s1 + $0x188] sm:$0xff]
    %v89 = vld [vmem:[%s1 + $0x190] sm:$0xff]
    %v90 = vld [vmem:[%s1 + $0x198] sm:$0xff]
    %v91 = vld [vmem:[%s1 + $0x1a0] sm:$0xff]
    %v92 = vld [vmem:[%s1 + $0x1a8] sm:$0xff]
    %v93 = vld [vmem:[%s1 + $0x1b0] sm:$0xff]
    %v94 = vld [vmem:[%s1 + $0x1b8] sm:$0xff]
    %v95 = vld [vmem:[%s1 + $0x1c0] sm:$0xff]
    %v96 = vld [vmem:[%s1 + $0x1c8] sm:$0xff]
    %v97 = vld [vmem:[%s1 + $0x1d0] sm:$0xff]
    %v98 = vld [vmem:[%s1 + $0x1d8] sm:$0xff]
    %v99 = vld [vmem:[%s1 + $0x1e0] sm:$0xff]
    %v100 = vld [vmem:[%s1 + $0x1e8] sm:$0xff]
    %v101 = vld [vmem:[%s1 + $0x1f0] sm:$0xff]
    %v102 = vld [vmem:[%s1 + $0x1f8] sm:$0xff]
    %v103 = vld [vmem:[%s1 + $0x200] sm:$0xff]
    %v104 = vld [vmem:[%s1 + $0x208] sm:$0xff]
    %v105 = vld [vmem:[%s1 + $0x210] sm:$0xff]
    %v106 = vld [vmem:[%s1 + $0x218] sm:$0xff]
    %v107 = vld [vmem:[%s1 + $0x220] sm:$0xff]
    %v108 = vld [vmem:[%s1 + $0x228] sm:$0xff]
    %v109 = vld [vmem:[%s1 + $0x230] sm:$0xff]
    %v110 = vld [vmem:[%s1 + $0x238] sm:$0xff]
    %v111 = vld [vmem:[%s1 + $0x240] sm:$0xff]
    %v112 = vld [vmem:[%s1 + $0x248] sm:$0xff]
    %v113 = vld [vmem:[%s1 + $0x250] sm:$0xff]
    %v114 = vld [vmem:[%s1 + $0x258] sm:$0xff]
    %v115 = vld [vmem:[%s1 + $0x260] sm:$0xff]
    %v116 = vld [vmem:[%s1 + $0x268] sm:$0xff]
    %v117 = vld [vmem:[%s1 + $0x270] sm:$0xff]
    %v118 = vld [vmem:[%s1 + $0x278] sm:$0xff]
    %v119 = vld [vmem:[%s1 + $0x280] sm:$0xff]
    %v120 = vld [vmem:[%s1 + $0x288] sm:$0xff]
    %v121 = vld [vmem:[%s1 + $0x290] sm:$0xff]
    %v122 = vld [vmem:[%s1 + $0x298] sm:$0xff]
    %v123 = vld [vmem:[%s1 + $0x2a0] sm:$0xff]
    %v124 = vld [vmem:[%s1 + $0x2a8] sm:$0xff]
    %v125 = vld [vmem:[%s1 + $0x2b0] sm:$0xff]
    %v126 = vld [vmem:[%s1 + $0x2b8] sm:$0xff]
    %v127 = vld [vmem:[%s1 + $0x2c0] sm:$0xff]
    %v128 = vld [vmem:[%s1 + $0x2c8] sm:$0xff]
    %v129 = vld [vmem:[%s1 + $0x2d0] sm:$0xff]
    %v130 = vld [vmem:[%s1 + $0x2d8] sm:$0xff]
    %v131 = vld [vmem:[%s1 + $0x2e0] sm:$0xff]
    %v132 = vld [vmem:[%s1 + $0x2e8] sm:$0xff]
    %v133 = vld [vmem:[%s1 + $0x2f0] sm:$0xff]
    %v134 = vld [vmem:[%s1 + $0x2f8] sm:$0xff]
    %v135 = vld [vmem:[%s1 + $0x300] sm:$0xff]
    %v136 = vld [vmem:[%s1 + $0x308] sm:$0xff]
    %v137 = vld [vmem:[%s1 + $0x310] sm:$0xff]
    %v138 = vld [vmem:[%s1 + $0x318] sm:$0xff]
    %v139 = vld [vmem:[%s1 + $0x320] sm:$0xff]
    %v140 = vld [vmem:[%s1 + $0x328] sm:$0xff]
    %v141 = vld [vmem:[%s1 + $0x330] sm:$0xff]
    %v142 = vld [vmem:[%s1 + $0x338] sm:$0xff]
    %v143 = vld [vmem:[%s1 + $0x340] sm:$0xff]
    %v144 = vld [vmem:[%s1 + $0x348] sm:$0xff]
    %v145 = vld [vmem:[%s1 + $0x350] sm:$0xff]
    %v146 = vld [vmem:[%s1 + $0x358] sm:$0xff]
    %v147 = vld [vmem:[%s1 + $0x360] sm:$0xff]
    %v148 = vld [vmem:[%s1 + $0x368] sm:$0xff]
    %v149 = vld [vmem:[%s1 + $0x370] sm:$0xff]
    %v150 = vld [vmem:[%s1 + $0x378] sm:$0xff]
    %v151 = vld [vmem:[%s1 + $0x380] sm:$0xff]
    %v152 = vld [vmem:[%s1 + $0x388] sm:$0xff]
    %v153 = vld [vmem:[%s1 + $0x390] sm:$0xff]
    %v154 = vld [vmem:[%s1 + $0x398] sm:$0xff]
    %v155 = vld [vmem:[%s1 + $0x3a0] sm:$0xff]
    %v156 = vld [vmem:[%s1 + $0x3a8] sm:$0xff]
    %v157 = vld [vmem:[%s1 + $0x3b0] sm:$0xff]
    %v158 = vld [vmem:[%s1 + $0x3b8] sm:$0xff]
    %v159 = vld [vmem:[%s1 + $0x3c0] sm:$0xff]
    %v160 = vld [vmem:[%s1 + $0x3c8] sm:$0xff]
    %v161 = vld [vmem:[%s1 + $0x3d0] sm:$0xff]
    %v162 = vld [vmem:[%s1 + $0x3d8] sm:$0xff]
    %v163 = vld [vmem:[%s1 + $0x3e0] sm:$0xff]
    %v164 = vld [vmem:[%s1 + $0x3e8] sm:$0xff]
    %v165 = vld [vmem:[%s1 + $0x3f0] sm:$0xff]
    %v166 = vld [vmem:[%s1 + $0x3f8] sm:$0xff]
    %v167 = vld [vmem:[%s1 + $0x400] sm:$0xff]
    %v168 = vld [vmem:[%s1 + $0x408] sm:$0xff]
    %v169 = vld [vmem:[%s1 + $0x410] sm:$0xff]
    %v170 = vld [vmem:[%s1 + $0x418] sm:$0xff]
    %v171 = vld [vmem:[%s1 + $0x420] sm:$0xff]
    %v172 = vld [vmem:[%s1 + $0x428] sm:$0xff]
    %v173 = vld [vmem:[%s1 + $0x430] sm:$0xff]
    %v174 = vld [vmem:[%s1 + $0x438] sm:$0xff]
    %v175 = vld [vmem:[%s1 + $0x440] sm:$0xff]
    %v176 = vld [vmem:[%s1 + $0x448] sm:$0xff]
    %v177 = vld [vmem:[%s1 + $0x450] sm:$0xff]
    %v178 = vld [vmem:[%s1 + $0x458] sm:$0xff]
    %v179 = vld [vmem:[%s1 + $0x460] sm:$0xff]
    %v180 = vld [vmem:[%s1 + $0x468] sm:$0xff]
    %v181 = vld [vmem:[%s1 + $0x470] sm:$0xff]
    %v182 = vld [vmem:[%s1 + $0x478] sm:$0xff]
    %v183 = vld [vmem:[%s1 + $0x480] sm:$0xff]
    %v184 = vld [vmem:[%s1 + $0x488] sm:$0xff]
    %v185 = vld [vmem:[%s1 + $0x490] sm:$0xff]
    %v186 = vld [vmem:[%s1 + $0x498] sm:$0xff]
    %v187 = vld [vmem:[%s1 + $0x4a0] sm:$0xff]
    %v188 = vld [vmem:[%s1 + $0x4a8] sm:$0xff]
    %v189 = vld [vmem:[%s1 + $0x4b0] sm:$0xff]
    %v190 = vld [vmem:[%s1 + $0x4b8] sm:$0xff]
    %v191 = vld [vmem:[%s1 + $0x4c0] sm:$0xff]
    %v192 = vld [vmem:[%s1 + $0x4c8] sm:$0xff]
    %v193 = vld [vmem:[%s1 + $0x4d0] sm:$0xff]
    %v194 = vld [vmem:[%s1 + $0x4d8] sm:$0xff]
    %v195 = vld [vmem:[%s1 + $0x4e0] sm:$0xff]
    %v196 = vld [vmem:[%s1 + $0x4e8] sm:$0xff]
    %v197 = vld [vmem:[%s1 + $0x4f0] sm:$0xff]
    %v198 = vld [vmem:[%s1 + $0x4f8] sm:$0xff]
    %v199 = vld [vmem:[%s1 + $0x500] sm:$0xff]
    %v200 = vld [vmem:[%s1 + $0x508] sm:$0xff]
    %v201 = vld [vmem:[%s1 + $0x510] sm:$0xff]
    %v202 = vld [vmem:[%s1 + $0x518] sm:$0xff]
    %v203 = vld [vmem:[%s1 + $0x520] sm:$0xff]
    %v204 = vld [vmem:[%s1 + $0x528] sm:$0xff]
    %v205 = vld [vmem:[%s1 + $0x530] sm:$0xff]
    %v206 = vld [vmem:[%s1 + $0x538] sm:$0xff]
    %v207 = vld [vmem:[%s1 + $0x540] sm:$0xff]
    %v208 = vld [vmem:[%s1 + $0x548] sm:$0xff]
    %v209 = vld [vmem:[%s1 + $0x550] sm:$0xff]
    %v210 = vld [vmem:[%s1 + $0x558] sm:$0xff]
    %v211 = vld [vmem:[%s1 + $0x560] sm:$0xff]
    %v212 = vld [vmem:[%s1 + $0x568] sm:$0xff]
    %v213 = vld [vmem:[%s1 + $0x570] sm:$0xff]
    %v214 = vld [vmem:[%s1 + $0x578] sm:$0xff]
    %v215 = vld [vmem:[%s1 + $0x580] sm:$0xff]
    %v216 = vld [vmem:[%s1 + $0x588] sm:$0xff]
    %v217 = vld [vmem:[%s1 + $0x590] sm:$0xff]
    %v218 = vld [vmem:[%s1 + $0x598] sm:$0xff]
    %v219 = vld [vmem:[%s1 + $0x5a0] sm:$0xff]
    %v220 = vld [vmem:[%s1 + $0x5a8] sm:$0xff]
    %v221 = vld [vmem:[%s1 + $0x5b0] sm:$0xff]
    %v222 = vld [vmem:[%s1 + $0x5b8] sm:$0xff]
    %v223 = vld [vmem:[%s1 + $0x5c0] sm:$0xff]
    %v224 = vld [vmem:[%s1 + $0x5c8] sm:$0xff]
    %v225 = vld [vmem:[%s1 + $0x5d0] sm:$0xff]
    %v226 = vld [vmem:[%s1 + $0x5d8] sm:$0xff]
    %v227 = vld [vmem:[%s1 + $0x5e0] sm:$0xff]
    %v228 = vld [vmem:[%s1 + $0x5e8] sm:$0xff]
    %v229 = vld [vmem:[%s1 + $0x5f0] sm:$0xff]
    %v230 = vld [vmem:[%s1 + $0x5f8] sm:$0xff]
    %v231 = vld [vmem:[%s1 + $0x600] sm:$0xff]
    %v232 = vld [vmem:[%s1 + $0x608] sm:$0xff]
    %v233 = vld [vmem:[%s1 + $0x610] sm:$0xff]
    %v234 = vld [vmem:[%s1 + $0x618] sm:$0xff]
    %v235 = vld [vmem:[%s1 + $0x620] sm:$0xff]
    %v236 = vld [vmem:[%s1 + $0x628] sm:$0xff]
    %v237 = vld [vmem:[%s1 + $0x630] sm:$0xff]
    %v238 = vld [vmem:[%s1 + $0x638] sm:$0xff]
    %v239 = vld [vmem:[%s1 + $0x640] sm:$0xff]
    %v240 = vld [vmem:[%s1 + $0x648] sm:$0xff]
    %v241 = vld [vmem:[%s1 + $0x650] sm:$0xff]
    %v242 = vld [vmem:[%s1 + $0x658] sm:$0xff]
    %v243 = vld [vmem:[%s1 + $0x660] sm:$0xff]
    %v244 = vld [vmem:[%s1 + $0x668] sm:$0xff]
    %v245 = vld [vmem:[%s1 + $0x670] sm:$0xff]
    %v246 = vld [vmem:[%s1 + $0x678] sm:$0xff]
    %v247 = vld [vmem:[%s1 + $0x680] sm:$0xff]
    %v248 = vld [vmem:[%s1 + $0x688] sm:$0xff]
    %v249 = vld [vmem:[%s1 + $0x690] sm:$0xff]
    %v250 = vld [vmem:[%s1 + $0x698] sm:$0xff]
    %v251 = vld [vmem:[%s1 + $0x6a0] sm:$0xff]
    %v252 = vld [vmem:[%s1 + $0x6a8] sm:$0xff]
    %v253 = vld [vmem:[%s1 + $0x6b0] sm:$0xff]
    %v254 = vld [vmem:[%s1 + $0x6b8] sm:$0xff]
    %v255 = vld [vmem:[%s1 + $0x6c0] sm:$0xff]
    %v256 = vld [vmem:[%s1 + $0x6c8] sm:$0xff]
    %v257 = vld [vmem:[%s1 + $0x6d0] sm:$0xff]
    %v258 = vld [vmem:[%s1 + $0x6d8] sm:$0xff]
    %v259 = vld [vmem:[%s1 + $0x6e0] sm:$0xff]
    %v260 = vld [vmem:[%s1 + $0x6e8] sm:$0xff]
    %v261 = vld [vmem:[%s1 + $0x6f0] sm:$0xff]
    %v262 = vld [vmem:[%s1 + $0x6f8] sm:$0xff]
    %v263 = vld [vmem:[%s1 + $0x700] sm:$0xff]
    %v264 = vld [vmem:[%s1 + $0x708] sm:$0xff]
    %v265 = vld [vmem:[%s1 + $0x710] sm:$0xff]
    %v266 = vld [vmem:[%s1 + $0x718] sm:$0xff]
    %v267 = vld [vmem:[%s1 + $0x720] sm:$0xff]
    %v268 = vld [vmem:[%s1 + $0x728] sm:$0xff]
    %v269 = vld [vmem:[%s1 + $0x730] sm:$0xff]
    %v270 = vld [vmem:[%s1 + $0x738] sm:$0xff]
    %v271 = vld [vmem:[%s1 + $0x740] sm:$0xff]
    %v272 = vld [vmem:[%s1 + $0x748] sm:$0xff]
    %v273 = vld [vmem:[%s1 + $0x750] sm:$0xff]
    %v274 = vld [vmem:[%s1 + $0x758] sm:$0xff]
    %v275 = vld [vmem:[%s1 + $0x760] sm:$0xff]
    %v276 = vld [vmem:[%s1 + $0x768] sm:$0xff]
    %v277 = vld [vmem:[%s1 + $0x770] sm:$0xff]
    %v278 = vld [vmem:[%s1 + $0x778] sm:$0xff]
    %v279 = vld [vmem:[%s1 + $0x780] sm:$0xff]
    %v280 = vld [vmem:[%s1 + $0x788] sm:$0xff]
    %v281 = vld [vmem:[%s1 + $0x790] sm:$0xff]
    %v282 = vld [vmem:[%s1 + $0x798] sm:$0xff]
    %v283 = vld [vmem:[%s1 + $0x7a0] sm:$0xff]
    %v284 = vld [vmem:[%s1 + $0x7a8] sm:$0xff]
    %v285 = vld [vmem:[%s1 + $0x7b0] sm:$0xff]
    %v286 = vld [vmem:[%s1 + $0x7b8] sm:$0xff]
    %v287 = vld [vmem:[%s1 + $0x7c0] sm:$0xff]
    %v288 = vld [vmem:[%s1 + $0x7c8] sm:$0xff]
    %v289 = vld [vmem:[%s1 + $0x7d0] sm:$0xff]
    %v290 = vld [vmem:[%s1 + $0x7d8] sm:$0xff]
    %v291 = vld [vmem:[%s1 + $0x7e0] sm:$0xff]
    %v292 = vld [vmem:[%s1 + $0x7e8] sm:$0xff]
    %v293 = vld [vmem:[%s1 + $0x7f0] sm:$0xff]
    %v294 = vld [vmem:[%s1 + $0x7f8] sm:$0xff]
    %v295 = vld [vmem:[%s1 + $0x800] sm:$0xff]
    %v296 = vld [vmem:[%s1 + $0x808] sm:$0xff]
    %v297 = vld [vmem:[%s1 + $0x810] sm:$0xff]
    %v298 = vld [vmem:[%s1 + $0x818] sm:$0xff]
    %v299 = vld [vmem:[%s1 + $0x820] sm:$0xff]
    %v300 = vld [vmem:[%s1 + $0x828] sm:$0xff]
    %v301 = vld [vmem:[%s1 + $0x830] sm:$0xff]
    %v302 = vld [vmem:[%s1 + $0x838] sm:$0xff]
    %v303 = vld [vmem:[%s1 + $0x840] sm:$0xff]
    %v304 = vld [vmem:[%s1 + $0x848] sm:$0xff]
    %v305 = vld [vmem:[%s1 + $0x850] sm:$0xff]
    %v306 = vld [vmem:[%s1 + $0x858] sm:$0xff]
    %v307 = vld [vmem:[%s1 + $0x860] sm:$0xff]
    %v308 = vld [vmem:[%s1 + $0x868] sm:$0xff]
    %v309 = vld [vmem:[%s1 + $0x870] sm:$0xff]
    %v310 = vld [vmem:[%s1 + $0x878] sm:$0xff]
    %v311 = vld [vmem:[%s1 + $0x880] sm:$0xff]
    %v312 = vld [vmem:[%s1 + $0x888] sm:$0xff]
    %v313 = vld [vmem:[%s1 + $0x890] sm:$0xff]
    %v314 = vld [vmem:[%s1 + $0x898] sm:$0xff]
    %v315 = vld [vmem:[%s1 + $0x8a0] sm:$0xff]
    %v316 = vld [vmem:[%s1 + $0x8a8] sm:$0xff]
    %v317 = vld [vmem:[%s1 + $0x8b0] sm:$0xff]
    %v318 = vld [vmem:[%s1 + $0x8b8] sm:$0xff]
    %v319 = vld [vmem:[%s1 + $0x8c0] sm:$0xff]
    %v320 = vld [vmem:[%s1 + $0x8c8] sm:$0xff]
    %v321 = vld [vmem:[%s1 + $0x8d0] sm:$0xff]
    %v322 = vld [vmem:[%s1 + $0x8d8] sm:$0xff]
    %v323 = vld [vmem:[%s1 + $0x8e0] sm:$0xff]
    %v324 = vld [vmem:[%s1 + $0x8e8] sm:$0xff]
    %v325 = vld [vmem:[%s1 + $0x8f0] sm:$0xff]
    %v326 = vld [vmem:[%s1 + $0x8f8] sm:$0xff]
    %v327 = vld [vmem:[%s1 + $0x900] sm:$0xff]
    %v328 = vld [vmem:[%s1 + $0x908] sm:$0xff]
    %v329 = vld [vmem:[%s1 + $0x910] sm:$0xff]
    %v330 = vld [vmem:[%s1 + $0x918] sm:$0xff]
    %v331 = vld [vmem:[%s1 + $0x920] sm:$0xff]
    %v332 = vld [vmem:[%s1 + $0x928] sm:$0xff]
    %v333 = vld [vmem:[%s1 + $0x930] sm:$0xff]
    %v334 = vld [vmem:[%s1 + $0x938] sm:$0xff]
    %v335 = vld [vmem:[%s1 + $0x940] sm:$0xff]
    %v336 = vld [vmem:[%s1 + $0x948] sm:$0xff]
    %v337 = vld [vmem:[%s1 + $0x950] sm:$0xff]
    %v338 = vld [vmem:[%s1 + $0x958] sm:$0xff]
    %v339 = vld [vmem:[%s1 + $0x960] sm:$0xff]
    %v340 = vld [vmem:[%s1 + $0x968] sm:$0xff]
    %v341 = vld [vmem:[%s1 + $0x970] sm:$0xff]
    %v342 = vld [vmem:[%s1 + $0x978] sm:$0xff]
    %v343 = vld [vmem:[%s1 + $0x980] sm:$0xff]
    %v344 = vld [vmem:[%s1 + $0x988] sm:$0xff]
    %v345 = vld [vmem:[%s1 + $0x990] sm:$0xff]
    %v346 = vld [vmem:[%s1 + $0x998] sm:$0xff]
    %v347 = vld [vmem:[%s1 + $0x9a0] sm:$0xff]
    %v348 = vld [vmem:[%s1 + $0x9a8] sm:$0xff]
    %v349 = vld [vmem:[%s1 + $0x9b0] sm:$0xff]
    %v350 = vld [vmem:[%s1 + $0x9b8] sm:$0xff]
    %v351 = vld [vmem:[%s1 + $0x9c0] sm:$0xff]
    %v352 = vld [vmem:[%s1 + $0x9c8] sm:$0xff]
    %v353 = vld [vmem:[%s1 + $0x9d0] sm:$0xff]
    %v354 = vld [vmem:[%s1 + $0x9d8] sm:$0xff]
    %v355 = vld [vmem:[%s1 + $0x9e0] sm:$0xff]
    %v356 = vld [vmem:[%s1 + $0x9e8] sm:$0xff]
    %v357 = vld [vmem:[%s1 + $0x9f0] sm:$0xff]
    %v358 = vld [vmem:[%s1 + $0x9f8] sm:$0xff]
    %v359 = vld [vmem:[%s1 + $0xa00] sm:$0xff]
    %v360 = vld [vmem:[%s1 + $0xa08] sm:$0xff]
    %v361 = vld [vmem:[%s1 + $0xa10] sm:$0xff]
    %v362 = vld [vmem:[%s1 + $0xa18] sm:$0xff]
    %v363 = vld [vmem:[%s1 + $0xa20] sm:$0xff]
    %v364 = vld [vmem:[%s1 + $0xa28] sm:$0xff]
    %v365 = vld [vmem:[%s1 + $0xa30] sm:$0xff]
    %v366 = vld [vmem:[%s1 + $0xa38] sm:$0xff]
    %v367 = vld [vmem:[%s1 + $0xa40] sm:$0xff]
    %v368 = vld [vmem:[%s1 + $0xa48] sm:$0xff]
    %v369 = vld [vmem:[%s1 + $0xa50] sm:$0xff]
    %v370 = vld [vmem:[%s1 + $0xa58] sm:$0xff]
    %v371 = vld [vmem:[%s1 + $0xa60] sm:$0xff]
    %v372 = vld [vmem:[%s1 + $0xa68] sm:$0xff]
    %v373 = vld [vmem:[%s1 + $0xa70] sm:$0xff]
    %v374 = vld [vmem:[%s1 + $0xa78] sm:$0xff]
    %v375 = vld [vmem:[%s1 + $0xa80] sm:$0xff]
    %v376 = vld [vmem:[%s1 + $0xa88] sm:$0xff]
    %v377 = vld [vmem:[%s1 + $0xa90] sm:$0xff]
    %v378 = vld [vmem:[%s1 + $0xa98] sm:$0xff]
    %v379 = vld [vmem:[%s1 + $0xaa0] sm:$0xff]
    %v380 = vld [vmem:[%s1 + $0xaa8] sm:$0xff]
    %v381 = vld [vmem:[%s1 + $0xab0] sm:$0xff]
    %v382 = vld [vmem:[%s1 + $0xab8] sm:$0xff]
    %v383 = vld [vmem:[%s1 + $0xac0] sm:$0xff]
    %v384 = vld [vmem:[%s1 + $0xac8] sm:$0xff]
    %v385 = vld [vmem:[%s1 + $0xad0] sm:$0xff]
    %v386 = vld [vmem:[%s1 + $0xad8] sm:$0xff]
    %v387 = vld [vmem:[%s1 + $0xae0] sm:$0xff]
    %v388 = vld [vmem:[%s1 + $0xae8] sm:$0xff]
    %v389 = vld [vmem:[%s1 + $0xaf0] sm:$0xff]
    %v390 = vld [vmem:[%s1 + $0xaf8] sm:$0xff]
    %v391 = vld [vmem:[%s1 + $0xb00] sm:$0xff]
    %v392 = vld [vmem:[%s1 + $0xb08] sm:$0xff]
    %v393 = vld [vmem:[%s1 + $0xb10] sm:$0xff]
    %v394 = vld [vmem:[%s1 + $0xb18] sm:$0xff]
    %v395 = vld [vmem:[%s1 + $0xb20] sm:$0xff]
    %v396 = vld [vmem:[%s1 + $0xb28] sm:$0xff]
    %v397 = vld [vmem:[%s1 + $0xb30] sm:$0xff]
    %v398 = vld [vmem:[%s1 + $0xb38] sm:$0xff]
    %v399 = vld [vmem:[%s1 + $0xb40] sm:$0xff]
    %v400 = vld [vmem:[%s1 + $0xb48] sm:$0xff]
    %v401 = vld [vmem:[%s1 + $0xb50] sm:$0xff]
    %v402 = vld [vmem:[%s1 + $0xb58] sm:$0xff]
    %v403 = vld [vmem:[%s1 + $0xb60] sm:$0xff]
    %v404 = vld [vmem:[%s1 + $0xb68] sm:$0xff]
    %v405 = vld [vmem:[%s1 + $0xb70] sm:$0xff]
    %v406 = vld [vmem:[%s1 + $0xb78] sm:$0xff]
    %v407 = vld [vmem:[%s1 + $0xb80] sm:$0xff]
    %v408 = vld [vmem:[%s1 + $0xb88] sm:$0xff]
    %v409 = vld [vmem:[%s1 + $0xb90] sm:$0xff]
    %v410 = vld [vmem:[%s1 + $0xb98] sm:$0xff]
    %v411 = vld [vmem:[%s1 + $0xba0] sm:$0xff]
    %v412 = vld [vmem:[%s1 + $0xba8] sm:$0xff]
    %v413 = vld [vmem:[%s1 + $0xbb0] sm:$0xff]
    %v414 = vld [vmem:[%s1 + $0xbb8] sm:$0xff]
    %v415 = vld [vmem:[%s1 + $0xbc0] sm:$0xff]
    %v416 = vld [vmem:[%s1 + $0xbc8] sm:$0xff]
    %v417 = vld [vmem:[%s1 + $0xbd0] sm:$0xff]
    %v418 = vld [vmem:[%s1 + $0xbd8] sm:$0xff]
    %v419 = vld [vmem:[%s1 + $0xbe0] sm:$0xff]
    %v420 = vld [vmem:[%s1 + $0xbe8] sm:$0xff]
    %v421 = vld [vmem:[%s1 + $0xbf0] sm:$0xff]
    %v422 = vld [vmem:[%s1 + $0xbf8] sm:$0xff]
    %v423 = vld [vmem:[%s1 + $0xc00] sm:$0xff]
    %v424 = vld [vmem:[%s1 + $0xc08] sm:$0xff]
    %v425 = vld [vmem:[%s1 + $0xc10] sm:$0xff]
    %v426 = vld [vmem:[%s1 + $0xc18] sm:$0xff]
    %v427 = vld [vmem:[%s1 + $0xc20] sm:$0xff]
    %v428 = vld [vmem:[%s1 + $0xc28] sm:$0xff]
    %v429 = vld [vmem:[%s1 + $0xc30] sm:$0xff]
    %v430 = vld [vmem:[%s1 + $0xc38] sm:$0xff]
    %v431 = vld [vmem:[%s1 + $0xc40] sm:$0xff]
    %v432 = vld [vmem:[%s1 + $0xc48] sm:$0xff]
    %v433 = vld [vmem:[%s1 + $0xc50] sm:$0xff]
    %v434 = vld [vmem:[%s1 + $0xc58] sm:$0xff]
    %v435 = vld [vmem:[%s1 + $0xc60] sm:$0xff]
    %v436 = vld [vmem:[%s1 + $0xc68] sm:$0xff]
    %v437 = vld [vmem:[%s1 + $0xc70] sm:$0xff]
    %v438 = vld [vmem:[%s1 + $0xc78] sm:$0xff]
    %v439 = vld [vmem:[%s1 + $0xc80] sm:$0xff]
    %v440 = vld [vmem:[%s1 + $0xc88] sm:$0xff]
    %v441 = vld [vmem:[%s1 + $0xc90] sm:$0xff]
    %v442 = vld [vmem:[%s1 + $0xc98] sm:$0xff]
    %v443 = vld [vmem:[%s1 + $0xca0] sm:$0xff]
    %v444 = vld [vmem:[%s1 + $0xca8] sm:$0xff]
    %v445 = vld [vmem:[%s1 + $0xcb0] sm:$0xff]
    %v446 = vld [vmem:[%s1 + $0xcb8] sm:$0xff]
    %v447 = vld [vmem:[%s1 + $0xcc0] sm:$0xff]
    %v448 = vld [vmem:[%s1 + $0xcc8] sm:$0xff]
    %v449 = vld [vmem:[%s1 + $0xcd0] sm:$0xff]
    %v450 = vld [vmem:[%s1 + $0xcd8] sm:$0xff]
    %v451 = vld [vmem:[%s1 + $0xce0] sm:$0xff]
    %v452 = vld [vmem:[%s1 + $0xce8] sm:$0xff]
    %v453 = vld [vmem:[%s1 + $0xcf0] sm:$0xff]
    %v454 = vld [vmem:[%s1 + $0xcf8] sm:$0xff]
    %v455 = vld [vmem:[%s1 + $0xd00] sm:$0xff]
    %v456 = vld [vmem:[%s1 + $0xd08] sm:$0xff]
    %v457 = vld [vmem:[%s1 + $0xd10] sm:$0xff]
    %v458 = vld [vmem:[%s1 + $0xd18] sm:$0xff]
    %v459 = vld [vmem:[%s1 + $0xd20] sm:$0xff]
    %v460 = vld [vmem:[%s1 + $0xd28] sm:$0xff]
    %v461 = vld [vmem:[%s1 + $0xd30] sm:$0xff]
    %v462 = vld [vmem:[%s1 + $0xd38] sm:$0xff]
    %v463 = vld [vmem:[%s1 + $0xd40] sm:$0xff]
    %v464 = vld [vmem:[%s1 + $0xd48] sm:$0xff]
    %v465 = vld [vmem:[%s1 + $0xd50] sm:$0xff]
    %v466 = vld [vmem:[%s1 + $0xd58] sm:$0xff]
    %v467 = vld [vmem:[%s1 + $0xd60] sm:$0xff]
    %v468 = vld [vmem:[%s1 + $0xd68] sm:$0xff]
    %v469 = vld [vmem:[%s1 + $0xd70] sm:$0xff]
    %v470 = vld [vmem:[%s1 + $0xd78] sm:$0xff]
    %v471 = vld [vmem:[%s1 + $0xd80] sm:$0xff]
    %v472 = vld [vmem:[%s1 + $0xd88] sm:$0xff]
    %v473 = vld [vmem:[%s1 + $0xd90] sm:$0xff]
    %v474 = vld [vmem:[%s1 + $0xd98] sm:$0xff]
    %v475 = vld [vmem:[%s1 + $0xda0] sm:$0xff]
    %v476 = vld [vmem:[%s1 + $0xda8] sm:$0xff]
    %v477 = vld [vmem:[%s1 + $0xdb0] sm:$0xff]
    %v478 = vld [vmem:[%s1 + $0xdb8] sm:$0xff]
    %v479 = vld [vmem:[%s1 + $0xdc0] sm:$0xff]
    %v480 = vld [vmem:[%s1 + $0xdc8] sm:$0xff]
    %v481 = vld [vmem:[%s1 + $0xdd0] sm:$0xff]
    %v482 = vld [vmem:[%s1 + $0xdd8] sm:$0xff]
    %v483 = vld [vmem:[%s1 + $0xde0] sm:$0xff]
    %v484 = vld [vmem:[%s1 + $0xde8] sm:$0xff]
    %v485 = vld [vmem:[%s1 + $0xdf0] sm:$0xff]
    %v486 = vld [vmem:[%s1 + $0xdf8] sm:$0xff]
    %v487 = vld [vmem:[%s1 + $0xe00] sm:$0xff]
    %v488 = vld [vmem:[%s1 + $0xe08] sm:$0xff]
    %v489 = vld [vmem:[%s1 + $0xe10] sm:$0xff]
    %v490 = vld [vmem:[%s1 + $0xe18] sm:$0xff]
    %v491 = vld [vmem:[%s1 + $0xe20] sm:$0xff]
    %v492 = vld [vmem:[%s1 + $0xe28] sm:$0xff]
    %v493 = vld [vmem:[%s1 + $0xe30] sm:$0xff]
    %v494 = vld [vmem:[%s1 + $0xe38] sm:$0xff]
    %v495 = vld [vmem:[%s1 + $0xe40] sm:$0xff]
    %v496 = vld [vmem:[%s1 + $0xe48] sm:$0xff]
    %v497 = vld [vmem:[%s1 + $0xe50] sm:$0xff]
    %v498 = vld [vmem:[%s1 + $0xe58] sm:$0xff]
    %v499 = vld [vmem:[%s1 + $0xe60] sm:$0xff]
    %v500 = vld [vmem:[%s1 + $0xe68] sm:$0xff]
    %v501 = vld [vmem:[%s1 + $0xe70] sm:$0xff]
    %v502 = vld [vmem:[%s1 + $0xe78] sm:$0xff]
    %v503 = vld [vmem:[%s1 + $0xe80] sm:$0xff]
    %v504 = vld [vmem:[%s1 + $0xe88] sm:$0xff]
    %v505 = vld [vmem:[%s1 + $0xe90] sm:$0xff]
    %v506 = vld [vmem:[%s1 + $0xe98] sm:$0xff]
    %v507 = vld [vmem:[%s1 + $0xea0] sm:$0xff]
    %v508 = vld [vmem:[%s1 + $0xea8] sm:$0xff]
    %v509 = vld [vmem:[%s1 + $0xeb0] sm:$0xff]
    %v510 = vld [vmem:[%s1 + $0xeb8] sm:$0xff]
    %v511 = vld [vmem:[%s1 + $0xec0] sm:$0xff]
    %v512 = vld [vmem:[%s1 + $0xec8] sm:$0xff]
    %v513 = vld [vmem:[%s1 + $0xed0] sm:$0xff]
    %v514 = vld [vmem:[%s1 + $0xed8] sm:$0xff]
    %v515 = vld [vmem:[%s1 + $0xee0] sm:$0xff]
    %v516 = vld [vmem:[%s1 + $0xee8] sm:$0xff]
    %v517 = vld [vmem:[%s1 + $0xef0] sm:$0xff]
    %v518 = vld [vmem:[%s1 + $0xef8] sm:$0xff]
    %v519 = vld [vmem:[%s1 + $0xf00] sm:$0xff]
    %v520 = vld [vmem:[%s1 + $0xf08] sm:$0xff]
    %v521 = vld [vmem:[%s1 + $0xf10] sm:$0xff]
    %v522 = vld [vmem:[%s1 + $0xf18] sm:$0xff]
    %v523 = vld [vmem:[%s1 + $0xf20] sm:$0xff]
    %v524 = vld [vmem:[%s1 + $0xf28] sm:$0xff]
    %v525 = vld [vmem:[%s1 + $0xf30] sm:$0xff]
    %v526 = vld [vmem:[%s1 + $0xf38] sm:$0xff]
    %v527 = vld [vmem:[%s1 + $0xf40] sm:$0xff]
    %v528 = vld [vmem:[%s1 + $0xf48] sm:$0xff]
    %v529 = vld [vmem:[%s1 + $0xf50] sm:$0xff]
    %v530 = vld [vmem:[%s1 + $0xf58] sm:$0xff]
    %v531 = vld [vmem:[%s1 + $0xf60] sm:$0xff]
    %v532 = vld [vmem:[%s1 + $0xf68] sm:$0xff]
    %v533 = vld [vmem:[%s1 + $0xf70] sm:$0xff]
    %v534 = vld [vmem:[%s1 + $0xf78] sm:$0xff]
    %v535 = vld [vmem:[%s1 + $0xf80] sm:$0xff]
    %v536 = vld [vmem:[%s1 + $0xf88] sm:$0xff]
    %v537 = vld [vmem:[%s1 + $0xf90] sm:$0xff]
    %v538 = vld [vmem:[%s1 + $0xf98] sm:$0xff]
    %v539 = vld [vmem:[%s1 + $0xfa0] sm:$0xff]
    %v540 = vld [vmem:[%s1 + $0xfa8] sm:$0xff]
    %v541 = vld [vmem:[%s1 + $0xfb0] sm:$0xff]
    %v542 = vld [vmem:[%s1 + $0xfb8] sm:$0xff]
    %v543 = vld [vmem:[%s1 + $0xfc0] sm:$0xff]
    %v544 = vld [vmem:[%s1 + $0xfc8] sm:$0xff]
    %v545 = vld [vmem:[%s1 + $0xfd0] sm:$0xff]
    %v546 = vld [vmem:[%s1 + $0xfd8] sm:$0xff]
    %v547 = vld [vmem:[%s1 + $0xfe0] sm:$0xff]
    %v548 = vld [vmem:[%s1 + $0xfe8] sm:$0xff]
    %v549 = vld [vmem:[%s1 + $0xff0] sm:$0xff]
    %v550 = vld [vmem:[%s1 + $0xff8] sm:$0xff]
    %v551 = vld [vmem:[%s1 + $0x1000] sm:$0xff]
    %v552 = vld [vmem:[%s1 + $0x1008] sm:$0xff]
    %v553 = vld [vmem:[%s1 + $0x1010] sm:$0xff]
    %v554 = vld [vmem:[%s1 + $0x1018] sm:$0xff]
    %v555 = vld [vmem:[%s1 + $0x1020] sm:$0xff]
    %v556 = vld [vmem:[%s1 + $0x1028] sm:$0xff]
    %v557 = vld [vmem:[%s1 + $0x1030] sm:$0xff]
    %v558 = vld [vmem:[%s1 + $0x1038] sm:$0xff]
    %v559 = vld [vmem:[%s1 + $0x1040] sm:$0xff]
    %v560 = vld [vmem:[%s1 + $0x1048] sm:$0xff]
    %v561 = vld [vmem:[%s1 + $0x1050] sm:$0xff]
    %v562 = vld [vmem:[%s1 + $0x1058] sm:$0xff]
    %v563 = vld [vmem:[%s1 + $0x1060] sm:$0xff]
    %v564 = vld [vmem:[%s1 + $0x1068] sm:$0xff]
    %v565 = vld [vmem:[%s1 + $0x1070] sm:$0xff]
    %v566 = vld [vmem:[%s1 + $0x1078] sm:$0xff]
    %v567 = vld [vmem:[%s1 + $0x1080] sm:$0xff]
    %v568 = vld [vmem:[%s1 + $0x1088] sm:$0xff]
    %v569 = vld [vmem:[%s1 + $0x1090] sm:$0xff]
    %v570 = vld [vmem:[%s1 + $0x1098] sm:$0xff]
    %v571 = vld [vmem:[%s1 + $0x10a0] sm:$0xff]
    %v572 = vld [vmem:[%s1 + $0x10a8] sm:$0xff]
    %v573 = vld [vmem:[%s1 + $0x10b0] sm:$0xff]
    %v574 = vld [vmem:[%s1 + $0x10b8] sm:$0xff]
    %v575 = vld [vmem:[%s1 + $0x10c0] sm:$0xff]
    %v576 = vld [vmem:[%s1 + $0x10c8] sm:$0xff]
    %v577 = vld [vmem:[%s1 + $0x10d0] sm:$0xff]
    %v578 = vld [vmem:[%s1 + $0x10d8] sm:$0xff]
    %v579 = vld [vmem:[%s1 + $0x10e0] sm:$0xff]
    %v580 = vld [vmem:[%s1 + $0x10e8] sm:$0xff]
    %v581 = vld [vmem:[%s1 + $0x10f0] sm:$0xff]
    %v582 = vld [vmem:[%s1 + $0x10f8] sm:$0xff]
    %v583 = vld [vmem:[%s1 + $0x1100] sm:$0xff]
    %v584 = vld [vmem:[%s1 + $0x1108] sm:$0xff]
    %v585 = vld [vmem:[%s1 + $0x1110] sm:$0xff]
    %v586 = vld [vmem:[%s1 + $0x1118] sm:$0xff]
    %v587 = vld [vmem:[%s1 + $0x1120] sm:$0xff]
    %v588 = vld [vmem:[%s1 + $0x1128] sm:$0xff]
    %v589 = vld [vmem:[%s1 + $0x1130] sm:$0xff]
    %v590 = vld [vmem:[%s1 + $0x1138] sm:$0xff]
    %v591 = vld [vmem:[%s1 + $0x1140] sm:$0xff]
    %v592 = vld [vmem:[%s1 + $0x1148] sm:$0xff]
    %v593 = vld [vmem:[%s1 + $0x1150] sm:$0xff]
    %v594 = vld [vmem:[%s1 + $0x1158] sm:$0xff]
    %v595 = vld [vmem:[%s1 + $0x1160] sm:$0xff]
    %v596 = vld [vmem:[%s1 + $0x1168] sm:$0xff]
    %v597 = vld [vmem:[%s1 + $0x1170] sm:$0xff]
    %v598 = vld [vmem:[%s1 + $0x1178] sm:$0xff]
    %v599 = vld [vmem:[%s1 + $0x1180] sm:$0xff]
    %v600 = vld [vmem:[%s1 + $0x1188] sm:$0xff]
    %v601 = vld [vmem:[%s1 + $0x1190] sm:$0xff]
    %v602 = vld [vmem:[%s1 + $0x1198] sm:$0xff]
    %v603 = vld [vmem:[%s1 + $0x11a0] sm:$0xff]
    %v604 = vld [vmem:[%s1 + $0x11a8] sm:$0xff]
    %v605 = vld [vmem:[%s1 + $0x11b0] sm:$0xff]
    %v606 = vld [vmem:[%s1 + $0x11b8] sm:$0xff]
    %v607 = vld [vmem:[%s1 + $0x11c0] sm:$0xff]
    %v608 = vld [vmem:[%s1 + $0x11c8] sm:$0xff]
    %v609 = vld [vmem:[%s1 + $0x11d0] sm:$0xff]
    %v610 = vld [vmem:[%s1 + $0x11d8] sm:$0xff]
    %v611 = vld [vmem:[%s1 + $0x11e0] sm:$0xff]
    %v612 = vld [vmem:[%s1 + $0x11e8] sm:$0xff]
    %v613 = vld [vmem:[%s1 + $0x11f0] sm:$0xff]
    %v614 = vld [vmem:[%s1 + $0x11f8] sm:$0xff]
    %v615 = vld [vmem:[%s1 + $0x1200] sm:$0xff]
    %v616 = vld [vmem:[%s1 + $0x1208] sm:$0xff]
    %v617 = vld [vmem:[%s1 + $0x1210] sm:$0xff]
    %v618 = vld [vmem:[%s1 + $0x1218] sm:$0xff]
    %v619 = vld [vmem:[%s1 + $0x1220] sm:$0xff]
    %v620 = vld [vmem:[%s1 + $0x1228] sm:$0xff]
    %v621 = vld [vmem:[%s1 + $0x1230] sm:$0xff]
    %v622 = vld [vmem:[%s1 + $0x1238] sm:$0xff]
    %v623 = vld [vmem:[%s1 + $0x1240] sm:$0xff]
    %v624 = vld [vmem:[%s1 + $0x1248] sm:$0xff]
    %v625 = vld [vmem:[%s1 + $0x1250] sm:$0xff]
    %v626 = vld [vmem:[%s1 + $0x1258] sm:$0xff]
    %v627 = vld [vmem:[%s1 + $0x1260] sm:$0xff]
    %v628 = vld [vmem:[%s1 + $0x1268] sm:$0xff]
    %v629 = vld [vmem:[%s1 + $0x1270] sm:$0xff]
    %v630 = vld [vmem:[%s1 + $0x1278] sm:$0xff]
    %v631 = vld [vmem:[%s1 + $0x1280] sm:$0xff]
    %v632 = vld [vmem:[%s1 + $0x1288] sm:$0xff]
    %v633 = vld [vmem:[%s1 + $0x1290] sm:$0xff]
    %v634 = vld [vmem:[%s1 + $0x1298] sm:$0xff]
    %v635 = vld [vmem:[%s1 + $0x12a0] sm:$0xff]
    %v636 = vld [vmem:[%s1 + $0x12a8] sm:$0xff]
    %v637 = vld [vmem:[%s1 + $0x12b0] sm:$0xff]
    %v638 = vld [vmem:[%s1 + $0x12b8] sm:$0xff]
    %v639 = vld [vmem:[%s1 + $0x12c0] sm:$0xff]
    %v640 = vld [vmem:[%s1 + $0x12c8] sm:$0xff]
    %v641 = vld [vmem:[%s1 + $0x12d0] sm:$0xff]
    %v642 = vld [vmem:[%s1 + $0x12d8] sm:$0xff]
    %v643 = vld [vmem:[%s1 + $0x12e0] sm:$0xff]
    %v644 = vld [vmem:[%s1 + $0x12e8] sm:$0xff]
    %v645 = vld [vmem:[%s1 + $0x12f0] sm:$0xff]
    %v646 = vld [vmem:[%s1 + $0x12f8] sm:$0xff]
    %v647 = vld [vmem:[%s1 + $0x1300] sm:$0xff]
    %v648 = vld [vmem:[%s1 + $0x1308] sm:$0xff]
    %v649 = vld [vmem:[%s1 + $0x1310] sm:$0xff]
    %v650 = vld [vmem:[%s1 + $0x1318] sm:$0xff]
    %v651 = vld [vmem:[%s1 + $0x1320] sm:$0xff]
    %v652 = vld [vmem:[%s1 + $0x1328] sm:$0xff]
    %v653 = vld [vmem:[%s1 + $0x1330] sm:$0xff]
    %v654 = vld [vmem:[%s1 + $0x1338] sm:$0xff]
    %v655 = vld [vmem:[%s1 + $0x1340] sm:$0xff]
    %v656 = vld [vmem:[%s1 + $0x1348] sm:$0xff]
    %v657 = vld [vmem:[%s1 + $0x1350] sm:$0xff]
    %v658 = vld [vmem:[%s1 + $0x1358] sm:$0xff]
    %v659 = vld [vmem:[%s1 + $0x1360] sm:$0xff]
    %v660 = vld [vmem:[%s1 + $0x1368] sm:$0xff]
    %v661 = vld [vmem:[%s1 + $0x1370] sm:$0xff]
    %v662 = vld [vmem:[%s1 + $0x1378] sm:$0xff]
    %v663 = vld [vmem:[%s1 + $0x1380] sm:$0xff]
    %v664 = vld [vmem:[%s1 + $0x1388] sm:$0xff]
    %v665 = vld [vmem:[%s1 + $0x1390] sm:$0xff]
    %v666 = vld [vmem:[%s1 + $0x1398] sm:$0xff]
    %v667 = vld [vmem:[%s1 + $0x13a0] sm:$0xff]
    %v668 = vld [vmem:[%s1 + $0x13a8] sm:$0xff]
    %v669 = vld [vmem:[%s1 + $0x13b0] sm:$0xff]
    %v670 = vld [vmem:[%s1 + $0x13b8] sm:$0xff]
    %v671 = vld [vmem:[%s1 + $0x13c0] sm:$0xff]
    %v672 = vld [vmem:[%s1 + $0x13c8] sm:$0xff]
    %v673 = vld [vmem:[%s1 + $0x13d0] sm:$0xff]
    %v674 = vld [vmem:[%s1 + $0x13d8] sm:$0xff]
    %v675 = vld [vmem:[%s1 + $0x13e0] sm:$0xff]
    %v676 = vld [vmem:[%s1 + $0x13e8] sm:$0xff]
    %v677 = vld [vmem:[%s1 + $0x13f0] sm:$0xff]
    %v678 = vld [vmem:[%s1 + $0x13f8] sm:$0xff]
    %v679 = vld [vmem:[%s1 + $0x1400] sm:$0xff]
    %v680 = vld [vmem:[%s1 + $0x1408] sm:$0xff]
    %v681 = vld [vmem:[%s1 + $0x1410] sm:$0xff]
    %v682 = vld [vmem:[%s1 + $0x1418] sm:$0xff]
    %v683 = vld [vmem:[%s1 + $0x1420] sm:$0xff]
    %v684 = vld [vmem:[%s1 + $0x1428] sm:$0xff]
    %v685 = vld [vmem:[%s1 + $0x1430] sm:$0xff]
    %v686 = vld [vmem:[%s1 + $0x1438] sm:$0xff]
    %v687 = vld [vmem:[%s1 + $0x1440] sm:$0xff]
    %v688 = vld [vmem:[%s1 + $0x1448] sm:$0xff]
    %v689 = vld [vmem:[%s1 + $0x1450] sm:$0xff]
    %v690 = vld [vmem:[%s1 + $0x1458] sm:$0xff]
    %v691 = vld [vmem:[%s1 + $0x1460] sm:$0xff]
    %v692 = vld [vmem:[%s1 + $0x1468] sm:$0xff]
    %v693 = vld [vmem:[%s1 + $0x1470] sm:$0xff]
    %v694 = vld [vmem:[%s1 + $0x1478] sm:$0xff]
    %v695 = vld [vmem:[%s1 + $0x1480] sm:$0xff]
    %v696 = vld [vmem:[%s1 + $0x1488] sm:$0xff]
    %v697 = vld [vmem:[%s1 + $0x1490] sm:$0xff]
    %v698 = vld [vmem:[%s1 + $0x1498] sm:$0xff]
    %v699 = vld [vmem:[%s1 + $0x14a0] sm:$0xff]
    %v700 = vld [vmem:[%s1 + $0x14a8] sm:$0xff]
    %v701 = vld [vmem:[%s1 + $0x14b0] sm:$0xff]
    %v702 = vld [vmem:[%s1 + $0x14b8] sm:$0xff]
    %v703 = vld [vmem:[%s1 + $0x14c0] sm:$0xff]
    %v704 = vld [vmem:[%s1 + $0x14c8] sm:$0xff]
    %v705 = vld [vmem:[%s1 + $0x14d0] sm:$0xff]
    %v706 = vld [vmem:[%s1 + $0x14d8] sm:$0xff]
    %v707 = vld [vmem:[%s1 + $0x14e0] sm:$0xff]
    %v708 = vld [vmem:[%s1 + $0x14e8] sm:$0xff]
    %v709 = vld [vmem:[%s1 + $0x14f0] sm:$0xff]
    %v710 = vld [vmem:[%s1 + $0x14f8] sm:$0xff]
    %v711 = vld [vmem:[%s1 + $0x1500] sm:$0xff]
    %v712 = vld [vmem:[%s1 + $0x1508] sm:$0xff]
    %v713 = vld [vmem:[%s1 + $0x1510] sm:$0xff]
    %v714 = vld [vmem:[%s1 + $0x1518] sm:$0xff]
    %v715 = vld [vmem:[%s1 + $0x1520] sm:$0xff]
    %v716 = vld [vmem:[%s1 + $0x1528] sm:$0xff]
    %v717 = vld [vmem:[%s1 + $0x1530] sm:$0xff]
    %v718 = vld [vmem:[%s1 + $0x1538] sm:$0xff]
    %v719 = vld [vmem:[%s1 + $0x1540] sm:$0xff]
    %v720 = vld [vmem:[%s1 + $0x1548] sm:$0xff]
    %v721 = vld [vmem:[%s1 + $0x1550] sm:$0xff]
    %v722 = vld [vmem:[%s1 + $0x1558] sm:$0xff]
    %v723 = vld [vmem:[%s1 + $0x1560] sm:$0xff]
    %v724 = vld [vmem:[%s1 + $0x1568] sm:$0xff]
    %v725 = vld [vmem:[%s1 + $0x1570] sm:$0xff]
    %v726 = vld [vmem:[%s1 + $0x1578] sm:$0xff]
    %v727 = vld [vmem:[%s1 + $0x1580] sm:$0xff]
    %v728 = vld [vmem:[%s1 + $0x1588] sm:$0xff]
    %v729 = vld [vmem:[%s1 + $0x1590] sm:$0xff]
    %v730 = vld [vmem:[%s1 + $0x1598] sm:$0xff]
    %v731 = vld [vmem:[%s1 + $0x15a0] sm:$0xff]
    %v732 = vld [vmem:[%s1 + $0x15a8] sm:$0xff]
    %v733 = vld [vmem:[%s1 + $0x15b0] sm:$0xff]
    %v734 = vld [vmem:[%s1 + $0x15b8] sm:$0xff]
    %v735 = vld [vmem:[%s1 + $0x15c0] sm:$0xff]
    %v736 = vld [vmem:[%s1 + $0x15c8] sm:$0xff]
    %v737 = vld [vmem:[%s1 + $0x15d0] sm:$0xff]
    %v738 = vld [vmem:[%s1 + $0x15d8] sm:$0xff]
    %v739 = vld [vmem:[%s1 + $0x15e0] sm:$0xff]
    %v740 = vld [vmem:[%s1 + $0x15e8] sm:$0xff]
    %v741 = vld [vmem:[%s1 + $0x15f0] sm:$0xff]
    %v742 = vld [vmem:[%s1 + $0x15f8] sm:$0xff]
    %v743 = vld [vmem:[%s1 + $0x1600] sm:$0xff]
    %v744 = vld [vmem:[%s1 + $0x1608] sm:$0xff]
    %v745 = vld [vmem:[%s1 + $0x1610] sm:$0xff]
    %v746 = vld [vmem:[%s1 + $0x1618] sm:$0xff]
    %v747 = vld [vmem:[%s1 + $0x1620] sm:$0xff]
    %v748 = vld [vmem:[%s1 + $0x1628] sm:$0xff]
    %v749 = vld [vmem:[%s1 + $0x1630] sm:$0xff]
    %v750 = vld [vmem:[%s1 + $0x1638] sm:$0xff]
    %v751 = vld [vmem:[%s1 + $0x1640] sm:$0xff]
    %v752 = vld [vmem:[%s1 + $0x1648] sm:$0xff]
    %v753 = vld [vmem:[%s1 + $0x1650] sm:$0xff]
    %v754 = vld [vmem:[%s1 + $0x1658] sm:$0xff]
    %v755 = vld [vmem:[%s1 + $0x1660] sm:$0xff]
    %v756 = vld [vmem:[%s1 + $0x1668] sm:$0xff]
    %v757 = vld [vmem:[%s1 + $0x1670] sm:$0xff]
    %v758 = vld [vmem:[%s1 + $0x1678] sm:$0xff]
    %v759 = vld [vmem:[%s1 + $0x1680] sm:$0xff]
    %v760 = vld [vmem:[%s1 + $0x1688] sm:$0xff]
    %v761 = vld [vmem:[%s1 + $0x1690] sm:$0xff]
    %v762 = vld [vmem:[%s1 + $0x1698] sm:$0xff]
    %v763 = vld [vmem:[%s1 + $0x16a0] sm:$0xff]
    %v764 = vld [vmem:[%s1 + $0x16a8] sm:$0xff]
    %v765 = vld [vmem:[%s1 + $0x16b0] sm:$0xff]
    %v766 = vld [vmem:[%s1 + $0x16b8] sm:$0xff]
    %v767 = vld [vmem:[%s1 + $0x16c0] sm:$0xff]
    %v768 = vld [vmem:[%s1 + $0x16c8] sm:$0xff]
    %v769 = vld [vmem:[%s1 + $0x16d0] sm:$0xff]
    %v770 = vld [vmem:[%s1 + $0x16d8] sm:$0xff]
    %v771 = vld [vmem:[%s1 + $0x16e0] sm:$0xff]
    %v772 = vld [vmem:[%s1 + $0x16e8] sm:$0xff]
    %v773 = vld [vmem:[%s1 + $0x16f0] sm:$0xff]
    %v774 = vld [vmem:[%s1 + $0x16f8] sm:$0xff]
    %v775 = vld [vmem:[%s1 + $0x1700] sm:$0xff]
    %v776 = vld [vmem:[%s1 + $0x1708] sm:$0xff]
    %v777 = vld [vmem:[%s1 + $0x1710] sm:$0xff]
    %v778 = vld [vmem:[%s1 + $0x1718] sm:$0xff]
    %v779 = vld [vmem:[%s1 + $0x1720] sm:$0xff]
    %v780 = vld [vmem:[%s1 + $0x1728] sm:$0xff]
    %v781 = vld [vmem:[%s1 + $0x1730] sm:$0xff]
    %v782 = vld [vmem:[%s1 + $0x1738] sm:$0xff]
    %v783 = vld [vmem:[%s1 + $0x1740] sm:$0xff]
    %v784 = vld [vmem:[%s1 + $0x1748] sm:$0xff]
    %v785 = vld [vmem:[%s1 + $0x1750] sm:$0xff]
    %v786 = vld [vmem:[%s1 + $0x1758] sm:$0xff]
    %v787 = vld [vmem:[%s1 + $0x1760] sm:$0xff]
    %v788 = vld [vmem:[%s1 + $0x1768] sm:$0xff]
    %v789 = vld [vmem:[%s1 + $0x1770] sm:$0xff]
    %v790 = vld [vmem:[%s1 + $0x1778] sm:$0xff]
    %v791 = vld [vmem:[%s1 + $0x1780] sm:$0xff]
    %v792 = vld [vmem:[%s1 + $0x1788] sm:$0xff]
    %v793 = vld [vmem:[%s1 + $0x1790] sm:$0xff]
    %v794 = vld [vmem:[%s1 + $0x1798] sm:$0xff]
    %v795 = vld [vmem:[%s1 + $0x17a0] sm:$0xff]
    %v796 = vld [vmem:[%s1 + $0x17a8] sm:$0xff]
    %v797 = vld [vmem:[%s1 + $0x17b0] sm:$0xff]
    %v798 = vld [vmem:[%s1 + $0x17b8] sm:$0xff]
    %v799 = vld [vmem:[%s1 + $0x17c0] sm:$0xff]
    %v800 = vld [vmem:[%s1 + $0x17c8] sm:$0xff]
    %v801 = vld [vmem:[%s1 + $0x17d0] sm:$0xff]
    %v802 = vld [vmem:[%s1 + $0x17d8] sm:$0xff]
    %v803 = vld [vmem:[%s1 + $0x17e0] sm:$0xff]
    %v804 = vld [vmem:[%s1 + $0x17e8] sm:$0xff]
    %v805 = vld [vmem:[%s1 + $0x17f0] sm:$0xff]
    %v806 = vld [vmem:[%s1 + $0x17f8] sm:$0xff]
    %v807 = vld [vmem:[%s1 + $0x1800] sm:$0xff]
    %v808 = vld [vmem:[%s1 + $0x1808] sm:$0xff]
    %v809 = vld [vmem:[%s1 + $0x1810] sm:$0xff]
    %v810 = vld [vmem:[%s1 + $0x1818] sm:$0xff]
    %v811 = vld [vmem:[%s1 + $0x1820] sm:$0xff]
    %v812 = vld [vmem:[%s1 + $0x1828] sm:$0xff]
    %v813 = vld [vmem:[%s1 + $0x1830] sm:$0xff]
    %v814 = vld [vmem:[%s1 + $0x1838] sm:$0xff]
    %v815 = vld [vmem:[%s1 + $0x1840] sm:$0xff]
    %v816 = vld [vmem:[%s1 + $0x1848] sm:$0xff]
    %v817 = vld [vmem:[%s1 + $0x1850] sm:$0xff]
    %v818 = vld [vmem:[%s1 + $0x1858] sm:$0xff]
    %v819 = vld [vmem:[%s1 + $0x1860] sm:$0xff]
    %v820 = vld [vmem:[%s1 + $0x1868] sm:$0xff]
    %v821 = vld [vmem:[%s1 + $0x1870] sm:$0xff]
    %v822 = vld [vmem:[%s1 + $0x1878] sm:$0xff]
    %v823 = vld [vmem:[%s1 + $0x1880] sm:$0xff]
    %v824 = vld [vmem:[%s1 + $0x1888] sm:$0xff]
    %v825 = vld [vmem:[%s1 + $0x1890] sm:$0xff]
    %v826 = vld [vmem:[%s1 + $0x1898] sm:$0xff]
    %v827 = vld [vmem:[%s1 + $0x18a0] sm:$0xff]
    %v828 = vld [vmem:[%s1 + $0x18a8] sm:$0xff]
    %v829 = vld [vmem:[%s1 + $0x18b0] sm:$0xff]
    %v830 = vld [vmem:[%s1 + $0x18b8] sm:$0xff]
    %v831 = vld [vmem:[%s1 + $0x18c0] sm:$0xff]
    %v832 = vld [vmem:[%s1 + $0x18c8] sm:$0xff]
    %v833 = vld [vmem:[%s1 + $0x18d0] sm:$0xff]
    %v834 = vld [vmem:[%s1 + $0x18d8] sm:$0xff]
    %v835 = vld [vmem:[%s1 + $0x18e0] sm:$0xff]
    %v836 = vld [vmem:[%s1 + $0x18e8] sm:$0xff]
    %v837 = vld [vmem:[%s1 + $0x18f0] sm:$0xff]
    %v838 = vld [vmem:[%s1 + $0x18f8] sm:$0xff]
    %v839 = vld [vmem:[%s1 + $0x1900] sm:$0xff]
    %v840 = vld [vmem:[%s1 + $0x1908] sm:$0xff]
    %v841 = vld [vmem:[%s1 + $0x1910] sm:$0xff]
    %v842 = vld [vmem:[%s1 + $0x1918] sm:$0xff]
    %v843 = vld [vmem:[%s1 + $0x1920] sm:$0xff]
    %v844 = vld [vmem:[%s1 + $0x1928] sm:$0xff]
    %v845 = vld [vmem:[%s1 + $0x1930] sm:$0xff]
    %v846 = vld [vmem:[%s1 + $0x1938] sm:$0xff]
    %v847 = vld [vmem:[%s1 + $0x1940] sm:$0xff]
    %v848 = vld [vmem:[%s1 + $0x1948] sm:$0xff]
    %v849 = vld [vmem:[%s1 + $0x1950] sm:$0xff]
    %v850 = vld [vmem:[%s1 + $0x1958] sm:$0xff]
    %v851 = vld [vmem:[%s1 + $0x1960] sm:$0xff]
    %v852 = vld [vmem:[%s1 + $0x1968] sm:$0xff]
    %v853 = vld [vmem:[%s1 + $0x1970] sm:$0xff]
    %v854 = vld [vmem:[%s1 + $0x1978] sm:$0xff]
    %v855 = vld [vmem:[%s1 + $0x1980] sm:$0xff]
    %v856 = vld [vmem:[%s1 + $0x1988] sm:$0xff]
    %v857 = vld [vmem:[%s1 + $0x1990] sm:$0xff]
    %v858 = vld [vmem:[%s1 + $0x1998] sm:$0xff]
    %v859 = vld [vmem:[%s1 + $0x19a0] sm:$0xff]
    %v860 = vld [vmem:[%s1 + $0x19a8] sm:$0xff]
    %v861 = vld [vmem:[%s1 + $0x19b0] sm:$0xff]
    %v862 = vld [vmem:[%s1 + $0x19b8] sm:$0xff]
    %v863 = vld [vmem:[%s1 + $0x19c0] sm:$0xff]
    %v864 = vld [vmem:[%s1 + $0x19c8] sm:$0xff]
    %v865 = vld [vmem:[%s1 + $0x19d0] sm:$0xff]
    %v866 = vld [vmem:[%s1 + $0x19d8] sm:$0xff]
    %v867 = vld [vmem:[%s1 + $0x19e0] sm:$0xff]
    %v868 = vld [vmem:[%s1 + $0x19e8] sm:$0xff]
    %v869 = vld [vmem:[%s1 + $0x19f0] sm:$0xff]
    %v870 = vld [vmem:[%s1 + $0x19f8] sm:$0xff]
    %v871 = vld [vmem:[%s1 + $0x1a00] sm:$0xff]
    %v872 = vld [vmem:[%s1 + $0x1a08] sm:$0xff]
    %v873 = vld [vmem:[%s1 + $0x1a10] sm:$0xff]
    %v874 = vld [vmem:[%s1 + $0x1a18] sm:$0xff]
    %v875 = vld [vmem:[%s1 + $0x1a20] sm:$0xff]
    %v876 = vld [vmem:[%s1 + $0x1a28] sm:$0xff]
    %v877 = vld [vmem:[%s1 + $0x1a30] sm:$0xff]
    %v878 = vld [vmem:[%s1 + $0x1a38] sm:$0xff]
    %v879 = vld [vmem:[%s1 + $0x1a40] sm:$0xff]
    %v880 = vld [vmem:[%s1 + $0x1a48] sm:$0xff]
    %v881 = vld [vmem:[%s1 + $0x1a50] sm:$0xff]
    %v882 = vld [vmem:[%s1 + $0x1a58] sm:$0xff]
    %v883 = vld [vmem:[%s1 + $0x1a60] sm:$0xff]
    %v884 = vld [vmem:[%s1 + $0x1a68] sm:$0xff]
    %v885 = vld [vmem:[%s1 + $0x1a70] sm:$0xff]
    %v886 = vld [vmem:[%s1 + $0x1a78] sm:$0xff]
    %v887 = vld [vmem:[%s1 + $0x1a80] sm:$0xff]
    %v888 = vld [vmem:[%s1 + $0x1a88] sm:$0xff]
    %v889 = vld [vmem:[%s1 + $0x1a90] sm:$0xff]
    %v890 = vld [vmem:[%s1 + $0x1a98] sm:$0xff]
    %v891 = vld [vmem:[%s1 + $0x1aa0] sm:$0xff]
    %v892 = vld [vmem:[%s1 + $0x1aa8] sm:$0xff]
    %v893 = vld [vmem:[%s1 + $0x1ab0] sm:$0xff]
    %v894 = vld [vmem:[%s1 + $0x1ab8] sm:$0xff]
    %v895 = vld [vmem:[%s1 + $0x1ac0] sm:$0xff]
    %v896 = vld [vmem:[%s1 + $0x1ac8] sm:$0xff]
    %v897 = vld [vmem:[%s1 + $0x1ad0] sm:$0xff]
    %v898 = vld [vmem:[%s1 + $0x1ad8] sm:$0xff]
    %v899 = vld [vmem:[%s1 + $0x1ae0] sm:$0xff]
    %v900 = vld [vmem:[%s1 + $0x1ae8] sm:$0xff]
    %v901 = vld [vmem:[%s1 + $0x1af0] sm:$0xff]
    %v902 = vld [vmem:[%s1 + $0x1af8] sm:$0xff]
    %v903 = vld [vmem:[%s1 + $0x1b00] sm:$0xff]
    %v904 = vld [vmem:[%s1 + $0x1b08] sm:$0xff]
    %v905 = vld [vmem:[%s1 + $0x1b10] sm:$0xff]
    %v906 = vld [vmem:[%s1 + $0x1b18] sm:$0xff]
    %v907 = vld [vmem:[%s1 + $0x1b20] sm:$0xff]
    %v908 = vld [vmem:[%s1 + $0x1b28] sm:$0xff]
    %v909 = vld [vmem:[%s1 + $0x1b30] sm:$0xff]
    %v910 = vld [vmem:[%s1 + $0x1b38] sm:$0xff]
    %v911 = vld [vmem:[%s1 + $0x1b40] sm:$0xff]
    %v912 = vld [vmem:[%s1 + $0x1b48] sm:$0xff]
    %v913 = vld [vmem:[%s1 + $0x1b50] sm:$0xff]
    %v914 = vld [vmem:[%s1 + $0x1b58] sm:$0xff]
    %v915 = vld [vmem:[%s1 + $0x1b60] sm:$0xff]
    %v916 = vld [vmem:[%s1 + $0x1b68] sm:$0xff]
    %v917 = vld [vmem:[%s1 + $0x1b70] sm:$0xff]
    %v918 = vld [vmem:[%s1 + $0x1b78] sm:$0xff]
    %v919 = vld [vmem:[%s1 + $0x1b80] sm:$0xff]
    %v920 = vld [vmem:[%s1 + $0x1b88] sm:$0xff]
    %v921 = vld [vmem:[%s1 + $0x1b90] sm:$0xff]
    %v922 = vld [vmem:[%s1 + $0x1b98] sm:$0xff]
    %v923 = vld [vmem:[%s1 + $0x1ba0] sm:$0xff]
    %v924 = vld [vmem:[%s1 + $0x1ba8] sm:$0xff]
    %v925 = vld [vmem:[%s1 + $0x1bb0] sm:$0xff]
    %v926 = vld [vmem:[%s1 + $0x1bb8] sm:$0xff]
    %v927 = vld [vmem:[%s1 + $0x1bc0] sm:$0xff]
    %v928 = vld [vmem:[%s1 + $0x1bc8] sm:$0xff]
    %v929 = vld [vmem:[%s1 + $0x1bd0] sm:$0xff]
    %v930 = vld [vmem:[%s1 + $0x1bd8] sm:$0xff]
    %v931 = vld [vmem:[%s1 + $0x1be0] sm:$0xff]
    %v932 = vld [vmem:[%s1 + $0x1be8] sm:$0xff]
    %v933 = vld [vmem:[%s1 + $0x1bf0] sm:$0xff]
    %v934 = vld [vmem:[%s1 + $0x1bf8] sm:$0xff]
    %v935 = vld [vmem:[%s1 + $0x1c00] sm:$0xff]
    %v936 = vld [vmem:[%s1 + $0x1c08] sm:$0xff]
    %v937 = vld [vmem:[%s1 + $0x1c10] sm:$0xff]
    %v938 = vld [vmem:[%s1 + $0x1c18] sm:$0xff]
    %v939 = vld [vmem:[%s1 + $0x1c20] sm:$0xff]
    %v940 = vld [vmem:[%s1 + $0x1c28] sm:$0xff]
    %v941 = vld [vmem:[%s1 + $0x1c30] sm:$0xff]
    %v942 = vld [vmem:[%s1 + $0x1c38] sm:$0xff]
    %v943 = vld [vmem:[%s1 + $0x1c40] sm:$0xff]
    %v944 = vld [vmem:[%s1 + $0x1c48] sm:$0xff]
    %v945 = vld [vmem:[%s1 + $0x1c50] sm:$0xff]
    %v946 = vld [vmem:[%s1 + $0x1c58] sm:$0xff]
    %v947 = vld [vmem:[%s1 + $0x1c60] sm:$0xff]
    %v948 = vld [vmem:[%s1 + $0x1c68] sm:$0xff]
    %v949 = vld [vmem:[%s1 + $0x1c70] sm:$0xff]
    %v950 = vld [vmem:[%s1 + $0x1c78] sm:$0xff]
    %v951 = vld [vmem:[%s1 + $0x1c80] sm:$0xff]
    %v952 = vld [vmem:[%s1 + $0x1c88] sm:$0xff]
    %v953 = vld [vmem:[%s1 + $0x1c90] sm:$0xff]
    %v954 = vld [vmem:[%s1 + $0x1c98] sm:$0xff]
    %v955 = vld [vmem:[%s1 + $0x1ca0] sm:$0xff]
    %v956 = vld [vmem:[%s1 + $0x1ca8] sm:$0xff]
    %v957 = vld [vmem:[%s1 + $0x1cb0] sm:$0xff]
    %v958 = vld [vmem:[%s1 + $0x1cb8] sm:$0xff]
    %v959 = vld [vmem:[%s1 + $0x1cc0] sm:$0xff]
    %v960 = vld [vmem:[%s1 + $0x1cc8] sm:$0xff]
    %v961 = vld [vmem:[%s1 + $0x1cd0] sm:$0xff]
    %v962 = vld [vmem:[%s1 + $0x1cd8] sm:$0xff]
    %v963 = vld [vmem:[%s1 + $0x1ce0] sm:$0xff]
    %v964 = vld [vmem:[%s1 + $0x1ce8] sm:$0xff]
    %v965 = vld [vmem:[%s1 + $0x1cf0] sm:$0xff]
    %v966 = vld [vmem:[%s1 + $0x1cf8] sm:$0xff]
    %v967 = vld [vmem:[%s1 + $0x1d00] sm:$0xff]
    %v968 = vld [vmem:[%s1 + $0x1d08] sm:$0xff]
    %v969 = vld [vmem:[%s1 + $0x1d10] sm:$0xff]
    %v970 = vld [vmem:[%s1 + $0x1d18] sm:$0xff]
    %v971 = vld [vmem:[%s1 + $0x1d20] sm:$0xff]
    %v972 = vld [vmem:[%s1 + $0x1d28] sm:$0xff]
    %v973 = vld [vmem:[%s1 + $0x1d30] sm:$0xff]
    %v974 = vld [vmem:[%s1 + $0x1d38] sm:$0xff]
    %v975 = vld [vmem:[%s1 + $0x1d40] sm:$0xff]
    %v976 = vld [vmem:[%s1 + $0x1d48] sm:$0xff]
    %v977 = vld [vmem:[%s1 + $0x1d50] sm:$0xff]
    %v978 = vld [vmem:[%s1 + $0x1d58] sm:$0xff]
    %v979 = vld [vmem:[%s1 + $0x1d60] sm:$0xff]
    %v980 = vld [vmem:[%s1 + $0x1d68] sm:$0xff]
    %v981 = vld [vmem:[%s1 + $0x1d70] sm:$0xff]
    %v982 = vld [vmem:[%s1 + $0x1d78] sm:$0xff]
    %v983 = vld [vmem:[%s1 + $0x1d80] sm:$0xff]
    %v984 = vld [vmem:[%s1 + $0x1d88] sm:$0xff]
    %v985 = vld [vmem:[%s1 + $0x1d90] sm:$0xff]
    %v986 = vld [vmem:[%s1 + $0x1d98] sm:$0xff]
    %v987 = vld [vmem:[%s1 + $0x1da0] sm:$0xff]
    %v988 = vld [vmem:[%s1 + $0x1da8] sm:$0xff]
    %v989 = vld [vmem:[%s1 + $0x1db0] sm:$0xff]
    %v990 = vld [vmem:[%s1 + $0x1db8] sm:$0xff]
    %v991 = vld [vmem:[%s1 + $0x1dc0] sm:$0xff]
    %v992 = vld [vmem:[%s1 + $0x1dc8] sm:$0xff]
    %v993 = vld [vmem:[%s1 + $0x1dd0] sm:$0xff]
    %v994 = vld [vmem:[%s1 + $0x1dd8] sm:$0xff]
    %v995 = vld [vmem:[%s1 + $0x1de0] sm:$0xff]
    %v996 = vld [vmem:[%s1 + $0x1de8] sm:$0xff]
    %v997 = vld [vmem:[%s1 + $0x1df0] sm:$0xff]
    %v998 = vld [vmem:[%s1 + $0x1df8] sm:$0xff]
    %v999 = vld [vmem:[%s1 + $0x1e00] sm:$0xff]
    %v1000 = vld [vmem:[%s1 + $0x1e08] sm:$0xff]
    %v1001 = vld [vmem:[%s1 + $0x1e10] sm:$0xff]
    %v1002 = vld [vmem:[%s1 + $0x1e18] sm:$0xff]
    %v1003 = vld [vmem:[%s1 + $0x1e20] sm:$0xff]
    %v1004 = vld [vmem:[%s1 + $0x1e28] sm:$0xff]
    %v1005 = vld [vmem:[%s1 + $0x1e30] sm:$0xff]
    %v1006 = vld [vmem:[%s1 + $0x1e38] sm:$0xff]
    %v1007 = vld [vmem:[%s1 + $0x1e40] sm:$0xff]
    %v1008 = vld [vmem:[%s1 + $0x1e48] sm:$0xff]
    %v1009 = vld [vmem:[%s1 + $0x1e50] sm:$0xff]
    %v1010 = vld [vmem:[%s1 + $0x1e58] sm:$0xff]
    %v1011 = vld [vmem:[%s1 + $0x1e60] sm:$0xff]
    %v1012 = vld [vmem:[%s1 + $0x1e68] sm:$0xff]
    %v1013 = vld [vmem:[%s1 + $0x1e70] sm:$0xff]
    %v1014 = vld [vmem:[%s1 + $0x1e78] sm:$0xff]
    %v1015 = vld [vmem:[%s1 + $0x1e80] sm:$0xff]
    %v1016 = vld [vmem:[%s1 + $0x1e88] sm:$0xff]
    %v1017 = vld [vmem:[%s1 + $0x1e90] sm:$0xff]
    %v1018 = vld [vmem:[%s1 + $0x1e98] sm:$0xff]
    %v1019 = vld [vmem:[%s1 + $0x1ea0] sm:$0xff]
    %v1020 = vld [vmem:[%s1 + $0x1ea8] sm:$0xff]
    %v1021 = vld [vmem:[%s1 + $0x1eb0] sm:$0xff]
    %v1022 = vld [vmem:[%s1 + $0x1eb8] sm:$0xff]
    %v1023 = vld [vmem:[%s1 + $0x1ec0] sm:$0xff]
    %v1024 = vld [vmem:[%s1 + $0x1ec8] sm:$0xff]
    %v1025 = vld [vmem:[%s1 + $0x1ed0] sm:$0xff]
    %v1026 = vld [vmem:[%s1 + $0x1ed8] sm:$0xff]
    %v1027 = vld [vmem:[%s1 + $0x1ee0] sm:$0xff]
    %v1028 = vld [vmem:[%s1 + $0x1ee8] sm:$0xff]
    %v1029 = vld [vmem:[%s1 + $0x1ef0] sm:$0xff]
    %v1030 = vld [vmem:[%s1 + $0x1ef8] sm:$0xff]
    %v1031 = vld [vmem:[%s1 + $0x1f00] sm:$0xff]
    %v1032 = vld [vmem:[%s1 + $0x1f08] sm:$0xff]
    %v1033 = vld [vmem:[%s1 + $0x1f10] sm:$0xff]
    %v1034 = vld [vmem:[%s1 + $0x1f18] sm:$0xff]
    %v1035 = vld [vmem:[%s1 + $0x1f20] sm:$0xff]
    %v1036 = vld [vmem:[%s1 + $0x1f28] sm:$0xff]
    %v1037 = vld [vmem:[%s1 + $0x1f30] sm:$0xff]
    %v1038 = vld [vmem:[%s1 + $0x1f38] sm:$0xff]
    %v1039 = vld [vmem:[%s1 + $0x1f40] sm:$0xff]
    %v1040 = vld [vmem:[%s1 + $0x1f48] sm:$0xff]
    %v1041 = vld [vmem:[%s1 + $0x1f50] sm:$0xff]
    %v1042 = vld [vmem:[%s1 + $0x1f58] sm:$0xff]
    %v1043 = vld [vmem:[%s1 + $0x1f60] sm:$0xff]
    %v1044 = vld [vmem:[%s1 + $0x1f68] sm:$0xff]
    %v1045 = vld [vmem:[%s1 + $0x1f70] sm:$0xff]
    %v1046 = vld [vmem:[%s1 + $0x1f78] sm:$0xff]
    %v1047 = vld [vmem:[%s1 + $0x1f80] sm:$0xff]
    %v1048 = vld [vmem:[%s1 + $0x1f88] sm:$0xff]
    %v1049 = vld [vmem:[%s1 + $0x1f90] sm:$0xff]
    %v1050 = vld [vmem:[%s1 + $0x1f98] sm:$0xff]
    %v1051 = vld [vmem:[%s1 + $0x1fa0] sm:$0xff]
    %v1052 = vld [vmem:[%s1 + $0x1fa8] sm:$0xff]
    %v1053 = vld [vmem:[%s1 + $0x1fb0] sm:$0xff]
    %v1054 = vld [vmem:[%s1 + $0x1fb8] sm:$0xff]
    %v1055 = vld [vmem:[%s1 + $0x1fc0] sm:$0xff]
    %v1056 = vld [vmem:[%s1 + $0x1fc8] sm:$0xff]
    %v1057 = vld [vmem:[%s1 + $0x1fd0] sm:$0xff]
    %v1058 = vld [vmem:[%s1 + $0x1fd8] sm:$0xff]
    %v1059 = vld [vmem:[%s1 + $0x1fe0] sm:$0xff]
    %v1060 = vld [vmem:[%s1 + $0x1fe8] sm:$0xff]
    %v1061 = vld [vmem:[%s1 + $0x1ff0] sm:$0xff]
    %v1062 = vld [vmem:[%s1 + $0x1ff8] sm:$0xff]
    %v1063 = vld [vmem:[%s1 + $0x2000] sm:$0xff]
    %v1064 = vld [vmem:[%s1 + $0x2008] sm:$0xff]
    %v1065 = vld [vmem:[%s1 + $0x2010] sm:$0xff]
    %v1066 = vld [vmem:[%s1 + $0x2018] sm:$0xff]
    %v1067 = vld [vmem:[%s1 + $0x2020] sm:$0xff]
    %v1068 = vld [vmem:[%s1 + $0x2028] sm:$0xff]
    %v1069 = vld [vmem:[%s1 + $0x2030] sm:$0xff]
    %v1070 = vld [vmem:[%s1 + $0x2038] sm:$0xff]
    %v1071 = vld [vmem:[%s1 + $0x2040] sm:$0xff]
    %v1072 = vld [vmem:[%s1 + $0x2048] sm:$0xff]
    %v1073 = vld [vmem:[%s1 + $0x2050] sm:$0xff]
    %v1074 = vld [vmem:[%s1 + $0x2058] sm:$0xff]
    %v1075 = vld [vmem:[%s1 + $0x2060] sm:$0xff]
    %v1076 = vld [vmem:[%s1 + $0x2068] sm:$0xff]
    %v1077 = vld [vmem:[%s1 + $0x2070] sm:$0xff]
    %v1078 = vld [vmem:[%s1 + $0x2078] sm:$0xff]
    %v1079 = vld [vmem:[%s1 + $0x2080] sm:$0xff]
    %v1080 = vld [vmem:[%s1 + $0x2088] sm:$0xff]
    %v1081 = vld [vmem:[%s1 + $0x2090] sm:$0xff]
    %v1082 = vld [vmem:[%s1 + $0x2098] sm:$0xff]
    %v1083 = vld [vmem:[%s1 + $0x20a0] sm:$0xff]
    %v1084 = vld [vmem:[%s1 + $0x20a8] sm:$0xff]
    %v1085 = vld [vmem:[%s1 + $0x20b0] sm:$0xff]
    %v1086 = vld [vmem:[%s1 + $0x20b8] sm:$0xff]
    %v1087 = vld [vmem:[%s1 + $0x20c0] sm:$0xff]
    %v1088 = vld [vmem:[%s1 + $0x20c8] sm:$0xff]
    %v1089 = vld [vmem:[%s1 + $0x20d0] sm:$0xff]
    %v1090 = vld [vmem:[%s1 + $0x20d8] sm:$0xff]
    %v1091 = vld [vmem:[%s1 + $0x20e0] sm:$0xff]
    %v1092 = vld [vmem:[%s1 + $0x20e8] sm:$0xff]
    %v1093 = vld [vmem:[%s1 + $0x20f0] sm:$0xff]
    %v1094 = vld [vmem:[%s1 + $0x20f8] sm:$0xff]
    %v1095 = vld [vmem:[%s1 + $0x2100] sm:$0xff]
    %v1096 = vld [vmem:[%s1 + $0x2108] sm:$0xff]
    %v1097 = vld [vmem:[%s1 + $0x2110] sm:$0xff]
    %v1098 = vld [vmem:[%s1 + $0x2118] sm:$0xff]
    %v1099 = vld [vmem:[%s1 + $0x2120] sm:$0xff]
    %v1100 = vld [vmem:[%s1 + $0x2128] sm:$0xff]
    %v1101 = vld [vmem:[%s1 + $0x2130] sm:$0xff]
    %v1102 = vld [vmem:[%s1 + $0x2138] sm:$0xff]
    %v1103 = vld [vmem:[%s1 + $0x2140] sm:$0xff]
    %v1104 = vld [vmem:[%s1 + $0x2148] sm:$0xff]
    %v1105 = vld [vmem:[%s1 + $0x2150] sm:$0xff]
    %v1106 = vld [vmem:[%s1 + $0x2158] sm:$0xff]
    %v1107 = vld [vmem:[%s1 + $0x2160] sm:$0xff]
    %v1108 = vld [vmem:[%s1 + $0x2168] sm:$0xff]
    %v1109 = vld [vmem:[%s1 + $0x2170] sm:$0xff]
    %v1110 = vld [vmem:[%s1 + $0x2178] sm:$0xff]
    %v1111 = vld [vmem:[%s1 + $0x2180] sm:$0xff]
    %v1112 = vld [vmem:[%s1 + $0x2188] sm:$0xff]
    %v1113 = vld [vmem:[%s1 + $0x2190] sm:$0xff]
    %v1114 = vld [vmem:[%s1 + $0x2198] sm:$0xff]
    %v1115 = vld [vmem:[%s1 + $0x21a0] sm:$0xff]
    %v1116 = vld [vmem:[%s1 + $0x21a8] sm:$0xff]
    %v1117 = vld [vmem:[%s1 + $0x21b0] sm:$0xff]
    %v1118 = vld [vmem:[%s1 + $0x21b8] sm:$0xff]
    %v1119 = vld [vmem:[%s1 + $0x21c0] sm:$0xff]
    %v1120 = vld [vmem:[%s1 + $0x21c8] sm:$0xff]
    %v1121 = vld [vmem:[%s1 + $0x21d0] sm:$0xff]
    %v1122 = vld [vmem:[%s1 + $0x21d8] sm:$0xff]
    %v1123 = vld [vmem:[%s1 + $0x21e0] sm:$0xff]
    %v1124 = vld [vmem:[%s1 + $0x21e8] sm:$0xff]
    %v1125 = vld [vmem:[%s1 + $0x21f0] sm:$0xff]
    %v1126 = vld [vmem:[%s1 + $0x21f8] sm:$0xff]
    %v1127 = vld [vmem:[%s1 + $0x2200] sm:$0xff]
    %v1128 = vld [vmem:[%s1 + $0x2208] sm:$0xff]
    %v1129 = vld [vmem:[%s1 + $0x2210] sm:$0xff]
    %v1130 = vld [vmem:[%s1 + $0x2218] sm:$0xff]
    %v1131 = vld [vmem:[%s1 + $0x2220] sm:$0xff]
    %v1132 = vld [vmem:[%s1 + $0x2228] sm:$0xff]
    %v1133 = vld [vmem:[%s1 + $0x2230] sm:$0xff]
    %v1134 = vld [vmem:[%s1 + $0x2238] sm:$0xff]
    %v1135 = vld [vmem:[%s1 + $0x2240] sm:$0xff]
    %v1136 = vld [vmem:[%s1 + $0x2248] sm:$0xff]
    %v1137 = vld [vmem:[%s1 + $0x2250] sm:$0xff]
    %v1138 = vld [vmem:[%s1 + $0x2258] sm:$0xff]
    %v1139 = vld [vmem:[%s1 + $0x2260] sm:$0xff]
    %v1140 = vld [vmem:[%s1 + $0x2268] sm:$0xff]
    %v1141 = vld [vmem:[%s1 + $0x2270] sm:$0xff]
    %v1142 = vld [vmem:[%s1 + $0x2278] sm:$0xff]
    %v1143 = vld [vmem:[%s1 + $0x2280] sm:$0xff]
    %v1144 = vld [vmem:[%s1 + $0x2288] sm:$0xff]
    %v1145 = vld [vmem:[%s1 + $0x2290] sm:$0xff]
    %v1146 = vld [vmem:[%s1 + $0x2298] sm:$0xff]
    %v1147 = vld [vmem:[%s1 + $0x22a0] sm:$0xff]
    %v1148 = vld [vmem:[%s1 + $0x22a8] sm:$0xff]
    %v1149 = vld [vmem:[%s1 + $0x22b0] sm:$0xff]
    %v1150 = vld [vmem:[%s1 + $0x22b8] sm:$0xff]
    %v1151 = vld [vmem:[%s1 + $0x22c0] sm:$0xff]
    %v1152 = vld [vmem:[%s1 + $0x22c8] sm:$0xff]
    %v1153 = vld [vmem:[%s1 + $0x22d0] sm:$0xff]
    %v1154 = vld [vmem:[%s1 + $0x22d8] sm:$0xff]
    %v1155 = vld [vmem:[%s1 + $0x22e0] sm:$0xff]
    %v1156 = vld [vmem:[%s1 + $0x22e8] sm:$0xff]
    %v1157 = vld [vmem:[%s1 + $0x22f0] sm:$0xff]
    %v1158 = vld [vmem:[%s1 + $0x22f8] sm:$0xff]
    %v1159 = vld [vmem:[%s1 + $0x2300] sm:$0xff]
    %v1160 = vld [vmem:[%s1 + $0x2308] sm:$0xff]
    %v1161 = vld [vmem:[%s1 + $0x2310] sm:$0xff]
    %v1162 = vld [vmem:[%s1 + $0x2318] sm:$0xff]
    %v1163 = vld [vmem:[%s1 + $0x2320] sm:$0xff]
    %v1164 = vld [vmem:[%s1 + $0x2328] sm:$0xff]
    %v1165 = vld [vmem:[%s1 + $0x2330] sm:$0xff]
    %v1166 = vld [vmem:[%s1 + $0x2338] sm:$0xff]
    %v1167 = vld [vmem:[%s1 + $0x2340] sm:$0xff]
    %v1168 = vld [vmem:[%s1 + $0x2348] sm:$0xff]
    %v1169 = vld [vmem:[%s1 + $0x2350] sm:$0xff]
    %v1170 = vld [vmem:[%s1 + $0x2358] sm:$0xff]
    %v1171 = vld [vmem:[%s1 + $0x2360] sm:$0xff]
    %v1172 = vld [vmem:[%s1 + $0x2368] sm:$0xff]
    %v1173 = vld [vmem:[%s1 + $0x2370] sm:$0xff]
    %v1174 = vld [vmem:[%s1 + $0x2378] sm:$0xff]
    %v1175 = vld [vmem:[%s1 + $0x2380] sm:$0xff]
    %v1176 = vld [vmem:[%s1 + $0x2388] sm:$0xff]
    %v1177 = vld [vmem:[%s1 + $0x2390] sm:$0xff]
    %v1178 = vld [vmem:[%s1 + $0x2398] sm:$0xff]
    %v1179 = vld [vmem:[%s1 + $0x23a0] sm:$0xff]
    %v1180 = vld [vmem:[%s1 + $0x23a8] sm:$0xff]
    %v1181 = vld [vmem:[%s1 + $0x23b0] sm:$0xff]
    %v1182 = vld [vmem:[%s1 + $0x23b8] sm:$0xff]
    %v1183 = vld [vmem:[%s1 + $0x23c0] sm:$0xff]
    %v1184 = vld [vmem:[%s1 + $0x23c8] sm:$0xff]
    %v1185 = vld [vmem:[%s1 + $0x23d0] sm:$0xff]
    %v1186 = vld [vmem:[%s1 + $0x23d8] sm:$0xff]
    %v1187 = vld [vmem:[%s1 + $0x23e0] sm:$0xff]
    %v1188 = vld [vmem:[%s1 + $0x23e8] sm:$0xff]
    %v1189 = vld [vmem:[%s1 + $0x23f0] sm:$0xff]
    %v1190 = vld [vmem:[%s1 + $0x23f8] sm:$0xff]
    %v1191 = vld [vmem:[%s1 + $0x2400] sm:$0xff]
    %v1192 = vld [vmem:[%s1 + $0x2408] sm:$0xff]
    %v1193 = vld [vmem:[%s1 + $0x2410] sm:$0xff]
    %v1194 = vld [vmem:[%s1 + $0x2418] sm:$0xff]
    %v1195 = vld [vmem:[%s1 + $0x2420] sm:$0xff]
    %v1196 = vld [vmem:[%s1 + $0x2428] sm:$0xff]
    %v1197 = vld [vmem:[%s1 + $0x2430] sm:$0xff]
    %v1198 = vld [vmem:[%s1 + $0x2438] sm:$0xff]
    %v1199 = vld [vmem:[%s1 + $0x2440] sm:$0xff]
    %v1200 = vld [vmem:[%s1 + $0x2448] sm:$0xff]
    %v1201 = vld [vmem:[%s1 + $0x2450] sm:$0xff]
    %v1202 = vld [vmem:[%s1 + $0x2458] sm:$0xff]
    %v1203 = vld [vmem:[%s1 + $0x2460] sm:$0xff]
    %v1204 = vld [vmem:[%s1 + $0x2468] sm:$0xff]
    %v1205 = vld [vmem:[%s1 + $0x2470] sm:$0xff]
    %v1206 = vld [vmem:[%s1 + $0x2478] sm:$0xff]
    %v1207 = vld [vmem:[%s1 + $0x2480] sm:$0xff]
    %v1208 = vld [vmem:[%s1 + $0x2488] sm:$0xff]
    %v1209 = vld [vmem:[%s1 + $0x2490] sm:$0xff]
    %v1210 = vld [vmem:[%s1 + $0x2498] sm:$0xff]
    %v1211 = vld [vmem:[%s1 + $0x24a0] sm:$0xff]
    %v1212 = vld [vmem:[%s1 + $0x24a8] sm:$0xff]
    %v1213 = vld [vmem:[%s1 + $0x24b0] sm:$0xff]
    %v1214 = vld [vmem:[%s1 + $0x24b8] sm:$0xff]
    %v1215 = vld [vmem:[%s1 + $0x24c0] sm:$0xff]
    %v1216 = vld [vmem:[%s1 + $0x24c8] sm:$0xff]
    %v1217 = vld [vmem:[%s1 + $0x24d0] sm:$0xff]
    %v1218 = vld [vmem:[%s1 + $0x24d8] sm:$0xff]
    %v1219 = vld [vmem:[%s1 + $0x24e0] sm:$0xff]
    %v1220 = vld [vmem:[%s1 + $0x24e8] sm:$0xff]
    %v1221 = vld [vmem:[%s1 + $0x24f0] sm:$0xff]
    %v1222 = vld [vmem:[%s1 + $0x24f8] sm:$0xff]
    %v1223 = vld [vmem:[%s1 + $0x2500] sm:$0xff]
    %v1224 = vld [vmem:[%s1 + $0x2508] sm:$0xff]
    %v1225 = vld [vmem:[%s1 + $0x2510] sm:$0xff]
    %v1226 = vld [vmem:[%s1 + $0x2518] sm:$0xff]
    %v1227 = vld [vmem:[%s1 + $0x2520] sm:$0xff]
    %v1228 = vld [vmem:[%s1 + $0x2528] sm:$0xff]
    %v1229 = vld [vmem:[%s1 + $0x2530] sm:$0xff]
    %v1230 = vld [vmem:[%s1 + $0x2538] sm:$0xff]
    %v1231 = vld [vmem:[%s1 + $0x2540] sm:$0xff]
    %v1232 = vld [vmem:[%s1 + $0x2548] sm:$0xff]
    %v1233 = vld [vmem:[%s1 + $0x2550] sm:$0xff]
    %v1234 = vld [vmem:[%s1 + $0x2558] sm:$0xff]
    %v1235 = vld [vmem:[%s1 + $0x2560] sm:$0xff]
    %v1236 = vld [vmem:[%s1 + $0x2568] sm:$0xff]
    %v1237 = vld [vmem:[%s1 + $0x2570] sm:$0xff]
    %v1238 = vld [vmem:[%s1 + $0x2578] sm:$0xff]
    %v1239 = vld [vmem:[%s1 + $0x2580] sm:$0xff]
    %v1240 = vld [vmem:[%s1 + $0x2588] sm:$0xff]
    %v1241 = vld [vmem:[%s1 + $0x2590] sm:$0xff]
    %v1242 = vld [vmem:[%s1 + $0x2598] sm:$0xff]
    %v1243 = vld [vmem:[%s1 + $0x25a0] sm:$0xff]
    %v1244 = vld [vmem:[%s1 + $0x25a8] sm:$0xff]
    %v1245 = vld [vmem:[%s1 + $0x25b0] sm:$0xff]
    %v1246 = vld [vmem:[%s1 + $0x25b8] sm:$0xff]
    %v1247 = vld [vmem:[%s1 + $0x25c0] sm:$0xff]
    %v1248 = vld [vmem:[%s1 + $0x25c8] sm:$0xff]
    %v1249 = vld [vmem:[%s1 + $0x25d0] sm:$0xff]
    %v1250 = vld [vmem:[%s1 + $0x25d8] sm:$0xff]
    %v1251 = vld [vmem:[%s1 + $0x25e0] sm:$0xff]
    %v1252 = vld [vmem:[%s1 + $0x25e8] sm:$0xff]
    %v1253 = vld [vmem:[%s1 + $0x25f0] sm:$0xff]
    %v1254 = vld [vmem:[%s1 + $0x25f8] sm:$0xff]
    %v1255 = vld [vmem:[%s1 + $0x2600] sm:$0xff]
    %v1256 = vld [vmem:[%s1 + $0x2608] sm:$0xff]
    %v1257 = vld [vmem:[%s1 + $0x2610] sm:$0xff]
    %v1258 = vld [vmem:[%s1 + $0x2618] sm:$0xff]
    %v1259 = vld [vmem:[%s1 + $0x2620] sm:$0xff]
    %v1260 = vld [vmem:[%s1 + $0x2628] sm:$0xff]
    %v1261 = vld [vmem:[%s1 + $0x2630] sm:$0xff]
    %v1262 = vld [vmem:[%s1 + $0x2638] sm:$0xff]
    %v1263 = vld [vmem:[%s1 + $0x2640] sm:$0xff]
    %v1264 = vld [vmem:[%s1 + $0x2648] sm:$0xff]
    %v1265 = vld [vmem:[%s1 + $0x2650] sm:$0xff]
    %v1266 = vld [vmem:[%s1 + $0x2658] sm:$0xff]
    %v1267 = vld [vmem:[%s1 + $0x2660] sm:$0xff]
    %v1268 = vld [vmem:[%s1 + $0x2668] sm:$0xff]
    %v1269 = vld [vmem:[%s1 + $0x2670] sm:$0xff]
    %v1270 = vld [vmem:[%s1 + $0x2678] sm:$0xff]
    %v1271 = vld [vmem:[%s1 + $0x2680] sm:$0xff]
    %v1272 = vld [vmem:[%s1 + $0x2688] sm:$0xff]
    %v1273 = vld [vmem:[%s1 + $0x2690] sm:$0xff]
    %v1274 = vld [vmem:[%s1 + $0x2698] sm:$0xff]
    %v1275 = vld [vmem:[%s1 + $0x26a0] sm:$0xff]
    %v1276 = vld [vmem:[%s1 + $0x26a8] sm:$0xff]
    %v1277 = vld [vmem:[%s1 + $0x26b0] sm:$0xff]
    %v1278 = vld [vmem:[%s1 + $0x26b8] sm:$0xff]
    %v1279 = vld [vmem:[%s1 + $0x26c0] sm:$0xff]
    %v1280 = vld [vmem:[%s1 + $0x26c8] sm:$0xff]
    %v1281 = vld [vmem:[%s1 + $0x26d0] sm:$0xff]
    %v1282 = vld [vmem:[%s1 + $0x26d8] sm:$0xff]
    %v1283 = vld [vmem:[%s1 + $0x26e0] sm:$0xff]
    %v1284 = vld [vmem:[%s1 + $0x26e8] sm:$0xff]
    %v1285 = vld [vmem:[%s1 + $0x26f0] sm:$0xff]
    %v1286 = vld [vmem:[%s1 + $0x26f8] sm:$0xff]
    %v1287 = vld [vmem:[%s1 + $0x2700] sm:$0xff]
    %v1288 = vld [vmem:[%s1 + $0x2708] sm:$0xff]
    %v1289 = vld [vmem:[%s1 + $0x2710] sm:$0xff]
    %v1290 = vld [vmem:[%s1 + $0x2718] sm:$0xff]
    %v1291 = vld [vmem:[%s1 + $0x2720] sm:$0xff]
    %v1292 = vld [vmem:[%s1 + $0x2728] sm:$0xff]
    %v1293 = vld [vmem:[%s1 + $0x2730] sm:$0xff]
    %v1294 = vld [vmem:[%s1 + $0x2738] sm:$0xff]
    %v1295 = vld [vmem:[%s1 + $0x2740] sm:$0xff]
    %v1296 = vld [vmem:[%s1 + $0x2748] sm:$0xff]
    %v1297 = vld [vmem:[%s1 + $0x2750] sm:$0xff]
    %v1298 = vld [vmem:[%s1 + $0x2758] sm:$0xff]
    %v1299 = vld [vmem:[%s1 + $0x2760] sm:$0xff]
    %v1300 = vld [vmem:[%s1 + $0x2768] sm:$0xff]
    %v1301 = vld [vmem:[%s1 + $0x2770] sm:$0xff]
    %v1302 = vld [vmem:[%s1 + $0x2778] sm:$0xff]
    %v1303 = vld [vmem:[%s1 + $0x2780] sm:$0xff]
    %v1304 = vld [vmem:[%s1 + $0x2788] sm:$0xff]
    %v1305 = vld [vmem:[%s1 + $0x2790] sm:$0xff]
    %v1306 = vld [vmem:[%s1 + $0x2798] sm:$0xff]
    %v1307 = vld [vmem:[%s1 + $0x27a0] sm:$0xff]
    %v1308 = vld [vmem:[%s1 + $0x27a8] sm:$0xff]
    %v1309 = vld [vmem:[%s1 + $0x27b0] sm:$0xff]
    %v1310 = vld [vmem:[%s1 + $0x27b8] sm:$0xff]
    %v1311 = vld [vmem:[%s1 + $0x27c0] sm:$0xff]
    %v1312 = vld [vmem:[%s1 + $0x27c8] sm:$0xff]
    %v1313 = vld [vmem:[%s1 + $0x27d0] sm:$0xff]
    %v1314 = vld [vmem:[%s1 + $0x27d8] sm:$0xff]
    %v1315 = vld [vmem:[%s1 + $0x27e0] sm:$0xff]
    %v1316 = vld [vmem:[%s1 + $0x27e8] sm:$0xff]
    %v1317 = vld [vmem:[%s1 + $0x27f0] sm:$0xff]
    %v1318 = vld [vmem:[%s1 + $0x27f8] sm:$0xff]
    %v1319 = vld [vmem:[%s1 + $0x2800] sm:$0xff]
    %v1320 = vld [vmem:[%s1 + $0x2808] sm:$0xff]
    %v1321 = vld [vmem:[%s1 + $0x2810] sm:$0xff]
    %v1322 = vld [vmem:[%s1 + $0x2818] sm:$0xff]
    %v1323 = vld [vmem:[%s1 + $0x2820] sm:$0xff]
    %v1324 = vld [vmem:[%s1 + $0x2828] sm:$0xff]
    %v1325 = vld [vmem:[%s1 + $0x2830] sm:$0xff]
    %v1326 = vld [vmem:[%s1 + $0x2838] sm:$0xff]
    %v1327 = vld [vmem:[%s1 + $0x2840] sm:$0xff]
    %v1328 = vld [vmem:[%s1 + $0x2848] sm:$0xff]
    %v1329 = vld [vmem:[%s1 + $0x2850] sm:$0xff]
    %v1330 = vld [vmem:[%s1 + $0x2858] sm:$0xff]
    %v1331 = vld [vmem:[%s1 + $0x2860] sm:$0xff]
    %v1332 = vld [vmem:[%s1 + $0x2868] sm:$0xff]
    %v1333 = vld [vmem:[%s1 + $0x2870] sm:$0xff]
    %v1334 = vld [vmem:[%s1 + $0x2878] sm:$0xff]
    %v1335 = vld [vmem:[%s1 + $0x2880] sm:$0xff]
    %v1336 = vld [vmem:[%s1 + $0x2888] sm:$0xff]
    %v1337 = vld [vmem:[%s1 + $0x2890] sm:$0xff]
    %v1338 = vld [vmem:[%s1 + $0x2898] sm:$0xff]
    %v1339 = vld [vmem:[%s1 + $0x28a0] sm:$0xff]
    %v1340 = vld [vmem:[%s1 + $0x28a8] sm:$0xff]
    %v1341 = vld [vmem:[%s1 + $0x28b0] sm:$0xff]
    %v1342 = vld [vmem:[%s1 + $0x28b8] sm:$0xff]
    %v1343 = vld [vmem:[%s1 + $0x28c0] sm:$0xff]
    %v1344 = vld [vmem:[%s1 + $0x28c8] sm:$0xff]
    %v1345 = vld [vmem:[%s1 + $0x28d0] sm:$0xff]
    %v1346 = vld [vmem:[%s1 + $0x28d8] sm:$0xff]
    %v1347 = vld [vmem:[%s1 + $0x28e0] sm:$0xff]
    %v1348 = vld [vmem:[%s1 + $0x28e8] sm:$0xff]
    %v1349 = vld [vmem:[%s1 + $0x28f0] sm:$0xff]
    %v1350 = vld [vmem:[%s1 + $0x28f8] sm:$0xff]
    %v1351 = vld [vmem:[%s1 + $0x2900] sm:$0xff]
    %v1352 = vld [vmem:[%s1 + $0x2908] sm:$0xff]
    %v1353 = vld [vmem:[%s1 + $0x2910] sm:$0xff]
    %v1354 = vld [vmem:[%s1 + $0x2918] sm:$0xff]
    %v1355 = vld [vmem:[%s1 + $0x2920] sm:$0xff]
    %v1356 = vld [vmem:[%s1 + $0x2928] sm:$0xff]
    %v1357 = vld [vmem:[%s1 + $0x2930] sm:$0xff]
    %v1358 = vld [vmem:[%s1 + $0x2938] sm:$0xff]
    %v1359 = vld [vmem:[%s1 + $0x2940] sm:$0xff]
    %v1360 = vld [vmem:[%s1 + $0x2948] sm:$0xff]
    %v1361 = vld [vmem:[%s1 + $0x2950] sm:$0xff]
    %v1362 = vld [vmem:[%s1 + $0x2958] sm:$0xff]
    %v1363 = vld [vmem:[%s1 + $0x2960] sm:$0xff]
    %v1364 = vld [vmem:[%s1 + $0x2968] sm:$0xff]
    %v1365 = vld [vmem:[%s1 + $0x2970] sm:$0xff]
    %v1366 = vld [vmem:[%s1 + $0x2978] sm:$0xff]
    %v1367 = vld [vmem:[%s1 + $0x2980] sm:$0xff]
    %v1368 = vld [vmem:[%s1 + $0x2988] sm:$0xff]
    %v1369 = vld [vmem:[%s1 + $0x2990] sm:$0xff]
    %v1370 = vld [vmem:[%s1 + $0x2998] sm:$0xff]
    %v1371 = vld [vmem:[%s1 + $0x29a0] sm:$0xff]
    %v1372 = vld [vmem:[%s1 + $0x29a8] sm:$0xff]
    %v1373 = vld [vmem:[%s1 + $0x29b0] sm:$0xff]
    %v1374 = vld [vmem:[%s1 + $0x29b8] sm:$0xff]
    %v1375 = vld [vmem:[%s1 + $0x29c0] sm:$0xff]
    %v1376 = vld [vmem:[%s1 + $0x29c8] sm:$0xff]
    %v1377 = vld [vmem:[%s1 + $0x29d0] sm:$0xff]
    %v1378 = vld [vmem:[%s1 + $0x29d8] sm:$0xff]
    %v1379 = vld [vmem:[%s1 + $0x29e0] sm:$0xff]
    %v1380 = vld [vmem:[%s1 + $0x29e8] sm:$0xff]
    %v1381 = vld [vmem:[%s1 + $0x29f0] sm:$0xff]
    %v1382 = vld [vmem:[%s1 + $0x29f8] sm:$0xff]
    %v1383 = vld [vmem:[%s1 + $0x2a00] sm:$0xff]
    %v1384 = vld [vmem:[%s1 + $0x2a08] sm:$0xff]
    %v1385 = vld [vmem:[%s1 + $0x2a10] sm:$0xff]
    %v1386 = vld [vmem:[%s1 + $0x2a18] sm:$0xff]
    %v1387 = vld [vmem:[%s1 + $0x2a20] sm:$0xff]
    %v1388 = vld [vmem:[%s1 + $0x2a28] sm:$0xff]
    %v1389 = vld [vmem:[%s1 + $0x2a30] sm:$0xff]
    %v1390 = vld [vmem:[%s1 + $0x2a38] sm:$0xff]
    %v1391 = vld [vmem:[%s1 + $0x2a40] sm:$0xff]
    %v1392 = vld [vmem:[%s1 + $0x2a48] sm:$0xff]
    %v1393 = vld [vmem:[%s1 + $0x2a50] sm:$0xff]
    %v1394 = vld [vmem:[%s1 + $0x2a58] sm:$0xff]
    %v1395 = vld [vmem:[%s1 + $0x2a60] sm:$0xff]
    %v1396 = vld [vmem:[%s1 + $0x2a68] sm:$0xff]
    %v1397 = vld [vmem:[%s1 + $0x2a70] sm:$0xff]
    %v1398 = vld [vmem:[%s1 + $0x2a78] sm:$0xff]
    %v1399 = vld [vmem:[%s1 + $0x2a80] sm:$0xff]
    %v1400 = vld [vmem:[%s1 + $0x2a88] sm:$0xff]
    %v1401 = vld [vmem:[%s1 + $0x2a90] sm:$0xff]
    %v1402 = vld [vmem:[%s1 + $0x2a98] sm:$0xff]
    %v1403 = vld [vmem:[%s1 + $0x2aa0] sm:$0xff]
    %v1404 = vld [vmem:[%s1 + $0x2aa8] sm:$0xff]
    %v1405 = vld [vmem:[%s1 + $0x2ab0] sm:$0xff]
    %v1406 = vld [vmem:[%s1 + $0x2ab8] sm:$0xff]
    %v1407 = vld [vmem:[%s1 + $0x2ac0] sm:$0xff]
    %v1408 = vld [vmem:[%s1 + $0x2ac8] sm:$0xff]
    %v1409 = vld [vmem:[%s1 + $0x2ad0] sm:$0xff]
    %v1410 = vld [vmem:[%s1 + $0x2ad8] sm:$0xff]
    %v1411 = vld [vmem:[%s1 + $0x2ae0] sm:$0xff]
    %v1412 = vld [vmem:[%s1 + $0x2ae8] sm:$0xff]
    %v1413 = vld [vmem:[%s1 + $0x2af0] sm:$0xff]
    %v1414 = vld [vmem:[%s1 + $0x2af8] sm:$0xff]
    %v1415 = vld [vmem:[%s1 + $0x2b00] sm:$0xff]
    %v1416 = vld [vmem:[%s1 + $0x2b08] sm:$0xff]
    %v1417 = vld [vmem:[%s1 + $0x2b10] sm:$0xff]
    %v1418 = vld [vmem:[%s1 + $0x2b18] sm:$0xff]
    %v1419 = vld [vmem:[%s1 + $0x2b20] sm:$0xff]
    %v1420 = vld [vmem:[%s1 + $0x2b28] sm:$0xff]
    %v1421 = vld [vmem:[%s1 + $0x2b30] sm:$0xff]
    %v1422 = vld [vmem:[%s1 + $0x2b38] sm:$0xff]
    %v1423 = vld [vmem:[%s1 + $0x2b40] sm:$0xff]
    %v1424 = vld [vmem:[%s1 + $0x2b48] sm:$0xff]
    %v1425 = vld [vmem:[%s1 + $0x2b50] sm:$0xff]
    %v1426 = vld [vmem:[%s1 + $0x2b58] sm:$0xff]
    %v1427 = vld [vmem:[%s1 + $0x2b60] sm:$0xff]
    %v1428 = vld [vmem:[%s1 + $0x2b68] sm:$0xff]
    %v1429 = vld [vmem:[%s1 + $0x2b70] sm:$0xff]
    %v1430 = vld [vmem:[%s1 + $0x2b78] sm:$0xff]
    %v1431 = vld [vmem:[%s1 + $0x2b80] sm:$0xff]
    %v1432 = vld [vmem:[%s1 + $0x2b88] sm:$0xff]
    %v1433 = vld [vmem:[%s1 + $0x2b90] sm:$0xff]
    %v1434 = vld [vmem:[%s1 + $0x2b98] sm:$0xff]
    %v1435 = vld [vmem:[%s1 + $0x2ba0] sm:$0xff]
    %v1436 = vld [vmem:[%s1 + $0x2ba8] sm:$0xff]
    %v1437 = vld [vmem:[%s1 + $0x2bb0] sm:$0xff]
    %v1438 = vld [vmem:[%s1 + $0x2bb8] sm:$0xff]
    %v1439 = vld [vmem:[%s1 + $0x2bc0] sm:$0xff]
    %v1440 = vld [vmem:[%s1 + $0x2bc8] sm:$0xff]
    %v1441 = vld [vmem:[%s1 + $0x2bd0] sm:$0xff]
    %v1442 = vld [vmem:[%s1 + $0x2bd8] sm:$0xff]
    %v1443 = vld [vmem:[%s1 + $0x2be0] sm:$0xff]
    %v1444 = vld [vmem:[%s1 + $0x2be8] sm:$0xff]
    %v1445 = vld [vmem:[%s1 + $0x2bf0] sm:$0xff]
    %v1446 = vld [vmem:[%s1 + $0x2bf8] sm:$0xff]
    %v1447 = vld [vmem:[%s1 + $0x2c00] sm:$0xff]
    %v1448 = vld [vmem:[%s1 + $0x2c08] sm:$0xff]
    %v1449 = vld [vmem:[%s1 + $0x2c10] sm:$0xff]
    %v1450 = vld [vmem:[%s1 + $0x2c18] sm:$0xff]
    %v1451 = vld [vmem:[%s1 + $0x2c20] sm:$0xff]
    %v1452 = vld [vmem:[%s1 + $0x2c28] sm:$0xff]
    %v1453 = vld [vmem:[%s1 + $0x2c30] sm:$0xff]
    %v1454 = vld [vmem:[%s1 + $0x2c38] sm:$0xff]
    %v1455 = vld [vmem:[%s1 + $0x2c40] sm:$0xff]
    %v1456 = vld [vmem:[%s1 + $0x2c48] sm:$0xff]
    %v1457 = vld [vmem:[%s1 + $0x2c50] sm:$0xff]
    %v1458 = vld [vmem:[%s1 + $0x2c58] sm:$0xff]
    %v1459 = vld [vmem:[%s1 + $0x2c60] sm:$0xff]
    %v1460 = vld [vmem:[%s1 + $0x2c68] sm:$0xff]
    %v1461 = vld [vmem:[%s1 + $0x2c70] sm:$0xff]
    %v1462 = vld [vmem:[%s1 + $0x2c78] sm:$0xff]
    %v1463 = vld [vmem:[%s1 + $0x2c80] sm:$0xff]
    %v1464 = vld [vmem:[%s1 + $0x2c88] sm:$0xff]
    %v1465 = vld [vmem:[%s1 + $0x2c90] sm:$0xff]
    %v1466 = vld [vmem:[%s1 + $0x2c98] sm:$0xff]
    %v1467 = vld [vmem:[%s1 + $0x2ca0] sm:$0xff]
    %v1468 = vld [vmem:[%s1 + $0x2ca8] sm:$0xff]
    %v1469 = vld [vmem:[%s1 + $0x2cb0] sm:$0xff]
    %v1470 = vld [vmem:[%s1 + $0x2cb8] sm:$0xff]
    %v1471 = vld [vmem:[%s1 + $0x2cc0] sm:$0xff]
    %v1472 = vld [vmem:[%s1 + $0x2cc8] sm:$0xff]
    %v1473 = vld [vmem:[%s1 + $0x2cd0] sm:$0xff]
    %v1474 = vld [vmem:[%s1 + $0x2cd8] sm:$0xff]
    %v1475 = vld [vmem:[%s1 + $0x2ce0] sm:$0xff]
    %v1476 = vld [vmem:[%s1 + $0x2ce8] sm:$0xff]
    %v1477 = vld [vmem:[%s1 + $0x2cf0] sm:$0xff]
    %v1478 = vld [vmem:[%s1 + $0x2cf8] sm:$0xff]
    %v1479 = vld [vmem:[%s1 + $0x2d00] sm:$0xff]
    %v1480 = vld [vmem:[%s1 + $0x2d08] sm:$0xff]
    %v1481 = vld [vmem:[%s1 + $0x2d10] sm:$0xff]
    %v1482 = vld [vmem:[%s1 + $0x2d18] sm:$0xff]
    %v1483 = vld [vmem:[%s1 + $0x2d20] sm:$0xff]
    %v1484 = vld [vmem:[%s1 + $0x2d28] sm:$0xff]
    %v1485 = vld [vmem:[%s1 + $0x2d30] sm:$0xff]
    %v1486 = vld [vmem:[%s1 + $0x2d38] sm:$0xff]
    %v1487 = vld [vmem:[%s1 + $0x2d40] sm:$0xff]
    %v1488 = vld [vmem:[%s1 + $0x2d48] sm:$0xff]
    %v1489 = vld [vmem:[%s1 + $0x2d50] sm:$0xff]
    %v1490 = vld [vmem:[%s1 + $0x2d58] sm:$0xff]
    %v1491 = vld [vmem:[%s1 + $0x2d60] sm:$0xff]
    %v1492 = vld [vmem:[%s1 + $0x2d68] sm:$0xff]
    %v1493 = vld [vmem:[%s1 + $0x2d70] sm:$0xff]
    %v1494 = vld [vmem:[%s1 + $0x2d78] sm:$0xff]
    %v1495 = vld [vmem:[%s1 + $0x2d80] sm:$0xff]
    %v1496 = vld [vmem:[%s1 + $0x2d88] sm:$0xff]
    %v1497 = vld [vmem:[%s1 + $0x2d90] sm:$0xff]
    %v1498 = vld [vmem:[%s1 + $0x2d98] sm:$0xff]
    %v1499 = vld [vmem:[%s1 + $0x2da0] sm:$0xff]
    %v1500 = vld [vmem:[%s1 + $0x2da8] sm:$0xff]
    %v1501 = vld [vmem:[%s1 + $0x2db0] sm:$0xff]
    %v1502 = vld [vmem:[%s1 + $0x2db8] sm:$0xff]
    %v1503 = vld [vmem:[%s1 + $0x2dc0] sm:$0xff]
    %v1504 = vld [vmem:[%s1 + $0x2dc8] sm:$0xff]
    %v1505 = vld [vmem:[%s1 + $0x2dd0] sm:$0xff]
    %v1506 = vld [vmem:[%s1 + $0x2dd8] sm:$0xff]
    %v1507 = vld [vmem:[%s1 + $0x2de0] sm:$0xff]
    %v1508 = vld [vmem:[%s1 + $0x2de8] sm:$0xff]
    %v1509 = vld [vmem:[%s1 + $0x2df0] sm:$0xff]
    %v1510 = vld [vmem:[%s1 + $0x2df8] sm:$0xff]
    %v1511 = vld [vmem:[%s1 + $0x2e00] sm:$0xff]
    %v1512 = vld [vmem:[%s1 + $0x2e08] sm:$0xff]
    %v1513 = vld [vmem:[%s1 + $0x2e10] sm:$0xff]
    %v1514 = vld [vmem:[%s1 + $0x2e18] sm:$0xff]
    %v1515 = vld [vmem:[%s1 + $0x2e20] sm:$0xff]
    %v1516 = vld [vmem:[%s1 + $0x2e28] sm:$0xff]
    %v1517 = vld [vmem:[%s1 + $0x2e30] sm:$0xff]
    %v1518 = vld [vmem:[%s1 + $0x2e38] sm:$0xff]
    %v1519 = vld [vmem:[%s1 + $0x2e40] sm:$0xff]
    %v1520 = vld [vmem:[%s1 + $0x2e48] sm:$0xff]
    %v1521 = vld [vmem:[%s1 + $0x2e50] sm:$0xff]
    %v1522 = vld [vmem:[%s1 + $0x2e58] sm:$0xff]
    %v1523 = vld [vmem:[%s1 + $0x2e60] sm:$0xff]
    %v1524 = vld [vmem:[%s1 + $0x2e68] sm:$0xff]
    %v1525 = vld [vmem:[%s1 + $0x2e70] sm:$0xff]
    %v1526 = vld [vmem:[%s1 + $0x2e78] sm:$0xff]
    %v1527 = vld [vmem:[%s1 + $0x2e80] sm:$0xff]
    %v1528 = vld [vmem:[%s1 + $0x2e88] sm:$0xff]
    %v1529 = vld [vmem:[%s1 + $0x2e90] sm:$0xff]
    %v1530 = vld [vmem:[%s1 + $0x2e98] sm:$0xff]
    %v1531 = vld [vmem:[%s1 + $0x2ea0] sm:$0xff]
    %v1532 = vld [vmem:[%s1 + $0x2ea8] sm:$0xff]
    %v1533 = vld [vmem:[%s1 + $0x2eb0] sm:$0xff]
    %v1534 = vld [vmem:[%s1 + $0x2eb8] sm:$0xff]
    %v1535 = vld [vmem:[%s1 + $0x2ec0] sm:$0xff]
    %v1536 = vld [vmem:[%s1 + $0x2ec8] sm:$0xff]
    %v1537 = vld [vmem:[%s1 + $0x2ed0] sm:$0xff]
    %v1538 = vld [vmem:[%s1 + $0x2ed8] sm:$0xff]
    %v1539 = vld [vmem:[%s1 + $0x2ee0] sm:$0xff]
    %v1540 = vld [vmem:[%s1 + $0x2ee8] sm:$0xff]
    %v1541 = vld [vmem:[%s1 + $0x2ef0] sm:$0xff]
    %v1542 = vld [vmem:[%s1 + $0x2ef8] sm:$0xff]
    %v1543 = vld [vmem:[%s1 + $0x2f00] sm:$0xff]
    %v1544 = vld [vmem:[%s1 + $0x2f08] sm:$0xff]
    %v1545 = vld [vmem:[%s1 + $0x2f10] sm:$0xff]
    %v1546 = vld [vmem:[%s1 + $0x2f18] sm:$0xff]
    %v1547 = vld [vmem:[%s1 + $0x2f20] sm:$0xff]
    %v1548 = vld [vmem:[%s1 + $0x2f28] sm:$0xff]
    %v1549 = vld [vmem:[%s1 + $0x2f30] sm:$0xff]
    %v1550 = vld [vmem:[%s1 + $0x2f38] sm:$0xff]
    %v1551 = vld [vmem:[%s1 + $0x2f40] sm:$0xff]
    %v1552 = vld [vmem:[%s1 + $0x2f48] sm:$0xff]
    %v1553 = vld [vmem:[%s1 + $0x2f50] sm:$0xff]
    %v1554 = vld [vmem:[%s1 + $0x2f58] sm:$0xff]
    %v1555 = vld [vmem:[%s1 + $0x2f60] sm:$0xff]
    %v1556 = vld [vmem:[%s1 + $0x2f68] sm:$0xff]
    %v1557 = vld [vmem:[%s1 + $0x2f70] sm:$0xff]
    %v1558 = vld [vmem:[%s1 + $0x2f78] sm:$0xff]
    %v1559 = vld [vmem:[%s1 + $0x2f80] sm:$0xff]
    %v1560 = vld [vmem:[%s1 + $0x2f88] sm:$0xff]
    %v1561 = vld [vmem:[%s1 + $0x2f90] sm:$0xff]
    %v1562 = vld [vmem:[%s1 + $0x2f98] sm:$0xff]
    %v1563 = vld [vmem:[%s1 + $0x2fa0] sm:$0xff]
    %v1564 = vld [vmem:[%s1 + $0x2fa8] sm:$0xff]
    %v1565 = vld [vmem:[%s1 + $0x2fb0] sm:$0xff]
    %v1566 = vld [vmem:[%s1 + $0x2fb8] sm:$0xff]
    %v1567 = vld [vmem:[%s1 + $0x2fc0] sm:$0xff]
    %v1568 = vld [vmem:[%s1 + $0x2fc8] sm:$0xff]
    %v1569 = vld [vmem:[%s1 + $0x2fd0] sm:$0xff]
    %v1570 = vld [vmem:[%s1 + $0x2fd8] sm:$0xff]
    %v1571 = vld [vmem:[%s1 + $0x2fe0] sm:$0xff]
    %v1572 = vld [vmem:[%s1 + $0x2fe8] sm:$0xff]
    %v1573 = vld [vmem:[%s1 + $0x2ff0] sm:$0xff]
    %v1574 = vld [vmem:[%s1 + $0x2ff8] sm:$0xff]
    %v1575 = vld [vmem:[%s2] sm:$0x1]
    %v1577 = vlaneseq
    %v1578 = vshrl.u32 %v1577, 7
    %v1579 = vsub.s32 0, %v1578
    %v1580 = vrot.slane %v1575, %v1579
    %v1606 = vcombine.high %v15, %v15
    %v1608 = vunpack.c.l.s4 1983009808
    %v1609 = vunpack.c.0.s8 %v1608
    %v1610 = vlaneseq
    %v1611 = vshrl.u32 %v1610, 7
    %v1612 = vsub.s32 %v1609, %v1611
    %v1613 = vrot.slane %v15, %v1612
    %v1615 = vunpack.c.l.s4 1983009808
    %v1616 = vunpack.c.0.s8 %v1615
    %v1617 = vlaneseq
    %v1618 = vshrl.u32 %v1617, 7
    %v1619 = vsub.s32 %v1616, %v1618
    %v1620 = vrot.slane %v1606, %v1619
    %v1621 = vcombine.high %v1613, %v1613
    %v1622 = vcombine.high %v1620, %v1620
    %v1623 = vcombine.high %v16, %v16
    %v1625 = vunpack.c.l.s4 1983009808
    %v1626 = vunpack.c.0.s8 %v1625
    %v1627 = vlaneseq
    %v1628 = vshrl.u32 %v1627, 7
    %v1629 = vsub.s32 %v1626, %v1628
    %v1630 = vrot.slane %v16, %v1629
    %v1632 = vunpack.c.l.s4 1983009808
    %v1633 = vunpack.c.0.s8 %v1632
    %v1634 = vlaneseq
    %v1635 = vshrl.u32 %v1634, 7
    %v1636 = vsub.s32 %v1633, %v1635
    %v1637 = vrot.slane %v1623, %v1636
    %v1638 = vcombine.high %v1630, %v1630
    %v1639 = vcombine.high %v1637, %v1637
    %v1640 = vcombine.high %v17, %v17
    %v1642 = vunpack.c.l.s4 1983009808
    %v1643 = vunpack.c.0.s8 %v1642
    %v1644 = vlaneseq
    %v1645 = vshrl.u32 %v1644, 7
    %v1646 = vsub.s32 %v1643, %v1645
    %v1647 = vrot.slane %v17, %v1646
    %v1649 = vunpack.c.l.s4 1983009808
    %v1650 = vunpack.c.0.s8 %v1649
    %v1651 = vlaneseq
    %v1652 = vshrl.u32 %v1651, 7
    %v1653 = vsub.s32 %v1650, %v1652
    %v1654 = vrot.slane %v1640, %v1653
    %v1655 = vcombine.high %v1647, %v1647
    %v1656 = vcombine.high %v1654, %v1654
    %v1657 = vcombine.high %v18, %v18
    %v1659 = vunpack.c.l.s4 1983009808
    %v1660 = vunpack.c.0.s8 %v1659
    %v1661 = vlaneseq
    %v1662 = vshrl.u32 %v1661, 7
    %v1663 = vsub.s32 %v1660, %v1662
    %v1664 = vrot.slane %v18, %v1663
    %v1666 = vunpack.c.l.s4 1983009808
    %v1667 = vunpack.c.0.s8 %v1666
    %v1668 = vlaneseq
    %v1669 = vshrl.u32 %v1668, 7
    %v1670 = vsub.s32 %v1667, %v1669
    %v1671 = vrot.slane %v1657, %v1670
    %v1672 = vcombine.high %v1664, %v1664
    %v1673 = vcombine.high %v1671, %v1671
    %v1674 = vcombine.high %v19, %v19
    %v1676 = vunpack.c.l.s4 1983009808
    %v1677 = vunpack.c.0.s8 %v1676
    %v1678 = vlaneseq
    %v1679 = vshrl.u32 %v1678, 7
    %v1680 = vsub.s32 %v1677, %v1679
    %v1681 = vrot.slane %v19, %v1680
    %v1683 = vunpack.c.l.s4 1983009808
    %v1684 = vunpack.c.0.s8 %v1683
    %v1685 = vlaneseq
    %v1686 = vshrl.u32 %v1685, 7
    %v1687 = vsub.s32 %v1684, %v1686
    %v1688 = vrot.slane %v1674, %v1687
    %v1689 = vcombine.high %v1681, %v1681
    %v1690 = vcombine.high %v1688, %v1688
    %v1691 = vcombine.high %v20, %v20
    %v1693 = vunpack.c.l.s4 1983009808
    %v1694 = vunpack.c.0.s8 %v1693
    %v1695 = vlaneseq
    %v1696 = vshrl.u32 %v1695, 7
    %v1697 = vsub.s32 %v1694, %v1696
    %v1698 = vrot.slane %v20, %v1697
    %v1700 = vunpack.c.l.s4 1983009808
    %v1701 = vunpack.c.0.s8 %v1700
    %v1702 = vlaneseq
    %v1703 = vshrl.u32 %v1702, 7
    %v1704 = vsub.s32 %v1701, %v1703
    %v1705 = vrot.slane %v1691, %v1704
    %v1706 = vcombine.high %v1698, %v1698
    %v1707 = vcombine.high %v1705, %v1705
    %v1708 = vcombine.high %v21, %v21
    %v1710 = vunpack.c.l.s4 1983009808
    %v1711 = vunpack.c.0.s8 %v1710
    %v1712 = vlaneseq
    %v1713 = vshrl.u32 %v1712, 7
    %v1714 = vsub.s32 %v1711, %v1713
    %v1715 = vrot.slane %v21, %v1714
    %v1717 = vunpack.c.l.s4 1983009808
    %v1718 = vunpack.c.0.s8 %v1717
    %v1719 = vlaneseq
    %v1720 = vshrl.u32 %v1719, 7
    %v1721 = vsub.s32 %v1718, %v1720
    %v1722 = vrot.slane %v1708, %v1721
    %v1723 = vcombine.high %v1715, %v1715
    %v1724 = vcombine.high %v1722, %v1722
    %v1725 = vcombine.high %v22, %v22
    %v1727 = vunpack.c.l.s4 1983009808
    %v1728 = vunpack.c.0.s8 %v1727
    %v1729 = vlaneseq
    %v1730 = vshrl.u32 %v1729, 7
    %v1731 = vsub.s32 %v1728, %v1730
    %v1732 = vrot.slane %v22, %v1731
    %v1734 = vunpack.c.l.s4 1983009808
    %v1735 = vunpack.c.0.s8 %v1734
    %v1736 = vlaneseq
    %v1737 = vshrl.u32 %v1736, 7
    %v1738 = vsub.s32 %v1735, %v1737
    %v1739 = vrot.slane %v1725, %v1738
    %v1740 = vcombine.high %v1732, %v1732
    %v1741 = vcombine.high %v1739, %v1739
    %v1742 = vcombine.high %v23, %v23
    %v1744 = vunpack.c.l.s4 1983009808
    %v1745 = vunpack.c.0.s8 %v1744
    %v1746 = vlaneseq
    %v1747 = vshrl.u32 %v1746, 7
    %v1748 = vsub.s32 %v1745, %v1747
    %v1749 = vrot.slane %v23, %v1748
    %v1751 = vunpack.c.l.s4 1983009808
    %v1752 = vunpack.c.0.s8 %v1751
    %v1753 = vlaneseq
    %v1754 = vshrl.u32 %v1753, 7
    %v1755 = vsub.s32 %v1752, %v1754
    %v1756 = vrot.slane %v1742, %v1755
    %v1757 = vcombine.high %v1749, %v1749
    %v1758 = vcombine.high %v1756, %v1756
    %v1759 = vcombine.high %v24, %v24
    %v1761 = vunpack.c.l.s4 1983009808
    %v1762 = vunpack.c.0.s8 %v1761
    %v1763 = vlaneseq
    %v1764 = vshrl.u32 %v1763, 7
    %v1765 = vsub.s32 %v1762, %v1764
    %v1766 = vrot.slane %v24, %v1765
    %v1768 = vunpack.c.l.s4 1983009808
    %v1769 = vunpack.c.0.s8 %v1768
    %v1770 = vlaneseq
    %v1771 = vshrl.u32 %v1770, 7
    %v1772 = vsub.s32 %v1769, %v1771
    %v1773 = vrot.slane %v1759, %v1772
    %v1774 = vcombine.high %v1766, %v1766
    %v1775 = vcombine.high %v1773, %v1773
    %v1776 = vcombine.high %v25, %v25
    %v1778 = vunpack.c.l.s4 1983009808
    %v1779 = vunpack.c.0.s8 %v1778
    %v1780 = vlaneseq
    %v1781 = vshrl.u32 %v1780, 7
    %v1782 = vsub.s32 %v1779, %v1781
    %v1783 = vrot.slane %v25, %v1782
    %v1785 = vunpack.c.l.s4 1983009808
    %v1786 = vunpack.c.0.s8 %v1785
    %v1787 = vlaneseq
    %v1788 = vshrl.u32 %v1787, 7
    %v1789 = vsub.s32 %v1786, %v1788
    %v1790 = vrot.slane %v1776, %v1789
    %v1791 = vcombine.high %v1783, %v1783
    %v1792 = vcombine.high %v1790, %v1790
    %v1793 = vcombine.high %v26, %v26
    %v1795 = vunpack.c.l.s4 1983009808
    %v1796 = vunpack.c.0.s8 %v1795
    %v1797 = vlaneseq
    %v1798 = vshrl.u32 %v1797, 7
    %v1799 = vsub.s32 %v1796, %v1798
    %v1800 = vrot.slane %v26, %v1799
    %v1802 = vunpack.c.l.s4 1983009808
    %v1803 = vunpack.c.0.s8 %v1802
    %v1804 = vlaneseq
    %v1805 = vshrl.u32 %v1804, 7
    %v1806 = vsub.s32 %v1803, %v1805
    %v1807 = vrot.slane %v1793, %v1806
    %v1808 = vcombine.high %v1800, %v1800
    %v1809 = vcombine.high %v1807, %v1807
    %v1810 = vcombine.high %v27, %v27
    %v1812 = vunpack.c.l.s4 1983009808
    %v1813 = vunpack.c.0.s8 %v1812
    %v1814 = vlaneseq
    %v1815 = vshrl.u32 %v1814, 7
    %v1816 = vsub.s32 %v1813, %v1815
    %v1817 = vrot.slane %v27, %v1816
    %v1819 = vunpack.c.l.s4 1983009808
    %v1820 = vunpack.c.0.s8 %v1819
    %v1821 = vlaneseq
    %v1822 = vshrl.u32 %v1821, 7
    %v1823 = vsub.s32 %v1820, %v1822
    %v1824 = vrot.slane %v1810, %v1823
    %v1825 = vcombine.high %v1817, %v1817
    %v1826 = vcombine.high %v1824, %v1824
    %v1827 = vcombine.high %v28, %v28
    %v1829 = vunpack.c.l.s4 1983009808
    %v1830 = vunpack.c.0.s8 %v1829
    %v1831 = vlaneseq
    %v1832 = vshrl.u32 %v1831, 7
    %v1833 = vsub.s32 %v1830, %v1832
    %v1834 = vrot.slane %v28, %v1833
    %v1836 = vunpack.c.l.s4 1983009808
    %v1837 = vunpack.c.0.s8 %v1836
    %v1838 = vlaneseq
    %v1839 = vshrl.u32 %v1838, 7
    %v1840 = vsub.s32 %v1837, %v1839
    %v1841 = vrot.slane %v1827, %v1840
    %v1842 = vcombine.high %v1834, %v1834
    %v1843 = vcombine.high %v1841, %v1841
    %v1844 = vcombine.high %v29, %v29
    %v1846 = vunpack.c.l.s4 1983009808
    %v1847 = vunpack.c.0.s8 %v1846
    %v1848 = vlaneseq
    %v1849 = vshrl.u32 %v1848, 7
    %v1850 = vsub.s32 %v1847, %v1849
    %v1851 = vrot.slane %v29, %v1850
    %v1853 = vunpack.c.l.s4 1983009808
    %v1854 = vunpack.c.0.s8 %v1853
    %v1855 = vlaneseq
    %v1856 = vshrl.u32 %v1855, 7
    %v1857 = vsub.s32 %v1854, %v1856
    %v1858 = vrot.slane %v1844, %v1857
    %v1859 = vcombine.high %v1851, %v1851
    %v1860 = vcombine.high %v1858, %v1858
    %v1861 = vcombine.high %v30, %v30
    %v1863 = vunpack.c.l.s4 1983009808
    %v1864 = vunpack.c.0.s8 %v1863
    %v1865 = vlaneseq
    %v1866 = vshrl.u32 %v1865, 7
    %v1867 = vsub.s32 %v1864, %v1866
    %v1868 = vrot.slane %v30, %v1867
    %v1870 = vunpack.c.l.s4 1983009808
    %v1871 = vunpack.c.0.s8 %v1870
    %v1872 = vlaneseq
    %v1873 = vshrl.u32 %v1872, 7
    %v1874 = vsub.s32 %v1871, %v1873
    %v1875 = vrot.slane %v1861, %v1874
    %v1876 = vcombine.high %v1868, %v1868
    %v1877 = vcombine.high %v1875, %v1875
    %v1878 = vcombine.high %v31, %v31
    %v1880 = vunpack.c.l.s4 1983009808
    %v1881 = vunpack.c.0.s8 %v1880
    %v1882 = vlaneseq
    %v1883 = vshrl.u32 %v1882, 7
    %v1884 = vsub.s32 %v1881, %v1883
    %v1885 = vrot.slane %v31, %v1884
    %v1887 = vunpack.c.l.s4 1983009808
    %v1888 = vunpack.c.0.s8 %v1887
    %v1889 = vlaneseq
    %v1890 = vshrl.u32 %v1889, 7
    %v1891 = vsub.s32 %v1888, %v1890
    %v1892 = vrot.slane %v1878, %v1891
    %v1893 = vcombine.high %v1885, %v1885
    %v1894 = vcombine.high %v1892, %v1892
    %v1895 = vcombine.high %v32, %v32
    %v1897 = vunpack.c.l.s4 1983009808
    %v1898 = vunpack.c.0.s8 %v1897
    %v1899 = vlaneseq
    %v1900 = vshrl.u32 %v1899, 7
    %v1901 = vsub.s32 %v1898, %v1900
    %v1902 = vrot.slane %v32, %v1901
    %v1904 = vunpack.c.l.s4 1983009808
    %v1905 = vunpack.c.0.s8 %v1904
    %v1906 = vlaneseq
    %v1907 = vshrl.u32 %v1906, 7
    %v1908 = vsub.s32 %v1905, %v1907
    %v1909 = vrot.slane %v1895, %v1908
    %v1910 = vcombine.high %v1902, %v1902
    %v1911 = vcombine.high %v1909, %v1909
    %v1912 = vcombine.high %v33, %v33
    %v1914 = vunpack.c.l.s4 1983009808
    %v1915 = vunpack.c.0.s8 %v1914
    %v1916 = vlaneseq
    %v1917 = vshrl.u32 %v1916, 7
    %v1918 = vsub.s32 %v1915, %v1917
    %v1919 = vrot.slane %v33, %v1918
    %v1921 = vunpack.c.l.s4 1983009808
    %v1922 = vunpack.c.0.s8 %v1921
    %v1923 = vlaneseq
    %v1924 = vshrl.u32 %v1923, 7
    %v1925 = vsub.s32 %v1922, %v1924
    %v1926 = vrot.slane %v1912, %v1925
    %v1927 = vcombine.high %v1919, %v1919
    %v1928 = vcombine.high %v1926, %v1926
    %v1929 = vcombine.high %v34, %v34
    %v1931 = vunpack.c.l.s4 1983009808
    %v1932 = vunpack.c.0.s8 %v1931
    %v1933 = vlaneseq
    %v1934 = vshrl.u32 %v1933, 7
    %v1935 = vsub.s32 %v1932, %v1934
    %v1936 = vrot.slane %v34, %v1935
    %v1938 = vunpack.c.l.s4 1983009808
    %v1939 = vunpack.c.0.s8 %v1938
    %v1940 = vlaneseq
    %v1941 = vshrl.u32 %v1940, 7
    %v1942 = vsub.s32 %v1939, %v1941
    %v1943 = vrot.slane %v1929, %v1942
    %v1944 = vcombine.high %v1936, %v1936
    %v1945 = vcombine.high %v1943, %v1943
    %v1946 = vcombine.high %v35, %v35
    %v1948 = vunpack.c.l.s4 1983009808
    %v1949 = vunpack.c.0.s8 %v1948
    %v1950 = vlaneseq
    %v1951 = vshrl.u32 %v1950, 7
    %v1952 = vsub.s32 %v1949, %v1951
    %v1953 = vrot.slane %v35, %v1952
    %v1955 = vunpack.c.l.s4 1983009808
    %v1956 = vunpack.c.0.s8 %v1955
    %v1957 = vlaneseq
    %v1958 = vshrl.u32 %v1957, 7
    %v1959 = vsub.s32 %v1956, %v1958
    %v1960 = vrot.slane %v1946, %v1959
    %v1961 = vcombine.high %v1953, %v1953
    %v1962 = vcombine.high %v1960, %v1960
    %v1963 = vcombine.high %v36, %v36
    %v1965 = vunpack.c.l.s4 1983009808
    %v1966 = vunpack.c.0.s8 %v1965
    %v1967 = vlaneseq
    %v1968 = vshrl.u32 %v1967, 7
    %v1969 = vsub.s32 %v1966, %v1968
    %v1970 = vrot.slane %v36, %v1969
    %v1972 = vunpack.c.l.s4 1983009808
    %v1973 = vunpack.c.0.s8 %v1972
    %v1974 = vlaneseq
    %v1975 = vshrl.u32 %v1974, 7
    %v1976 = vsub.s32 %v1973, %v1975
    %v1977 = vrot.slane %v1963, %v1976
    %v1978 = vcombine.high %v1970, %v1970
    %v1979 = vcombine.high %v1977, %v1977
    %v1980 = vcombine.high %v37, %v37
    %v1982 = vunpack.c.l.s4 1983009808
    %v1983 = vunpack.c.0.s8 %v1982
    %v1984 = vlaneseq
    %v1985 = vshrl.u32 %v1984, 7
    %v1986 = vsub.s32 %v1983, %v1985
    %v1987 = vrot.slane %v37, %v1986
    %v1989 = vunpack.c.l.s4 1983009808
    %v1990 = vunpack.c.0.s8 %v1989
    %v1991 = vlaneseq
    %v1992 = vshrl.u32 %v1991, 7
    %v1993 = vsub.s32 %v1990, %v1992
    %v1994 = vrot.slane %v1980, %v1993
    %v1995 = vcombine.high %v1987, %v1987
    %v1996 = vcombine.high %v1994, %v1994
    %v1997 = vcombine.high %v38, %v38
    %v1999 = vunpack.c.l.s4 1983009808
    %v2000 = vunpack.c.0.s8 %v1999
    %v2001 = vlaneseq
    %v2002 = vshrl.u32 %v2001, 7
    %v2003 = vsub.s32 %v2000, %v2002
    %v2004 = vrot.slane %v38, %v2003
    %v2006 = vunpack.c.l.s4 1983009808
    %v2007 = vunpack.c.0.s8 %v2006
    %v2008 = vlaneseq
    %v2009 = vshrl.u32 %v2008, 7
    %v2010 = vsub.s32 %v2007, %v2009
    %v2011 = vrot.slane %v1997, %v2010
    %v2012 = vcombine.high %v2004, %v2004
    %v2013 = vcombine.high %v2011, %v2011
    %2110 = vmatprep.subr.mxu0 0.0
    %2111 = vmatpush1.msra.mxu0 %v39
    %2112 = vmatprep.subr.mxu0 0.0
    %2113 = vmatpush1.msra.mxu0 %v40
    %2114 = vmatprep.subr.mxu0 0.0
    %2115 = vmatpush1.msra.mxu0 %v41
    %2116 = vmatprep.subr.mxu0 0.0
    %2117 = vmatpush1.msra.mxu0 %v42
    %2118 = vmatprep.subr.mxu0 0.0
    %2119 = vmatpush1.msra.mxu0 %v43
    %2120 = vmatprep.subr.mxu0 0.0
    %2121 = vmatpush1.msra.mxu0 %v44
    %2122 = vmatprep.subr.mxu0 0.0
    %2123 = vmatpush1.msra.mxu0 %v45
    %2124 = vmatprep.subr.mxu0 0.0
    %2125 = vmatpush1.msra.mxu0 %v46
    %2126 = vmatprep.subr.mxu0 0.0
    %2127 = vmatpush1.msra.mxu0 %v47
    %2128 = vmatprep.subr.mxu0 0.0
    %2129 = vmatpush1.msra.mxu0 %v48
    %2130 = vmatprep.subr.mxu0 0.0
    %2131 = vmatpush1.msra.mxu0 %v49
    %2132 = vmatprep.subr.mxu0 0.0
    %2133 = vmatpush1.msra.mxu0 %v50
    %2134 = vmatprep.subr.mxu0 0.0
    %2135 = vmatpush1.msra.mxu0 %v51
    %2136 = vmatprep.subr.mxu0 0.0
    %2137 = vmatpush1.msra.mxu0 %v52
    %2138 = vmatprep.subr.mxu0 0.0
    %2139 = vmatpush1.msra.mxu0 %v53
    %2140 = vmatprep.subr.mxu0 0.0
    %2141 = vmatpush1.msra.mxu0 %v54
    %2142 = vmatprep.subr.mxu0 0.0
    %2143 = vmatpush1.msra.mxu0 %v55
    %2144 = vmatprep.subr.mxu0 0.0
    %2145 = vmatpush1.msra.mxu0 %v56
    %2146 = vmatprep.subr.mxu0 0.0
    %2147 = vmatpush1.msra.mxu0 %v57
    %2148 = vmatprep.subr.mxu0 0.0
    %2149 = vmatpush1.msra.mxu0 %v58
    %2150 = vmatprep.subr.mxu0 0.0
    %2151 = vmatpush1.msra.mxu0 %v59
    %2152 = vmatprep.subr.mxu0 0.0
    %2153 = vmatpush1.msra.mxu0 %v60
    %2154 = vmatprep.subr.mxu0 0.0
    %2155 = vmatpush1.msra.mxu0 %v61
    %2156 = vmatprep.subr.mxu0 0.0
    %2157 = vmatpush1.msra.mxu0 %v62
    %2158 = vmatprep.subr.mxu0 0.0
    %2159 = vmatpush1.msra.mxu0 %v63
    %2160 = vmatprep.subr.mxu0 0.0
    %2161 = vmatpush1.msra.mxu0 %v64
    %2162 = vmatprep.subr.mxu0 0.0
    %2163 = vmatpush1.msra.mxu0 %v65
    %2164 = vmatprep.subr.mxu0 0.0
    %2165 = vmatpush1.msra.mxu0 %v66
    %2166 = vmatprep.subr.mxu0 0.0
    %2167 = vmatpush1.msra.mxu0 %v67
    %2168 = vmatprep.subr.mxu0 0.0
    %2169 = vmatpush1.msra.mxu0 %v68
    %2170 = vmatprep.subr.mxu0 0.0
    %2171 = vmatpush1.msra.mxu0 %v69
    %2172 = vmatprep.subr.mxu0 0.0
    %2173 = vmatpush1.msra.mxu0 %v70
    %2174 = vmatprep.mubr.f32.mxu0 %v1621
    %2175 = vmatmul.mubr.f32.gmra.mrb[0].mxu0 %v1613
    %v2176 = vpop.f32.mrb[0].mxu0
    %v2177 = vadd.f32 %v1580, %v2176
    %v2178 = vpop.f32.mrb[0].mxu0
    %2179 = vdwg.mxu0
    %2180 = vmatprep.subr.mxu0 0.0
    %2181 = vmatpush1.msra.mxu0 %v71
    %2182 = vmatprep.subr.mxu0 0.0
    %2183 = vmatpush1.msra.mxu0 %v72
    %2184 = vmatprep.subr.mxu0 0.0
    %2185 = vmatpush1.msra.mxu0 %v73
    %2186 = vmatprep.subr.mxu0 0.0
    %2187 = vmatpush1.msra.mxu0 %v74
    %2188 = vmatprep.subr.mxu0 0.0
    %2189 = vmatpush1.msra.mxu0 %v75
    %2190 = vmatprep.subr.mxu0 0.0
    %2191 = vmatpush1.msra.mxu0 %v76
    %2192 = vmatprep.subr.mxu0 0.0
    %2193 = vmatpush1.msra.mxu0 %v77
    %2194 = vmatprep.subr.mxu0 0.0
    %2195 = vmatpush1.msra.mxu0 %v78
    %2196 = vmatprep.subr.mxu0 0.0
    %2197 = vmatpush1.msra.mxu0 %v79
    %2198 = vmatprep.subr.mxu0 0.0
    %2199 = vmatpush1.msra.mxu0 %v80
    %2200 = vmatprep.subr.mxu0 0.0
    %2201 = vmatpush1.msra.mxu0 %v81
    %2202 = vmatprep.subr.mxu0 0.0
    %2203 = vmatpush1.msra.mxu0 %v82
    %2204 = vmatprep.subr.mxu0 0.0
    %2205 = vmatpush1.msra.mxu0 %v83
    %2206 = vmatprep.subr.mxu0 0.0
    %2207 = vmatpush1.msra.mxu0 %v84
    %2208 = vmatprep.subr.mxu0 0.0
    %2209 = vmatpush1.msra.mxu0 %v85
    %2210 = vmatprep.subr.mxu0 0.0
    %2211 = vmatpush1.msra.mxu0 %v86
    %2212 = vmatprep.subr.mxu0 0.0
    %2213 = vmatpush1.msra.mxu0 %v87
    %2214 = vmatprep.subr.mxu0 0.0
    %2215 = vmatpush1.msra.mxu0 %v88
    %2216 = vmatprep.subr.mxu0 0.0
    %2217 = vmatpush1.msra.mxu0 %v89
    %2218 = vmatprep.subr.mxu0 0.0
    %2219 = vmatpush1.msra.mxu0 %v90
    %2220 = vmatprep.subr.mxu0 0.0
    %2221 = vmatpush1.msra.mxu0 %v91
    %2222 = vmatprep.subr.mxu0 0.0
    %2223 = vmatpush1.msra.mxu0 %v92
    %2224 = vmatprep.subr.mxu0 0.0
    %2225 = vmatpush1.msra.mxu0 %v93
    %2226 = vmatprep.subr.mxu0 0.0
    %2227 = vmatpush1.msra.mxu0 %v94
    %2228 = vmatprep.subr.mxu0 0.0
    %2229 = vmatpush1.msra.mxu0 %v95
    %2230 = vmatprep.subr.mxu0 0.0
    %2231 = vmatpush1.msra.mxu0 %v96
    %2232 = vmatprep.subr.mxu0 0.0
    %2233 = vmatpush1.msra.mxu0 %v97
    %2234 = vmatprep.subr.mxu0 0.0
    %2235 = vmatpush1.msra.mxu0 %v98
    %2236 = vmatprep.subr.mxu0 0.0
    %2237 = vmatpush1.msra.mxu0 %v99
    %2238 = vmatprep.subr.mxu0 0.0
    %2239 = vmatpush1.msra.mxu0 %v100
    %2240 = vmatprep.subr.mxu0 0.0
    %2241 = vmatpush1.msra.mxu0 %v101
    %2242 = vmatprep.subr.mxu0 0.0
    %2243 = vmatpush1.msra.mxu0 %v102
    %2244 = vmatprep.mubr.f32.mxu0 %v1622
    %2245 = vmatmul.mubr.f32.gmra.mrb[0].mxu0 %v1620
    %v2246 = vpop.f32.mrb[0].mxu0
    %v2247 = vadd.f32 %v2177, %v2246
    %v2248 = vpop.f32.mrb[0].mxu0
    %2249 = vdwg.mxu0
    %2250 = vmatprep.subr.mxu0 0.0
    %2251 = vmatpush1.msra.mxu0 %v103
    %2252 = vmatprep.subr.mxu0 0.0
    %2253 = vmatpush1.msra.mxu0 %v104
    %2254 = vmatprep.subr.mxu0 0.0
    %2255 = vmatpush1.msra.mxu0 %v105
    %2256 = vmatprep.subr.mxu0 0.0
    %2257 = vmatpush1.msra.mxu0 %v106
    %2258 = vmatprep.subr.mxu0 0.0
    %2259 = vmatpush1.msra.mxu0 %v107
    %2260 = vmatprep.subr.mxu0 0.0
    %2261 = vmatpush1.msra.mxu0 %v108
    %2262 = vmatprep.subr.mxu0 0.0
    %2263 = vmatpush1.msra.mxu0 %v109
    %2264 = vmatprep.subr.mxu0 0.0
    %2265 = vmatpush1.msra.mxu0 %v110
    %2266 = vmatprep.subr.mxu0 0.0
    %2267 = vmatpush1.msra.mxu0 %v111
    %2268 = vmatprep.subr.mxu0 0.0
    %2269 = vmatpush1.msra.mxu0 %v112
    %2270 = vmatprep.subr.mxu0 0.0
    %2271 = vmatpush1.msra.mxu0 %v113
    %2272 = vmatprep.subr.mxu0 0.0
    %2273 = vmatpush1.msra.mxu0 %v114
    %2274 = vmatprep.subr.mxu0 0.0
    %2275 = vmatpush1.msra.mxu0 %v115
    %2276 = vmatprep.subr.mxu0 0.0
    %2277 = vmatpush1.msra.mxu0 %v116
    %2278 = vmatprep.subr.mxu0 0.0
    %2279 = vmatpush1.msra.mxu0 %v117
    %2280 = vmatprep.subr.mxu0 0.0
    %2281 = vmatpush1.msra.mxu0 %v118
    %2282 = vmatprep.subr.mxu0 0.0
    %2283 = vmatpush1.msra.mxu0 %v119
    %2284 = vmatprep.subr.mxu0 0.0
    %2285 = vmatpush1.msra.mxu0 %v120
    %2286 = vmatprep.subr.mxu0 0.0
    %2287 = vmatpush1.msra.mxu0 %v121
    %2288 = vmatprep.subr.mxu0 0.0
    %2289 = vmatpush1.msra.mxu0 %v122
    %2290 = vmatprep.subr.mxu0 0.0
    %2291 = vmatpush1.msra.mxu0 %v123
    %2292 = vmatprep.subr.mxu0 0.0
    %2293 = vmatpush1.msra.mxu0 %v124
    %2294 = vmatprep.subr.mxu0 0.0
    %2295 = vmatpush1.msra.mxu0 %v125
    %2296 = vmatprep.subr.mxu0 0.0
    %2297 = vmatpush1.msra.mxu0 %v126
    %2298 = vmatprep.subr.mxu0 0.0
    %2299 = vmatpush1.msra.mxu0 %v127
    %2300 = vmatprep.subr.mxu0 0.0
    %2301 = vmatpush1.msra.mxu0 %v128
    %2302 = vmatprep.subr.mxu0 0.0
    %2303 = vmatpush1.msra.mxu0 %v129
    %2304 = vmatprep.subr.mxu0 0.0
    %2305 = vmatpush1.msra.mxu0 %v130
    %2306 = vmatprep.subr.mxu0 0.0
    %2307 = vmatpush1.msra.mxu0 %v131
    %2308 = vmatprep.subr.mxu0 0.0
    %2309 = vmatpush1.msra.mxu0 %v132
    %2310 = vmatprep.subr.mxu0 0.0
    %2311 = vmatpush1.msra.mxu0 %v133
    %2312 = vmatprep.subr.mxu0 0.0
    %2313 = vmatpush1.msra.mxu0 %v134
    %2314 = vmatprep.mubr.f32.mxu0 %v1638
    %2315 = vmatmul.mubr.f32.gmra.mrb[0].mxu0 %v1630
    %v2316 = vpop.f32.mrb[0].mxu0
    %v2317 = vadd.f32 %v2247, %v2316
    %v2318 = vpop.f32.mrb[0].mxu0
    %2319 = vdwg.mxu0
    %2320 = vmatprep.subr.mxu0 0.0
    %2321 = vmatpush1.msra.mxu0 %v135
    %2322 = vmatprep.subr.mxu0 0.0
    %2323 = vmatpush1.msra.mxu0 %v136
    %2324 = vmatprep.subr.mxu0 0.0
    %2325 = vmatpush1.msra.mxu0 %v137
    %2326 = vmatprep.subr.mxu0 0.0
    %2327 = vmatpush1.msra.mxu0 %v138
    %2328 = vmatprep.subr.mxu0 0.0
    %2329 = vmatpush1.msra.mxu0 %v139
    %2330 = vmatprep.subr.mxu0 0.0
    %2331 = vmatpush1.msra.mxu0 %v140
    %2332 = vmatprep.subr.mxu0 0.0
    %2333 = vmatpush1.msra.mxu0 %v141
    %2334 = vmatprep.subr.mxu0 0.0
    %2335 = vmatpush1.msra.mxu0 %v142
    %2336 = vmatprep.subr.mxu0 0.0
    %2337 = vmatpush1.msra.mxu0 %v143
    %2338 = vmatprep.subr.mxu0 0.0
    %2339 = vmatpush1.msra.mxu0 %v144
    %2340 = vmatprep.subr.mxu0 0.0
    %2341 = vmatpush1.msra.mxu0 %v145
    %2342 = vmatprep.subr.mxu0 0.0
    %2343 = vmatpush1.msra.mxu0 %v146
    %2344 = vmatprep.subr.mxu0 0.0
    %2345 = vmatpush1.msra.mxu0 %v147
    %2346 = vmatprep.subr.mxu0 0.0
    %2347 = vmatpush1.msra.mxu0 %v148
    %2348 = vmatprep.subr.mxu0 0.0
    %2349 = vmatpush1.msra.mxu0 %v149
    %2350 = vmatprep.subr.mxu0 0.0
    %2351 = vmatpush1.msra.mxu0 %v150
    %2352 = vmatprep.subr.mxu0 0.0
    %2353 = vmatpush1.msra.mxu0 %v151
    %2354 = vmatprep.subr.mxu0 0.0
    %2355 = vmatpush1.msra.mxu0 %v152
    %2356 = vmatprep.subr.mxu0 0.0
    %2357 = vmatpush1.msra.mxu0 %v153
    %2358 = vmatprep.subr.mxu0 0.0
    %2359 = vmatpush1.msra.mxu0 %v154
    %2360 = vmatprep.subr.mxu0 0.0
    %2361 = vmatpush1.msra.mxu0 %v155
    %2362 = vmatprep.subr.mxu0 0.0
    %2363 = vmatpush1.msra.mxu0 %v156
    %2364 = vmatprep.subr.mxu0 0.0
    %2365 = vmatpush1.msra.mxu0 %v157
    %2366 = vmatprep.subr.mxu0 0.0
    %2367 = vmatpush1.msra.mxu0 %v158
    %2368 = vmatprep.subr.mxu0 0.0
    %2369 = vmatpush1.msra.mxu0 %v159
    %2370 = vmatprep.subr.mxu0 0.0
    %2371 = vmatpush1.msra.mxu0 %v160
    %2372 = vmatprep.subr.mxu0 0.0
    %2373 = vmatpush1.msra.mxu0 %v161
    %2374 = vmatprep.subr.mxu0 0.0
    %2375 = vmatpush1.msra.mxu0 %v162
    %2376 = vmatprep.subr.mxu0 0.0
    %2377 = vmatpush1.msra.mxu0 %v163
    %2378 = vmatprep.subr.mxu0 0.0
    %2379 = vmatpush1.msra.mxu0 %v164
    %2380 = vmatprep.subr.mxu0 0.0
    %2381 = vmatpush1.msra.mxu0 %v165
    %2382 = vmatprep.subr.mxu0 0.0
    %2383 = vmatpush1.msra.mxu0 %v166
    %2384 = vmatprep.mubr.f32.mxu0 %v1639
    %2385 = vmatmul.mubr.f32.gmra.mrb[0].mxu0 %v1637
    %v2386 = vpop.f32.mrb[0].mxu0
    %v2387 = vadd.f32 %v2317, %v2386
    %v2388 = vpop.f32.mrb[0].mxu0
    %2389 = vdwg.mxu0
    %2390 = vmatprep.subr.mxu0 0.0
    %2391 = vmatpush1.msra.mxu0 %v167
    %2392 = vmatprep.subr.mxu0 0.0
    %2393 = vmatpush1.msra.mxu0 %v168
    %2394 = vmatprep.subr.mxu0 0.0
    %2395 = vmatpush1.msra.mxu0 %v169
    %2396 = vmatprep.subr.mxu0 0.0
    %2397 = vmatpush1.msra.mxu0 %v170
    %2398 = vmatprep.subr.mxu0 0.0
    %2399 = vmatpush1.msra.mxu0 %v171
    %2400 = vmatprep.subr.mxu0 0.0
    %2401 = vmatpush1.msra.mxu0 %v172
    %2402 = vmatprep.subr.mxu0 0.0
    %2403 = vmatpush1.msra.mxu0 %v173
    %2404 = vmatprep.subr.mxu0 0.0
    %2405 = vmatpush1.msra.mxu0 %v174
    %2406 = vmatprep.subr.mxu0 0.0
    %2407 = vmatpush1.msra.mxu0 %v175
    %2408 = vmatprep.subr.mxu0 0.0
    %2409 = vmatpush1.msra.mxu0 %v176
    %2410 = vmatprep.subr.mxu0 0.0
    %2411 = vmatpush1.msra.mxu0 %v177
    %2412 = vmatprep.subr.mxu0 0.0
    %2413 = vmatpush1.msra.mxu0 %v178
    %2414 = vmatprep.subr.mxu0 0.0
    %2415 = vmatpush1.msra.mxu0 %v179
    %2416 = vmatprep.subr.mxu0 0.0
    %2417 = vmatpush1.msra.mxu0 %v180
    %2418 = vmatprep.subr.mxu0 0.0
    %2419 = vmatpush1.msra.mxu0 %v181
    %2420 = vmatprep.subr.mxu0 0.0
    %2421 = vmatpush1.msra.mxu0 %v182
    %2422 = vmatprep.subr.mxu0 0.0
    %2423 = vmatpush1.msra.mxu0 %v183
    %2424 = vmatprep.subr.mxu0 0.0
    %2425 = vmatpush1.msra.mxu0 %v184
    %2426 = vmatprep.subr.mxu0 0.0
    %2427 = vmatpush1.msra.mxu0 %v185
    %2428 = vmatprep.subr.mxu0 0.0
    %2429 = vmatpush1.msra.mxu0 %v186
    %2430 = vmatprep.subr.mxu0 0.0
    %2431 = vmatpush1.msra.mxu0 %v187
    %2432 = vmatprep.subr.mxu0 0.0
    %2433 = vmatpush1.msra.mxu0 %v188
    %2434 = vmatprep.subr.mxu0 0.0
    %2435 = vmatpush1.msra.mxu0 %v189
    %2436 = vmatprep.subr.mxu0 0.0
    %2437 = vmatpush1.msra.mxu0 %v190
    %2438 = vmatprep.subr.mxu0 0.0
    %2439 = vmatpush1.msra.mxu0 %v191
    %2440 = vmatprep.subr.mxu0 0.0
    %2441 = vmatpush1.msra.mxu0 %v192
    %2442 = vmatprep.subr.mxu0 0.0
    %2443 = vmatpush1.msra.mxu0 %v193
    %2444 = vmatprep.subr.mxu0 0.0
    %2445 = vmatpush1.msra.mxu0 %v194
    %2446 = vmatprep.subr.mxu0 0.0
    %2447 = vmatpush1.msra.mxu0 %v195
    %2448 = vmatprep.subr.mxu0 0.0
    %2449 = vmatpush1.msra.mxu0 %v196
    %2450 = vmatprep.subr.mxu0 0.0
    %2451 = vmatpush1.msra.mxu0 %v197
    %2452 = vmatprep.subr.mxu0 0.0
    %2453 = vmatpush1.msra.mxu0 %v198
    %2454 = vmatprep.mubr.f32.mxu0 %v1655
    %2455 = vmatmul.mubr.f32.gmra.mrb[0].mxu0 %v1647
    %v2456 = vpop.f32.mrb[0].mxu0
    %v2457 = vadd.f32 %v2387, %v2456
    %v2458 = vpop.f32.mrb[0].mxu0
    %2459 = vdwg.mxu0
    %2460 = vmatprep.subr.mxu0 0.0
    %2461 = vmatpush1.msra.mxu0 %v199
    %2462 = vmatprep.subr.mxu0 0.0
    %2463 = vmatpush1.msra.mxu0 %v200
    %2464 = vmatprep.subr.mxu0 0.0
    %2465 = vmatpush1.msra.mxu0 %v201
    %2466 = vmatprep.subr.mxu0 0.0
    %2467 = vmatpush1.msra.mxu0 %v202
    %2468 = vmatprep.subr.mxu0 0.0
    %2469 = vmatpush1.msra.mxu0 %v203
    %2470 = vmatprep.subr.mxu0 0.0
    %2471 = vmatpush1.msra.mxu0 %v204
    %2472 = vmatprep.subr.mxu0 0.0
    %2473 = vmatpush1.msra.mxu0 %v205
    %2474 = vmatprep.subr.mxu0 0.0
    %2475 = vmatpush1.msra.mxu0 %v206
    %2476 = vmatprep.subr.mxu0 0.0
    %2477 = vmatpush1.msra.mxu0 %v207
    %2478 = vmatprep.subr.mxu0 0.0
    %2479 = vmatpush1.msra.mxu0 %v208
    %2480 = vmatprep.subr.mxu0 0.0
    %2481 = vmatpush1.msra.mxu0 %v209
    %2482 = vmatprep.subr.mxu0 0.0
    %2483 = vmatpush1.msra.mxu0 %v210
    %2484 = vmatprep.subr.mxu0 0.0
    %2485 = vmatpush1.msra.mxu0 %v211
    %2486 = vmatprep.subr.mxu0 0.0
    %2487 = vmatpush1.msra.mxu0 %v212
    %2488 = vmatprep.subr.mxu0 0.0
    %2489 = vmatpush1.msra.mxu0 %v213
    %2490 = vmatprep.subr.mxu0 0.0
    %2491 = vmatpush1.msra.mxu0 %v214
    %2492 = vmatprep.subr.mxu0 0.0
    %2493 = vmatpush1.msra.mxu0 %v215
    %2494 = vmatprep.subr.mxu0 0.0
    %2495 = vmatpush1.msra.mxu0 %v216
    %2496 = vmatprep.subr.mxu0 0.0
    %2497 = vmatpush1.msra.mxu0 %v217
    %2498 = vmatprep.subr.mxu0 0.0
    %2499 = vmatpush1.msra.mxu0 %v218
    %2500 = vmatprep.subr.mxu0 0.0
    %2501 = vmatpush1.msra.mxu0 %v219
    %2502 = vmatprep.subr.mxu0 0.0
    %2503 = vmatpush1.msra.mxu0 %v220
    %2504 = vmatprep.subr.mxu0 0.0
    %2505 = vmatpush1.msra.mxu0 %v221
    %2506 = vmatprep.subr.mxu0 0.0
    %2507 = vmatpush1.msra.mxu0 %v222
    %2508 = vmatprep.subr.mxu0 0.0
    %2509 = vmatpush1.msra.mxu0 %v223
    %2510 = vmatprep.subr.mxu0 0.0
    %2511 = vmatpush1.msra.mxu0 %v224
    %2512 = vmatprep.subr.mxu0 0.0
    %2513 = vmatpush1.msra.mxu0 %v225
    %2514 = vmatprep.subr.mxu0 0.0
    %2515 = vmatpush1.msra.mxu0 %v226
    %2516 = vmatprep.subr.mxu0 0.0
    %2517 = vmatpush1.msra.mxu0 %v227
    %2518 = vmatprep.subr.mxu0 0.0
    %2519 = vmatpush1.msra.mxu0 %v228
    %2520 = vmatprep.subr.mxu0 0.0
    %2521 = vmatpush1.msra.mxu0 %v229
    %2522 = vmatprep.subr.mxu0 0.0
    %2523 = vmatpush1.msra.mxu0 %v230
    %2524 = vmatprep.mubr.f32.mxu0 %v1656
    %2525 = vmatmul.mubr.f32.gmra.mrb[0].mxu0 %v1654
    %v2526 = vpop.f32.mrb[0].mxu0
    %v2527 = vadd.f32 %v2457, %v2526
    %v2528 = vpop.f32.mrb[0].mxu0
    %2529 = vdwg.mxu0
    %2530 = vmatprep.subr.mxu0 0.0
    %2531 = vmatpush1.msra.mxu0 %v231
    %2532 = vmatprep.subr.mxu0 0.0
    %2533 = vmatpush1.msra.mxu0 %v232
    %2534 = vmatprep.subr.mxu0 0.0
    %2535 = vmatpush1.msra.mxu0 %v233
    %2536 = vmatprep.subr.mxu0 0.0
    %2537 = vmatpush1.msra.mxu0 %v234
    %2538 = vmatprep.subr.mxu0 0.0
    %2539 = vmatpush1.msra.mxu0 %v235
    %2540 = vmatprep.subr.mxu0 0.0
    %2541 = vmatpush1.msra.mxu0 %v236
    %2542 = vmatprep.subr.mxu0 0.0
    %2543 = vmatpush1.msra.mxu0 %v237
    %2544 = vmatprep.subr.mxu0 0.0
    %2545 = vmatpush1.msra.mxu0 %v238
    %2546 = vmatprep.subr.mxu0 0.0
    %2547 = vmatpush1.msra.mxu0 %v239
    %2548 = vmatprep.subr.mxu0 0.0
    %2549 = vmatpush1.msra.mxu0 %v240
    %2550 = vmatprep.subr.mxu0 0.0
    %2551 = vmatpush1.msra.mxu0 %v241
    %2552 = vmatprep.subr.mxu0 0.0
    %2553 = vmatpush1.msra.mxu0 %v242
    %2554 = vmatprep.subr.mxu0 0.0
    %2555 = vmatpush1.msra.mxu0 %v243
    %2556 = vmatprep.subr.mxu0 0.0
    %2557 = vmatpush1.msra.mxu0 %v244
    %2558 = vmatprep.subr.mxu0 0.0
    %2559 = vmatpush1.msra.mxu0 %v245
    %2560 = vmatprep.subr.mxu0 0.0
    %2561 = vmatpush1.msra.mxu0 %v246
    %2562 = vmatprep.subr.mxu0 0.0
    %2563 = vmatpush1.msra.mxu0 %v247
    %2564 = vmatprep.subr.mxu0 0.0
    %2565 = vmatpush1.msra.mxu0 %v248
    %2566 = vmatprep.subr.mxu0 0.0
    %2567 = vmatpush1.msra.mxu0 %v249
    %2568 = vmatprep.subr.mxu0 0.0
    %2569 = vmatpush1.msra.mxu0 %v250
    %2570 = vmatprep.subr.mxu0 0.0
    %2571 = vmatpush1.msra.mxu0 %v251
    %2572 = vmatprep.subr.mxu0 0.0
    %2573 = vmatpush1.msra.mxu0 %v252
    %2574 = vmatprep.subr.mxu0 0.0
    %2575 = vmatpush1.msra.mxu0 %v253
    %2576 = vmatprep.subr.mxu0 0.0
    %2577 = vmatpush1.msra.mxu0 %v254
    %2578 = vmatprep.subr.mxu0 0.0
    %2579 = vmatpush1.msra.mxu0 %v255
    %2580 = vmatprep.subr.mxu0 0.0
    %2581 = vmatpush1.msra.mxu0 %v256
    %2582 = vmatprep.subr.mxu0 0.0
    %2583 = vmatpush1.msra.mxu0 %v257
    %2584 = vmatprep.subr.mxu0 0.0
    %2585 = vmatpush1.msra.mxu0 %v258
    %2586 = vmatprep.subr.mxu0 0.0
    %2587 = vmatpush1.msra.mxu0 %v259
    %2588 = vmatprep.subr.mxu0 0.0
    %2589 = vmatpush1.msra.mxu0 %v260
    %2590 = vmatprep.subr.mxu0 0.0
    %2591 = vmatpush1.msra.mxu0 %v261
    %2592 = vmatprep.subr.mxu0 0.0
    %2593 = vmatpush1.msra.mxu0 %v262
    %2594 = vmatprep.mubr.f32.mxu0 %v1672
    %2595 = vmatmul.mubr.f32.gmra.mrb[0].mxu0 %v1664
    %v2596 = vpop.f32.mrb[0].mxu0
    %v2597 = vadd.f32 %v2527, %v2596
    %v2598 = vpop.f32.mrb[0].mxu0
    %2599 = vdwg.mxu0
    %2600 = vmatprep.subr.mxu0 0.0
    %2601 = vmatpush1.msra.mxu0 %v263
    %2602 = vmatprep.subr.mxu0 0.0
    %2603 = vmatpush1.msra.mxu0 %v264
    %2604 = vmatprep.subr.mxu0 0.0
    %2605 = vmatpush1.msra.mxu0 %v265
    %2606 = vmatprep.subr.mxu0 0.0
    %2607 = vmatpush1.msra.mxu0 %v266
    %2608 = vmatprep.subr.mxu0 0.0
    %2609 = vmatpush1.msra.mxu0 %v267
    %2610 = vmatprep.subr.mxu0 0.0
    %2611 = vmatpush1.msra.mxu0 %v268
    %2612 = vmatprep.subr.mxu0 0.0
    %2613 = vmatpush1.msra.mxu0 %v269
    %2614 = vmatprep.subr.mxu0 0.0
    %2615 = vmatpush1.msra.mxu0 %v270
    %2616 = vmatprep.subr.mxu0 0.0
    %2617 = vmatpush1.msra.mxu0 %v271
    %2618 = vmatprep.subr.mxu0 0.0
    %2619 = vmatpush1.msra.mxu0 %v272
    %2620 = vmatprep.subr.mxu0 0.0
    %2621 = vmatpush1.msra.mxu0 %v273
    %2622 = vmatprep.subr.mxu0 0.0
    %2623 = vmatpush1.msra.mxu0 %v274
    %2624 = vmatprep.subr.mxu0 0.0
    %2625 = vmatpush1.msra.mxu0 %v275
    %2626 = vmatprep.subr.mxu0 0.0
    %2627 = vmatpush1.msra.mxu0 %v276
    %2628 = vmatprep.subr.mxu0 0.0
    %2629 = vmatpush1.msra.mxu0 %v277
    %2630 = vmatprep.subr.mxu0 0.0
    %2631 = vmatpush1.msra.mxu0 %v278
    %2632 = vmatprep.subr.mxu0 0.0
    %2633 = vmatpush1.msra.mxu0 %v279
    %2634 = vmatprep.subr.mxu0 0.0
    %2635 = vmatpush1.msra.mxu0 %v280
    %2636 = vmatprep.subr.mxu0 0.0
    %2637 = vmatpush1.msra.mxu0 %v281
    %2638 = vmatprep.subr.mxu0 0.0
    %2639 = vmatpush1.msra.mxu0 %v282
    %2640 = vmatprep.subr.mxu0 0.0
    %2641 = vmatpush1.msra.mxu0 %v283
    %2642 = vmatprep.subr.mxu0 0.0
    %2643 = vmatpush1.msra.mxu0 %v284
    %2644 = vmatprep.subr.mxu0 0.0
    %2645 = vmatpush1.msra.mxu0 %v285
    %2646 = vmatprep.subr.mxu0 0.0
    %2647 = vmatpush1.msra.mxu0 %v286
    %2648 = vmatprep.subr.mxu0 0.0
    %2649 = vmatpush1.msra.mxu0 %v287
    %2650 = vmatprep.subr.mxu0 0.0
    %2651 = vmatpush1.msra.mxu0 %v288
    %2652 = vmatprep.subr.mxu0 0.0
    %2653 = vmatpush1.msra.mxu0 %v289
    %2654 = vmatprep.subr.mxu0 0.0
    %2655 = vmatpush1.msra.mxu0 %v290
    %2656 = vmatprep.subr.mxu0 0.0
    %2657 = vmatpush1.msra.mxu0 %v291
    %2658 = vmatprep.subr.mxu0 0.0
    %2659 = vmatpush1.msra.mxu0 %v292
    %2660 = vmatprep.subr.mxu0 0.0
    %2661 = vmatpush1.msra.mxu0 %v293
    %2662 = vmatprep.subr.mxu0 0.0
    %2663 = vmatpush1.msra.mxu0 %v294
    %2664 = vmatprep.mubr.f32.mxu0 %v1673
    %2665 = vmatmul.mubr.f32.gmra.mrb[0].mxu0 %v1671
    %v2666 = vpop.f32.mrb[0].mxu0
    %v2667 = vadd.f32 %v2597, %v2666
    %v2668 = vpop.f32.mrb[0].mxu0
    %2669 = vdwg.mxu0
    %2670 = vmatprep.subr.mxu0 0.0
    %2671 = vmatpush1.msra.mxu0 %v295
    %2672 = vmatprep.subr.mxu0 0.0
    %2673 = vmatpush1.msra.mxu0 %v296
    %2674 = vmatprep.subr.mxu0 0.0
    %2675 = vmatpush1.msra.mxu0 %v297
    %2676 = vmatprep.subr.mxu0 0.0
    %2677 = vmatpush1.msra.mxu0 %v298
    %2678 = vmatprep.subr.mxu0 0.0
    %2679 = vmatpush1.msra.mxu0 %v299
    %2680 = vmatprep.subr.mxu0 0.0
    %2681 = vmatpush1.msra.mxu0 %v300
    %2682 = vmatprep.subr.mxu0 0.0
    %2683 = vmatpush1.msra.mxu0 %v301
    %2684 = vmatprep.subr.mxu0 0.0
    %2685 = vmatpush1.msra.mxu0 %v302
    %2686 = vmatprep.subr.mxu0 0.0
    %2687 = vmatpush1.msra.mxu0 %v303
    %2688 = vmatprep.subr.mxu0 0.0
    %2689 = vmatpush1.msra.mxu0 %v304
    %2690 = vmatprep.subr.mxu0 0.0
    %2691 = vmatpush1.msra.mxu0 %v305
    %2692 = vmatprep.subr.mxu0 0.0
    %2693 = vmatpush1.msra.mxu0 %v306
    %2694 = vmatprep.subr.mxu0 0.0
    %2695 = vmatpush1.msra.mxu0 %v307
    %2696 = vmatprep.subr.mxu0 0.0
    %2697 = vmatpush1.msra.mxu0 %v308
    %2698 = vmatprep.subr.mxu0 0.0
    %2699 = vmatpush1.msra.mxu0 %v309
    %2700 = vmatprep.subr.mxu0 0.0
    %2701 = vmatpush1.msra.mxu0 %v310
    %2702 = vmatprep.subr.mxu0 0.0
    %2703 = vmatpush1.msra.mxu0 %v311
    %2704 = vmatprep.subr.mxu0 0.0
    %2705 = vmatpush1.msra.mxu0 %v312
    %2706 = vmatprep.subr.mxu0 0.0
    %2707 = vmatpush1.msra.mxu0 %v313
    %2708 = vmatprep.subr.mxu0 0.0
    %2709 = vmatpush1.msra.mxu0 %v314
    %2710 = vmatprep.subr.mxu0 0.0
    %2711 = vmatpush1.msra.mxu0 %v315
    %2712 = vmatprep.subr.mxu0 0.0
    %2713 = vmatpush1.msra.mxu0 %v316
    %2714 = vmatprep.subr.mxu0 0.0
    %2715 = vmatpush1.msra.mxu0 %v317
    %2716 = vmatprep.subr.mxu0 0.0
    %2717 = vmatpush1.msra.mxu0 %v318
    %2718 = vmatprep.subr.mxu0 0.0
    %2719 = vmatpush1.msra.mxu0 %v319
    %2720 = vmatprep.subr.mxu0 0.0
    %2721 = vmatpush1.msra.mxu0 %v320
    %2722 = vmatprep.subr.mxu0 0.0
    %2723 = vmatpush1.msra.mxu0 %v321
    %2724 = vmatprep.subr.mxu0 0.0
    %2725 = vmatpush1.msra.mxu0 %v322
    %2726 = vmatprep.subr.mxu0 0.0
    %2727 = vmatpush1.msra.mxu0 %v323
    %2728 = vmatprep.subr.mxu0 0.0
    %2729 = vmatpush1.msra.mxu0 %v324
    %2730 = vmatprep.subr.mxu0 0.0
    %2731 = vmatpush1.msra.mxu0 %v325
    %2732 = vmatprep.subr.mxu0 0.0
    %2733 = vmatpush1.msra.mxu0 %v326
    %2734 = vmatprep.mubr.f32.mxu0 %v1689
    %2735 = vmatmul.mubr.f32.gmra.mrb[0].mxu0 %v1681
    %v2736 = vpop.f32.mrb[0].mxu0
    %v2737 = vadd.f32 %v2667, %v2736
    %v2738 = vpop.f32.mrb[0].mxu0
    %2739 = vdwg.mxu0
    %2740 = vmatprep.subr.mxu0 0.0
    %2741 = vmatpush1.msra.mxu0 %v327
    %2742 = vmatprep.subr.mxu0 0.0
    %2743 = vmatpush1.msra.mxu0 %v328
    %2744 = vmatprep.subr.mxu0 0.0
    %2745 = vmatpush1.msra.mxu0 %v329
    %2746 = vmatprep.subr.mxu0 0.0
    %2747 = vmatpush1.msra.mxu0 %v330
    %2748 = vmatprep.subr.mxu0 0.0
    %2749 = vmatpush1.msra.mxu0 %v331
    %2750 = vmatprep.subr.mxu0 0.0
    %2751 = vmatpush1.msra.mxu0 %v332
    %2752 = vmatprep.subr.mxu0 0.0
    %2753 = vmatpush1.msra.mxu0 %v333
    %2754 = vmatprep.subr.mxu0 0.0
    %2755 = vmatpush1.msra.mxu0 %v334
    %2756 = vmatprep.subr.mxu0 0.0
    %2757 = vmatpush1.msra.mxu0 %v335
    %2758 = vmatprep.subr.mxu0 0.0
    %2759 = vmatpush1.msra.mxu0 %v336
    %2760 = vmatprep.subr.mxu0 0.0
    %2761 = vmatpush1.msra.mxu0 %v337
    %2762 = vmatprep.subr.mxu0 0.0
    %2763 = vmatpush1.msra.mxu0 %v338
    %2764 = vmatprep.subr.mxu0 0.0
    %2765 = vmatpush1.msra.mxu0 %v339
    %2766 = vmatprep.subr.mxu0 0.0
    %2767 = vmatpush1.msra.mxu0 %v340
    %2768 = vmatprep.subr.mxu0 0.0
    %2769 = vmatpush1.msra.mxu0 %v341
    %2770 = vmatprep.subr.mxu0 0.0
    %2771 = vmatpush1.msra.mxu0 %v342
    %2772 = vmatprep.subr.mxu0 0.0
    %2773 = vmatpush1.msra.mxu0 %v343
    %2774 = vmatprep.subr.mxu0 0.0
    %2775 = vmatpush1.msra.mxu0 %v344
    %2776 = vmatprep.subr.mxu0 0.0
    %2777 = vmatpush1.msra.mxu0 %v345
    %2778 = vmatprep.subr.mxu0 0.0
    %2779 = vmatpush1.msra.mxu0 %v346
    %2780 = vmatprep.subr.mxu0 0.0
    %2781 = vmatpush1.msra.mxu0 %v347
    %2782 = vmatprep.subr.mxu0 0.0
    %2783 = vmatpush1.msra.mxu0 %v348
    %2784 = vmatprep.subr.mxu0 0.0
    %2785 = vmatpush1.msra.mxu0 %v349
    %2786 = vmatprep.subr.mxu0 0.0
    %2787 = vmatpush1.msra.mxu0 %v350
    %2788 = vmatprep.subr.mxu0 0.0
    %2789 = vmatpush1.msra.mxu0 %v351
    %2790 = vmatprep.subr.mxu0 0.0
    %2791 = vmatpush1.msra.mxu0 %v352
    %2792 = vmatprep.subr.mxu0 0.0
    %2793 = vmatpush1.msra.mxu0 %v353
    %2794 = vmatprep.subr.mxu0 0.0
    %2795 = vmatpush1.msra.mxu0 %v354
    %2796 = vmatprep.subr.mxu0 0.0
    %2797 = vmatpush1.msra.mxu0 %v355
    %2798 = vmatprep.subr.mxu0 0.0
    %2799 = vmatpush1.msra.mxu0 %v356
    %2800 = vmatprep.subr.mxu0 0.0
    %2801 = vmatpush1.msra.mxu0 %v357
    %2802 = vmatprep.subr.mxu0 0.0
    %2803 = vmatpush1.msra.mxu0 %v358
    %2804 = vmatprep.mubr.f32.mxu0 %v1690
    %2805 = vmatmul.mubr.f32.gmra.mrb[0].mxu0 %v1688
    %v2806 = vpop.f32.mrb[0].mxu0
    %v2807 = vadd.f32 %v2737, %v2806
    %v2808 = vpop.f32.mrb[0].mxu0
    %2809 = vdwg.mxu0
    %2810 = vmatprep.subr.mxu0 0.0
    %2811 = vmatpush1.msra.mxu0 %v359
    %2812 = vmatprep.subr.mxu0 0.0
    %2813 = vmatpush1.msra.mxu0 %v360
    %2814 = vmatprep.subr.mxu0 0.0
    %2815 = vmatpush1.msra.mxu0 %v361
    %2816 = vmatprep.subr.mxu0 0.0
    %2817 = vmatpush1.msra.mxu0 %v362
    %2818 = vmatprep.subr.mxu0 0.0
    %2819 = vmatpush1.msra.mxu0 %v363
    %2820 = vmatprep.subr.mxu0 0.0
    %2821 = vmatpush1.msra.mxu0 %v364
    %2822 = vmatprep.subr.mxu0 0.0
    %2823 = vmatpush1.msra.mxu0 %v365
    %2824 = vmatprep.subr.mxu0 0.0
    %2825 = vmatpush1.msra.mxu0 %v366
    %2826 = vmatprep.subr.mxu0 0.0
    %2827 = vmatpush1.msra.mxu0 %v367
    %2828 = vmatprep.subr.mxu0 0.0
    %2829 = vmatpush1.msra.mxu0 %v368
    %2830 = vmatprep.subr.mxu0 0.0
    %2831 = vmatpush1.msra.mxu0 %v369
    %2832 = vmatprep.subr.mxu0 0.0
    %2833 = vmatpush1.msra.mxu0 %v370
    %2834 = vmatprep.subr.mxu0 0.0
    %2835 = vmatpush1.msra.mxu0 %v371
    %2836 = vmatprep.subr.mxu0 0.0
    %2837 = vmatpush1.msra.mxu0 %v372
    %2838 = vmatprep.subr.mxu0 0.0
    %2839 = vmatpush1.msra.mxu0 %v373
    %2840 = vmatprep.subr.mxu0 0.0
    %2841 = vmatpush1.msra.mxu0 %v374
    %2842 = vmatprep.subr.mxu0 0.0
    %2843 = vmatpush1.msra.mxu0 %v375
    %2844 = vmatprep.subr.mxu0 0.0
    %2845 = vmatpush1.msra.mxu0 %v376
    %2846 = vmatprep.subr.mxu0 0.0
    %2847 = vmatpush1.msra.mxu0 %v377
    %2848 = vmatprep.subr.mxu0 0.0
    %2849 = vmatpush1.msra.mxu0 %v378
    %2850 = vmatprep.subr.mxu0 0.0
    %2851 = vmatpush1.msra.mxu0 %v379
    %2852 = vmatprep.subr.mxu0 0.0
    %2853 = vmatpush1.msra.mxu0 %v380
    %2854 = vmatprep.subr.mxu0 0.0
    %2855 = vmatpush1.msra.mxu0 %v381
    %2856 = vmatprep.subr.mxu0 0.0
    %2857 = vmatpush1.msra.mxu0 %v382
    %2858 = vmatprep.subr.mxu0 0.0
    %2859 = vmatpush1.msra.mxu0 %v383
    %2860 = vmatprep.subr.mxu0 0.0
    %2861 = vmatpush1.msra.mxu0 %v384
    %2862 = vmatprep.subr.mxu0 0.0
    %2863 = vmatpush1.msra.mxu0 %v385
    %2864 = vmatprep.subr.mxu0 0.0
    %2865 = vmatpush1.msra.mxu0 %v386
    %2866 = vmatprep.subr.mxu0 0.0
    %2867 = vmatpush1.msra.mxu0 %v387
    %2868 = vmatprep.subr.mxu0 0.0
    %2869 = vmatpush1.msra.mxu0 %v388
    %2870 = vmatprep.subr.mxu0 0.0
    %2871 = vmatpush1.msra.mxu0 %v389
    %2872 = vmatprep.subr.mxu0 0.0
    %2873 = vmatpush1.msra.mxu0 %v390
    %2874 = vmatprep.mubr.f32.mxu0 %v1706
    %2875 = vmatmul.mubr.f32.gmra.mrb[0].mxu0 %v1698
    %v2876 = vpop.f32.mrb[0].mxu0
    %v2877 = vadd.f32 %v2807, %v2876
    %v2878 = vpop.f32.mrb[0].mxu0
    %2879 = vdwg.mxu0
    %2880 = vmatprep.subr.mxu0 0.0
    %2881 = vmatpush1.msra.mxu0 %v391
    %2882 = vmatprep.subr.mxu0 0.0
    %2883 = vmatpush1.msra.mxu0 %v392
    %2884 = vmatprep.subr.mxu0 0.0
    %2885 = vmatpush1.msra.mxu0 %v393
    %2886 = vmatprep.subr.mxu0 0.0
    %2887 = vmatpush1.msra.mxu0 %v394
    %2888 = vmatprep.subr.mxu0 0.0
    %2889 = vmatpush1.msra.mxu0 %v395
    %2890 = vmatprep.subr.mxu0 0.0
    %2891 = vmatpush1.msra.mxu0 %v396
    %2892 = vmatprep.subr.mxu0 0.0
    %2893 = vmatpush1.msra.mxu0 %v397
    %2894 = vmatprep.subr.mxu0 0.0
    %2895 = vmatpush1.msra.mxu0 %v398
    %2896 = vmatprep.subr.mxu0 0.0
    %2897 = vmatpush1.msra.mxu0 %v399
    %2898 = vmatprep.subr.mxu0 0.0
    %2899 = vmatpush1.msra.mxu0 %v400
    %2900 = vmatprep.subr.mxu0 0.0
    %2901 = vmatpush1.msra.mxu0 %v401
    %2902 = vmatprep.subr.mxu0 0.0
    %2903 = vmatpush1.msra.mxu0 %v402
    %2904 = vmatprep.subr.mxu0 0.0
    %2905 = vmatpush1.msra.mxu0 %v403
    %2906 = vmatprep.subr.mxu0 0.0
    %2907 = vmatpush1.msra.mxu0 %v404
    %2908 = vmatprep.subr.mxu0 0.0
    %2909 = vmatpush1.msra.mxu0 %v405
    %2910 = vmatprep.subr.mxu0 0.0
    %2911 = vmatpush1.msra.mxu0 %v406
    %2912 = vmatprep.subr.mxu0 0.0
    %2913 = vmatpush1.msra.mxu0 %v407
    %2914 = vmatprep.subr.mxu0 0.0
    %2915 = vmatpush1.msra.mxu0 %v408
    %2916 = vmatprep.subr.mxu0 0.0
    %2917 = vmatpush1.msra.mxu0 %v409
    %2918 = vmatprep.subr.mxu0 0.0
    %2919 = vmatpush1.msra.mxu0 %v410
    %2920 = vmatprep.subr.mxu0 0.0
    %2921 = vmatpush1.msra.mxu0 %v411
    %2922 = vmatprep.subr.mxu0 0.0
    %2923 = vmatpush1.msra.mxu0 %v412
    %2924 = vmatprep.subr.mxu0 0.0
    %2925 = vmatpush1.msra.mxu0 %v413
    %2926 = vmatprep.subr.mxu0 0.0
    %2927 = vmatpush1.msra.mxu0 %v414
    %2928 = vmatprep.subr.mxu0 0.0
    %2929 = vmatpush1.msra.mxu0 %v415
    %2930 = vmatprep.subr.mxu0 0.0
    %2931 = vmatpush1.msra.mxu0 %v416
    %2932 = vmatprep.subr.mxu0 0.0
    %2933 = vmatpush1.msra.mxu0 %v417
    %2934 = vmatprep.subr.mxu0 0.0
    %2935 = vmatpush1.msra.mxu0 %v418
    %2936 = vmatprep.subr.mxu0 0.0
    %2937 = vmatpush1.msra.mxu0 %v419
    %2938 = vmatprep.subr.mxu0 0.0
    %2939 = vmatpush1.msra.mxu0 %v420
    %2940 = vmatprep.subr.mxu0 0.0
    %2941 = vmatpush1.msra.mxu0 %v421
    %2942 = vmatprep.subr.mxu0 0.0
    %2943 = vmatpush1.msra.mxu0 %v422
    %2944 = vmatprep.mubr.f32.mxu0 %v1707
    %2945 = vmatmul.mubr.f32.gmra.mrb[0].mxu0 %v1705
    %v2946 = vpop.f32.mrb[0].mxu0
    %v2947 = vadd.f32 %v2877, %v2946
    %v2948 = vpop.f32.mrb[0].mxu0
    %2949 = vdwg.mxu0
    %2950 = vmatprep.subr.mxu0 0.0
    %2951 = vmatpush1.msra.mxu0 %v423
    %2952 = vmatprep.subr.mxu0 0.0
    %2953 = vmatpush1.msra.mxu0 %v424
    %2954 = vmatprep.subr.mxu0 0.0
    %2955 = vmatpush1.msra.mxu0 %v425
    %2956 = vmatprep.subr.mxu0 0.0
    %2957 = vmatpush1.msra.mxu0 %v426
    %2958 = vmatprep.subr.mxu0 0.0
    %2959 = vmatpush1.msra.mxu0 %v427
    %2960 = vmatprep.subr.mxu0 0.0
    %2961 = vmatpush1.msra.mxu0 %v428
    %2962 = vmatprep.subr.mxu0 0.0
    %2963 = vmatpush1.msra.mxu0 %v429
    %2964 = vmatprep.subr.mxu0 0.0
    %2965 = vmatpush1.msra.mxu0 %v430
    %2966 = vmatprep.subr.mxu0 0.0
    %2967 = vmatpush1.msra.mxu0 %v431
    %2968 = vmatprep.subr.mxu0 0.0
    %2969 = vmatpush1.msra.mxu0 %v432
    %2970 = vmatprep.subr.mxu0 0.0
    %2971 = vmatpush1.msra.mxu0 %v433
    %2972 = vmatprep.subr.mxu0 0.0
    %2973 = vmatpush1.msra.mxu0 %v434
    %2974 = vmatprep.subr.mxu0 0.0
    %2975 = vmatpush1.msra.mxu0 %v435
    %2976 = vmatprep.subr.mxu0 0.0
    %2977 = vmatpush1.msra.mxu0 %v436
    %2978 = vmatprep.subr.mxu0 0.0
    %2979 = vmatpush1.msra.mxu0 %v437
    %2980 = vmatprep.subr.mxu0 0.0
    %2981 = vmatpush1.msra.mxu0 %v438
    %2982 = vmatprep.subr.mxu0 0.0
    %2983 = vmatpush1.msra.mxu0 %v439
    %2984 = vmatprep.subr.mxu0 0.0
    %2985 = vmatpush1.msra.mxu0 %v440
    %2986 = vmatprep.subr.mxu0 0.0
    %2987 = vmatpush1.msra.mxu0 %v441
    %2988 = vmatprep.subr.mxu0 0.0
    %2989 = vmatpush1.msra.mxu0 %v442
    %2990 = vmatprep.subr.mxu0 0.0
    %2991 = vmatpush1.msra.mxu0 %v443
    %2992 = vmatprep.subr.mxu0 0.0
    %2993 = vmatpush1.msra.mxu0 %v444
    %2994 = vmatprep.subr.mxu0 0.0
    %2995 = vmatpush1.msra.mxu0 %v445
    %2996 = vmatprep.subr.mxu0 0.0
    %2997 = vmatpush1.msra.mxu0 %v446
    %2998 = vmatprep.subr.mxu0 0.0
    %2999 = vmatpush1.msra.mxu0 %v447
    %3000 = vmatprep.subr.mxu0 0.0
    %3001 = vmatpush1.msra.mxu0 %v448
    %3002 = vmatprep.subr.mxu0 0.0
    %3003 = vmatpush1.msra.mxu0 %v449
    %3004 = vmatprep.subr.mxu0 0.0
    %3005 = vmatpush1.msra.mxu0 %v450
    %3006 = vmatprep.subr.mxu0 0.0
    %3007 = vmatpush1.msra.mxu0 %v451
    %3008 = vmatprep.subr.mxu0 0.0
    %3009 = vmatpush1.msra.mxu0 %v452
    %3010 = vmatprep.subr.mxu0 0.0
    %3011 = vmatpush1.msra.mxu0 %v453
    %3012 = vmatprep.subr.mxu0 0.0
    %3013 = vmatpush1.msra.mxu0 %v454
    %3014 = vmatprep.mubr.f32.mxu0 %v1723
    %3015 = vmatmul.mubr.f32.gmra.mrb[0].mxu0 %v1715
    %v3016 = vpop.f32.mrb[0].mxu0
    %v3017 = vadd.f32 %v2947, %v3016
    %v3018 = vpop.f32.mrb[0].mxu0
    %3019 = vdwg.mxu0
    %3020 = vmatprep.subr.mxu0 0.0
    %3021 = vmatpush1.msra.mxu0 %v455
    %3022 = vmatprep.subr.mxu0 0.0
    %3023 = vmatpush1.msra.mxu0 %v456
    %3024 = vmatprep.subr.mxu0 0.0
    %3025 = vmatpush1.msra.mxu0 %v457
    %3026 = vmatprep.subr.mxu0 0.0
    %3027 = vmatpush1.msra.mxu0 %v458
    %3028 = vmatprep.subr.mxu0 0.0
    %3029 = vmatpush1.msra.mxu0 %v459
    %3030 = vmatprep.subr.mxu0 0.0
    %3031 = vmatpush1.msra.mxu0 %v460
    %3032 = vmatprep.subr.mxu0 0.0
    %3033 = vmatpush1.msra.mxu0 %v461
    %3034 = vmatprep.subr.mxu0 0.0
    %3035 = vmatpush1.msra.mxu0 %v462
    %3036 = vmatprep.subr.mxu0 0.0
    %3037 = vmatpush1.msra.mxu0 %v463
    %3038 = vmatprep.subr.mxu0 0.0
    %3039 = vmatpush1.msra.mxu0 %v464
    %3040 = vmatprep.subr.mxu0 0.0
    %3041 = vmatpush1.msra.mxu0 %v465
    %3042 = vmatprep.subr.mxu0 0.0
    %3043 = vmatpush1.msra.mxu0 %v466
    %3044 = vmatprep.subr.mxu0 0.0
    %3045 = vmatpush1.msra.mxu0 %v467
    %3046 = vmatprep.subr.mxu0 0.0
    %3047 = vmatpush1.msra.mxu0 %v468
    %3048 = vmatprep.subr.mxu0 0.0
    %3049 = vmatpush1.msra.mxu0 %v469
    %3050 = vmatprep.subr.mxu0 0.0
    %3051 = vmatpush1.msra.mxu0 %v470
    %3052 = vmatprep.subr.mxu0 0.0
    %3053 = vmatpush1.msra.mxu0 %v471
    %3054 = vmatprep.subr.mxu0 0.0
    %3055 = vmatpush1.msra.mxu0 %v472
    %3056 = vmatprep.subr.mxu0 0.0
    %3057 = vmatpush1.msra.mxu0 %v473
    %3058 = vmatprep.subr.mxu0 0.0
    %3059 = vmatpush1.msra.mxu0 %v474
    %3060 = vmatprep.subr.mxu0 0.0
    %3061 = vmatpush1.msra.mxu0 %v475
    %3062 = vmatprep.subr.mxu0 0.0
    %3063 = vmatpush1.msra.mxu0 %v476
    %3064 = vmatprep.subr.mxu0 0.0
    %3065 = vmatpush1.msra.mxu0 %v477
    %3066 = vmatprep.subr.mxu0 0.0
    %3067 = vmatpush1.msra.mxu0 %v478
    %3068 = vmatprep.subr.mxu0 0.0
    %3069 = vmatpush1.msra.mxu0 %v479
    %3070 = vmatprep.subr.mxu0 0.0
    %3071 = vmatpush1.msra.mxu0 %v480
    %3072 = vmatprep.subr.mxu0 0.0
    %3073 = vmatpush1.msra.mxu0 %v481
    %3074 = vmatprep.subr.mxu0 0.0
    %3075 = vmatpush1.msra.mxu0 %v482
    %3076 = vmatprep.subr.mxu0 0.0
    %3077 = vmatpush1.msra.mxu0 %v483
    %3078 = vmatprep.subr.mxu0 0.0
    %3079 = vmatpush1.msra.mxu0 %v484
    %3080 = vmatprep.subr.mxu0 0.0
    %3081 = vmatpush1.msra.mxu0 %v485
    %3082 = vmatprep.subr.mxu0 0.0
    %3083 = vmatpush1.msra.mxu0 %v486
    %3084 = vmatprep.mubr.f32.mxu0 %v1724
    %3085 = vmatmul.mubr.f32.gmra.mrb[0].mxu0 %v1722
    %v3086 = vpop.f32.mrb[0].mxu0
    %v3087 = vadd.f32 %v3017, %v3086
    %v3088 = vpop.f32.mrb[0].mxu0
    %3089 = vdwg.mxu0
    %3090 = vmatprep.subr.mxu0 0.0
    %3091 = vmatpush1.msra.mxu0 %v487
    %3092 = vmatprep.subr.mxu0 0.0
    %3093 = vmatpush1.msra.mxu0 %v488
    %3094 = vmatprep.subr.mxu0 0.0
    %3095 = vmatpush1.msra.mxu0 %v489
    %3096 = vmatprep.subr.mxu0 0.0
    %3097 = vmatpush1.msra.mxu0 %v490
    %3098 = vmatprep.subr.mxu0 0.0
    %3099 = vmatpush1.msra.mxu0 %v491
    %3100 = vmatprep.subr.mxu0 0.0
    %3101 = vmatpush1.msra.mxu0 %v492
    %3102 = vmatprep.subr.mxu0 0.0
    %3103 = vmatpush1.msra.mxu0 %v493
    %3104 = vmatprep.subr.mxu0 0.0
    %3105 = vmatpush1.msra.mxu0 %v494
    %3106 = vmatprep.subr.mxu0 0.0
    %3107 = vmatpush1.msra.mxu0 %v495
    %3108 = vmatprep.subr.mxu0 0.0
    %3109 = vmatpush1.msra.mxu0 %v496
    %3110 = vmatprep.subr.mxu0 0.0
    %3111 = vmatpush1.msra.mxu0 %v497
    %3112 = vmatprep.subr.mxu0 0.0
    %3113 = vmatpush1.msra.mxu0 %v498
    %3114 = vmatprep.subr.mxu0 0.0
    %3115 = vmatpush1.msra.mxu0 %v499
    %3116 = vmatprep.subr.mxu0 0.0
    %3117 = vmatpush1.msra.mxu0 %v500
    %3118 = vmatprep.subr.mxu0 0.0
    %3119 = vmatpush1.msra.mxu0 %v501
    %3120 = vmatprep.subr.mxu0 0.0
    %3121 = vmatpush1.msra.mxu0 %v502
    %3122 = vmatprep.subr.mxu0 0.0
    %3123 = vmatpush1.msra.mxu0 %v503
    %3124 = vmatprep.subr.mxu0 0.0
    %3125 = vmatpush1.msra.mxu0 %v504
    %3126 = vmatprep.subr.mxu0 0.0
    %3127 = vmatpush1.msra.mxu0 %v505
    %3128 = vmatprep.subr.mxu0 0.0
    %3129 = vmatpush1.msra.mxu0 %v506
    %3130 = vmatprep.subr.mxu0 0.0
    %3131 = vmatpush1.msra.mxu0 %v507
    %3132 = vmatprep.subr.mxu0 0.0
    %3133 = vmatpush1.msra.mxu0 %v508
    %3134 = vmatprep.subr.mxu0 0.0
    %3135 = vmatpush1.msra.mxu0 %v509
    %3136 = vmatprep.subr.mxu0 0.0
    %3137 = vmatpush1.msra.mxu0 %v510
    %3138 = vmatprep.subr.mxu0 0.0
    %3139 = vmatpush1.msra.mxu0 %v511
    %3140 = vmatprep.subr.mxu0 0.0
    %3141 = vmatpush1.msra.mxu0 %v512
    %3142 = vmatprep.subr.mxu0 0.0
    %3143 = vmatpush1.msra.mxu0 %v513
    %3144 = vmatprep.subr.mxu0 0.0
    %3145 = vmatpush1.msra.mxu0 %v514
    %3146 = vmatprep.subr.mxu0 0.0
    %3147 = vmatpush1.msra.mxu0 %v515
    %3148 = vmatprep.subr.mxu0 0.0
    %3149 = vmatpush1.msra.mxu0 %v516
    %3150 = vmatprep.subr.mxu0 0.0
    %3151 = vmatpush1.msra.mxu0 %v517
    %3152 = vmatprep.subr.mxu0 0.0
    %3153 = vmatpush1.msra.mxu0 %v518
    %3154 = vmatprep.mubr.f32.mxu0 %v1740
    %3155 = vmatmul.mubr.f32.gmra.mrb[0].mxu0 %v1732
    %v3156 = vpop.f32.mrb[0].mxu0
    %v3157 = vadd.f32 %v3087, %v3156
    %v3158 = vpop.f32.mrb[0].mxu0
    %3159 = vdwg.mxu0
    %3160 = vmatprep.subr.mxu0 0.0
    %3161 = vmatpush1.msra.mxu0 %v519
    %3162 = vmatprep.subr.mxu0 0.0
    %3163 = vmatpush1.msra.mxu0 %v520
    %3164 = vmatprep.subr.mxu0 0.0
    %3165 = vmatpush1.msra.mxu0 %v521
    %3166 = vmatprep.subr.mxu0 0.0
    %3167 = vmatpush1.msra.mxu0 %v522
    %3168 = vmatprep.subr.mxu0 0.0
    %3169 = vmatpush1.msra.mxu0 %v523
    %3170 = vmatprep.subr.mxu0 0.0
    %3171 = vmatpush1.msra.mxu0 %v524
    %3172 = vmatprep.subr.mxu0 0.0
    %3173 = vmatpush1.msra.mxu0 %v525
    %3174 = vmatprep.subr.mxu0 0.0
    %3175 = vmatpush1.msra.mxu0 %v526
    %3176 = vmatprep.subr.mxu0 0.0
    %3177 = vmatpush1.msra.mxu0 %v527
    %3178 = vmatprep.subr.mxu0 0.0
    %3179 = vmatpush1.msra.mxu0 %v528
    %3180 = vmatprep.subr.mxu0 0.0
    %3181 = vmatpush1.msra.mxu0 %v529
    %3182 = vmatprep.subr.mxu0 0.0
    %3183 = vmatpush1.msra.mxu0 %v530
    %3184 = vmatprep.subr.mxu0 0.0
    %3185 = vmatpush1.msra.mxu0 %v531
    %3186 = vmatprep.subr.mxu0 0.0
    %3187 = vmatpush1.msra.mxu0 %v532
    %3188 = vmatprep.subr.mxu0 0.0
    %3189 = vmatpush1.msra.mxu0 %v533
    %3190 = vmatprep.subr.mxu0 0.0
    %3191 = vmatpush1.msra.mxu0 %v534
    %3192 = vmatprep.subr.mxu0 0.0
    %3193 = vmatpush1.msra.mxu0 %v535
    %3194 = vmatprep.subr.mxu0 0.0
    %3195 = vmatpush1.msra.mxu0 %v536
    %3196 = vmatprep.subr.mxu0 0.0
    %3197 = vmatpush1.msra.mxu0 %v537
    %3198 = vmatprep.subr.mxu0 0.0
    %3199 = vmatpush1.msra.mxu0 %v538
    %3200 = vmatprep.subr.mxu0 0.0
    %3201 = vmatpush1.msra.mxu0 %v539
    %3202 = vmatprep.subr.mxu0 0.0
    %3203 = vmatpush1.msra.mxu0 %v540
    %3204 = vmatprep.subr.mxu0 0.0
    %3205 = vmatpush1.msra.mxu0 %v541
    %3206 = vmatprep.subr.mxu0 0.0
    %3207 = vmatpush1.msra.mxu0 %v542
    %3208 = vmatprep.subr.mxu0 0.0
    %3209 = vmatpush1.msra.mxu0 %v543
    %3210 = vmatprep.subr.mxu0 0.0
    %3211 = vmatpush1.msra.mxu0 %v544
    %3212 = vmatprep.subr.mxu0 0.0
    %3213 = vmatpush1.msra.mxu0 %v545
    %3214 = vmatprep.subr.mxu0 0.0
    %3215 = vmatpush1.msra.mxu0 %v546
    %3216 = vmatprep.subr.mxu0 0.0
    %3217 = vmatpush1.msra.mxu0 %v547
    %3218 = vmatprep.subr.mxu0 0.0
    %3219 = vmatpush1.msra.mxu0 %v548
    %3220 = vmatprep.subr.mxu0 0.0
    %3221 = vmatpush1.msra.mxu0 %v549
    %3222 = vmatprep.subr.mxu0 0.0
    %3223 = vmatpush1.msra.mxu0 %v550
    %3224 = vmatprep.mubr.f32.mxu0 %v1741
    %3225 = vmatmul.mubr.f32.gmra.mrb[0].mxu0 %v1739
    %v3226 = vpop.f32.mrb[0].mxu0
    %v3227 = vadd.f32 %v3157, %v3226
    %v3228 = vpop.f32.mrb[0].mxu0
    %3229 = vdwg.mxu0
    %3230 = vmatprep.subr.mxu0 0.0
    %3231 = vmatpush1.msra.mxu0 %v551
    %3232 = vmatprep.subr.mxu0 0.0
    %3233 = vmatpush1.msra.mxu0 %v552
    %3234 = vmatprep.subr.mxu0 0.0
    %3235 = vmatpush1.msra.mxu0 %v553
    %3236 = vmatprep.subr.mxu0 0.0
    %3237 = vmatpush1.msra.mxu0 %v554
    %3238 = vmatprep.subr.mxu0 0.0
    %3239 = vmatpush1.msra.mxu0 %v555
    %3240 = vmatprep.subr.mxu0 0.0
    %3241 = vmatpush1.msra.mxu0 %v556
    %3242 = vmatprep.subr.mxu0 0.0
    %3243 = vmatpush1.msra.mxu0 %v557
    %3244 = vmatprep.subr.mxu0 0.0
    %3245 = vmatpush1.msra.mxu0 %v558
    %3246 = vmatprep.subr.mxu0 0.0
    %3247 = vmatpush1.msra.mxu0 %v559
    %3248 = vmatprep.subr.mxu0 0.0
    %3249 = vmatpush1.msra.mxu0 %v560
    %3250 = vmatprep.subr.mxu0 0.0
    %3251 = vmatpush1.msra.mxu0 %v561
    %3252 = vmatprep.subr.mxu0 0.0
    %3253 = vmatpush1.msra.mxu0 %v562
    %3254 = vmatprep.subr.mxu0 0.0
    %3255 = vmatpush1.msra.mxu0 %v563
    %3256 = vmatprep.subr.mxu0 0.0
    %3257 = vmatpush1.msra.mxu0 %v564
    %3258 = vmatprep.subr.mxu0 0.0
    %3259 = vmatpush1.msra.mxu0 %v565
    %3260 = vmatprep.subr.mxu0 0.0
    %3261 = vmatpush1.msra.mxu0 %v566
    %3262 = vmatprep.subr.mxu0 0.0
    %3263 = vmatpush1.msra.mxu0 %v567
    %3264 = vmatprep.subr.mxu0 0.0
    %3265 = vmatpush1.msra.mxu0 %v568
    %3266 = vmatprep.subr.mxu0 0.0
    %3267 = vmatpush1.msra.mxu0 %v569
    %3268 = vmatprep.subr.mxu0 0.0
    %3269 = vmatpush1.msra.mxu0 %v570
    %3270 = vmatprep.subr.mxu0 0.0
    %3271 = vmatpush1.msra.mxu0 %v571
    %3272 = vmatprep.subr.mxu0 0.0
    %3273 = vmatpush1.msra.mxu0 %v572
    %3274 = vmatprep.subr.mxu0 0.0
    %3275 = vmatpush1.msra.mxu0 %v573
    %3276 = vmatprep.subr.mxu0 0.0
    %3277 = vmatpush1.msra.mxu0 %v574
    %3278 = vmatprep.subr.mxu0 0.0
    %3279 = vmatpush1.msra.mxu0 %v575
    %3280 = vmatprep.subr.mxu0 0.0
    %3281 = vmatpush1.msra.mxu0 %v576
    %3282 = vmatprep.subr.mxu0 0.0
    %3283 = vmatpush1.msra.mxu0 %v577
    %3284 = vmatprep.subr.mxu0 0.0
    %3285 = vmatpush1.msra.mxu0 %v578
    %3286 = vmatprep.subr.mxu0 0.0
    %3287 = vmatpush1.msra.mxu0 %v579
    %3288 = vmatprep.subr.mxu0 0.0
    %3289 = vmatpush1.msra.mxu0 %v580
    %3290 = vmatprep.subr.mxu0 0.0
    %3291 = vmatpush1.msra.mxu0 %v581
    %3292 = vmatprep.subr.mxu0 0.0
    %3293 = vmatpush1.msra.mxu0 %v582
    %3294 = vmatprep.mubr.f32.mxu0 %v1757
    %3295 = vmatmul.mubr.f32.gmra.mrb[0].mxu0 %v1749
    %v3296 = vpop.f32.mrb[0].mxu0
    %v3297 = vadd.f32 %v3227, %v3296
    %v3298 = vpop.f32.mrb[0].mxu0
    %3299 = vdwg.mxu0
    %3300 = vmatprep.subr.mxu0 0.0
    %3301 = vmatpush1.msra.mxu0 %v583
    %3302 = vmatprep.subr.mxu0 0.0
    %3303 = vmatpush1.msra.mxu0 %v584
    %3304 = vmatprep.subr.mxu0 0.0
    %3305 = vmatpush1.msra.mxu0 %v585
    %3306 = vmatprep.subr.mxu0 0.0
    %3307 = vmatpush1.msra.mxu0 %v586
    %3308 = vmatprep.subr.mxu0 0.0
    %3309 = vmatpush1.msra.mxu0 %v587
    %3310 = vmatprep.subr.mxu0 0.0
    %3311 = vmatpush1.msra.mxu0 %v588
    %3312 = vmatprep.subr.mxu0 0.0
    %3313 = vmatpush1.msra.mxu0 %v589
    %3314 = vmatprep.subr.mxu0 0.0
    %3315 = vmatpush1.msra.mxu0 %v590
    %3316 = vmatprep.subr.mxu0 0.0
    %3317 = vmatpush1.msra.mxu0 %v591
    %3318 = vmatprep.subr.mxu0 0.0
    %3319 = vmatpush1.msra.mxu0 %v592
    %3320 = vmatprep.subr.mxu0 0.0
    %3321 = vmatpush1.msra.mxu0 %v593
    %3322 = vmatprep.subr.mxu0 0.0
    %3323 = vmatpush1.msra.mxu0 %v594
    %3324 = vmatprep.subr.mxu0 0.0
    %3325 = vmatpush1.msra.mxu0 %v595
    %3326 = vmatprep.subr.mxu0 0.0
    %3327 = vmatpush1.msra.mxu0 %v596
    %3328 = vmatprep.subr.mxu0 0.0
    %3329 = vmatpush1.msra.mxu0 %v597
    %3330 = vmatprep.subr.mxu0 0.0
    %3331 = vmatpush1.msra.mxu0 %v598
    %3332 = vmatprep.subr.mxu0 0.0
    %3333 = vmatpush1.msra.mxu0 %v599
    %3334 = vmatprep.subr.mxu0 0.0
    %3335 = vmatpush1.msra.mxu0 %v600
    %3336 = vmatprep.subr.mxu0 0.0
    %3337 = vmatpush1.msra.mxu0 %v601
    %3338 = vmatprep.subr.mxu0 0.0
    %3339 = vmatpush1.msra.mxu0 %v602
    %3340 = vmatprep.subr.mxu0 0.0
    %3341 = vmatpush1.msra.mxu0 %v603
    %3342 = vmatprep.subr.mxu0 0.0
    %3343 = vmatpush1.msra.mxu0 %v604
    %3344 = vmatprep.subr.mxu0 0.0
    %3345 = vmatpush1.msra.mxu0 %v605
    %3346 = vmatprep.subr.mxu0 0.0
    %3347 = vmatpush1.msra.mxu0 %v606
    %3348 = vmatprep.subr.mxu0 0.0
    %3349 = vmatpush1.msra.mxu0 %v607
    %3350 = vmatprep.subr.mxu0 0.0
    %3351 = vmatpush1.msra.mxu0 %v608
    %3352 = vmatprep.subr.mxu0 0.0
    %3353 = vmatpush1.msra.mxu0 %v609
    %3354 = vmatprep.subr.mxu0 0.0
    %3355 = vmatpush1.msra.mxu0 %v610
    %3356 = vmatprep.subr.mxu0 0.0
    %3357 = vmatpush1.msra.mxu0 %v611
    %3358 = vmatprep.subr.mxu0 0.0
    %3359 = vmatpush1.msra.mxu0 %v612
    %3360 = vmatprep.subr.mxu0 0.0
    %3361 = vmatpush1.msra.mxu0 %v613
    %3362 = vmatprep.subr.mxu0 0.0
    %3363 = vmatpush1.msra.mxu0 %v614
    %3364 = vmatprep.mubr.f32.mxu0 %v1758
    %3365 = vmatmul.mubr.f32.gmra.mrb[0].mxu0 %v1756
    %v3366 = vpop.f32.mrb[0].mxu0
    %v3367 = vadd.f32 %v3297, %v3366
    %v3368 = vpop.f32.mrb[0].mxu0
    %3369 = vdwg.mxu0
    %3370 = vmatprep.subr.mxu0 0.0
    %3371 = vmatpush1.msra.mxu0 %v615
    %3372 = vmatprep.subr.mxu0 0.0
    %3373 = vmatpush1.msra.mxu0 %v616
    %3374 = vmatprep.subr.mxu0 0.0
    %3375 = vmatpush1.msra.mxu0 %v617
    %3376 = vmatprep.subr.mxu0 0.0
    %3377 = vmatpush1.msra.mxu0 %v618
    %3378 = vmatprep.subr.mxu0 0.0
    %3379 = vmatpush1.msra.mxu0 %v619
    %3380 = vmatprep.subr.mxu0 0.0
    %3381 = vmatpush1.msra.mxu0 %v620
    %3382 = vmatprep.subr.mxu0 0.0
    %3383 = vmatpush1.msra.mxu0 %v621
    %3384 = vmatprep.subr.mxu0 0.0
    %3385 = vmatpush1.msra.mxu0 %v622
    %3386 = vmatprep.subr.mxu0 0.0
    %3387 = vmatpush1.msra.mxu0 %v623
    %3388 = vmatprep.subr.mxu0 0.0
    %3389 = vmatpush1.msra.mxu0 %v624
    %3390 = vmatprep.subr.mxu0 0.0
    %3391 = vmatpush1.msra.mxu0 %v625
    %3392 = vmatprep.subr.mxu0 0.0
    %3393 = vmatpush1.msra.mxu0 %v626
    %3394 = vmatprep.subr.mxu0 0.0
    %3395 = vmatpush1.msra.mxu0 %v627
    %3396 = vmatprep.subr.mxu0 0.0
    %3397 = vmatpush1.msra.mxu0 %v628
    %3398 = vmatprep.subr.mxu0 0.0
    %3399 = vmatpush1.msra.mxu0 %v629
    %3400 = vmatprep.subr.mxu0 0.0
    %3401 = vmatpush1.msra.mxu0 %v630
    %3402 = vmatprep.subr.mxu0 0.0
    %3403 = vmatpush1.msra.mxu0 %v631
    %3404 = vmatprep.subr.mxu0 0.0
    %3405 = vmatpush1.msra.mxu0 %v632
    %3406 = vmatprep.subr.mxu0 0.0
    %3407 = vmatpush1.msra.mxu0 %v633
    %3408 = vmatprep.subr.mxu0 0.0
    %3409 = vmatpush1.msra.mxu0 %v634
    %3410 = vmatprep.subr.mxu0 0.0
    %3411 = vmatpush1.msra.mxu0 %v635
    %3412 = vmatprep.subr.mxu0 0.0
    %3413 = vmatpush1.msra.mxu0 %v636
    %3414 = vmatprep.subr.mxu0 0.0
    %3415 = vmatpush1.msra.mxu0 %v637
    %3416 = vmatprep.subr.mxu0 0.0
    %3417 = vmatpush1.msra.mxu0 %v638
    %3418 = vmatprep.subr.mxu0 0.0
    %3419 = vmatpush1.msra.mxu0 %v639
    %3420 = vmatprep.subr.mxu0 0.0
    %3421 = vmatpush1.msra.mxu0 %v640
    %3422 = vmatprep.subr.mxu0 0.0
    %3423 = vmatpush1.msra.mxu0 %v641
    %3424 = vmatprep.subr.mxu0 0.0
    %3425 = vmatpush1.msra.mxu0 %v642
    %3426 = vmatprep.subr.mxu0 0.0
    %3427 = vmatpush1.msra.mxu0 %v643
    %3428 = vmatprep.subr.mxu0 0.0
    %3429 = vmatpush1.msra.mxu0 %v644
    %3430 = vmatprep.subr.mxu0 0.0
    %3431 = vmatpush1.msra.mxu0 %v645
    %3432 = vmatprep.subr.mxu0 0.0
    %3433 = vmatpush1.msra.mxu0 %v646
    %3434 = vmatprep.mubr.f32.mxu0 %v1774
    %3435 = vmatmul.mubr.f32.gmra.mrb[0].mxu0 %v1766
    %v3436 = vpop.f32.mrb[0].mxu0
    %v3437 = vadd.f32 %v3367, %v3436
    %v3438 = vpop.f32.mrb[0].mxu0
    %3439 = vdwg.mxu0
    %3440 = vmatprep.subr.mxu0 0.0
    %3441 = vmatpush1.msra.mxu0 %v647
    %3442 = vmatprep.subr.mxu0 0.0
    %3443 = vmatpush1.msra.mxu0 %v648
    %3444 = vmatprep.subr.mxu0 0.0
    %3445 = vmatpush1.msra.mxu0 %v649
    %3446 = vmatprep.subr.mxu0 0.0
    %3447 = vmatpush1.msra.mxu0 %v650
    %3448 = vmatprep.subr.mxu0 0.0
    %3449 = vmatpush1.msra.mxu0 %v651
    %3450 = vmatprep.subr.mxu0 0.0
    %3451 = vmatpush1.msra.mxu0 %v652
    %3452 = vmatprep.subr.mxu0 0.0
    %3453 = vmatpush1.msra.mxu0 %v653
    %3454 = vmatprep.subr.mxu0 0.0
    %3455 = vmatpush1.msra.mxu0 %v654
    %3456 = vmatprep.subr.mxu0 0.0
    %3457 = vmatpush1.msra.mxu0 %v655
    %3458 = vmatprep.subr.mxu0 0.0
    %3459 = vmatpush1.msra.mxu0 %v656
    %3460 = vmatprep.subr.mxu0 0.0
    %3461 = vmatpush1.msra.mxu0 %v657
    %3462 = vmatprep.subr.mxu0 0.0
    %3463 = vmatpush1.msra.mxu0 %v658
    %3464 = vmatprep.subr.mxu0 0.0
    %3465 = vmatpush1.msra.mxu0 %v659
    %3466 = vmatprep.subr.mxu0 0.0
    %3467 = vmatpush1.msra.mxu0 %v660
    %3468 = vmatprep.subr.mxu0 0.0
    %3469 = vmatpush1.msra.mxu0 %v661
    %3470 = vmatprep.subr.mxu0 0.0
    %3471 = vmatpush1.msra.mxu0 %v662
    %3472 = vmatprep.subr.mxu0 0.0
    %3473 = vmatpush1.msra.mxu0 %v663
    %3474 = vmatprep.subr.mxu0 0.0
    %3475 = vmatpush1.msra.mxu0 %v664
    %3476 = vmatprep.subr.mxu0 0.0
    %3477 = vmatpush1.msra.mxu0 %v665
    %3478 = vmatprep.subr.mxu0 0.0
    %3479 = vmatpush1.msra.mxu0 %v666
    %3480 = vmatprep.subr.mxu0 0.0
    %3481 = vmatpush1.msra.mxu0 %v667
    %3482 = vmatprep.subr.mxu0 0.0
    %3483 = vmatpush1.msra.mxu0 %v668
    %3484 = vmatprep.subr.mxu0 0.0
    %3485 = vmatpush1.msra.mxu0 %v669
    %3486 = vmatprep.subr.mxu0 0.0
    %3487 = vmatpush1.msra.mxu0 %v670
    %3488 = vmatprep.subr.mxu0 0.0
    %3489 = vmatpush1.msra.mxu0 %v671
    %3490 = vmatprep.subr.mxu0 0.0
    %3491 = vmatpush1.msra.mxu0 %v672
    %3492 = vmatprep.subr.mxu0 0.0
    %3493 = vmatpush1.msra.mxu0 %v673
    %3494 = vmatprep.subr.mxu0 0.0
    %3495 = vmatpush1.msra.mxu0 %v674
    %3496 = vmatprep.subr.mxu0 0.0
    %3497 = vmatpush1.msra.mxu0 %v675
    %3498 = vmatprep.subr.mxu0 0.0
    %3499 = vmatpush1.msra.mxu0 %v676
    %3500 = vmatprep.subr.mxu0 0.0
    %3501 = vmatpush1.msra.mxu0 %v677
    %3502 = vmatprep.subr.mxu0 0.0
    %3503 = vmatpush1.msra.mxu0 %v678
    %3504 = vmatprep.mubr.f32.mxu0 %v1775
    %3505 = vmatmul.mubr.f32.gmra.mrb[0].mxu0 %v1773
    %v3506 = vpop.f32.mrb[0].mxu0
    %v3507 = vadd.f32 %v3437, %v3506
    %v3508 = vpop.f32.mrb[0].mxu0
    %3509 = vdwg.mxu0
    %3510 = vmatprep.subr.mxu0 0.0
    %3511 = vmatpush1.msra.mxu0 %v679
    %3512 = vmatprep.subr.mxu0 0.0
    %3513 = vmatpush1.msra.mxu0 %v680
    %3514 = vmatprep.subr.mxu0 0.0
    %3515 = vmatpush1.msra.mxu0 %v681
    %3516 = vmatprep.subr.mxu0 0.0
    %3517 = vmatpush1.msra.mxu0 %v682
    %3518 = vmatprep.subr.mxu0 0.0
    %3519 = vmatpush1.msra.mxu0 %v683
    %3520 = vmatprep.subr.mxu0 0.0
    %3521 = vmatpush1.msra.mxu0 %v684
    %3522 = vmatprep.subr.mxu0 0.0
    %3523 = vmatpush1.msra.mxu0 %v685
    %3524 = vmatprep.subr.mxu0 0.0
    %3525 = vmatpush1.msra.mxu0 %v686
    %3526 = vmatprep.subr.mxu0 0.0
    %3527 = vmatpush1.msra.mxu0 %v687
    %3528 = vmatprep.subr.mxu0 0.0
    %3529 = vmatpush1.msra.mxu0 %v688
    %3530 = vmatprep.subr.mxu0 0.0
    %3531 = vmatpush1.msra.mxu0 %v689
    %3532 = vmatprep.subr.mxu0 0.0
    %3533 = vmatpush1.msra.mxu0 %v690
    %3534 = vmatprep.subr.mxu0 0.0
    %3535 = vmatpush1.msra.mxu0 %v691
    %3536 = vmatprep.subr.mxu0 0.0
    %3537 = vmatpush1.msra.mxu0 %v692
    %3538 = vmatprep.subr.mxu0 0.0
    %3539 = vmatpush1.msra.mxu0 %v693
    %3540 = vmatprep.subr.mxu0 0.0
    %3541 = vmatpush1.msra.mxu0 %v694
    %3542 = vmatprep.subr.mxu0 0.0
    %3543 = vmatpush1.msra.mxu0 %v695
    %3544 = vmatprep.subr.mxu0 0.0
    %3545 = vmatpush1.msra.mxu0 %v696
    %3546 = vmatprep.subr.mxu0 0.0
    %3547 = vmatpush1.msra.mxu0 %v697
    %3548 = vmatprep.subr.mxu0 0.0
    %3549 = vmatpush1.msra.mxu0 %v698
    %3550 = vmatprep.subr.mxu0 0.0
    %3551 = vmatpush1.msra.mxu0 %v699
    %3552 = vmatprep.subr.mxu0 0.0
    %3553 = vmatpush1.msra.mxu0 %v700
    %3554 = vmatprep.subr.mxu0 0.0
    %3555 = vmatpush1.msra.mxu0 %v701
    %3556 = vmatprep.subr.mxu0 0.0
    %3557 = vmatpush1.msra.mxu0 %v702
    %3558 = vmatprep.subr.mxu0 0.0
    %3559 = vmatpush1.msra.mxu0 %v703
    %3560 = vmatprep.subr.mxu0 0.0
    %3561 = vmatpush1.msra.mxu0 %v704
    %3562 = vmatprep.subr.mxu0 0.0
    %3563 = vmatpush1.msra.mxu0 %v705
    %3564 = vmatprep.subr.mxu0 0.0
    %3565 = vmatpush1.msra.mxu0 %v706
    %3566 = vmatprep.subr.mxu0 0.0
    %3567 = vmatpush1.msra.mxu0 %v707
    %3568 = vmatprep.subr.mxu0 0.0
    %3569 = vmatpush1.msra.mxu0 %v708
    %3570 = vmatprep.subr.mxu0 0.0
    %3571 = vmatpush1.msra.mxu0 %v709
    %3572 = vmatprep.subr.mxu0 0.0
    %3573 = vmatpush1.msra.mxu0 %v710
    %3574 = vmatprep.mubr.f32.mxu0 %v1791
    %3575 = vmatmul.mubr.f32.gmra.mrb[0].mxu0 %v1783
    %v3576 = vpop.f32.mrb[0].mxu0
    %v3577 = vadd.f32 %v3507, %v3576
    %v3578 = vpop.f32.mrb[0].mxu0
    %3579 = vdwg.mxu0
    %3580 = vmatprep.subr.mxu0 0.0
    %3581 = vmatpush1.msra.mxu0 %v711
    %3582 = vmatprep.subr.mxu0 0.0
    %3583 = vmatpush1.msra.mxu0 %v712
    %3584 = vmatprep.subr.mxu0 0.0
    %3585 = vmatpush1.msra.mxu0 %v713
    %3586 = vmatprep.subr.mxu0 0.0
    %3587 = vmatpush1.msra.mxu0 %v714
    %3588 = vmatprep.subr.mxu0 0.0
    %3589 = vmatpush1.msra.mxu0 %v715
    %3590 = vmatprep.subr.mxu0 0.0
    %3591 = vmatpush1.msra.mxu0 %v716
    %3592 = vmatprep.subr.mxu0 0.0
    %3593 = vmatpush1.msra.mxu0 %v717
    %3594 = vmatprep.subr.mxu0 0.0
    %3595 = vmatpush1.msra.mxu0 %v718
    %3596 = vmatprep.subr.mxu0 0.0
    %3597 = vmatpush1.msra.mxu0 %v719
    %3598 = vmatprep.subr.mxu0 0.0
    %3599 = vmatpush1.msra.mxu0 %v720
    %3600 = vmatprep.subr.mxu0 0.0
    %3601 = vmatpush1.msra.mxu0 %v721
    %3602 = vmatprep.subr.mxu0 0.0
    %3603 = vmatpush1.msra.mxu0 %v722
    %3604 = vmatprep.subr.mxu0 0.0
    %3605 = vmatpush1.msra.mxu0 %v723
    %3606 = vmatprep.subr.mxu0 0.0
    %3607 = vmatpush1.msra.mxu0 %v724
    %3608 = vmatprep.subr.mxu0 0.0
    %3609 = vmatpush1.msra.mxu0 %v725
    %3610 = vmatprep.subr.mxu0 0.0
    %3611 = vmatpush1.msra.mxu0 %v726
    %3612 = vmatprep.subr.mxu0 0.0
    %3613 = vmatpush1.msra.mxu0 %v727
    %3614 = vmatprep.subr.mxu0 0.0
    %3615 = vmatpush1.msra.mxu0 %v728
    %3616 = vmatprep.subr.mxu0 0.0
    %3617 = vmatpush1.msra.mxu0 %v729
    %3618 = vmatprep.subr.mxu0 0.0
    %3619 = vmatpush1.msra.mxu0 %v730
    %3620 = vmatprep.subr.mxu0 0.0
    %3621 = vmatpush1.msra.mxu0 %v731
    %3622 = vmatprep.subr.mxu0 0.0
    %3623 = vmatpush1.msra.mxu0 %v732
    %3624 = vmatprep.subr.mxu0 0.0
    %3625 = vmatpush1.msra.mxu0 %v733
    %3626 = vmatprep.subr.mxu0 0.0
    %3627 = vmatpush1.msra.mxu0 %v734
    %3628 = vmatprep.subr.mxu0 0.0
    %3629 = vmatpush1.msra.mxu0 %v735
    %3630 = vmatprep.subr.mxu0 0.0
    %3631 = vmatpush1.msra.mxu0 %v736
    %3632 = vmatprep.subr.mxu0 0.0
    %3633 = vmatpush1.msra.mxu0 %v737
    %3634 = vmatprep.subr.mxu0 0.0
    %3635 = vmatpush1.msra.mxu0 %v738
    %3636 = vmatprep.subr.mxu0 0.0
    %3637 = vmatpush1.msra.mxu0 %v739
    %3638 = vmatprep.subr.mxu0 0.0
    %3639 = vmatpush1.msra.mxu0 %v740
    %3640 = vmatprep.subr.mxu0 0.0
    %3641 = vmatpush1.msra.mxu0 %v741
    %3642 = vmatprep.subr.mxu0 0.0
    %3643 = vmatpush1.msra.mxu0 %v742
    %3644 = vmatprep.mubr.f32.mxu0 %v1792
    %3645 = vmatmul.mubr.f32.gmra.mrb[0].mxu0 %v1790
    %v3646 = vpop.f32.mrb[0].mxu0
    %v3647 = vadd.f32 %v3577, %v3646
    %v3648 = vpop.f32.mrb[0].mxu0
    %3649 = vdwg.mxu0
    %3650 = vmatprep.subr.mxu0 0.0
    %3651 = vmatpush1.msra.mxu0 %v743
    %3652 = vmatprep.subr.mxu0 0.0
    %3653 = vmatpush1.msra.mxu0 %v744
    %3654 = vmatprep.subr.mxu0 0.0
    %3655 = vmatpush1.msra.mxu0 %v745
    %3656 = vmatprep.subr.mxu0 0.0
    %3657 = vmatpush1.msra.mxu0 %v746
    %3658 = vmatprep.subr.mxu0 0.0
    %3659 = vmatpush1.msra.mxu0 %v747
    %3660 = vmatprep.subr.mxu0 0.0
    %3661 = vmatpush1.msra.mxu0 %v748
    %3662 = vmatprep.subr.mxu0 0.0
    %3663 = vmatpush1.msra.mxu0 %v749
    %3664 = vmatprep.subr.mxu0 0.0
    %3665 = vmatpush1.msra.mxu0 %v750
    %3666 = vmatprep.subr.mxu0 0.0
    %3667 = vmatpush1.msra.mxu0 %v751
    %3668 = vmatprep.subr.mxu0 0.0
    %3669 = vmatpush1.msra.mxu0 %v752
    %3670 = vmatprep.subr.mxu0 0.0
    %3671 = vmatpush1.msra.mxu0 %v753
    %3672 = vmatprep.subr.mxu0 0.0
    %3673 = vmatpush1.msra.mxu0 %v754
    %3674 = vmatprep.subr.mxu0 0.0
    %3675 = vmatpush1.msra.mxu0 %v755
    %3676 = vmatprep.subr.mxu0 0.0
    %3677 = vmatpush1.msra.mxu0 %v756
    %3678 = vmatprep.subr.mxu0 0.0
    %3679 = vmatpush1.msra.mxu0 %v757
    %3680 = vmatprep.subr.mxu0 0.0
    %3681 = vmatpush1.msra.mxu0 %v758
    %3682 = vmatprep.subr.mxu0 0.0
    %3683 = vmatpush1.msra.mxu0 %v759
    %3684 = vmatprep.subr.mxu0 0.0
    %3685 = vmatpush1.msra.mxu0 %v760
    %3686 = vmatprep.subr.mxu0 0.0
    %3687 = vmatpush1.msra.mxu0 %v761
    %3688 = vmatprep.subr.mxu0 0.0
    %3689 = vmatpush1.msra.mxu0 %v762
    %3690 = vmatprep.subr.mxu0 0.0
    %3691 = vmatpush1.msra.mxu0 %v763
    %3692 = vmatprep.subr.mxu0 0.0
    %3693 = vmatpush1.msra.mxu0 %v764
    %3694 = vmatprep.subr.mxu0 0.0
    %3695 = vmatpush1.msra.mxu0 %v765
    %3696 = vmatprep.subr.mxu0 0.0
    %3697 = vmatpush1.msra.mxu0 %v766
    %3698 = vmatprep.subr.mxu0 0.0
    %3699 = vmatpush1.msra.mxu0 %v767
    %3700 = vmatprep.subr.mxu0 0.0
    %3701 = vmatpush1.msra.mxu0 %v768
    %3702 = vmatprep.subr.mxu0 0.0
    %3703 = vmatpush1.msra.mxu0 %v769
    %3704 = vmatprep.subr.mxu0 0.0
    %3705 = vmatpush1.msra.mxu0 %v770
    %3706 = vmatprep.subr.mxu0 0.0
    %3707 = vmatpush1.msra.mxu0 %v771
    %3708 = vmatprep.subr.mxu0 0.0
    %3709 = vmatpush1.msra.mxu0 %v772
    %3710 = vmatprep.subr.mxu0 0.0
    %3711 = vmatpush1.msra.mxu0 %v773
    %3712 = vmatprep.subr.mxu0 0.0
    %3713 = vmatpush1.msra.mxu0 %v774
    %3714 = vmatprep.mubr.f32.mxu0 %v1808
    %3715 = vmatmul.mubr.f32.gmra.mrb[0].mxu0 %v1800
    %v3716 = vpop.f32.mrb[0].mxu0
    %v3717 = vadd.f32 %v3647, %v3716
    %v3718 = vpop.f32.mrb[0].mxu0
    %3719 = vdwg.mxu0
    %3720 = vmatprep.subr.mxu0 0.0
    %3721 = vmatpush1.msra.mxu0 %v775
    %3722 = vmatprep.subr.mxu0 0.0
    %3723 = vmatpush1.msra.mxu0 %v776
    %3724 = vmatprep.subr.mxu0 0.0
    %3725 = vmatpush1.msra.mxu0 %v777
    %3726 = vmatprep.subr.mxu0 0.0
    %3727 = vmatpush1.msra.mxu0 %v778
    %3728 = vmatprep.subr.mxu0 0.0
    %3729 = vmatpush1.msra.mxu0 %v779
    %3730 = vmatprep.subr.mxu0 0.0
    %3731 = vmatpush1.msra.mxu0 %v780
    %3732 = vmatprep.subr.mxu0 0.0
    %3733 = vmatpush1.msra.mxu0 %v781
    %3734 = vmatprep.subr.mxu0 0.0
    %3735 = vmatpush1.msra.mxu0 %v782
    %3736 = vmatprep.subr.mxu0 0.0
    %3737 = vmatpush1.msra.mxu0 %v783
    %3738 = vmatprep.subr.mxu0 0.0
    %3739 = vmatpush1.msra.mxu0 %v784
    %3740 = vmatprep.subr.mxu0 0.0
    %3741 = vmatpush1.msra.mxu0 %v785
    %3742 = vmatprep.subr.mxu0 0.0
    %3743 = vmatpush1.msra.mxu0 %v786
    %3744 = vmatprep.subr.mxu0 0.0
    %3745 = vmatpush1.msra.mxu0 %v787
    %3746 = vmatprep.subr.mxu0 0.0
    %3747 = vmatpush1.msra.mxu0 %v788
    %3748 = vmatprep.subr.mxu0 0.0
    %3749 = vmatpush1.msra.mxu0 %v789
    %3750 = vmatprep.subr.mxu0 0.0
    %3751 = vmatpush1.msra.mxu0 %v790
    %3752 = vmatprep.subr.mxu0 0.0
    %3753 = vmatpush1.msra.mxu0 %v791
    %3754 = vmatprep.subr.mxu0 0.0
    %3755 = vmatpush1.msra.mxu0 %v792
    %3756 = vmatprep.subr.mxu0 0.0
    %3757 = vmatpush1.msra.mxu0 %v793
    %3758 = vmatprep.subr.mxu0 0.0
    %3759 = vmatpush1.msra.mxu0 %v794
    %3760 = vmatprep.subr.mxu0 0.0
    %3761 = vmatpush1.msra.mxu0 %v795
    %3762 = vmatprep.subr.mxu0 0.0
    %3763 = vmatpush1.msra.mxu0 %v796
    %3764 = vmatprep.subr.mxu0 0.0
    %3765 = vmatpush1.msra.mxu0 %v797
    %3766 = vmatprep.subr.mxu0 0.0
    %3767 = vmatpush1.msra.mxu0 %v798
    %3768 = vmatprep.subr.mxu0 0.0
    %3769 = vmatpush1.msra.mxu0 %v799
    %3770 = vmatprep.subr.mxu0 0.0
    %3771 = vmatpush1.msra.mxu0 %v800
    %3772 = vmatprep.subr.mxu0 0.0
    %3773 = vmatpush1.msra.mxu0 %v801
    %3774 = vmatprep.subr.mxu0 0.0
    %3775 = vmatpush1.msra.mxu0 %v802
    %3776 = vmatprep.subr.mxu0 0.0
    %3777 = vmatpush1.msra.mxu0 %v803
    %3778 = vmatprep.subr.mxu0 0.0
    %3779 = vmatpush1.msra.mxu0 %v804
    %3780 = vmatprep.subr.mxu0 0.0
    %3781 = vmatpush1.msra.mxu0 %v805
    %3782 = vmatprep.subr.mxu0 0.0
    %3783 = vmatpush1.msra.mxu0 %v806
    %3784 = vmatprep.mubr.f32.mxu0 %v1809
    %3785 = vmatmul.mubr.f32.gmra.mrb[0].mxu0 %v1807
    %v3786 = vpop.f32.mrb[0].mxu0
    %v3787 = vadd.f32 %v3717, %v3786
    %v3788 = vpop.f32.mrb[0].mxu0
    %3789 = vdwg.mxu0
    %3790 = vmatprep.subr.mxu0 0.0
    %3791 = vmatpush1.msra.mxu0 %v807
    %3792 = vmatprep.subr.mxu0 0.0
    %3793 = vmatpush1.msra.mxu0 %v808
    %3794 = vmatprep.subr.mxu0 0.0
    %3795 = vmatpush1.msra.mxu0 %v809
    %3796 = vmatprep.subr.mxu0 0.0
    %3797 = vmatpush1.msra.mxu0 %v810
    %3798 = vmatprep.subr.mxu0 0.0
    %3799 = vmatpush1.msra.mxu0 %v811
    %3800 = vmatprep.subr.mxu0 0.0
    %3801 = vmatpush1.msra.mxu0 %v812
    %3802 = vmatprep.subr.mxu0 0.0
    %3803 = vmatpush1.msra.mxu0 %v813
    %3804 = vmatprep.subr.mxu0 0.0
    %3805 = vmatpush1.msra.mxu0 %v814
    %3806 = vmatprep.subr.mxu0 0.0
    %3807 = vmatpush1.msra.mxu0 %v815
    %3808 = vmatprep.subr.mxu0 0.0
    %3809 = vmatpush1.msra.mxu0 %v816
    %3810 = vmatprep.subr.mxu0 0.0
    %3811 = vmatpush1.msra.mxu0 %v817
    %3812 = vmatprep.subr.mxu0 0.0
    %3813 = vmatpush1.msra.mxu0 %v818
    %3814 = vmatprep.subr.mxu0 0.0
    %3815 = vmatpush1.msra.mxu0 %v819
    %3816 = vmatprep.subr.mxu0 0.0
    %3817 = vmatpush1.msra.mxu0 %v820
    %3818 = vmatprep.subr.mxu0 0.0
    %3819 = vmatpush1.msra.mxu0 %v821
    %3820 = vmatprep.subr.mxu0 0.0
    %3821 = vmatpush1.msra.mxu0 %v822
    %3822 = vmatprep.subr.mxu0 0.0
    %3823 = vmatpush1.msra.mxu0 %v823
    %3824 = vmatprep.subr.mxu0 0.0
    %3825 = vmatpush1.msra.mxu0 %v824
    %3826 = vmatprep.subr.mxu0 0.0
    %3827 = vmatpush1.msra.mxu0 %v825
    %3828 = vmatprep.subr.mxu0 0.0
    %3829 = vmatpush1.msra.mxu0 %v826
    %3830 = vmatprep.subr.mxu0 0.0
    %3831 = vmatpush1.msra.mxu0 %v827
    %3832 = vmatprep.subr.mxu0 0.0
    %3833 = vmatpush1.msra.mxu0 %v828
    %3834 = vmatprep.subr.mxu0 0.0
    %3835 = vmatpush1.msra.mxu0 %v829
    %3836 = vmatprep.subr.mxu0 0.0
    %3837 = vmatpush1.msra.mxu0 %v830
    %3838 = vmatprep.subr.mxu0 0.0
    %3839 = vmatpush1.msra.mxu0 %v831
    %3840 = vmatprep.subr.mxu0 0.0
    %3841 = vmatpush1.msra.mxu0 %v832
    %3842 = vmatprep.subr.mxu0 0.0
    %3843 = vmatpush1.msra.mxu0 %v833
    %3844 = vmatprep.subr.mxu0 0.0
    %3845 = vmatpush1.msra.mxu0 %v834
    %3846 = vmatprep.subr.mxu0 0.0
    %3847 = vmatpush1.msra.mxu0 %v835
    %3848 = vmatprep.subr.mxu0 0.0
    %3849 = vmatpush1.msra.mxu0 %v836
    %3850 = vmatprep.subr.mxu0 0.0
    %3851 = vmatpush1.msra.mxu0 %v837
    %3852 = vmatprep.subr.mxu0 0.0
    %3853 = vmatpush1.msra.mxu0 %v838
    %3854 = vmatprep.mubr.f32.mxu0 %v1825
    %3855 = vmatmul.mubr.f32.gmra.mrb[0].mxu0 %v1817
    %v3856 = vpop.f32.mrb[0].mxu0
    %v3857 = vadd.f32 %v3787, %v3856
    %v3858 = vpop.f32.mrb[0].mxu0
    %3859 = vdwg.mxu0
    %3860 = vmatprep.subr.mxu0 0.0
    %3861 = vmatpush1.msra.mxu0 %v839
    %3862 = vmatprep.subr.mxu0 0.0
    %3863 = vmatpush1.msra.mxu0 %v840
    %3864 = vmatprep.subr.mxu0 0.0
    %3865 = vmatpush1.msra.mxu0 %v841
    %3866 = vmatprep.subr.mxu0 0.0
    %3867 = vmatpush1.msra.mxu0 %v842
    %3868 = vmatprep.subr.mxu0 0.0
    %3869 = vmatpush1.msra.mxu0 %v843
    %3870 = vmatprep.subr.mxu0 0.0
    %3871 = vmatpush1.msra.mxu0 %v844
    %3872 = vmatprep.subr.mxu0 0.0
    %3873 = vmatpush1.msra.mxu0 %v845
    %3874 = vmatprep.subr.mxu0 0.0
    %3875 = vmatpush1.msra.mxu0 %v846
    %3876 = vmatprep.subr.mxu0 0.0
    %3877 = vmatpush1.msra.mxu0 %v847
    %3878 = vmatprep.subr.mxu0 0.0
    %3879 = vmatpush1.msra.mxu0 %v848
    %3880 = vmatprep.subr.mxu0 0.0
    %3881 = vmatpush1.msra.mxu0 %v849
    %3882 = vmatprep.subr.mxu0 0.0
    %3883 = vmatpush1.msra.mxu0 %v850
    %3884 = vmatprep.subr.mxu0 0.0
    %3885 = vmatpush1.msra.mxu0 %v851
    %3886 = vmatprep.subr.mxu0 0.0
    %3887 = vmatpush1.msra.mxu0 %v852
    %3888 = vmatprep.subr.mxu0 0.0
    %3889 = vmatpush1.msra.mxu0 %v853
    %3890 = vmatprep.subr.mxu0 0.0
    %3891 = vmatpush1.msra.mxu0 %v854
    %3892 = vmatprep.subr.mxu0 0.0
    %3893 = vmatpush1.msra.mxu0 %v855
    %3894 = vmatprep.subr.mxu0 0.0
    %3895 = vmatpush1.msra.mxu0 %v856
    %3896 = vmatprep.subr.mxu0 0.0
    %3897 = vmatpush1.msra.mxu0 %v857
    %3898 = vmatprep.subr.mxu0 0.0
    %3899 = vmatpush1.msra.mxu0 %v858
    %3900 = vmatprep.subr.mxu0 0.0
    %3901 = vmatpush1.msra.mxu0 %v859
    %3902 = vmatprep.subr.mxu0 0.0
    %3903 = vmatpush1.msra.mxu0 %v860
    %3904 = vmatprep.subr.mxu0 0.0
    %3905 = vmatpush1.msra.mxu0 %v861
    %3906 = vmatprep.subr.mxu0 0.0
    %3907 = vmatpush1.msra.mxu0 %v862
    %3908 = vmatprep.subr.mxu0 0.0
    %3909 = vmatpush1.msra.mxu0 %v863
    %3910 = vmatprep.subr.mxu0 0.0
    %3911 = vmatpush1.msra.mxu0 %v864
    %3912 = vmatprep.subr.mxu0 0.0
    %3913 = vmatpush1.msra.mxu0 %v865
    %3914 = vmatprep.subr.mxu0 0.0
    %3915 = vmatpush1.msra.mxu0 %v866
    %3916 = vmatprep.subr.mxu0 0.0
    %3917 = vmatpush1.msra.mxu0 %v867
    %3918 = vmatprep.subr.mxu0 0.0
    %3919 = vmatpush1.msra.mxu0 %v868
    %3920 = vmatprep.subr.mxu0 0.0
    %3921 = vmatpush1.msra.mxu0 %v869
    %3922 = vmatprep.subr.mxu0 0.0
    %3923 = vmatpush1.msra.mxu0 %v870
    %3924 = vmatprep.mubr.f32.mxu0 %v1826
    %3925 = vmatmul.mubr.f32.gmra.mrb[0].mxu0 %v1824
    %v3926 = vpop.f32.mrb[0].mxu0
    %v3927 = vadd.f32 %v3857, %v3926
    %v3928 = vpop.f32.mrb[0].mxu0
    %3929 = vdwg.mxu0
    %3930 = vmatprep.subr.mxu0 0.0
    %3931 = vmatpush1.msra.mxu0 %v871
    %3932 = vmatprep.subr.mxu0 0.0
    %3933 = vmatpush1.msra.mxu0 %v872
    %3934 = vmatprep.subr.mxu0 0.0
    %3935 = vmatpush1.msra.mxu0 %v873
    %3936 = vmatprep.subr.mxu0 0.0
    %3937 = vmatpush1.msra.mxu0 %v874
    %3938 = vmatprep.subr.mxu0 0.0
    %3939 = vmatpush1.msra.mxu0 %v875
    %3940 = vmatprep.subr.mxu0 0.0
    %3941 = vmatpush1.msra.mxu0 %v876
    %3942 = vmatprep.subr.mxu0 0.0
    %3943 = vmatpush1.msra.mxu0 %v877
    %3944 = vmatprep.subr.mxu0 0.0
    %3945 = vmatpush1.msra.mxu0 %v878
    %3946 = vmatprep.subr.mxu0 0.0
    %3947 = vmatpush1.msra.mxu0 %v879
    %3948 = vmatprep.subr.mxu0 0.0
    %3949 = vmatpush1.msra.mxu0 %v880
    %3950 = vmatprep.subr.mxu0 0.0
    %3951 = vmatpush1.msra.mxu0 %v881
    %3952 = vmatprep.subr.mxu0 0.0
    %3953 = vmatpush1.msra.mxu0 %v882
    %3954 = vmatprep.subr.mxu0 0.0
    %3955 = vmatpush1.msra.mxu0 %v883
    %3956 = vmatprep.subr.mxu0 0.0
    %3957 = vmatpush1.msra.mxu0 %v884
    %3958 = vmatprep.subr.mxu0 0.0
    %3959 = vmatpush1.msra.mxu0 %v885
    %3960 = vmatprep.subr.mxu0 0.0
    %3961 = vmatpush1.msra.mxu0 %v886
    %3962 = vmatprep.subr.mxu0 0.0
    %3963 = vmatpush1.msra.mxu0 %v887
    %3964 = vmatprep.subr.mxu0 0.0
    %3965 = vmatpush1.msra.mxu0 %v888
    %3966 = vmatprep.subr.mxu0 0.0
    %3967 = vmatpush1.msra.mxu0 %v889
    %3968 = vmatprep.subr.mxu0 0.0
    %3969 = vmatpush1.msra.mxu0 %v890
    %3970 = vmatprep.subr.mxu0 0.0
    %3971 = vmatpush1.msra.mxu0 %v891
    %3972 = vmatprep.subr.mxu0 0.0
    %3973 = vmatpush1.msra.mxu0 %v892
    %3974 = vmatprep.subr.mxu0 0.0
    %3975 = vmatpush1.msra.mxu0 %v893
    %3976 = vmatprep.subr.mxu0 0.0
    %3977 = vmatpush1.msra.mxu0 %v894
    %3978 = vmatprep.subr.mxu0 0.0
    %3979 = vmatpush1.msra.mxu0 %v895
    %3980 = vmatprep.subr.mxu0 0.0
    %3981 = vmatpush1.msra.mxu0 %v896
    %3982 = vmatprep.subr.mxu0 0.0
    %3983 = vmatpush1.msra.mxu0 %v897
    %3984 = vmatprep.subr.mxu0 0.0
    %3985 = vmatpush1.msra.mxu0 %v898
    %3986 = vmatprep.subr.mxu0 0.0
    %3987 = vmatpush1.msra.mxu0 %v899
    %3988 = vmatprep.subr.mxu0 0.0
    %3989 = vmatpush1.msra.mxu0 %v900
    %3990 = vmatprep.subr.mxu0 0.0
    %3991 = vmatpush1.msra.mxu0 %v901
    %3992 = vmatprep.subr.mxu0 0.0
    %3993 = vmatpush1.msra.mxu0 %v902
    %3994 = vmatprep.mubr.f32.mxu0 %v1842
    %3995 = vmatmul.mubr.f32.gmra.mrb[0].mxu0 %v1834
    %v3996 = vpop.f32.mrb[0].mxu0
    %v3997 = vadd.f32 %v3927, %v3996
    %v3998 = vpop.f32.mrb[0].mxu0
    %3999 = vdwg.mxu0
    %4000 = vmatprep.subr.mxu0 0.0
    %4001 = vmatpush1.msra.mxu0 %v903
    %4002 = vmatprep.subr.mxu0 0.0
    %4003 = vmatpush1.msra.mxu0 %v904
    %4004 = vmatprep.subr.mxu0 0.0
    %4005 = vmatpush1.msra.mxu0 %v905
    %4006 = vmatprep.subr.mxu0 0.0
    %4007 = vmatpush1.msra.mxu0 %v906
    %4008 = vmatprep.subr.mxu0 0.0
    %4009 = vmatpush1.msra.mxu0 %v907
    %4010 = vmatprep.subr.mxu0 0.0
    %4011 = vmatpush1.msra.mxu0 %v908
    %4012 = vmatprep.subr.mxu0 0.0
    %4013 = vmatpush1.msra.mxu0 %v909
    %4014 = vmatprep.subr.mxu0 0.0
    %4015 = vmatpush1.msra.mxu0 %v910
    %4016 = vmatprep.subr.mxu0 0.0
    %4017 = vmatpush1.msra.mxu0 %v911
    %4018 = vmatprep.subr.mxu0 0.0
    %4019 = vmatpush1.msra.mxu0 %v912
    %4020 = vmatprep.subr.mxu0 0.0
    %4021 = vmatpush1.msra.mxu0 %v913
    %4022 = vmatprep.subr.mxu0 0.0
    %4023 = vmatpush1.msra.mxu0 %v914
    %4024 = vmatprep.subr.mxu0 0.0
    %4025 = vmatpush1.msra.mxu0 %v915
    %4026 = vmatprep.subr.mxu0 0.0
    %4027 = vmatpush1.msra.mxu0 %v916
    %4028 = vmatprep.subr.mxu0 0.0
    %4029 = vmatpush1.msra.mxu0 %v917
    %4030 = vmatprep.subr.mxu0 0.0
    %4031 = vmatpush1.msra.mxu0 %v918
    %4032 = vmatprep.subr.mxu0 0.0
    %4033 = vmatpush1.msra.mxu0 %v919
    %4034 = vmatprep.subr.mxu0 0.0
    %4035 = vmatpush1.msra.mxu0 %v920
    %4036 = vmatprep.subr.mxu0 0.0
    %4037 = vmatpush1.msra.mxu0 %v921
    %4038 = vmatprep.subr.mxu0 0.0
    %4039 = vmatpush1.msra.mxu0 %v922
    %4040 = vmatprep.subr.mxu0 0.0
    %4041 = vmatpush1.msra.mxu0 %v923
    %4042 = vmatprep.subr.mxu0 0.0
    %4043 = vmatpush1.msra.mxu0 %v924
    %4044 = vmatprep.subr.mxu0 0.0
    %4045 = vmatpush1.msra.mxu0 %v925
    %4046 = vmatprep.subr.mxu0 0.0
    %4047 = vmatpush1.msra.mxu0 %v926
    %4048 = vmatprep.subr.mxu0 0.0
    %4049 = vmatpush1.msra.mxu0 %v927
    %4050 = vmatprep.subr.mxu0 0.0
    %4051 = vmatpush1.msra.mxu0 %v928
    %4052 = vmatprep.subr.mxu0 0.0
    %4053 = vmatpush1.msra.mxu0 %v929
    %4054 = vmatprep.subr.mxu0 0.0
    %4055 = vmatpush1.msra.mxu0 %v930
    %4056 = vmatprep.subr.mxu0 0.0
    %4057 = vmatpush1.msra.mxu0 %v931
    %4058 = vmatprep.subr.mxu0 0.0
    %4059 = vmatpush1.msra.mxu0 %v932
    %4060 = vmatprep.subr.mxu0 0.0
    %4061 = vmatpush1.msra.mxu0 %v933
    %4062 = vmatprep.subr.mxu0 0.0
    %4063 = vmatpush1.msra.mxu0 %v934
    %4064 = vmatprep.mubr.f32.mxu0 %v1843
    %4065 = vmatmul.mubr.f32.gmra.mrb[0].mxu0 %v1841
    %v4066 = vpop.f32.mrb[0].mxu0
    %v4067 = vadd.f32 %v3997, %v4066
    %v4068 = vpop.f32.mrb[0].mxu0
    %4069 = vdwg.mxu0
    %4070 = vmatprep.subr.mxu0 0.0
    %4071 = vmatpush1.msra.mxu0 %v935
    %4072 = vmatprep.subr.mxu0 0.0
    %4073 = vmatpush1.msra.mxu0 %v936
    %4074 = vmatprep.subr.mxu0 0.0
    %4075 = vmatpush1.msra.mxu0 %v937
    %4076 = vmatprep.subr.mxu0 0.0
    %4077 = vmatpush1.msra.mxu0 %v938
    %4078 = vmatprep.subr.mxu0 0.0
    %4079 = vmatpush1.msra.mxu0 %v939
    %4080 = vmatprep.subr.mxu0 0.0
    %4081 = vmatpush1.msra.mxu0 %v940
    %4082 = vmatprep.subr.mxu0 0.0
    %4083 = vmatpush1.msra.mxu0 %v941
    %4084 = vmatprep.subr.mxu0 0.0
    %4085 = vmatpush1.msra.mxu0 %v942
    %4086 = vmatprep.subr.mxu0 0.0
    %4087 = vmatpush1.msra.mxu0 %v943
    %4088 = vmatprep.subr.mxu0 0.0
    %4089 = vmatpush1.msra.mxu0 %v944
    %4090 = vmatprep.subr.mxu0 0.0
    %4091 = vmatpush1.msra.mxu0 %v945
    %4092 = vmatprep.subr.mxu0 0.0
    %4093 = vmatpush1.msra.mxu0 %v946
    %4094 = vmatprep.subr.mxu0 0.0
    %4095 = vmatpush1.msra.mxu0 %v947
    %4096 = vmatprep.subr.mxu0 0.0
    %4097 = vmatpush1.msra.mxu0 %v948
    %4098 = vmatprep.subr.mxu0 0.0
    %4099 = vmatpush1.msra.mxu0 %v949
    %4100 = vmatprep.subr.mxu0 0.0
    %4101 = vmatpush1.msra.mxu0 %v950
    %4102 = vmatprep.subr.mxu0 0.0
    %4103 = vmatpush1.msra.mxu0 %v951
    %4104 = vmatprep.subr.mxu0 0.0
    %4105 = vmatpush1.msra.mxu0 %v952
    %4106 = vmatprep.subr.mxu0 0.0
    %4107 = vmatpush1.msra.mxu0 %v953
    %4108 = vmatprep.subr.mxu0 0.0
    %4109 = vmatpush1.msra.mxu0 %v954
    %4110 = vmatprep.subr.mxu0 0.0
    %4111 = vmatpush1.msra.mxu0 %v955
    %4112 = vmatprep.subr.mxu0 0.0
    %4113 = vmatpush1.msra.mxu0 %v956
    %4114 = vmatprep.subr.mxu0 0.0
    %4115 = vmatpush1.msra.mxu0 %v957
    %4116 = vmatprep.subr.mxu0 0.0
    %4117 = vmatpush1.msra.mxu0 %v958
    %4118 = vmatprep.subr.mxu0 0.0
    %4119 = vmatpush1.msra.mxu0 %v959
    %4120 = vmatprep.subr.mxu0 0.0
    %4121 = vmatpush1.msra.mxu0 %v960
    %4122 = vmatprep.subr.mxu0 0.0
    %4123 = vmatpush1.msra.mxu0 %v961
    %4124 = vmatprep.subr.mxu0 0.0
    %4125 = vmatpush1.msra.mxu0 %v962
    %4126 = vmatprep.subr.mxu0 0.0
    %4127 = vmatpush1.msra.mxu0 %v963
    %4128 = vmatprep.subr.mxu0 0.0
    %4129 = vmatpush1.msra.mxu0 %v964
    %4130 = vmatprep.subr.mxu0 0.0
    %4131 = vmatpush1.msra.mxu0 %v965
    %4132 = vmatprep.subr.mxu0 0.0
    %4133 = vmatpush1.msra.mxu0 %v966
    %4134 = vmatprep.mubr.f32.mxu0 %v1859
    %4135 = vmatmul.mubr.f32.gmra.mrb[0].mxu0 %v1851
    %v4136 = vpop.f32.mrb[0].mxu0
    %v4137 = vadd.f32 %v4067, %v4136
    %v4138 = vpop.f32.mrb[0].mxu0
    %4139 = vdwg.mxu0
    %4140 = vmatprep.subr.mxu0 0.0
    %4141 = vmatpush1.msra.mxu0 %v967
    %4142 = vmatprep.subr.mxu0 0.0
    %4143 = vmatpush1.msra.mxu0 %v968
    %4144 = vmatprep.subr.mxu0 0.0
    %4145 = vmatpush1.msra.mxu0 %v969
    %4146 = vmatprep.subr.mxu0 0.0
    %4147 = vmatpush1.msra.mxu0 %v970
    %4148 = vmatprep.subr.mxu0 0.0
    %4149 = vmatpush1.msra.mxu0 %v971
    %4150 = vmatprep.subr.mxu0 0.0
    %4151 = vmatpush1.msra.mxu0 %v972
    %4152 = vmatprep.subr.mxu0 0.0
    %4153 = vmatpush1.msra.mxu0 %v973
    %4154 = vmatprep.subr.mxu0 0.0
    %4155 = vmatpush1.msra.mxu0 %v974
    %4156 = vmatprep.subr.mxu0 0.0
    %4157 = vmatpush1.msra.mxu0 %v975
    %4158 = vmatprep.subr.mxu0 0.0
    %4159 = vmatpush1.msra.mxu0 %v976
    %4160 = vmatprep.subr.mxu0 0.0
    %4161 = vmatpush1.msra.mxu0 %v977
    %4162 = vmatprep.subr.mxu0 0.0
    %4163 = vmatpush1.msra.mxu0 %v978
    %4164 = vmatprep.subr.mxu0 0.0
    %4165 = vmatpush1.msra.mxu0 %v979
    %4166 = vmatprep.subr.mxu0 0.0
    %4167 = vmatpush1.msra.mxu0 %v980
    %4168 = vmatprep.subr.mxu0 0.0
    %4169 = vmatpush1.msra.mxu0 %v981
    %4170 = vmatprep.subr.mxu0 0.0
    %4171 = vmatpush1.msra.mxu0 %v982
    %4172 = vmatprep.subr.mxu0 0.0
    %4173 = vmatpush1.msra.mxu0 %v983
    %4174 = vmatprep.subr.mxu0 0.0
    %4175 = vmatpush1.msra.mxu0 %v984
    %4176 = vmatprep.subr.mxu0 0.0
    %4177 = vmatpush1.msra.mxu0 %v985
    %4178 = vmatprep.subr.mxu0 0.0
    %4179 = vmatpush1.msra.mxu0 %v986
    %4180 = vmatprep.subr.mxu0 0.0
    %4181 = vmatpush1.msra.mxu0 %v987
    %4182 = vmatprep.subr.mxu0 0.0
    %4183 = vmatpush1.msra.mxu0 %v988
    %4184 = vmatprep.subr.mxu0 0.0
    %4185 = vmatpush1.msra.mxu0 %v989
    %4186 = vmatprep.subr.mxu0 0.0
    %4187 = vmatpush1.msra.mxu0 %v990
    %4188 = vmatprep.subr.mxu0 0.0
    %4189 = vmatpush1.msra.mxu0 %v991
    %4190 = vmatprep.subr.mxu0 0.0
    %4191 = vmatpush1.msra.mxu0 %v992
    %4192 = vmatprep.subr.mxu0 0.0
    %4193 = vmatpush1.msra.mxu0 %v993
    %4194 = vmatprep.subr.mxu0 0.0
    %4195 = vmatpush1.msra.mxu0 %v994
    %4196 = vmatprep.subr.mxu0 0.0
    %4197 = vmatpush1.msra.mxu0 %v995
    %4198 = vmatprep.subr.mxu0 0.0
    %4199 = vmatpush1.msra.mxu0 %v996
    %4200 = vmatprep.subr.mxu0 0.0
    %4201 = vmatpush1.msra.mxu0 %v997
    %4202 = vmatprep.subr.mxu0 0.0
    %4203 = vmatpush1.msra.mxu0 %v998
    %4204 = vmatprep.mubr.f32.mxu0 %v1860
    %4205 = vmatmul.mubr.f32.gmra.mrb[0].mxu0 %v1858
    %v4206 = vpop.f32.mrb[0].mxu0
    %v4207 = vadd.f32 %v4137, %v4206
    %v4208 = vpop.f32.mrb[0].mxu0
    %4209 = vdwg.mxu0
    %4210 = vmatprep.subr.mxu0 0.0
    %4211 = vmatpush1.msra.mxu0 %v999
    %4212 = vmatprep.subr.mxu0 0.0
    %4213 = vmatpush1.msra.mxu0 %v1000
    %4214 = vmatprep.subr.mxu0 0.0
    %4215 = vmatpush1.msra.mxu0 %v1001
    %4216 = vmatprep.subr.mxu0 0.0
    %4217 = vmatpush1.msra.mxu0 %v1002
    %4218 = vmatprep.subr.mxu0 0.0
    %4219 = vmatpush1.msra.mxu0 %v1003
    %4220 = vmatprep.subr.mxu0 0.0
    %4221 = vmatpush1.msra.mxu0 %v1004
    %4222 = vmatprep.subr.mxu0 0.0
    %4223 = vmatpush1.msra.mxu0 %v1005
    %4224 = vmatprep.subr.mxu0 0.0
    %4225 = vmatpush1.msra.mxu0 %v1006
    %4226 = vmatprep.subr.mxu0 0.0
    %4227 = vmatpush1.msra.mxu0 %v1007
    %4228 = vmatprep.subr.mxu0 0.0
    %4229 = vmatpush1.msra.mxu0 %v1008
    %4230 = vmatprep.subr.mxu0 0.0
    %4231 = vmatpush1.msra.mxu0 %v1009
    %4232 = vmatprep.subr.mxu0 0.0
    %4233 = vmatpush1.msra.mxu0 %v1010
    %4234 = vmatprep.subr.mxu0 0.0
    %4235 = vmatpush1.msra.mxu0 %v1011
    %4236 = vmatprep.subr.mxu0 0.0
    %4237 = vmatpush1.msra.mxu0 %v1012
    %4238 = vmatprep.subr.mxu0 0.0
    %4239 = vmatpush1.msra.mxu0 %v1013
    %4240 = vmatprep.subr.mxu0 0.0
    %4241 = vmatpush1.msra.mxu0 %v1014
    %4242 = vmatprep.subr.mxu0 0.0
    %4243 = vmatpush1.msra.mxu0 %v1015
    %4244 = vmatprep.subr.mxu0 0.0
    %4245 = vmatpush1.msra.mxu0 %v1016
    %4246 = vmatprep.subr.mxu0 0.0
    %4247 = vmatpush1.msra.mxu0 %v1017
    %4248 = vmatprep.subr.mxu0 0.0
    %4249 = vmatpush1.msra.mxu0 %v1018
    %4250 = vmatprep.subr.mxu0 0.0
    %4251 = vmatpush1.msra.mxu0 %v1019
    %4252 = vmatprep.subr.mxu0 0.0
    %4253 = vmatpush1.msra.mxu0 %v1020
    %4254 = vmatprep.subr.mxu0 0.0
    %4255 = vmatpush1.msra.mxu0 %v1021
    %4256 = vmatprep.subr.mxu0 0.0
    %4257 = vmatpush1.msra.mxu0 %v1022
    %4258 = vmatprep.subr.mxu0 0.0
    %4259 = vmatpush1.msra.mxu0 %v1023
    %4260 = vmatprep.subr.mxu0 0.0
    %4261 = vmatpush1.msra.mxu0 %v1024
    %4262 = vmatprep.subr.mxu0 0.0
    %4263 = vmatpush1.msra.mxu0 %v1025
    %4264 = vmatprep.subr.mxu0 0.0
    %4265 = vmatpush1.msra.mxu0 %v1026
    %4266 = vmatprep.subr.mxu0 0.0
    %4267 = vmatpush1.msra.mxu0 %v1027
    %4268 = vmatprep.subr.mxu0 0.0
    %4269 = vmatpush1.msra.mxu0 %v1028
    %4270 = vmatprep.subr.mxu0 0.0
    %4271 = vmatpush1.msra.mxu0 %v1029
    %4272 = vmatprep.subr.mxu0 0.0
    %4273 = vmatpush1.msra.mxu0 %v1030
    %4274 = vmatprep.mubr.f32.mxu0 %v1876
    %4275 = vmatmul.mubr.f32.gmra.mrb[0].mxu0 %v1868
    %v4276 = vpop.f32.mrb[0].mxu0
    %v4277 = vadd.f32 %v4207, %v4276
    %v4278 = vpop.f32.mrb[0].mxu0
    %4279 = vdwg.mxu0
    %4280 = vmatprep.subr.mxu0 0.0
    %4281 = vmatpush1.msra.mxu0 %v1031
    %4282 = vmatprep.subr.mxu0 0.0
    %4283 = vmatpush1.msra.mxu0 %v1032
    %4284 = vmatprep.subr.mxu0 0.0
    %4285 = vmatpush1.msra.mxu0 %v1033
    %4286 = vmatprep.subr.mxu0 0.0
    %4287 = vmatpush1.msra.mxu0 %v1034
    %4288 = vmatprep.subr.mxu0 0.0
    %4289 = vmatpush1.msra.mxu0 %v1035
    %4290 = vmatprep.subr.mxu0 0.0
    %4291 = vmatpush1.msra.mxu0 %v1036
    %4292 = vmatprep.subr.mxu0 0.0
    %4293 = vmatpush1.msra.mxu0 %v1037
    %4294 = vmatprep.subr.mxu0 0.0
    %4295 = vmatpush1.msra.mxu0 %v1038
    %4296 = vmatprep.subr.mxu0 0.0
    %4297 = vmatpush1.msra.mxu0 %v1039
    %4298 = vmatprep.subr.mxu0 0.0
    %4299 = vmatpush1.msra.mxu0 %v1040
    %4300 = vmatprep.subr.mxu0 0.0
    %4301 = vmatpush1.msra.mxu0 %v1041
    %4302 = vmatprep.subr.mxu0 0.0
    %4303 = vmatpush1.msra.mxu0 %v1042
    %4304 = vmatprep.subr.mxu0 0.0
    %4305 = vmatpush1.msra.mxu0 %v1043
    %4306 = vmatprep.subr.mxu0 0.0
    %4307 = vmatpush1.msra.mxu0 %v1044
    %4308 = vmatprep.subr.mxu0 0.0
    %4309 = vmatpush1.msra.mxu0 %v1045
    %4310 = vmatprep.subr.mxu0 0.0
    %4311 = vmatpush1.msra.mxu0 %v1046
    %4312 = vmatprep.subr.mxu0 0.0
    %4313 = vmatpush1.msra.mxu0 %v1047
    %4314 = vmatprep.subr.mxu0 0.0
    %4315 = vmatpush1.msra.mxu0 %v1048
    %4316 = vmatprep.subr.mxu0 0.0
    %4317 = vmatpush1.msra.mxu0 %v1049
    %4318 = vmatprep.subr.mxu0 0.0
    %4319 = vmatpush1.msra.mxu0 %v1050
    %4320 = vmatprep.subr.mxu0 0.0
    %4321 = vmatpush1.msra.mxu0 %v1051
    %4322 = vmatprep.subr.mxu0 0.0
    %4323 = vmatpush1.msra.mxu0 %v1052
    %4324 = vmatprep.subr.mxu0 0.0
    %4325 = vmatpush1.msra.mxu0 %v1053
    %4326 = vmatprep.subr.mxu0 0.0
    %4327 = vmatpush1.msra.mxu0 %v1054
    %4328 = vmatprep.subr.mxu0 0.0
    %4329 = vmatpush1.msra.mxu0 %v1055
    %4330 = vmatprep.subr.mxu0 0.0
    %4331 = vmatpush1.msra.mxu0 %v1056
    %4332 = vmatprep.subr.mxu0 0.0
    %4333 = vmatpush1.msra.mxu0 %v1057
    %4334 = vmatprep.subr.mxu0 0.0
    %4335 = vmatpush1.msra.mxu0 %v1058
    %4336 = vmatprep.subr.mxu0 0.0
    %4337 = vmatpush1.msra.mxu0 %v1059
    %4338 = vmatprep.subr.mxu0 0.0
    %4339 = vmatpush1.msra.mxu0 %v1060
    %4340 = vmatprep.subr.mxu0 0.0
    %4341 = vmatpush1.msra.mxu0 %v1061
    %4342 = vmatprep.subr.mxu0 0.0
    %4343 = vmatpush1.msra.mxu0 %v1062
    %4344 = vmatprep.mubr.f32.mxu0 %v1877
    %4345 = vmatmul.mubr.f32.gmra.mrb[0].mxu0 %v1875
    %v4346 = vpop.f32.mrb[0].mxu0
    %v4347 = vadd.f32 %v4277, %v4346
    %v4348 = vpop.f32.mrb[0].mxu0
    %4349 = vdwg.mxu0
    %4350 = vmatprep.subr.mxu0 0.0
    %4351 = vmatpush1.msra.mxu0 %v1063
    %4352 = vmatprep.subr.mxu0 0.0
    %4353 = vmatpush1.msra.mxu0 %v1064
    %4354 = vmatprep.subr.mxu0 0.0
    %4355 = vmatpush1.msra.mxu0 %v1065
    %4356 = vmatprep.subr.mxu0 0.0
    %4357 = vmatpush1.msra.mxu0 %v1066
    %4358 = vmatprep.subr.mxu0 0.0
    %4359 = vmatpush1.msra.mxu0 %v1067
    %4360 = vmatprep.subr.mxu0 0.0
    %4361 = vmatpush1.msra.mxu0 %v1068
    %4362 = vmatprep.subr.mxu0 0.0
    %4363 = vmatpush1.msra.mxu0 %v1069
    %4364 = vmatprep.subr.mxu0 0.0
    %4365 = vmatpush1.msra.mxu0 %v1070
    %4366 = vmatprep.subr.mxu0 0.0
    %4367 = vmatpush1.msra.mxu0 %v1071
    %4368 = vmatprep.subr.mxu0 0.0
    %4369 = vmatpush1.msra.mxu0 %v1072
    %4370 = vmatprep.subr.mxu0 0.0
    %4371 = vmatpush1.msra.mxu0 %v1073
    %4372 = vmatprep.subr.mxu0 0.0
    %4373 = vmatpush1.msra.mxu0 %v1074
    %4374 = vmatprep.subr.mxu0 0.0
    %4375 = vmatpush1.msra.mxu0 %v1075
    %4376 = vmatprep.subr.mxu0 0.0
    %4377 = vmatpush1.msra.mxu0 %v1076
    %4378 = vmatprep.subr.mxu0 0.0
    %4379 = vmatpush1.msra.mxu0 %v1077
    %4380 = vmatprep.subr.mxu0 0.0
    %4381 = vmatpush1.msra.mxu0 %v1078
    %4382 = vmatprep.subr.mxu0 0.0
    %4383 = vmatpush1.msra.mxu0 %v1079
    %4384 = vmatprep.subr.mxu0 0.0
    %4385 = vmatpush1.msra.mxu0 %v1080
    %4386 = vmatprep.subr.mxu0 0.0
    %4387 = vmatpush1.msra.mxu0 %v1081
    %4388 = vmatprep.subr.mxu0 0.0
    %4389 = vmatpush1.msra.mxu0 %v1082
    %4390 = vmatprep.subr.mxu0 0.0
    %4391 = vmatpush1.msra.mxu0 %v1083
    %4392 = vmatprep.subr.mxu0 0.0
    %4393 = vmatpush1.msra.mxu0 %v1084
    %4394 = vmatprep.subr.mxu0 0.0
    %4395 = vmatpush1.msra.mxu0 %v1085
    %4396 = vmatprep.subr.mxu0 0.0
    %4397 = vmatpush1.msra.mxu0 %v1086
    %4398 = vmatprep.subr.mxu0 0.0
    %4399 = vmatpush1.msra.mxu0 %v1087
    %4400 = vmatprep.subr.mxu0 0.0
    %4401 = vmatpush1.msra.mxu0 %v1088
    %4402 = vmatprep.subr.mxu0 0.0
    %4403 = vmatpush1.msra.mxu0 %v1089
    %4404 = vmatprep.subr.mxu0 0.0
    %4405 = vmatpush1.msra.mxu0 %v1090
    %4406 = vmatprep.subr.mxu0 0.0
    %4407 = vmatpush1.msra.mxu0 %v1091
    %4408 = vmatprep.subr.mxu0 0.0
    %4409 = vmatpush1.msra.mxu0 %v1092
    %4410 = vmatprep.subr.mxu0 0.0
    %4411 = vmatpush1.msra.mxu0 %v1093
    %4412 = vmatprep.subr.mxu0 0.0
    %4413 = vmatpush1.msra.mxu0 %v1094
    %4414 = vmatprep.mubr.f32.mxu0 %v1893
    %4415 = vmatmul.mubr.f32.gmra.mrb[0].mxu0 %v1885
    %v4416 = vpop.f32.mrb[0].mxu0
    %v4417 = vadd.f32 %v4347, %v4416
    %v4418 = vpop.f32.mrb[0].mxu0
    %4419 = vdwg.mxu0
    %4420 = vmatprep.subr.mxu0 0.0
    %4421 = vmatpush1.msra.mxu0 %v1095
    %4422 = vmatprep.subr.mxu0 0.0
    %4423 = vmatpush1.msra.mxu0 %v1096
    %4424 = vmatprep.subr.mxu0 0.0
    %4425 = vmatpush1.msra.mxu0 %v1097
    %4426 = vmatprep.subr.mxu0 0.0
    %4427 = vmatpush1.msra.mxu0 %v1098
    %4428 = vmatprep.subr.mxu0 0.0
    %4429 = vmatpush1.msra.mxu0 %v1099
    %4430 = vmatprep.subr.mxu0 0.0
    %4431 = vmatpush1.msra.mxu0 %v1100
    %4432 = vmatprep.subr.mxu0 0.0
    %4433 = vmatpush1.msra.mxu0 %v1101
    %4434 = vmatprep.subr.mxu0 0.0
    %4435 = vmatpush1.msra.mxu0 %v1102
    %4436 = vmatprep.subr.mxu0 0.0
    %4437 = vmatpush1.msra.mxu0 %v1103
    %4438 = vmatprep.subr.mxu0 0.0
    %4439 = vmatpush1.msra.mxu0 %v1104
    %4440 = vmatprep.subr.mxu0 0.0
    %4441 = vmatpush1.msra.mxu0 %v1105
    %4442 = vmatprep.subr.mxu0 0.0
    %4443 = vmatpush1.msra.mxu0 %v1106
    %4444 = vmatprep.subr.mxu0 0.0
    %4445 = vmatpush1.msra.mxu0 %v1107
    %4446 = vmatprep.subr.mxu0 0.0
    %4447 = vmatpush1.msra.mxu0 %v1108
    %4448 = vmatprep.subr.mxu0 0.0
    %4449 = vmatpush1.msra.mxu0 %v1109
    %4450 = vmatprep.subr.mxu0 0.0
    %4451 = vmatpush1.msra.mxu0 %v1110
    %4452 = vmatprep.subr.mxu0 0.0
    %4453 = vmatpush1.msra.mxu0 %v1111
    %4454 = vmatprep.subr.mxu0 0.0
    %4455 = vmatpush1.msra.mxu0 %v1112
    %4456 = vmatprep.subr.mxu0 0.0
    %4457 = vmatpush1.msra.mxu0 %v1113
    %4458 = vmatprep.subr.mxu0 0.0
    %4459 = vmatpush1.msra.mxu0 %v1114
    %4460 = vmatprep.subr.mxu0 0.0
    %4461 = vmatpush1.msra.mxu0 %v1115
    %4462 = vmatprep.subr.mxu0 0.0
    %4463 = vmatpush1.msra.mxu0 %v1116
    %4464 = vmatprep.subr.mxu0 0.0
    %4465 = vmatpush1.msra.mxu0 %v1117
    %4466 = vmatprep.subr.mxu0 0.0
    %4467 = vmatpush1.msra.mxu0 %v1118
    %4468 = vmatprep.subr.mxu0 0.0
    %4469 = vmatpush1.msra.mxu0 %v1119
    %4470 = vmatprep.subr.mxu0 0.0
    %4471 = vmatpush1.msra.mxu0 %v1120
    %4472 = vmatprep.subr.mxu0 0.0
    %4473 = vmatpush1.msra.mxu0 %v1121
    %4474 = vmatprep.subr.mxu0 0.0
    %4475 = vmatpush1.msra.mxu0 %v1122
    %4476 = vmatprep.subr.mxu0 0.0
    %4477 = vmatpush1.msra.mxu0 %v1123
    %4478 = vmatprep.subr.mxu0 0.0
    %4479 = vmatpush1.msra.mxu0 %v1124
    %4480 = vmatprep.subr.mxu0 0.0
    %4481 = vmatpush1.msra.mxu0 %v1125
    %4482 = vmatprep.subr.mxu0 0.0
    %4483 = vmatpush1.msra.mxu0 %v1126
    %4484 = vmatprep.mubr.f32.mxu0 %v1894
    %4485 = vmatmul.mubr.f32.gmra.mrb[0].mxu0 %v1892
    %v4486 = vpop.f32.mrb[0].mxu0
    %v4487 = vadd.f32 %v4417, %v4486
    %v4488 = vpop.f32.mrb[0].mxu0
    %4489 = vdwg.mxu0
    %4490 = vmatprep.subr.mxu0 0.0
    %4491 = vmatpush1.msra.mxu0 %v1127
    %4492 = vmatprep.subr.mxu0 0.0
    %4493 = vmatpush1.msra.mxu0 %v1128
    %4494 = vmatprep.subr.mxu0 0.0
    %4495 = vmatpush1.msra.mxu0 %v1129
    %4496 = vmatprep.subr.mxu0 0.0
    %4497 = vmatpush1.msra.mxu0 %v1130
    %4498 = vmatprep.subr.mxu0 0.0
    %4499 = vmatpush1.msra.mxu0 %v1131
    %4500 = vmatprep.subr.mxu0 0.0
    %4501 = vmatpush1.msra.mxu0 %v1132
    %4502 = vmatprep.subr.mxu0 0.0
    %4503 = vmatpush1.msra.mxu0 %v1133
    %4504 = vmatprep.subr.mxu0 0.0
    %4505 = vmatpush1.msra.mxu0 %v1134
    %4506 = vmatprep.subr.mxu0 0.0
    %4507 = vmatpush1.msra.mxu0 %v1135
    %4508 = vmatprep.subr.mxu0 0.0
    %4509 = vmatpush1.msra.mxu0 %v1136
    %4510 = vmatprep.subr.mxu0 0.0
    %4511 = vmatpush1.msra.mxu0 %v1137
    %4512 = vmatprep.subr.mxu0 0.0
    %4513 = vmatpush1.msra.mxu0 %v1138
    %4514 = vmatprep.subr.mxu0 0.0
    %4515 = vmatpush1.msra.mxu0 %v1139
    %4516 = vmatprep.subr.mxu0 0.0
    %4517 = vmatpush1.msra.mxu0 %v1140
    %4518 = vmatprep.subr.mxu0 0.0
    %4519 = vmatpush1.msra.mxu0 %v1141
    %4520 = vmatprep.subr.mxu0 0.0
    %4521 = vmatpush1.msra.mxu0 %v1142
    %4522 = vmatprep.subr.mxu0 0.0
    %4523 = vmatpush1.msra.mxu0 %v1143
    %4524 = vmatprep.subr.mxu0 0.0
    %4525 = vmatpush1.msra.mxu0 %v1144
    %4526 = vmatprep.subr.mxu0 0.0
    %4527 = vmatpush1.msra.mxu0 %v1145
    %4528 = vmatprep.subr.mxu0 0.0
    %4529 = vmatpush1.msra.mxu0 %v1146
    %4530 = vmatprep.subr.mxu0 0.0
    %4531 = vmatpush1.msra.mxu0 %v1147
    %4532 = vmatprep.subr.mxu0 0.0
    %4533 = vmatpush1.msra.mxu0 %v1148
    %4534 = vmatprep.subr.mxu0 0.0
    %4535 = vmatpush1.msra.mxu0 %v1149
    %4536 = vmatprep.subr.mxu0 0.0
    %4537 = vmatpush1.msra.mxu0 %v1150
    %4538 = vmatprep.subr.mxu0 0.0
    %4539 = vmatpush1.msra.mxu0 %v1151
    %4540 = vmatprep.subr.mxu0 0.0
    %4541 = vmatpush1.msra.mxu0 %v1152
    %4542 = vmatprep.subr.mxu0 0.0
    %4543 = vmatpush1.msra.mxu0 %v1153
    %4544 = vmatprep.subr.mxu0 0.0
    %4545 = vmatpush1.msra.mxu0 %v1154
    %4546 = vmatprep.subr.mxu0 0.0
    %4547 = vmatpush1.msra.mxu0 %v1155
    %4548 = vmatprep.subr.mxu0 0.0
    %4549 = vmatpush1.msra.mxu0 %v1156
    %4550 = vmatprep.subr.mxu0 0.0
    %4551 = vmatpush1.msra.mxu0 %v1157
    %4552 = vmatprep.subr.mxu0 0.0
    %4553 = vmatpush1.msra.mxu0 %v1158
    %4554 = vmatprep.mubr.f32.mxu0 %v1910
    %4555 = vmatmul.mubr.f32.gmra.mrb[0].mxu0 %v1902
    %v4556 = vpop.f32.mrb[0].mxu0
    %v4557 = vadd.f32 %v4487, %v4556
    %v4558 = vpop.f32.mrb[0].mxu0
    %4559 = vdwg.mxu0
    %4560 = vmatprep.subr.mxu0 0.0
    %4561 = vmatpush1.msra.mxu0 %v1159
    %4562 = vmatprep.subr.mxu0 0.0
    %4563 = vmatpush1.msra.mxu0 %v1160
    %4564 = vmatprep.subr.mxu0 0.0
    %4565 = vmatpush1.msra.mxu0 %v1161
    %4566 = vmatprep.subr.mxu0 0.0
    %4567 = vmatpush1.msra.mxu0 %v1162
    %4568 = vmatprep.subr.mxu0 0.0
    %4569 = vmatpush1.msra.mxu0 %v1163
    %4570 = vmatprep.subr.mxu0 0.0
    %4571 = vmatpush1.msra.mxu0 %v1164
    %4572 = vmatprep.subr.mxu0 0.0
    %4573 = vmatpush1.msra.mxu0 %v1165
    %4574 = vmatprep.subr.mxu0 0.0
    %4575 = vmatpush1.msra.mxu0 %v1166
    %4576 = vmatprep.subr.mxu0 0.0
    %4577 = vmatpush1.msra.mxu0 %v1167
    %4578 = vmatprep.subr.mxu0 0.0
    %4579 = vmatpush1.msra.mxu0 %v1168
    %4580 = vmatprep.subr.mxu0 0.0
    %4581 = vmatpush1.msra.mxu0 %v1169
    %4582 = vmatprep.subr.mxu0 0.0
    %4583 = vmatpush1.msra.mxu0 %v1170
    %4584 = vmatprep.subr.mxu0 0.0
    %4585 = vmatpush1.msra.mxu0 %v1171
    %4586 = vmatprep.subr.mxu0 0.0
    %4587 = vmatpush1.msra.mxu0 %v1172
    %4588 = vmatprep.subr.mxu0 0.0
    %4589 = vmatpush1.msra.mxu0 %v1173
    %4590 = vmatprep.subr.mxu0 0.0
    %4591 = vmatpush1.msra.mxu0 %v1174
    %4592 = vmatprep.subr.mxu0 0.0
    %4593 = vmatpush1.msra.mxu0 %v1175
    %4594 = vmatprep.subr.mxu0 0.0
    %4595 = vmatpush1.msra.mxu0 %v1176
    %4596 = vmatprep.subr.mxu0 0.0
    %4597 = vmatpush1.msra.mxu0 %v1177
    %4598 = vmatprep.subr.mxu0 0.0
    %4599 = vmatpush1.msra.mxu0 %v1178
    %4600 = vmatprep.subr.mxu0 0.0
    %4601 = vmatpush1.msra.mxu0 %v1179
    %4602 = vmatprep.subr.mxu0 0.0
    %4603 = vmatpush1.msra.mxu0 %v1180
    %4604 = vmatprep.subr.mxu0 0.0
    %4605 = vmatpush1.msra.mxu0 %v1181
    %4606 = vmatprep.subr.mxu0 0.0
    %4607 = vmatpush1.msra.mxu0 %v1182
    %4608 = vmatprep.subr.mxu0 0.0
    %4609 = vmatpush1.msra.mxu0 %v1183
    %4610 = vmatprep.subr.mxu0 0.0
    %4611 = vmatpush1.msra.mxu0 %v1184
    %4612 = vmatprep.subr.mxu0 0.0
    %4613 = vmatpush1.msra.mxu0 %v1185
    %4614 = vmatprep.subr.mxu0 0.0
    %4615 = vmatpush1.msra.mxu0 %v1186
    %4616 = vmatprep.subr.mxu0 0.0
    %4617 = vmatpush1.msra.mxu0 %v1187
    %4618 = vmatprep.subr.mxu0 0.0
    %4619 = vmatpush1.msra.mxu0 %v1188
    %4620 = vmatprep.subr.mxu0 0.0
    %4621 = vmatpush1.msra.mxu0 %v1189
    %4622 = vmatprep.subr.mxu0 0.0
    %4623 = vmatpush1.msra.mxu0 %v1190
    %4624 = vmatprep.mubr.f32.mxu0 %v1911
    %4625 = vmatmul.mubr.f32.gmra.mrb[0].mxu0 %v1909
    %v4626 = vpop.f32.mrb[0].mxu0
    %v4627 = vadd.f32 %v4557, %v4626
    %v4628 = vpop.f32.mrb[0].mxu0
    %4629 = vdwg.mxu0
    %4630 = vmatprep.subr.mxu0 0.0
    %4631 = vmatpush1.msra.mxu0 %v1191
    %4632 = vmatprep.subr.mxu0 0.0
    %4633 = vmatpush1.msra.mxu0 %v1192
    %4634 = vmatprep.subr.mxu0 0.0
    %4635 = vmatpush1.msra.mxu0 %v1193
    %4636 = vmatprep.subr.mxu0 0.0
    %4637 = vmatpush1.msra.mxu0 %v1194
    %4638 = vmatprep.subr.mxu0 0.0
    %4639 = vmatpush1.msra.mxu0 %v1195
    %4640 = vmatprep.subr.mxu0 0.0
    %4641 = vmatpush1.msra.mxu0 %v1196
    %4642 = vmatprep.subr.mxu0 0.0
    %4643 = vmatpush1.msra.mxu0 %v1197
    %4644 = vmatprep.subr.mxu0 0.0
    %4645 = vmatpush1.msra.mxu0 %v1198
    %4646 = vmatprep.subr.mxu0 0.0
    %4647 = vmatpush1.msra.mxu0 %v1199
    %4648 = vmatprep.subr.mxu0 0.0
    %4649 = vmatpush1.msra.mxu0 %v1200
    %4650 = vmatprep.subr.mxu0 0.0
    %4651 = vmatpush1.msra.mxu0 %v1201
    %4652 = vmatprep.subr.mxu0 0.0
    %4653 = vmatpush1.msra.mxu0 %v1202
    %4654 = vmatprep.subr.mxu0 0.0
    %4655 = vmatpush1.msra.mxu0 %v1203
    %4656 = vmatprep.subr.mxu0 0.0
    %4657 = vmatpush1.msra.mxu0 %v1204
    %4658 = vmatprep.subr.mxu0 0.0
    %4659 = vmatpush1.msra.mxu0 %v1205
    %4660 = vmatprep.subr.mxu0 0.0
    %4661 = vmatpush1.msra.mxu0 %v1206
    %4662 = vmatprep.subr.mxu0 0.0
    %4663 = vmatpush1.msra.mxu0 %v1207
    %4664 = vmatprep.subr.mxu0 0.0
    %4665 = vmatpush1.msra.mxu0 %v1208
    %4666 = vmatprep.subr.mxu0 0.0
    %4667 = vmatpush1.msra.mxu0 %v1209
    %4668 = vmatprep.subr.mxu0 0.0
    %4669 = vmatpush1.msra.mxu0 %v1210
    %4670 = vmatprep.subr.mxu0 0.0
    %4671 = vmatpush1.msra.mxu0 %v1211
    %4672 = vmatprep.subr.mxu0 0.0
    %4673 = vmatpush1.msra.mxu0 %v1212
    %4674 = vmatprep.subr.mxu0 0.0
    %4675 = vmatpush1.msra.mxu0 %v1213
    %4676 = vmatprep.subr.mxu0 0.0
    %4677 = vmatpush1.msra.mxu0 %v1214
    %4678 = vmatprep.subr.mxu0 0.0
    %4679 = vmatpush1.msra.mxu0 %v1215
    %4680 = vmatprep.subr.mxu0 0.0
    %4681 = vmatpush1.msra.mxu0 %v1216
    %4682 = vmatprep.subr.mxu0 0.0
    %4683 = vmatpush1.msra.mxu0 %v1217
    %4684 = vmatprep.subr.mxu0 0.0
    %4685 = vmatpush1.msra.mxu0 %v1218
    %4686 = vmatprep.subr.mxu0 0.0
    %4687 = vmatpush1.msra.mxu0 %v1219
    %4688 = vmatprep.subr.mxu0 0.0
    %4689 = vmatpush1.msra.mxu0 %v1220
    %4690 = vmatprep.subr.mxu0 0.0
    %4691 = vmatpush1.msra.mxu0 %v1221
    %4692 = vmatprep.subr.mxu0 0.0
    %4693 = vmatpush1.msra.mxu0 %v1222
    %4694 = vmatprep.mubr.f32.mxu0 %v1927
    %4695 = vmatmul.mubr.f32.gmra.mrb[0].mxu0 %v1919
    %v4696 = vpop.f32.mrb[0].mxu0
    %v4697 = vadd.f32 %v4627, %v4696
    %v4698 = vpop.f32.mrb[0].mxu0
    %4699 = vdwg.mxu0
    %4700 = vmatprep.subr.mxu0 0.0
    %4701 = vmatpush1.msra.mxu0 %v1223
    %4702 = vmatprep.subr.mxu0 0.0
    %4703 = vmatpush1.msra.mxu0 %v1224
    %4704 = vmatprep.subr.mxu0 0.0
    %4705 = vmatpush1.msra.mxu0 %v1225
    %4706 = vmatprep.subr.mxu0 0.0
    %4707 = vmatpush1.msra.mxu0 %v1226
    %4708 = vmatprep.subr.mxu0 0.0
    %4709 = vmatpush1.msra.mxu0 %v1227
    %4710 = vmatprep.subr.mxu0 0.0
    %4711 = vmatpush1.msra.mxu0 %v1228
    %4712 = vmatprep.subr.mxu0 0.0
    %4713 = vmatpush1.msra.mxu0 %v1229
    %4714 = vmatprep.subr.mxu0 0.0
    %4715 = vmatpush1.msra.mxu0 %v1230
    %4716 = vmatprep.subr.mxu0 0.0
    %4717 = vmatpush1.msra.mxu0 %v1231
    %4718 = vmatprep.subr.mxu0 0.0
    %4719 = vmatpush1.msra.mxu0 %v1232
    %4720 = vmatprep.subr.mxu0 0.0
    %4721 = vmatpush1.msra.mxu0 %v1233
    %4722 = vmatprep.subr.mxu0 0.0
    %4723 = vmatpush1.msra.mxu0 %v1234
    %4724 = vmatprep.subr.mxu0 0.0
    %4725 = vmatpush1.msra.mxu0 %v1235
    %4726 = vmatprep.subr.mxu0 0.0
    %4727 = vmatpush1.msra.mxu0 %v1236
    %4728 = vmatprep.subr.mxu0 0.0
    %4729 = vmatpush1.msra.mxu0 %v1237
    %4730 = vmatprep.subr.mxu0 0.0
    %4731 = vmatpush1.msra.mxu0 %v1238
    %4732 = vmatprep.subr.mxu0 0.0
    %4733 = vmatpush1.msra.mxu0 %v1239
    %4734 = vmatprep.subr.mxu0 0.0
    %4735 = vmatpush1.msra.mxu0 %v1240
    %4736 = vmatprep.subr.mxu0 0.0
    %4737 = vmatpush1.msra.mxu0 %v1241
    %4738 = vmatprep.subr.mxu0 0.0
    %4739 = vmatpush1.msra.mxu0 %v1242
    %4740 = vmatprep.subr.mxu0 0.0
    %4741 = vmatpush1.msra.mxu0 %v1243
    %4742 = vmatprep.subr.mxu0 0.0
    %4743 = vmatpush1.msra.mxu0 %v1244
    %4744 = vmatprep.subr.mxu0 0.0
    %4745 = vmatpush1.msra.mxu0 %v1245
    %4746 = vmatprep.subr.mxu0 0.0
    %4747 = vmatpush1.msra.mxu0 %v1246
    %4748 = vmatprep.subr.mxu0 0.0
    %4749 = vmatpush1.msra.mxu0 %v1247
    %4750 = vmatprep.subr.mxu0 0.0
    %4751 = vmatpush1.msra.mxu0 %v1248
    %4752 = vmatprep.subr.mxu0 0.0
    %4753 = vmatpush1.msra.mxu0 %v1249
    %4754 = vmatprep.subr.mxu0 0.0
    %4755 = vmatpush1.msra.mxu0 %v1250
    %4756 = vmatprep.subr.mxu0 0.0
    %4757 = vmatpush1.msra.mxu0 %v1251
    %4758 = vmatprep.subr.mxu0 0.0
    %4759 = vmatpush1.msra.mxu0 %v1252
    %4760 = vmatprep.subr.mxu0 0.0
    %4761 = vmatpush1.msra.mxu0 %v1253
    %4762 = vmatprep.subr.mxu0 0.0
    %4763 = vmatpush1.msra.mxu0 %v1254
    %4764 = vmatprep.mubr.f32.mxu0 %v1928
    %4765 = vmatmul.mubr.f32.gmra.mrb[0].mxu0 %v1926
    %v4766 = vpop.f32.mrb[0].mxu0
    %v4767 = vadd.f32 %v4697, %v4766
    %v4768 = vpop.f32.mrb[0].mxu0
    %4769 = vdwg.mxu0
    %4770 = vmatprep.subr.mxu0 0.0
    %4771 = vmatpush1.msra.mxu0 %v1255
    %4772 = vmatprep.subr.mxu0 0.0
    %4773 = vmatpush1.msra.mxu0 %v1256
    %4774 = vmatprep.subr.mxu0 0.0
    %4775 = vmatpush1.msra.mxu0 %v1257
    %4776 = vmatprep.subr.mxu0 0.0
    %4777 = vmatpush1.msra.mxu0 %v1258
    %4778 = vmatprep.subr.mxu0 0.0
    %4779 = vmatpush1.msra.mxu0 %v1259
    %4780 = vmatprep.subr.mxu0 0.0
    %4781 = vmatpush1.msra.mxu0 %v1260
    %4782 = vmatprep.subr.mxu0 0.0
    %4783 = vmatpush1.msra.mxu0 %v1261
    %4784 = vmatprep.subr.mxu0 0.0
    %4785 = vmatpush1.msra.mxu0 %v1262
    %4786 = vmatprep.subr.mxu0 0.0
    %4787 = vmatpush1.msra.mxu0 %v1263
    %4788 = vmatprep.subr.mxu0 0.0
    %4789 = vmatpush1.msra.mxu0 %v1264
    %4790 = vmatprep.subr.mxu0 0.0
    %4791 = vmatpush1.msra.mxu0 %v1265
    %4792 = vmatprep.subr.mxu0 0.0
    %4793 = vmatpush1.msra.mxu0 %v1266
    %4794 = vmatprep.subr.mxu0 0.0
    %4795 = vmatpush1.msra.mxu0 %v1267
    %4796 = vmatprep.subr.mxu0 0.0
    %4797 = vmatpush1.msra.mxu0 %v1268
    %4798 = vmatprep.subr.mxu0 0.0
    %4799 = vmatpush1.msra.mxu0 %v1269
    %4800 = vmatprep.subr.mxu0 0.0
    %4801 = vmatpush1.msra.mxu0 %v1270
    %4802 = vmatprep.subr.mxu0 0.0
    %4803 = vmatpush1.msra.mxu0 %v1271
    %4804 = vmatprep.subr.mxu0 0.0
    %4805 = vmatpush1.msra.mxu0 %v1272
    %4806 = vmatprep.subr.mxu0 0.0
    %4807 = vmatpush1.msra.mxu0 %v1273
    %4808 = vmatprep.subr.mxu0 0.0
    %4809 = vmatpush1.msra.mxu0 %v1274
    %4810 = vmatprep.subr.mxu0 0.0
    %4811 = vmatpush1.msra.mxu0 %v1275
    %4812 = vmatprep.subr.mxu0 0.0
    %4813 = vmatpush1.msra.mxu0 %v1276
    %4814 = vmatprep.subr.mxu0 0.0
    %4815 = vmatpush1.msra.mxu0 %v1277
    %4816 = vmatprep.subr.mxu0 0.0
    %4817 = vmatpush1.msra.mxu0 %v1278
    %4818 = vmatprep.subr.mxu0 0.0
    %4819 = vmatpush1.msra.mxu0 %v1279
    %4820 = vmatprep.subr.mxu0 0.0
    %4821 = vmatpush1.msra.mxu0 %v1280
    %4822 = vmatprep.subr.mxu0 0.0
    %4823 = vmatpush1.msra.mxu0 %v1281
    %4824 = vmatprep.subr.mxu0 0.0
    %4825 = vmatpush1.msra.mxu0 %v1282
    %4826 = vmatprep.subr.mxu0 0.0
    %4827 = vmatpush1.msra.mxu0 %v1283
    %4828 = vmatprep.subr.mxu0 0.0
    %4829 = vmatpush1.msra.mxu0 %v1284
    %4830 = vmatprep.subr.mxu0 0.0
    %4831 = vmatpush1.msra.mxu0 %v1285
    %4832 = vmatprep.subr.mxu0 0.0
    %4833 = vmatpush1.msra.mxu0 %v1286
    %4834 = vmatprep.mubr.f32.mxu0 %v1944
    %4835 = vmatmul.mubr.f32.gmra.mrb[0].mxu0 %v1936
    %v4836 = vpop.f32.mrb[0].mxu0
    %v4837 = vadd.f32 %v4767, %v4836
    %v4838 = vpop.f32.mrb[0].mxu0
    %4839 = vdwg.mxu0
    %4840 = vmatprep.subr.mxu0 0.0
    %4841 = vmatpush1.msra.mxu0 %v1287
    %4842 = vmatprep.subr.mxu0 0.0
    %4843 = vmatpush1.msra.mxu0 %v1288
    %4844 = vmatprep.subr.mxu0 0.0
    %4845 = vmatpush1.msra.mxu0 %v1289
    %4846 = vmatprep.subr.mxu0 0.0
    %4847 = vmatpush1.msra.mxu0 %v1290
    %4848 = vmatprep.subr.mxu0 0.0
    %4849 = vmatpush1.msra.mxu0 %v1291
    %4850 = vmatprep.subr.mxu0 0.0
    %4851 = vmatpush1.msra.mxu0 %v1292
    %4852 = vmatprep.subr.mxu0 0.0
    %4853 = vmatpush1.msra.mxu0 %v1293
    %4854 = vmatprep.subr.mxu0 0.0
    %4855 = vmatpush1.msra.mxu0 %v1294
    %4856 = vmatprep.subr.mxu0 0.0
    %4857 = vmatpush1.msra.mxu0 %v1295
    %4858 = vmatprep.subr.mxu0 0.0
    %4859 = vmatpush1.msra.mxu0 %v1296
    %4860 = vmatprep.subr.mxu0 0.0
    %4861 = vmatpush1.msra.mxu0 %v1297
    %4862 = vmatprep.subr.mxu0 0.0
    %4863 = vmatpush1.msra.mxu0 %v1298
    %4864 = vmatprep.subr.mxu0 0.0
    %4865 = vmatpush1.msra.mxu0 %v1299
    %4866 = vmatprep.subr.mxu0 0.0
    %4867 = vmatpush1.msra.mxu0 %v1300
    %4868 = vmatprep.subr.mxu0 0.0
    %4869 = vmatpush1.msra.mxu0 %v1301
    %4870 = vmatprep.subr.mxu0 0.0
    %4871 = vmatpush1.msra.mxu0 %v1302
    %4872 = vmatprep.subr.mxu0 0.0
    %4873 = vmatpush1.msra.mxu0 %v1303
    %4874 = vmatprep.subr.mxu0 0.0
    %4875 = vmatpush1.msra.mxu0 %v1304
    %4876 = vmatprep.subr.mxu0 0.0
    %4877 = vmatpush1.msra.mxu0 %v1305
    %4878 = vmatprep.subr.mxu0 0.0
    %4879 = vmatpush1.msra.mxu0 %v1306
    %4880 = vmatprep.subr.mxu0 0.0
    %4881 = vmatpush1.msra.mxu0 %v1307
    %4882 = vmatprep.subr.mxu0 0.0
    %4883 = vmatpush1.msra.mxu0 %v1308
    %4884 = vmatprep.subr.mxu0 0.0
    %4885 = vmatpush1.msra.mxu0 %v1309
    %4886 = vmatprep.subr.mxu0 0.0
    %4887 = vmatpush1.msra.mxu0 %v1310
    %4888 = vmatprep.subr.mxu0 0.0
    %4889 = vmatpush1.msra.mxu0 %v1311
    %4890 = vmatprep.subr.mxu0 0.0
    %4891 = vmatpush1.msra.mxu0 %v1312
    %4892 = vmatprep.subr.mxu0 0.0
    %4893 = vmatpush1.msra.mxu0 %v1313
    %4894 = vmatprep.subr.mxu0 0.0
    %4895 = vmatpush1.msra.mxu0 %v1314
    %4896 = vmatprep.subr.mxu0 0.0
    %4897 = vmatpush1.msra.mxu0 %v1315
    %4898 = vmatprep.subr.mxu0 0.0
    %4899 = vmatpush1.msra.mxu0 %v1316
    %4900 = vmatprep.subr.mxu0 0.0
    %4901 = vmatpush1.msra.mxu0 %v1317
    %4902 = vmatprep.subr.mxu0 0.0
    %4903 = vmatpush1.msra.mxu0 %v1318
    %4904 = vmatprep.mubr.f32.mxu0 %v1945
    %4905 = vmatmul.mubr.f32.gmra.mrb[0].mxu0 %v1943
    %v4906 = vpop.f32.mrb[0].mxu0
    %v4907 = vadd.f32 %v4837, %v4906
    %v4908 = vpop.f32.mrb[0].mxu0
    %4909 = vdwg.mxu0
    %4910 = vmatprep.subr.mxu0 0.0
    %4911 = vmatpush1.msra.mxu0 %v1319
    %4912 = vmatprep.subr.mxu0 0.0
    %4913 = vmatpush1.msra.mxu0 %v1320
    %4914 = vmatprep.subr.mxu0 0.0
    %4915 = vmatpush1.msra.mxu0 %v1321
    %4916 = vmatprep.subr.mxu0 0.0
    %4917 = vmatpush1.msra.mxu0 %v1322
    %4918 = vmatprep.subr.mxu0 0.0
    %4919 = vmatpush1.msra.mxu0 %v1323
    %4920 = vmatprep.subr.mxu0 0.0
    %4921 = vmatpush1.msra.mxu0 %v1324
    %4922 = vmatprep.subr.mxu0 0.0
    %4923 = vmatpush1.msra.mxu0 %v1325
    %4924 = vmatprep.subr.mxu0 0.0
    %4925 = vmatpush1.msra.mxu0 %v1326
    %4926 = vmatprep.subr.mxu0 0.0
    %4927 = vmatpush1.msra.mxu0 %v1327
    %4928 = vmatprep.subr.mxu0 0.0
    %4929 = vmatpush1.msra.mxu0 %v1328
    %4930 = vmatprep.subr.mxu0 0.0
    %4931 = vmatpush1.msra.mxu0 %v1329
    %4932 = vmatprep.subr.mxu0 0.0
    %4933 = vmatpush1.msra.mxu0 %v1330
    %4934 = vmatprep.subr.mxu0 0.0
    %4935 = vmatpush1.msra.mxu0 %v1331
    %4936 = vmatprep.subr.mxu0 0.0
    %4937 = vmatpush1.msra.mxu0 %v1332
    %4938 = vmatprep.subr.mxu0 0.0
    %4939 = vmatpush1.msra.mxu0 %v1333
    %4940 = vmatprep.subr.mxu0 0.0
    %4941 = vmatpush1.msra.mxu0 %v1334
    %4942 = vmatprep.subr.mxu0 0.0
    %4943 = vmatpush1.msra.mxu0 %v1335
    %4944 = vmatprep.subr.mxu0 0.0
    %4945 = vmatpush1.msra.mxu0 %v1336
    %4946 = vmatprep.subr.mxu0 0.0
    %4947 = vmatpush1.msra.mxu0 %v1337
    %4948 = vmatprep.subr.mxu0 0.0
    %4949 = vmatpush1.msra.mxu0 %v1338
    %4950 = vmatprep.subr.mxu0 0.0
    %4951 = vmatpush1.msra.mxu0 %v1339
    %4952 = vmatprep.subr.mxu0 0.0
    %4953 = vmatpush1.msra.mxu0 %v1340
    %4954 = vmatprep.subr.mxu0 0.0
    %4955 = vmatpush1.msra.mxu0 %v1341
    %4956 = vmatprep.subr.mxu0 0.0
    %4957 = vmatpush1.msra.mxu0 %v1342
    %4958 = vmatprep.subr.mxu0 0.0
    %4959 = vmatpush1.msra.mxu0 %v1343
    %4960 = vmatprep.subr.mxu0 0.0
    %4961 = vmatpush1.msra.mxu0 %v1344
    %4962 = vmatprep.subr.mxu0 0.0
    %4963 = vmatpush1.msra.mxu0 %v1345
    %4964 = vmatprep.subr.mxu0 0.0
    %4965 = vmatpush1.msra.mxu0 %v1346
    %4966 = vmatprep.subr.mxu0 0.0
    %4967 = vmatpush1.msra.mxu0 %v1347
    %4968 = vmatprep.subr.mxu0 0.0
    %4969 = vmatpush1.msra.mxu0 %v1348
    %4970 = vmatprep.subr.mxu0 0.0
    %4971 = vmatpush1.msra.mxu0 %v1349
    %4972 = vmatprep.subr.mxu0 0.0
    %4973 = vmatpush1.msra.mxu0 %v1350
    %4974 = vmatprep.mubr.f32.mxu0 %v1961
    %4975 = vmatmul.mubr.f32.gmra.mrb[0].mxu0 %v1953
    %v4976 = vpop.f32.mrb[0].mxu0
    %v4977 = vadd.f32 %v4907, %v4976
    %v4978 = vpop.f32.mrb[0].mxu0
    %4979 = vdwg.mxu0
    %4980 = vmatprep.subr.mxu0 0.0
    %4981 = vmatpush1.msra.mxu0 %v1351
    %4982 = vmatprep.subr.mxu0 0.0
    %4983 = vmatpush1.msra.mxu0 %v1352
    %4984 = vmatprep.subr.mxu0 0.0
    %4985 = vmatpush1.msra.mxu0 %v1353
    %4986 = vmatprep.subr.mxu0 0.0
    %4987 = vmatpush1.msra.mxu0 %v1354
    %4988 = vmatprep.subr.mxu0 0.0
    %4989 = vmatpush1.msra.mxu0 %v1355
    %4990 = vmatprep.subr.mxu0 0.0
    %4991 = vmatpush1.msra.mxu0 %v1356
    %4992 = vmatprep.subr.mxu0 0.0
    %4993 = vmatpush1.msra.mxu0 %v1357
    %4994 = vmatprep.subr.mxu0 0.0
    %4995 = vmatpush1.msra.mxu0 %v1358
    %4996 = vmatprep.subr.mxu0 0.0
    %4997 = vmatpush1.msra.mxu0 %v1359
    %4998 = vmatprep.subr.mxu0 0.0
    %4999 = vmatpush1.msra.mxu0 %v1360
    %5000 = vmatprep.subr.mxu0 0.0
    %5001 = vmatpush1.msra.mxu0 %v1361
    %5002 = vmatprep.subr.mxu0 0.0
    %5003 = vmatpush1.msra.mxu0 %v1362
    %5004 = vmatprep.subr.mxu0 0.0
    %5005 = vmatpush1.msra.mxu0 %v1363
    %5006 = vmatprep.subr.mxu0 0.0
    %5007 = vmatpush1.msra.mxu0 %v1364
    %5008 = vmatprep.subr.mxu0 0.0
    %5009 = vmatpush1.msra.mxu0 %v1365
    %5010 = vmatprep.subr.mxu0 0.0
    %5011 = vmatpush1.msra.mxu0 %v1366
    %5012 = vmatprep.subr.mxu0 0.0
    %5013 = vmatpush1.msra.mxu0 %v1367
    %5014 = vmatprep.subr.mxu0 0.0
    %5015 = vmatpush1.msra.mxu0 %v1368
    %5016 = vmatprep.subr.mxu0 0.0
    %5017 = vmatpush1.msra.mxu0 %v1369
    %5018 = vmatprep.subr.mxu0 0.0
    %5019 = vmatpush1.msra.mxu0 %v1370
    %5020 = vmatprep.subr.mxu0 0.0
    %5021 = vmatpush1.msra.mxu0 %v1371
    %5022 = vmatprep.subr.mxu0 0.0
    %5023 = vmatpush1.msra.mxu0 %v1372
    %5024 = vmatprep.subr.mxu0 0.0
    %5025 = vmatpush1.msra.mxu0 %v1373
    %5026 = vmatprep.subr.mxu0 0.0
    %5027 = vmatpush1.msra.mxu0 %v1374
    %5028 = vmatprep.subr.mxu0 0.0
    %5029 = vmatpush1.msra.mxu0 %v1375
    %5030 = vmatprep.subr.mxu0 0.0
    %5031 = vmatpush1.msra.mxu0 %v1376
    %5032 = vmatprep.subr.mxu0 0.0
    %5033 = vmatpush1.msra.mxu0 %v1377
    %5034 = vmatprep.subr.mxu0 0.0
    %5035 = vmatpush1.msra.mxu0 %v1378
    %5036 = vmatprep.subr.mxu0 0.0
    %5037 = vmatpush1.msra.mxu0 %v1379
    %5038 = vmatprep.subr.mxu0 0.0
    %5039 = vmatpush1.msra.mxu0 %v1380
    %5040 = vmatprep.subr.mxu0 0.0
    %5041 = vmatpush1.msra.mxu0 %v1381
    %5042 = vmatprep.subr.mxu0 0.0
    %5043 = vmatpush1.msra.mxu0 %v1382
    %5044 = vmatprep.mubr.f32.mxu0 %v1962
    %5045 = vmatmul.mubr.f32.gmra.mrb[0].mxu0 %v1960
    %v5046 = vpop.f32.mrb[0].mxu0
    %v5047 = vadd.f32 %v4977, %v5046
    %v5048 = vpop.f32.mrb[0].mxu0
    %5049 = vdwg.mxu0
    %5050 = vmatprep.subr.mxu0 0.0
    %5051 = vmatpush1.msra.mxu0 %v1383
    %5052 = vmatprep.subr.mxu0 0.0
    %5053 = vmatpush1.msra.mxu0 %v1384
    %5054 = vmatprep.subr.mxu0 0.0
    %5055 = vmatpush1.msra.mxu0 %v1385
    %5056 = vmatprep.subr.mxu0 0.0
    %5057 = vmatpush1.msra.mxu0 %v1386
    %5058 = vmatprep.subr.mxu0 0.0
    %5059 = vmatpush1.msra.mxu0 %v1387
    %5060 = vmatprep.subr.mxu0 0.0
    %5061 = vmatpush1.msra.mxu0 %v1388
    %5062 = vmatprep.subr.mxu0 0.0
    %5063 = vmatpush1.msra.mxu0 %v1389
    %5064 = vmatprep.subr.mxu0 0.0
    %5065 = vmatpush1.msra.mxu0 %v1390
    %5066 = vmatprep.subr.mxu0 0.0
    %5067 = vmatpush1.msra.mxu0 %v1391
    %5068 = vmatprep.subr.mxu0 0.0
    %5069 = vmatpush1.msra.mxu0 %v1392
    %5070 = vmatprep.subr.mxu0 0.0
    %5071 = vmatpush1.msra.mxu0 %v1393
    %5072 = vmatprep.subr.mxu0 0.0
    %5073 = vmatpush1.msra.mxu0 %v1394
    %5074 = vmatprep.subr.mxu0 0.0
    %5075 = vmatpush1.msra.mxu0 %v1395
    %5076 = vmatprep.subr.mxu0 0.0
    %5077 = vmatpush1.msra.mxu0 %v1396
    %5078 = vmatprep.subr.mxu0 0.0
    %5079 = vmatpush1.msra.mxu0 %v1397
    %5080 = vmatprep.subr.mxu0 0.0
    %5081 = vmatpush1.msra.mxu0 %v1398
    %5082 = vmatprep.subr.mxu0 0.0
    %5083 = vmatpush1.msra.mxu0 %v1399
    %5084 = vmatprep.subr.mxu0 0.0
    %5085 = vmatpush1.msra.mxu0 %v1400
    %5086 = vmatprep.subr.mxu0 0.0
    %5087 = vmatpush1.msra.mxu0 %v1401
    %5088 = vmatprep.subr.mxu0 0.0
    %5089 = vmatpush1.msra.mxu0 %v1402
    %5090 = vmatprep.subr.mxu0 0.0
    %5091 = vmatpush1.msra.mxu0 %v1403
    %5092 = vmatprep.subr.mxu0 0.0
    %5093 = vmatpush1.msra.mxu0 %v1404
    %5094 = vmatprep.subr.mxu0 0.0
    %5095 = vmatpush1.msra.mxu0 %v1405
    %5096 = vmatprep.subr.mxu0 0.0
    %5097 = vmatpush1.msra.mxu0 %v1406
    %5098 = vmatprep.subr.mxu0 0.0
    %5099 = vmatpush1.msra.mxu0 %v1407
    %5100 = vmatprep.subr.mxu0 0.0
    %5101 = vmatpush1.msra.mxu0 %v1408
    %5102 = vmatprep.subr.mxu0 0.0
    %5103 = vmatpush1.msra.mxu0 %v1409
    %5104 = vmatprep.subr.mxu0 0.0
    %5105 = vmatpush1.msra.mxu0 %v1410
    %5106 = vmatprep.subr.mxu0 0.0
    %5107 = vmatpush1.msra.mxu0 %v1411
    %5108 = vmatprep.subr.mxu0 0.0
    %5109 = vmatpush1.msra.mxu0 %v1412
    %5110 = vmatprep.subr.mxu0 0.0
    %5111 = vmatpush1.msra.mxu0 %v1413
    %5112 = vmatprep.subr.mxu0 0.0
    %5113 = vmatpush1.msra.mxu0 %v1414
    %5114 = vmatprep.mubr.f32.mxu0 %v1978
    %5115 = vmatmul.mubr.f32.gmra.mrb[0].mxu0 %v1970
    %v5116 = vpop.f32.mrb[0].mxu0
    %v5117 = vadd.f32 %v5047, %v5116
    %v5118 = vpop.f32.mrb[0].mxu0
    %5119 = vdwg.mxu0
    %5120 = vmatprep.subr.mxu0 0.0
    %5121 = vmatpush1.msra.mxu0 %v1415
    %5122 = vmatprep.subr.mxu0 0.0
    %5123 = vmatpush1.msra.mxu0 %v1416
    %5124 = vmatprep.subr.mxu0 0.0
    %5125 = vmatpush1.msra.mxu0 %v1417
    %5126 = vmatprep.subr.mxu0 0.0
    %5127 = vmatpush1.msra.mxu0 %v1418
    %5128 = vmatprep.subr.mxu0 0.0
    %5129 = vmatpush1.msra.mxu0 %v1419
    %5130 = vmatprep.subr.mxu0 0.0
    %5131 = vmatpush1.msra.mxu0 %v1420
    %5132 = vmatprep.subr.mxu0 0.0
    %5133 = vmatpush1.msra.mxu0 %v1421
    %5134 = vmatprep.subr.mxu0 0.0
    %5135 = vmatpush1.msra.mxu0 %v1422
    %5136 = vmatprep.subr.mxu0 0.0
    %5137 = vmatpush1.msra.mxu0 %v1423
    %5138 = vmatprep.subr.mxu0 0.0
    %5139 = vmatpush1.msra.mxu0 %v1424
    %5140 = vmatprep.subr.mxu0 0.0
    %5141 = vmatpush1.msra.mxu0 %v1425
    %5142 = vmatprep.subr.mxu0 0.0
    %5143 = vmatpush1.msra.mxu0 %v1426
    %5144 = vmatprep.subr.mxu0 0.0
    %5145 = vmatpush1.msra.mxu0 %v1427
    %5146 = vmatprep.subr.mxu0 0.0
    %5147 = vmatpush1.msra.mxu0 %v1428
    %5148 = vmatprep.subr.mxu0 0.0
    %5149 = vmatpush1.msra.mxu0 %v1429
    %5150 = vmatprep.subr.mxu0 0.0
    %5151 = vmatpush1.msra.mxu0 %v1430
    %5152 = vmatprep.subr.mxu0 0.0
    %5153 = vmatpush1.msra.mxu0 %v1431
    %5154 = vmatprep.subr.mxu0 0.0
    %5155 = vmatpush1.msra.mxu0 %v1432
    %5156 = vmatprep.subr.mxu0 0.0
    %5157 = vmatpush1.msra.mxu0 %v1433
    %5158 = vmatprep.subr.mxu0 0.0
    %5159 = vmatpush1.msra.mxu0 %v1434
    %5160 = vmatprep.subr.mxu0 0.0
    %5161 = vmatpush1.msra.mxu0 %v1435
    %5162 = vmatprep.subr.mxu0 0.0
    %5163 = vmatpush1.msra.mxu0 %v1436
    %5164 = vmatprep.subr.mxu0 0.0
    %5165 = vmatpush1.msra.mxu0 %v1437
    %5166 = vmatprep.subr.mxu0 0.0
    %5167 = vmatpush1.msra.mxu0 %v1438
    %5168 = vmatprep.subr.mxu0 0.0
    %5169 = vmatpush1.msra.mxu0 %v1439
    %5170 = vmatprep.subr.mxu0 0.0
    %5171 = vmatpush1.msra.mxu0 %v1440
    %5172 = vmatprep.subr.mxu0 0.0
    %5173 = vmatpush1.msra.mxu0 %v1441
    %5174 = vmatprep.subr.mxu0 0.0
    %5175 = vmatpush1.msra.mxu0 %v1442
    %5176 = vmatprep.subr.mxu0 0.0
    %5177 = vmatpush1.msra.mxu0 %v1443
    %5178 = vmatprep.subr.mxu0 0.0
    %5179 = vmatpush1.msra.mxu0 %v1444
    %5180 = vmatprep.subr.mxu0 0.0
    %5181 = vmatpush1.msra.mxu0 %v1445
    %5182 = vmatprep.subr.mxu0 0.0
    %5183 = vmatpush1.msra.mxu0 %v1446
    %5184 = vmatprep.mubr.f32.mxu0 %v1979
    %5185 = vmatmul.mubr.f32.gmra.mrb[0].mxu0 %v1977
    %v5186 = vpop.f32.mrb[0].mxu0
    %v5187 = vadd.f32 %v5117, %v5186
    %v5188 = vpop.f32.mrb[0].mxu0
    %5189 = vdwg.mxu0
    %5190 = vmatprep.subr.mxu0 0.0
    %5191 = vmatpush1.msra.mxu0 %v1447
    %5192 = vmatprep.subr.mxu0 0.0
    %5193 = vmatpush1.msra.mxu0 %v1448
    %5194 = vmatprep.subr.mxu0 0.0
    %5195 = vmatpush1.msra.mxu0 %v1449
    %5196 = vmatprep.subr.mxu0 0.0
    %5197 = vmatpush1.msra.mxu0 %v1450
    %5198 = vmatprep.subr.mxu0 0.0
    %5199 = vmatpush1.msra.mxu0 %v1451
    %5200 = vmatprep.subr.mxu0 0.0
    %5201 = vmatpush1.msra.mxu0 %v1452
    %5202 = vmatprep.subr.mxu0 0.0
    %5203 = vmatpush1.msra.mxu0 %v1453
    %5204 = vmatprep.subr.mxu0 0.0
    %5205 = vmatpush1.msra.mxu0 %v1454
    %5206 = vmatprep.subr.mxu0 0.0
    %5207 = vmatpush1.msra.mxu0 %v1455
    %5208 = vmatprep.subr.mxu0 0.0
    %5209 = vmatpush1.msra.mxu0 %v1456
    %5210 = vmatprep.subr.mxu0 0.0
    %5211 = vmatpush1.msra.mxu0 %v1457
    %5212 = vmatprep.subr.mxu0 0.0
    %5213 = vmatpush1.msra.mxu0 %v1458
    %5214 = vmatprep.subr.mxu0 0.0
    %5215 = vmatpush1.msra.mxu0 %v1459
    %5216 = vmatprep.subr.mxu0 0.0
    %5217 = vmatpush1.msra.mxu0 %v1460
    %5218 = vmatprep.subr.mxu0 0.0
    %5219 = vmatpush1.msra.mxu0 %v1461
    %5220 = vmatprep.subr.mxu0 0.0
    %5221 = vmatpush1.msra.mxu0 %v1462
    %5222 = vmatprep.subr.mxu0 0.0
    %5223 = vmatpush1.msra.mxu0 %v1463
    %5224 = vmatprep.subr.mxu0 0.0
    %5225 = vmatpush1.msra.mxu0 %v1464
    %5226 = vmatprep.subr.mxu0 0.0
    %5227 = vmatpush1.msra.mxu0 %v1465
    %5228 = vmatprep.subr.mxu0 0.0
    %5229 = vmatpush1.msra.mxu0 %v1466
    %5230 = vmatprep.subr.mxu0 0.0
    %5231 = vmatpush1.msra.mxu0 %v1467
    %5232 = vmatprep.subr.mxu0 0.0
    %5233 = vmatpush1.msra.mxu0 %v1468
    %5234 = vmatprep.subr.mxu0 0.0
    %5235 = vmatpush1.msra.mxu0 %v1469
    %5236 = vmatprep.subr.mxu0 0.0
    %5237 = vmatpush1.msra.mxu0 %v1470
    %5238 = vmatprep.subr.mxu0 0.0
    %5239 = vmatpush1.msra.mxu0 %v1471
    %5240 = vmatprep.subr.mxu0 0.0
    %5241 = vmatpush1.msra.mxu0 %v1472
    %5242 = vmatprep.subr.mxu0 0.0
    %5243 = vmatpush1.msra.mxu0 %v1473
    %5244 = vmatprep.subr.mxu0 0.0
    %5245 = vmatpush1.msra.mxu0 %v1474
    %5246 = vmatprep.subr.mxu0 0.0
    %5247 = vmatpush1.msra.mxu0 %v1475
    %5248 = vmatprep.subr.mxu0 0.0
    %5249 = vmatpush1.msra.mxu0 %v1476
    %5250 = vmatprep.subr.mxu0 0.0
    %5251 = vmatpush1.msra.mxu0 %v1477
    %5252 = vmatprep.subr.mxu0 0.0
    %5253 = vmatpush1.msra.mxu0 %v1478
    %5254 = vmatprep.mubr.f32.mxu0 %v1995
    %5255 = vmatmul.mubr.f32.gmra.mrb[0].mxu0 %v1987
    %v5256 = vpop.f32.mrb[0].mxu0
    %v5257 = vadd.f32 %v5187, %v5256
    %v5258 = vpop.f32.mrb[0].mxu0
    %5259 = vdwg.mxu0
    %5260 = vmatprep.subr.mxu0 0.0
    %5261 = vmatpush1.msra.mxu0 %v1479
    %5262 = vmatprep.subr.mxu0 0.0
    %5263 = vmatpush1.msra.mxu0 %v1480
    %5264 = vmatprep.subr.mxu0 0.0
    %5265 = vmatpush1.msra.mxu0 %v1481
    %5266 = vmatprep.subr.mxu0 0.0
    %5267 = vmatpush1.msra.mxu0 %v1482
    %5268 = vmatprep.subr.mxu0 0.0
    %5269 = vmatpush1.msra.mxu0 %v1483
    %5270 = vmatprep.subr.mxu0 0.0
    %5271 = vmatpush1.msra.mxu0 %v1484
    %5272 = vmatprep.subr.mxu0 0.0
    %5273 = vmatpush1.msra.mxu0 %v1485
    %5274 = vmatprep.subr.mxu0 0.0
    %5275 = vmatpush1.msra.mxu0 %v1486
    %5276 = vmatprep.subr.mxu0 0.0
    %5277 = vmatpush1.msra.mxu0 %v1487
    %5278 = vmatprep.subr.mxu0 0.0
    %5279 = vmatpush1.msra.mxu0 %v1488
    %5280 = vmatprep.subr.mxu0 0.0
    %5281 = vmatpush1.msra.mxu0 %v1489
    %5282 = vmatprep.subr.mxu0 0.0
    %5283 = vmatpush1.msra.mxu0 %v1490
    %5284 = vmatprep.subr.mxu0 0.0
    %5285 = vmatpush1.msra.mxu0 %v1491
    %5286 = vmatprep.subr.mxu0 0.0
    %5287 = vmatpush1.msra.mxu0 %v1492
    %5288 = vmatprep.subr.mxu0 0.0
    %5289 = vmatpush1.msra.mxu0 %v1493
    %5290 = vmatprep.subr.mxu0 0.0
    %5291 = vmatpush1.msra.mxu0 %v1494
    %5292 = vmatprep.subr.mxu0 0.0
    %5293 = vmatpush1.msra.mxu0 %v1495
    %5294 = vmatprep.subr.mxu0 0.0
    %5295 = vmatpush1.msra.mxu0 %v1496
    %5296 = vmatprep.subr.mxu0 0.0
    %5297 = vmatpush1.msra.mxu0 %v1497
    %5298 = vmatprep.subr.mxu0 0.0
    %5299 = vmatpush1.msra.mxu0 %v1498
    %5300 = vmatprep.subr.mxu0 0.0
    %5301 = vmatpush1.msra.mxu0 %v1499
    %5302 = vmatprep.subr.mxu0 0.0
    %5303 = vmatpush1.msra.mxu0 %v1500
    %5304 = vmatprep.subr.mxu0 0.0
    %5305 = vmatpush1.msra.mxu0 %v1501
    %5306 = vmatprep.subr.mxu0 0.0
    %5307 = vmatpush1.msra.mxu0 %v1502
    %5308 = vmatprep.subr.mxu0 0.0
    %5309 = vmatpush1.msra.mxu0 %v1503
    %5310 = vmatprep.subr.mxu0 0.0
    %5311 = vmatpush1.msra.mxu0 %v1504
    %5312 = vmatprep.subr.mxu0 0.0
    %5313 = vmatpush1.msra.mxu0 %v1505
    %5314 = vmatprep.subr.mxu0 0.0
    %5315 = vmatpush1.msra.mxu0 %v1506
    %5316 = vmatprep.subr.mxu0 0.0
    %5317 = vmatpush1.msra.mxu0 %v1507
    %5318 = vmatprep.subr.mxu0 0.0
    %5319 = vmatpush1.msra.mxu0 %v1508
    %5320 = vmatprep.subr.mxu0 0.0
    %5321 = vmatpush1.msra.mxu0 %v1509
    %5322 = vmatprep.subr.mxu0 0.0
    %5323 = vmatpush1.msra.mxu0 %v1510
    %5324 = vmatprep.mubr.f32.mxu0 %v1996
    %5325 = vmatmul.mubr.f32.gmra.mrb[0].mxu0 %v1994
    %v5326 = vpop.f32.mrb[0].mxu0
    %v5327 = vadd.f32 %v5257, %v5326
    %v5328 = vpop.f32.mrb[0].mxu0
    %5329 = vdwg.mxu0
    %5330 = vmatprep.subr.mxu0 0.0
    %5331 = vmatpush1.msra.mxu0 %v1511
    %5332 = vmatprep.subr.mxu0 0.0
    %5333 = vmatpush1.msra.mxu0 %v1512
    %5334 = vmatprep.subr.mxu0 0.0
    %5335 = vmatpush1.msra.mxu0 %v1513
    %5336 = vmatprep.subr.mxu0 0.0
    %5337 = vmatpush1.msra.mxu0 %v1514
    %5338 = vmatprep.subr.mxu0 0.0
    %5339 = vmatpush1.msra.mxu0 %v1515
    %5340 = vmatprep.subr.mxu0 0.0
    %5341 = vmatpush1.msra.mxu0 %v1516
    %5342 = vmatprep.subr.mxu0 0.0
    %5343 = vmatpush1.msra.mxu0 %v1517
    %5344 = vmatprep.subr.mxu0 0.0
    %5345 = vmatpush1.msra.mxu0 %v1518
    %5346 = vmatprep.subr.mxu0 0.0
    %5347 = vmatpush1.msra.mxu0 %v1519
    %5348 = vmatprep.subr.mxu0 0.0
    %5349 = vmatpush1.msra.mxu0 %v1520
    %5350 = vmatprep.subr.mxu0 0.0
    %5351 = vmatpush1.msra.mxu0 %v1521
    %5352 = vmatprep.subr.mxu0 0.0
    %5353 = vmatpush1.msra.mxu0 %v1522
    %5354 = vmatprep.subr.mxu0 0.0
    %5355 = vmatpush1.msra.mxu0 %v1523
    %5356 = vmatprep.subr.mxu0 0.0
    %5357 = vmatpush1.msra.mxu0 %v1524
    %5358 = vmatprep.subr.mxu0 0.0
    %5359 = vmatpush1.msra.mxu0 %v1525
    %5360 = vmatprep.subr.mxu0 0.0
    %5361 = vmatpush1.msra.mxu0 %v1526
    %5362 = vmatprep.subr.mxu0 0.0
    %5363 = vmatpush1.msra.mxu0 %v1527
    %5364 = vmatprep.subr.mxu0 0.0
    %5365 = vmatpush1.msra.mxu0 %v1528
    %5366 = vmatprep.subr.mxu0 0.0
    %5367 = vmatpush1.msra.mxu0 %v1529
    %5368 = vmatprep.subr.mxu0 0.0
    %5369 = vmatpush1.msra.mxu0 %v1530
    %5370 = vmatprep.subr.mxu0 0.0
    %5371 = vmatpush1.msra.mxu0 %v1531
    %5372 = vmatprep.subr.mxu0 0.0
    %5373 = vmatpush1.msra.mxu0 %v1532
    %5374 = vmatprep.subr.mxu0 0.0
    %5375 = vmatpush1.msra.mxu0 %v1533
    %5376 = vmatprep.subr.mxu0 0.0
    %5377 = vmatpush1.msra.mxu0 %v1534
    %5378 = vmatprep.subr.mxu0 0.0
    %5379 = vmatpush1.msra.mxu0 %v1535
    %5380 = vmatprep.subr.mxu0 0.0
    %5381 = vmatpush1.msra.mxu0 %v1536
    %5382 = vmatprep.subr.mxu0 0.0
    %5383 = vmatpush1.msra.mxu0 %v1537
    %5384 = vmatprep.subr.mxu0 0.0
    %5385 = vmatpush1.msra.mxu0 %v1538
    %5386 = vmatprep.subr.mxu0 0.0
    %5387 = vmatpush1.msra.mxu0 %v1539
    %5388 = vmatprep.subr.mxu0 0.0
    %5389 = vmatpush1.msra.mxu0 %v1540
    %5390 = vmatprep.subr.mxu0 0.0
    %5391 = vmatpush1.msra.mxu0 %v1541
    %5392 = vmatprep.subr.mxu0 0.0
    %5393 = vmatpush1.msra.mxu0 %v1542
    %5394 = vmatprep.mubr.f32.mxu0 %v2012
    %5395 = vmatmul.mubr.f32.gmra.mrb[0].mxu0 %v2004
    %v5396 = vpop.f32.mrb[0].mxu0
    %v5397 = vadd.f32 %v5327, %v5396
    %v5398 = vpop.f32.mrb[0].mxu0
    %5399 = vdwg.mxu0
    %5400 = vmatprep.subr.mxu0 0.0
    %5401 = vmatpush1.msra.mxu0 %v1543
    %5402 = vmatprep.subr.mxu0 0.0
    %5403 = vmatpush1.msra.mxu0 %v1544
    %5404 = vmatprep.subr.mxu0 0.0
    %5405 = vmatpush1.msra.mxu0 %v1545
    %5406 = vmatprep.subr.mxu0 0.0
    %5407 = vmatpush1.msra.mxu0 %v1546
    %5408 = vmatprep.subr.mxu0 0.0
    %5409 = vmatpush1.msra.mxu0 %v1547
    %5410 = vmatprep.subr.mxu0 0.0
    %5411 = vmatpush1.msra.mxu0 %v1548
    %5412 = vmatprep.subr.mxu0 0.0
    %5413 = vmatpush1.msra.mxu0 %v1549
    %5414 = vmatprep.subr.mxu0 0.0
    %5415 = vmatpush1.msra.mxu0 %v1550
    %5416 = vmatprep.subr.mxu0 0.0
    %5417 = vmatpush1.msra.mxu0 %v1551
    %5418 = vmatprep.subr.mxu0 0.0
    %5419 = vmatpush1.msra.mxu0 %v1552
    %5420 = vmatprep.subr.mxu0 0.0
    %5421 = vmatpush1.msra.mxu0 %v1553
    %5422 = vmatprep.subr.mxu0 0.0
    %5423 = vmatpush1.msra.mxu0 %v1554
    %5424 = vmatprep.subr.mxu0 0.0
    %5425 = vmatpush1.msra.mxu0 %v1555
    %5426 = vmatprep.subr.mxu0 0.0
    %5427 = vmatpush1.msra.mxu0 %v1556
    %5428 = vmatprep.subr.mxu0 0.0
    %5429 = vmatpush1.msra.mxu0 %v1557
    %5430 = vmatprep.subr.mxu0 0.0
    %5431 = vmatpush1.msra.mxu0 %v1558
    %5432 = vmatprep.subr.mxu0 0.0
    %5433 = vmatpush1.msra.mxu0 %v1559
    %5434 = vmatprep.subr.mxu0 0.0
    %5435 = vmatpush1.msra.mxu0 %v1560
    %5436 = vmatprep.subr.mxu0 0.0
    %5437 = vmatpush1.msra.mxu0 %v1561
    %5438 = vmatprep.subr.mxu0 0.0
    %5439 = vmatpush1.msra.mxu0 %v1562
    %5440 = vmatprep.subr.mxu0 0.0
    %5441 = vmatpush1.msra.mxu0 %v1563
    %5442 = vmatprep.subr.mxu0 0.0
    %5443 = vmatpush1.msra.mxu0 %v1564
    %5444 = vmatprep.subr.mxu0 0.0
    %5445 = vmatpush1.msra.mxu0 %v1565
    %5446 = vmatprep.subr.mxu0 0.0
    %5447 = vmatpush1.msra.mxu0 %v1566
    %5448 = vmatprep.subr.mxu0 0.0
    %5449 = vmatpush1.msra.mxu0 %v1567
    %5450 = vmatprep.subr.mxu0 0.0
    %5451 = vmatpush1.msra.mxu0 %v1568
    %5452 = vmatprep.subr.mxu0 0.0
    %5453 = vmatpush1.msra.mxu0 %v1569
    %5454 = vmatprep.subr.mxu0 0.0
    %5455 = vmatpush1.msra.mxu0 %v1570
    %5456 = vmatprep.subr.mxu0 0.0
    %5457 = vmatpush1.msra.mxu0 %v1571
    %5458 = vmatprep.subr.mxu0 0.0
    %5459 = vmatpush1.msra.mxu0 %v1572
    %5460 = vmatprep.subr.mxu0 0.0
    %5461 = vmatpush1.msra.mxu0 %v1573
    %5462 = vmatprep.subr.mxu0 0.0
    %5463 = vmatpush1.msra.mxu0 %v1574
    %5464 = vmatprep.mubr.f32.mxu0 %v2013
    %5465 = vmatmul.mubr.f32.gmra.mrb[0].mxu0 %v2011
    %v5466 = vpop.f32.mrb[0].mxu0
    %v5467 = vadd.f32 %v5397, %v5466
    %v5468 = vpop.f32.mrb[0].mxu0
    %5469 = vdwg.mxu0
    %vm5470 = vcmask 41984
    %5471 = vst.msk [vmem:[#allocation2] sm:$0x3] %vm5470, %v5467
    // Predicated region
    $region14: #{tpu_custom_call.1} parent=1 // pred_check
      _
    $region15: #{tpu_custom_call.1} parent=1 // pred_check_branch
      %5473 = sbr.rel (0) target = $region17
    $region16: #{tpu_custom_call.1} parent=1 // pred_region
      %s5475 = ssub.s32 32, 32
      %5476 = vsyncadd [#allocation3], %s5475
      %s5478 = sshll.u32 [#allocation2], 4
      %s5479 = int_to_ptr.vmem [resolvable:$true] %s5478
      %5481 = dma.vmem_to_hbm [thread:$0]  %s5479, 32, %s3, [#allocation3]
    $region17: #{tpu_custom_call.1} parent=1 // pred_fallthru
      _
    // Predicated region
    $region18: #{tpu_custom_call.1} parent=1 // pred_check
      _
    $region19: #{tpu_custom_call.1} parent=1 // pred_check_branch
      %5483 = sbr.rel (0) target = $region21
    $region20: #{tpu_custom_call.1} parent=1 // pred_region
      %5484 = dma.done [#allocation3], 32
    $region21: #{tpu_custom_call.1} parent=1 // pred_fallthru
      _
    %5485 = vsyncpa [#allocation3], 1

</llo_original>
